<compile_context>
chip_gen: v7x
topology: tpu7x:2x2x1
jax: 0.10.0
libtpu: 0.0.40
codegen_flags: <defaults>
</compile_context>

<pallas_src>
from functools import partial

import jax
import jax.numpy as jnp
from jax.experimental import pallas as pl
from jax.experimental.pallas import tpu as pltpu

P = 128  # per-gate lane width; every feature / hidden dim is padded to one lane tile


def _round_up(n, m):
    return ((n + m - 1) // m) * m


# ------------------------------ fused kernel ----------------------------------
def _fused_ae_kernel(x_ref, m_ref,
                     w1i_ref, b1_ref, renc_ref, b2_ref,
                     w3i_ref, b3_ref, rdec_ref, b4_ref,
                     wo_ref, bo_ref,
                     out_ref,
                     gx_scr, seq_scr):
    BPd, BPe = m_ref.shape            # padded decoder / encoder batch rows (multiples of 8)
    T = x_ref.shape[0] // BPe         # sequence length (rows are time-major: t*BP + b)

    def sigmoid(x):                   # one EUP push (tanh) instead of exp + reciprocal
        return 0.5 * jnp.tanh(0.5 * x) + 0.5

    def lstm_cell(gates, c):          # gates: (BP, 4*P) f32, lane-aligned 128-wide gate slices
        i_g = sigmoid(gates[:, 0 * P:1 * P])
        f_g = sigmoid(gates[:, 1 * P:2 * P])
        g_g = jnp.tanh(gates[:, 2 * P:3 * P])
        o_g = sigmoid(gates[:, 3 * P:4 * P])
        c_new = f_g * c + i_g * g_g
        h_new = o_g * jnp.tanh(c_new)
        return h_new, c_new

    def run_pair(BP, gA_at, gB_full, rhs_ref, store_B):
        # Wavefront-fused pair of stacked LSTMs.  Iteration s performs layer-A step s and
        # layer-B step s-1 from a single (BP, 2P) x (2P, 8P) bf16 MXU matmul whose RHS is
        # [[Whh_A, Wih_B], [0, Whh_B]].  gA_at(s) supplies layer-A's hoisted input gates,
        # gB_full the (hoisted-broadcast) layer-B bias.  Returns layer-B's final hidden.
        hA = jnp.zeros((BP, P), jnp.float32)
        cA = jnp.zeros((BP, P), jnp.float32)
        hB = jnp.zeros((BP, P), jnp.float32)
        cB = jnp.zeros((BP, P), jnp.float32)
        for s in range(T + 1):        # small static T -> fully unrolled
            if s == 0:
                fused = jnp.zeros((BP, 8 * P), jnp.float32)
            else:
                lhs = jnp.concatenate([hA, hB], axis=1).astype(jnp.bfloat16)   # (BP, 2P)
                fused = jnp.dot(lhs, rhs_ref[...],
                                preferred_element_type=jnp.float32)            # (BP, 8P)
            if s < T:                 # layer A, step s
                hA, cA = lstm_cell(gA_at(s) + fused[:, :4 * P], cA)
            if s >= 1:                # layer B, step s-1
                hB, cB = lstm_cell(gB_full + fused[:, 4 * P:], cB)
                store_B(s - 1, hB)
        return hB

    # ---- encoder pair (rnn1: F -> 2E, rnn2: 2E -> E) ----
    # Hoist x @ W1_ih (+ folded bias) off the serial path as one big bf16 matmul.
    gx_scr[...] = (jnp.dot(x_ref[...], w1i_ref[...], preferred_element_type=jnp.float32)
                   + b1_ref[...])
    b2_full = jnp.broadcast_to(b2_ref[...], (BPe, 4 * P))      # hoisted (no per-step broadcast)
    z = run_pair(BPe,
                 lambda s: gx_scr[s * BPe:(s + 1) * BPe, :],
                 b2_full, renc_ref,
                 lambda t, h: None)                            # only the final latent is needed

    # ---- decoder input: latent row b' // n_features via a (BPd, BPe) one-hot matmul ----
    z_dec = jnp.dot(m_ref[...], z.astype(jnp.bfloat16),
                    preferred_element_type=jnp.float32)         # (BPd, P)

    # ---- decoder pair (rnn1: E -> E, rnn2: E -> 2E) ----
    # dec_rnn1's input is time-constant, so its projection is computed once.
    gdx = (jnp.dot(z_dec.astype(jnp.bfloat16), w3i_ref[...],
                   preferred_element_type=jnp.float32) + b3_ref[...])          # (BPd, 4P)
    b4_full = jnp.broadcast_to(b4_ref[...], (BPd, 4 * P))

    def store_seq(t, h):
        seq_scr[t * BPd:(t + 1) * BPd, :] = h

    run_pair(BPd, lambda s: gdx, b4_full, rdec_ref, store_seq)

    # ---- output projection: one big lane-dense matmul over the whole decoder sequence ----
    out_ref[...] = (jnp.dot(seq_scr[...].astype(jnp.bfloat16), wo_ref[...],
                            preferred_element_type=jnp.float32)
                    + bo_ref[...])


# --------------------------- parameter packing ---------------------------------
def _pad_gate_matrix(w, in_dim, hid):
    """PyTorch gate-stacked weight (4*hid, in_dim) -> lane-padded (P, 4P) f32 (gate k in
    lanes [k*P, k*P+hid)).  Zero padding keeps padded state columns exactly 0."""
    out = jnp.zeros((P, 4 * P), jnp.float32)
    for k in range(4):                                   # PyTorch gate order i, f, g, o
        out = out.at[:in_dim, k * P:k * P + hid].set(w[k * hid:(k + 1) * hid, :].T)
    return out


def _pad_gate_bias(b, hid):
    out = jnp.zeros((1, 4 * P), jnp.float32)
    for k in range(4):
        out = out.at[0, k * P:k * P + hid].set(b[k * hid:(k + 1) * hid])
    return out


def _fused_rhs(w_hh_a, hid_a, w_ih_b, w_hh_b, hid_b):
    """Block RHS [[Whh_A, Wih_B], [0, Whh_B]] (2P, 8P) in bf16 for the wavefront-fused pair."""
    top = jnp.concatenate([_pad_gate_matrix(w_hh_a, hid_a, hid_a),
                           _pad_gate_matrix(w_ih_b, hid_a, hid_b)], axis=1)
    bot = jnp.concatenate([jnp.zeros((P, 4 * P), jnp.float32),
                           _pad_gate_matrix(w_hh_b, hid_b, hid_b)], axis=1)
    return jnp.concatenate([top, bot], axis=0).astype(jnp.bfloat16)


def _lstm_params(key, input_dim, hidden_dim):
    k = 1.0 / jnp.sqrt(jnp.float32(hidden_dim))
    k0, k1, k2, k3 = jax.random.split(key, 4)
    return (
        jax.random.uniform(k0, (4 * hidden_dim, input_dim), jnp.float32, -k, k),
        jax.random.uniform(k1, (4 * hidden_dim, hidden_dim), jnp.float32, -k, k),
        jax.random.uniform(k2, (4 * hidden_dim,), jnp.float32, -k, k),
        jax.random.uniform(k3, (4 * hidden_dim,), jnp.float32, -k, k),
    )


def make_params(key, n_features, embedding_dim):
    E = embedding_dim
    keys = jax.random.split(key, 6)
    kl = 1.0 / jnp.sqrt(jnp.float32(2 * E))
    return {
        "enc_rnn1": _lstm_params(keys[0], n_features, 2 * E),   # LSTM(n_features -> 2E)
        "enc_rnn2": _lstm_params(keys[1], 2 * E, E),            # LSTM(2E -> E)
        "dec_rnn1": _lstm_params(keys[2], E, E),                # LSTM(E -> E)
        "dec_rnn2": _lstm_params(keys[3], E, 2 * E),            # LSTM(E -> 2E)
        "out_w": jax.random.uniform(keys[4], (2 * E, n_features), jnp.float32, -kl, kl),
        "out_b": jax.random.uniform(keys[5], (n_features,), jnp.float32, -kl, kl),
    }


# ------------------------------ full forward -----------------------------------
@partial(jax.jit, static_argnums=(2, 3, 4))
def recurrent_autoencoder_forward(x, params, seq_len, n_features, embedding_dim):
    B, T, F = x.shape
    assert T == seq_len and F == n_features
    E = embedding_dim
    assert 2 * E <= P and n_features <= P
    Bd = B * n_features                      # decoder batch (PyTorch repeat/reshape quirk)
    BPe = _round_up(B, 8)                    # encoder batch padding (independent of n_features)
    BPd = _round_up(Bd, 8)                   # decoder batch padding

    # --- input: time-major, batch & feature padded to the (8,128) tile, bf16 for the MXU ---
    x_tm = jnp.transpose(x.astype(jnp.float32), (1, 0, 2))                       # (T, B, F)
    x_flat = (jnp.zeros((T, BPe, P), jnp.float32).at[:, :B, :F].set(x_tm)
              .reshape(T * BPe, P).astype(jnp.bfloat16))

    # --- replication matrix (BPd, BPe): decoder row b' reads latent row b'//n_features ---
    r = jnp.arange(BPd)
    c = jnp.arange(BPe)
    M = ((r[:, None] < Bd)
         & (c[None, :] == (r // n_features)[:, None])).astype(jnp.bfloat16)

    # --- lane-padded bf16 weights (all resident in VMEM inside the kernel) ---
    w1ih, w1hh, b1i, b1h = params["enc_rnn1"]
    w2ih, w2hh, b2i, b2h = params["enc_rnn2"]
    w3ih, w3hh, b3i, b3h = params["dec_rnn1"]
    w4ih, w4hh, b4i, b4h = params["dec_rnn2"]
    H1, H2, H3, H4 = 2 * E, E, E, 2 * E

    w1i = _pad_gate_matrix(w1ih, F, H1).astype(jnp.bfloat16)
    b1 = _pad_gate_bias(b1i + b1h, H1)
    renc = _fused_rhs(w1hh, H1, w2ih, w2hh, H2)
    b2 = _pad_gate_bias(b2i + b2h, H2)
    w3i = _pad_gate_matrix(w3ih, E, H3).astype(jnp.bfloat16)
    b3 = _pad_gate_bias(b3i + b3h, H3)
    rdec = _fused_rhs(w3hh, H3, w4ih, w4hh, H4)
    b4 = _pad_gate_bias(b4i + b4h, H4)
    wo = (jnp.zeros((P, P), jnp.float32).at[:2 * E, :F].set(params["out_w"])
          .astype(jnp.bfloat16))
    bo = jnp.zeros((1, P), jnp.float32).at[0, :F].set(params["out_b"])

    inputs = (x_flat, M, w1i, b1, renc, b2, w3i, b3, rdec, b4, wo, bo)
    vmem_spec = pl.BlockSpec(memory_space=pltpu.MemorySpace.VMEM)

    out_flat = pl.pallas_call(
        _fused_ae_kernel,
        out_shape=jax.ShapeDtypeStruct((T * BPd, P), jnp.float32),
        # No grid: single invocation, whole arrays VMEM-resident, no double-buffering.
        in_specs=[vmem_spec] * len(inputs),
        out_specs=vmem_spec,
        scratch_shapes=[
            pltpu.VMEM((T * BPe, 4 * P), jnp.float32),   # hoisted enc_rnn1 input gates
            pltpu.VMEM((T * BPd, P), jnp.float32),       # dec_rnn2 output sequence
        ],
        compiler_params=pltpu.CompilerParams(vmem_limit_bytes=32 * 1024 * 1024),
    )(*inputs)

    # slice the lane-dense padded slab back to the real shape: (B*n_features, T, n_features)
    out = out_flat.reshape(T, BPd, P)[:, :Bd, :F]
    return jnp.transpose(out, (1, 0, 2))


# --------------------------- pure-JAX references ---------------------------------
def _lstm_ref(x, w_ih, w_hh, b_ih, b_hh, mm_dtype=jnp.float32):
    B, T, D = x.shape
    H = w_hh.shape[1]
    wih = w_ih.astype(mm_dtype)
    whh = w_hh.astype(mm_dtype)

    def step(carry, xt):
        h, c = carry
        gates = (jnp.dot(xt.astype(mm_dtype), wih.T, preferred_element_type=jnp.float32)
                 + jnp.dot(h.astype(mm_dtype), whh.T, preferred_element_type=jnp.float32)
                 + b_ih + b_hh)
        i, f, g, o = jnp.split(gates, 4, axis=-1)
        i, f, o = jax.nn.sigmoid(i), jax.nn.sigmoid(f), jax.nn.sigmoid(o)
        g = jnp.tanh(g)
        c = f * c + i * g
        h = o * jnp.tanh(c)
        return (h, c), h

    init = (jnp.zeros((B, H), jnp.float32), jnp.zeros((B, H), jnp.float32))
    _, ys = jax.lax.scan(step, init, jnp.transpose(x, (1, 0, 2)))
    return jnp.transpose(ys, (1, 0, 2))


def _ref_forward(x, params, seq_len, n_features, embedding_dim, mm_dtype=jnp.float32):
    E = embedding_dim
    h1 = _lstm_ref(x, *params["enc_rnn1"], mm_dtype=mm_dtype)
    h2 = _lstm_ref(h1, *params["enc_rnn2"], mm_dtype=mm_dtype)
    z = h2[:, -1, :]
    d = jnp.tile(z[:, None, :], (1, seq_len, n_features)).reshape(-1, seq_len, E)
    d1 = _lstm_ref(d, *params["dec_rnn1"], mm_dtype=mm_dtype)
    d2 = _lstm_ref(d1, *params["dec_rnn2"], mm_dtype=mm_dtype)
    return (jnp.dot(d2.astype(mm_dtype), params["out_w"].astype(mm_dtype),
                    preferred_element_type=jnp.float32) + params["out_b"])


# ----------------------------------- main ---------------------------------------
if __name__ == "__main__":
    def run_case(B, T, n_features, E, key):
        kx, kp = jax.random.split(key)
        x = jax.random.normal(kx, (B, T, n_features), jnp.float32)
        params = make_params(kp, n_features, E)

        out = jax.block_until_ready(
            recurrent_autoencoder_forward(x, params, T, n_features, E))
        ref_bf = jax.block_until_ready(
            _ref_forward(x, params, T, n_features, E, mm_dtype=jnp.bfloat16))
        ref_f32 = jax.block_until_ready(
            _ref_forward(x, params, T, n_features, E, mm_dtype=jnp.float32))

        assert out.shape == ref_f32.shape, (out.shape, ref_f32.shape)
        err_bf = float(jnp.max(jnp.abs(out - ref_bf)))
        err_f32 = float(jnp.max(jnp.abs(out - ref_f32)))
        assert err_bf < 5e-3, f"mismatch vs bf16-matmul reference: {err_bf}"
        assert err_f32 < 5e-2, f"mismatch vs f32 reference: {err_f32}"

    key = jax.random.PRNGKey(0)
    k1, k2 = jax.random.split(key)
    # n_features = 1 (degenerate repeat) and n_features > 1 (exercises the repeat/reshape
    # replication path and the separate encoder/decoder batch padding, BPd != BPe).
    run_case(B=2, T=8, n_features=1, E=32, key=k1)
    run_case(B=3, T=6, n_features=3, E=16, key=k2)

    print("KERNEL_OK")
</pallas_src>

<mosaic_0001>
module attributes {stable_mosaic.version = 11 : i64} {
  func.func @_fused_ae_kernel(%arg0: memref<64x128xbf16, #tpu.memory_space<vmem>>, %arg1: memref<8x8xbf16, #tpu.memory_space<vmem>>, %arg2: memref<128x512xbf16, #tpu.memory_space<vmem>>, %arg3: memref<1x512xf32, #tpu.memory_space<vmem>>, %arg4: memref<256x1024xbf16, #tpu.memory_space<vmem>>, %arg5: memref<1x512xf32, #tpu.memory_space<vmem>>, %arg6: memref<128x512xbf16, #tpu.memory_space<vmem>>, %arg7: memref<1x512xf32, #tpu.memory_space<vmem>>, %arg8: memref<256x1024xbf16, #tpu.memory_space<vmem>>, %arg9: memref<1x512xf32, #tpu.memory_space<vmem>>, %arg10: memref<128x128xbf16, #tpu.memory_space<vmem>>, %arg11: memref<1x128xf32, #tpu.memory_space<vmem>>, %arg12: memref<64x128xf32, #tpu.memory_space<vmem>>, %arg13: memref<64x512xf32, #tpu.memory_space<vmem>>, %arg14: memref<64x128xf32, #tpu.memory_space<vmem>>) attributes {dimension_semantics = [], scalar_prefetch = 0 : i64, scratch_operands = 2 : i64, tpu.core_type = #tpu.core_type<tc>} {
    %c0 = arith.constant 0 : index
    %c0_0 = arith.constant 0 : index
    %0 = vector.load %arg0[%c0, %c0_0] : memref<64x128xbf16, #tpu.memory_space<vmem>>, vector<64x128xbf16>
    %c0_1 = arith.constant 0 : index
    %c0_2 = arith.constant 0 : index
    %1 = vector.load %arg2[%c0_1, %c0_2] : memref<128x512xbf16, #tpu.memory_space<vmem>>, vector<128x512xbf16>
    %cst = arith.constant dense<0.000000e+00> : vector<64x512xf32>
    %2 = tpu.matmul %0, %1, %cst {dimension_numbers = #tpu.dot_dimension_numbers<[1], [0], [0], [1], [0, 0, 1, 1], [], []>} : vector<64x128xbf16>, vector<128x512xbf16>, vector<64x512xf32> -> vector<64x512xf32>
    %c0_3 = arith.constant 0 : index
    %c0_4 = arith.constant 0 : index
    %3 = vector.load %arg3[%c0_3, %c0_4] : memref<1x512xf32, #tpu.memory_space<vmem>>, vector<1x512xf32>
    %4 = vector.broadcast %3 : vector<1x512xf32> to vector<64x512xf32>
    %5 = arith.addf %2, %4 : vector<64x512xf32>
    %c0_5 = arith.constant 0 : index
    %c0_6 = arith.constant 0 : index
    %6 = vector.load %arg13[%c0_5, %c0_6] : memref<64x512xf32, #tpu.memory_space<vmem>>, vector<64x512xf32>
    tpu.vector_store %arg13[%c0_5, %c0_6], %5 {strides = array<i32>} : memref<64x512xf32, #tpu.memory_space<vmem>>, vector<64x512xf32>,
    %c0_7 = arith.constant 0 : index
    %c0_8 = arith.constant 0 : index
    %7 = vector.load %arg5[%c0_7, %c0_8] : memref<1x512xf32, #tpu.memory_space<vmem>>, vector<1x512xf32>
    %8 = vector.shape_cast %7 : vector<1x512xf32> to vector<1x512xf32>
    %9 = vector.broadcast %8 : vector<1x512xf32> to vector<8x512xf32>
    %cst_9 = arith.constant 0.000000e+00 : f32
    %10 = vector.broadcast %cst_9 : f32 to vector<8x128xf32>
    %cst_10 = arith.constant 0.000000e+00 : f32
    %11 = vector.broadcast %cst_10 : f32 to vector<8x128xf32>
    %cst_11 = arith.constant 0.000000e+00 : f32
    %12 = vector.broadcast %cst_11 : f32 to vector<8x128xf32>
    %cst_12 = arith.constant 0.000000e+00 : f32
    %13 = vector.broadcast %cst_12 : f32 to vector<8x1024xf32>
    %c0_13 = arith.constant 0 : index
    %c0_14 = arith.constant 0 : index
    %14 = vector.load %arg13[%c0_13, %c0_14] : memref<64x512xf32, #tpu.memory_space<vmem>>, vector<8x512xf32>
    %15 = vector.extract_strided_slice %13 {offsets = [0, 0], sizes = [8, 512], strides = [1, 1]} : vector<8x1024xf32> to vector<8x512xf32>
    %16 = arith.addf %14, %15 : vector<8x512xf32>
    %17 = vector.extract_strided_slice %16 {offsets = [0, 0], sizes = [8, 128], strides = [1, 1]} : vector<8x512xf32> to vector<8x128xf32>
    %cst_15 = arith.constant 5.000000e-01 : f32
    %18 = vector.broadcast %cst_15 : f32 to vector<8x128xf32>
    %19 = arith.mulf %18, %17 : vector<8x128xf32>
    %20 = math.tanh %19 : vector<8x128xf32>
    %cst_16 = arith.constant 5.000000e-01 : f32
    %21 = vector.broadcast %cst_16 : f32 to vector<8x128xf32>
    %22 = arith.mulf %21, %20 : vector<8x128xf32>
    %cst_17 = arith.constant 5.000000e-01 : f32
    %23 = vector.broadcast %cst_17 : f32 to vector<8x128xf32>
    %24 = arith.addf %22, %23 : vector<8x128xf32>
    %25 = vector.extract_strided_slice %16 {offsets = [0, 128], sizes = [8, 128], strides = [1, 1]} : vector<8x512xf32> to vector<8x128xf32>
    %cst_18 = arith.constant 5.000000e-01 : f32
    %26 = vector.broadcast %cst_18 : f32 to vector<8x128xf32>
    %27 = arith.mulf %26, %25 : vector<8x128xf32>
    %28 = math.tanh %27 : vector<8x128xf32>
    %cst_19 = arith.constant 5.000000e-01 : f32
    %29 = vector.broadcast %cst_19 : f32 to vector<8x128xf32>
    %30 = arith.mulf %29, %28 : vector<8x128xf32>
    %cst_20 = arith.constant 5.000000e-01 : f32
    %31 = vector.broadcast %cst_20 : f32 to vector<8x128xf32>
    %32 = arith.addf %30, %31 : vector<8x128xf32>
    %33 = vector.extract_strided_slice %16 {offsets = [0, 256], sizes = [8, 128], strides = [1, 1]} : vector<8x512xf32> to vector<8x128xf32>
    %34 = math.tanh %33 : vector<8x128xf32>
    %35 = vector.extract_strided_slice %16 {offsets = [0, 384], sizes = [8, 128], strides = [1, 1]} : vector<8x512xf32> to vector<8x128xf32>
    %cst_21 = arith.constant 5.000000e-01 : f32
    %36 = vector.broadcast %cst_21 : f32 to vector<8x128xf32>
    %37 = arith.mulf %36, %35 : vector<8x128xf32>
    %38 = math.tanh %37 : vector<8x128xf32>
    %cst_22 = arith.constant 5.000000e-01 : f32
    %39 = vector.broadcast %cst_22 : f32 to vector<8x128xf32>
    %40 = arith.mulf %39, %38 : vector<8x128xf32>
    %cst_23 = arith.constant 5.000000e-01 : f32
    %41 = vector.broadcast %cst_23 : f32 to vector<8x128xf32>
    %42 = arith.addf %40, %41 : vector<8x128xf32>
    %43 = arith.mulf %32, %10 : vector<8x128xf32>
    %44 = arith.mulf %24, %34 : vector<8x128xf32>
    %45 = arith.addf %43, %44 : vector<8x128xf32>
    %46 = math.tanh %45 : vector<8x128xf32>
    %47 = arith.mulf %42, %46 : vector<8x128xf32>
    %48 = tpu.concatenate %47, %11 in 1 : vector<8x128xf32>, vector<8x128xf32> -> vector<8x256xf32>
    %49 = arith.truncf %48 : vector<8x256xf32> to vector<8x256xbf16>
    %c0_24 = arith.constant 0 : index
    %c0_25 = arith.constant 0 : index
    %50 = vector.load %arg4[%c0_24, %c0_25] : memref<256x1024xbf16, #tpu.memory_space<vmem>>, vector<256x1024xbf16>
    %cst_26 = arith.constant dense<0.000000e+00> : vector<8x1024xf32>
    %51 = tpu.matmul %49, %50, %cst_26 {dimension_numbers = #tpu.dot_dimension_numbers<[1], [0], [0], [1], [0, 0, 1, 1], [], []>} : vector<8x256xbf16>, vector<256x1024xbf16>, vector<8x1024xf32> -> vector<8x1024xf32>
    %c8 = arith.constant 8 : index
    %c0_27 = arith.constant 0 : index
    %52 = vector.load %arg13[%c8, %c0_27] : memref<64x512xf32, #tpu.memory_space<vmem>>, vector<8x512xf32>
    %53 = vector.extract_strided_slice %51 {offsets = [0, 0], sizes = [8, 512], strides = [1, 1]} : vector<8x1024xf32> to vector<8x512xf32>
    %54 = arith.addf %52, %53 : vector<8x512xf32>
    %55 = vector.extract_strided_slice %54 {offsets = [0, 0], sizes = [8, 128], strides = [1, 1]} : vector<8x512xf32> to vector<8x128xf32>
    %cst_28 = arith.constant 5.000000e-01 : f32
    %56 = vector.broadcast %cst_28 : f32 to vector<8x128xf32>
    %57 = arith.mulf %56, %55 : vector<8x128xf32>
    %58 = math.tanh %57 : vector<8x128xf32>
    %cst_29 = arith.constant 5.000000e-01 : f32
    %59 = vector.broadcast %cst_29 : f32 to vector<8x128xf32>
    %60 = arith.mulf %59, %58 : vector<8x128xf32>
    %cst_30 = arith.constant 5.000000e-01 : f32
    %61 = vector.broadcast %cst_30 : f32 to vector<8x128xf32>
    %62 = arith.addf %60, %61 : vector<8x128xf32>
    %63 = vector.extract_strided_slice %54 {offsets = [0, 128], sizes = [8, 128], strides = [1, 1]} : vector<8x512xf32> to vector<8x128xf32>
    %cst_31 = arith.constant 5.000000e-01 : f32
    %64 = vector.broadcast %cst_31 : f32 to vector<8x128xf32>
    %65 = arith.mulf %64, %63 : vector<8x128xf32>
    %66 = math.tanh %65 : vector<8x128xf32>
    %cst_32 = arith.constant 5.000000e-01 : f32
    %67 = vector.broadcast %cst_32 : f32 to vector<8x128xf32>
    %68 = arith.mulf %67, %66 : vector<8x128xf32>
    %cst_33 = arith.constant 5.000000e-01 : f32
    %69 = vector.broadcast %cst_33 : f32 to vector<8x128xf32>
    %70 = arith.addf %68, %69 : vector<8x128xf32>
    %71 = vector.extract_strided_slice %54 {offsets = [0, 256], sizes = [8, 128], strides = [1, 1]} : vector<8x512xf32> to vector<8x128xf32>
    %72 = math.tanh %71 : vector<8x128xf32>
    %73 = vector.extract_strided_slice %54 {offsets = [0, 384], sizes = [8, 128], strides = [1, 1]} : vector<8x512xf32> to vector<8x128xf32>
    %cst_34 = arith.constant 5.000000e-01 : f32
    %74 = vector.broadcast %cst_34 : f32 to vector<8x128xf32>
    %75 = arith.mulf %74, %73 : vector<8x128xf32>
    %76 = math.tanh %75 : vector<8x128xf32>
    %cst_35 = arith.constant 5.000000e-01 : f32
    %77 = vector.broadcast %cst_35 : f32 to vector<8x128xf32>
    %78 = arith.mulf %77, %76 : vector<8x128xf32>
    %cst_36 = arith.constant 5.000000e-01 : f32
    %79 = vector.broadcast %cst_36 : f32 to vector<8x128xf32>
    %80 = arith.addf %78, %79 : vector<8x128xf32>
    %81 = arith.mulf %70, %45 : vector<8x128xf32>
    %82 = arith.mulf %62, %72 : vector<8x128xf32>
    %83 = arith.addf %81, %82 : vector<8x128xf32>
    %84 = math.tanh %83 : vector<8x128xf32>
    %85 = arith.mulf %80, %84 : vector<8x128xf32>
    %86 = vector.extract_strided_slice %51 {offsets = [0, 512], sizes = [8, 512], strides = [1, 1]} : vector<8x1024xf32> to vector<8x512xf32>
    %87 = arith.addf %9, %86 : vector<8x512xf32>
    %88 = vector.extract_strided_slice %87 {offsets = [0, 0], sizes = [8, 128], strides = [1, 1]} : vector<8x512xf32> to vector<8x128xf32>
    %cst_37 = arith.constant 5.000000e-01 : f32
    %89 = vector.broadcast %cst_37 : f32 to vector<8x128xf32>
    %90 = arith.mulf %89, %88 : vector<8x128xf32>
    %91 = math.tanh %90 : vector<8x128xf32>
    %cst_38 = arith.constant 5.000000e-01 : f32
    %92 = vector.broadcast %cst_38 : f32 to vector<8x128xf32>
    %93 = arith.mulf %92, %91 : vector<8x128xf32>
    %cst_39 = arith.constant 5.000000e-01 : f32
    %94 = vector.broadcast %cst_39 : f32 to vector<8x128xf32>
    %95 = arith.addf %93, %94 : vector<8x128xf32>
    %96 = vector.extract_strided_slice %87 {offsets = [0, 128], sizes = [8, 128], strides = [1, 1]} : vector<8x512xf32> to vector<8x128xf32>
    %cst_40 = arith.constant 5.000000e-01 : f32
    %97 = vector.broadcast %cst_40 : f32 to vector<8x128xf32>
    %98 = arith.mulf %97, %96 : vector<8x128xf32>
    %99 = math.tanh %98 : vector<8x128xf32>
    %cst_41 = arith.constant 5.000000e-01 : f32
    %100 = vector.broadcast %cst_41 : f32 to vector<8x128xf32>
    %101 = arith.mulf %100, %99 : vector<8x128xf32>
    %cst_42 = arith.constant 5.000000e-01 : f32
    %102 = vector.broadcast %cst_42 : f32 to vector<8x128xf32>
    %103 = arith.addf %101, %102 : vector<8x128xf32>
    %104 = vector.extract_strided_slice %87 {offsets = [0, 256], sizes = [8, 128], strides = [1, 1]} : vector<8x512xf32> to vector<8x128xf32>
    %105 = math.tanh %104 : vector<8x128xf32>
    %106 = vector.extract_strided_slice %87 {offsets = [0, 384], sizes = [8, 128], strides = [1, 1]} : vector<8x512xf32> to vector<8x128xf32>
    %cst_43 = arith.constant 5.000000e-01 : f32
    %107 = vector.broadcast %cst_43 : f32 to vector<8x128xf32>
    %108 = arith.mulf %107, %106 : vector<8x128xf32>
    %109 = math.tanh %108 : vector<8x128xf32>
    %cst_44 = arith.constant 5.000000e-01 : f32
    %110 = vector.broadcast %cst_44 : f32 to vector<8x128xf32>
    %111 = arith.mulf %110, %109 : vector<8x128xf32>
    %cst_45 = arith.constant 5.000000e-01 : f32
    %112 = vector.broadcast %cst_45 : f32 to vector<8x128xf32>
    %113 = arith.addf %111, %112 : vector<8x128xf32>
    %114 = arith.mulf %103, %12 : vector<8x128xf32>
    %115 = arith.mulf %95, %105 : vector<8x128xf32>
    %116 = arith.addf %114, %115 : vector<8x128xf32>
    %117 = math.tanh %116 : vector<8x128xf32>
    %118 = arith.mulf %113, %117 : vector<8x128xf32>
    %119 = tpu.concatenate %85, %118 in 1 : vector<8x128xf32>, vector<8x128xf32> -> vector<8x256xf32>
    %120 = arith.truncf %119 : vector<8x256xf32> to vector<8x256xbf16>
    %c0_46 = arith.constant 0 : index
    %c0_47 = arith.constant 0 : index
    %121 = vector.load %arg4[%c0_46, %c0_47] : memref<256x1024xbf16, #tpu.memory_space<vmem>>, vector<256x1024xbf16>
    %cst_48 = arith.constant dense<0.000000e+00> : vector<8x1024xf32>
    %122 = tpu.matmul %120, %121, %cst_48 {dimension_numbers = #tpu.dot_dimension_numbers<[1], [0], [0], [1], [0, 0, 1, 1], [], []>} : vector<8x256xbf16>, vector<256x1024xbf16>, vector<8x1024xf32> -> vector<8x1024xf32>
    %c16 = arith.constant 16 : index
    %c0_49 = arith.constant 0 : index
    %123 = vector.load %arg13[%c16, %c0_49] : memref<64x512xf32, #tpu.memory_space<vmem>>, vector<8x512xf32>
    %124 = vector.extract_strided_slice %122 {offsets = [0, 0], sizes = [8, 512], strides = [1, 1]} : vector<8x1024xf32> to vector<8x512xf32>
    %125 = arith.addf %123, %124 : vector<8x512xf32>
    %126 = vector.extract_strided_slice %125 {offsets = [0, 0], sizes = [8, 128], strides = [1, 1]} : vector<8x512xf32> to vector<8x128xf32>
    %cst_50 = arith.constant 5.000000e-01 : f32
    %127 = vector.broadcast %cst_50 : f32 to vector<8x128xf32>
    %128 = arith.mulf %127, %126 : vector<8x128xf32>
    %129 = math.tanh %128 : vector<8x128xf32>
    %cst_51 = arith.constant 5.000000e-01 : f32
    %130 = vector.broadcast %cst_51 : f32 to vector<8x128xf32>
    %131 = arith.mulf %130, %129 : vector<8x128xf32>
    %cst_52 = arith.constant 5.000000e-01 : f32
    %132 = vector.broadcast %cst_52 : f32 to vector<8x128xf32>
    %133 = arith.addf %131, %132 : vector<8x128xf32>
    %134 = vector.extract_strided_slice %125 {offsets = [0, 128], sizes = [8, 128], strides = [1, 1]} : vector<8x512xf32> to vector<8x128xf32>
    %cst_53 = arith.constant 5.000000e-01 : f32
    %135 = vector.broadcast %cst_53 : f32 to vector<8x128xf32>
    %136 = arith.mulf %135, %134 : vector<8x128xf32>
    %137 = math.tanh %136 : vector<8x128xf32>
    %cst_54 = arith.constant 5.000000e-01 : f32
    %138 = vector.broadcast %cst_54 : f32 to vector<8x128xf32>
    %139 = arith.mulf %138, %137 : vector<8x128xf32>
    %cst_55 = arith.constant 5.000000e-01 : f32
    %140 = vector.broadcast %cst_55 : f32 to vector<8x128xf32>
    %141 = arith.addf %139, %140 : vector<8x128xf32>
    %142 = vector.extract_strided_slice %125 {offsets = [0, 256], sizes = [8, 128], strides = [1, 1]} : vector<8x512xf32> to vector<8x128xf32>
    %143 = math.tanh %142 : vector<8x128xf32>
    %144 = vector.extract_strided_slice %125 {offsets = [0, 384], sizes = [8, 128], strides = [1, 1]} : vector<8x512xf32> to vector<8x128xf32>
    %cst_56 = arith.constant 5.000000e-01 : f32
    %145 = vector.broadcast %cst_56 : f32 to vector<8x128xf32>
    %146 = arith.mulf %145, %144 : vector<8x128xf32>
    %147 = math.tanh %146 : vector<8x128xf32>
    %cst_57 = arith.constant 5.000000e-01 : f32
    %148 = vector.broadcast %cst_57 : f32 to vector<8x128xf32>
    %149 = arith.mulf %148, %147 : vector<8x128xf32>
    %cst_58 = arith.constant 5.000000e-01 : f32
    %150 = vector.broadcast %cst_58 : f32 to vector<8x128xf32>
    %151 = arith.addf %149, %150 : vector<8x128xf32>
    %152 = arith.mulf %141, %83 : vector<8x128xf32>
    %153 = arith.mulf %133, %143 : vector<8x128xf32>
    %154 = arith.addf %152, %153 : vector<8x128xf32>
    %155 = math.tanh %154 : vector<8x128xf32>
    %156 = arith.mulf %151, %155 : vector<8x128xf32>
    %157 = vector.extract_strided_slice %122 {offsets = [0, 512], sizes = [8, 512], strides = [1, 1]} : vector<8x1024xf32> to vector<8x512xf32>
    %158 = arith.addf %9, %157 : vector<8x512xf32>
    %159 = vector.extract_strided_slice %158 {offsets = [0, 0], sizes = [8, 128], strides = [1, 1]} : vector<8x512xf32> to vector<8x128xf32>
    %cst_59 = arith.constant 5.000000e-01 : f32
    %160 = vector.broadcast %cst_59 : f32 to vector<8x128xf32>
    %161 = arith.mulf %160, %159 : vector<8x128xf32>
    %162 = math.tanh %161 : vector<8x128xf32>
    %cst_60 = arith.constant 5.000000e-01 : f32
    %163 = vector.broadcast %cst_60 : f32 to vector<8x128xf32>
    %164 = arith.mulf %163, %162 : vector<8x128xf32>
    %cst_61 = arith.constant 5.000000e-01 : f32
    %165 = vector.broadcast %cst_61 : f32 to vector<8x128xf32>
    %166 = arith.addf %164, %165 : vector<8x128xf32>
    %167 = vector.extract_strided_slice %158 {offsets = [0, 128], sizes = [8, 128], strides = [1, 1]} : vector<8x512xf32> to vector<8x128xf32>
    %cst_62 = arith.constant 5.000000e-01 : f32
    %168 = vector.broadcast %cst_62 : f32 to vector<8x128xf32>
    %169 = arith.mulf %168, %167 : vector<8x128xf32>
    %170 = math.tanh %169 : vector<8x128xf32>
    %cst_63 = arith.constant 5.000000e-01 : f32
    %171 = vector.broadcast %cst_63 : f32 to vector<8x128xf32>
    %172 = arith.mulf %171, %170 : vector<8x128xf32>
    %cst_64 = arith.constant 5.000000e-01 : f32
    %173 = vector.broadcast %cst_64 : f32 to vector<8x128xf32>
    %174 = arith.addf %172, %173 : vector<8x128xf32>
    %175 = vector.extract_strided_slice %158 {offsets = [0, 256], sizes = [8, 128], strides = [1, 1]} : vector<8x512xf32> to vector<8x128xf32>
    %176 = math.tanh %175 : vector<8x128xf32>
    %177 = vector.extract_strided_slice %158 {offsets = [0, 384], sizes = [8, 128], strides = [1, 1]} : vector<8x512xf32> to vector<8x128xf32>
    %cst_65 = arith.constant 5.000000e-01 : f32
    %178 = vector.broadcast %cst_65 : f32 to vector<8x128xf32>
    %179 = arith.mulf %178, %177 : vector<8x128xf32>
    %180 = math.tanh %179 : vector<8x128xf32>
    %cst_66 = arith.constant 5.000000e-01 : f32
    %181 = vector.broadcast %cst_66 : f32 to vector<8x128xf32>
    %182 = arith.mulf %181, %180 : vector<8x128xf32>
    %cst_67 = arith.constant 5.000000e-01 : f32
    %183 = vector.broadcast %cst_67 : f32 to vector<8x128xf32>
    %184 = arith.addf %182, %183 : vector<8x128xf32>
    %185 = arith.mulf %174, %116 : vector<8x128xf32>
    %186 = arith.mulf %166, %176 : vector<8x128xf32>
    %187 = arith.addf %185, %186 : vector<8x128xf32>
    %188 = math.tanh %187 : vector<8x128xf32>
    %189 = arith.mulf %184, %188 : vector<8x128xf32>
    %190 = tpu.concatenate %156, %189 in 1 : vector<8x128xf32>, vector<8x128xf32> -> vector<8x256xf32>
    %191 = arith.truncf %190 : vector<8x256xf32> to vector<8x256xbf16>
    %c0_68 = arith.constant 0 : index
    %c0_69 = arith.constant 0 : index
    %192 = vector.load %arg4[%c0_68, %c0_69] : memref<256x1024xbf16, #tpu.memory_space<vmem>>, vector<256x1024xbf16>
    %cst_70 = arith.constant dense<0.000000e+00> : vector<8x1024xf32>
    %193 = tpu.matmul %191, %192, %cst_70 {dimension_numbers = #tpu.dot_dimension_numbers<[1], [0], [0], [1], [0, 0, 1, 1], [], []>} : vector<8x256xbf16>, vector<256x1024xbf16>, vector<8x1024xf32> -> vector<8x1024xf32>
    %c24 = arith.constant 24 : index
    %c0_71 = arith.constant 0 : index
    %194 = vector.load %arg13[%c24, %c0_71] : memref<64x512xf32, #tpu.memory_space<vmem>>, vector<8x512xf32>
    %195 = vector.extract_strided_slice %193 {offsets = [0, 0], sizes = [8, 512], strides = [1, 1]} : vector<8x1024xf32> to vector<8x512xf32>
    %196 = arith.addf %194, %195 : vector<8x512xf32>
    %197 = vector.extract_strided_slice %196 {offsets = [0, 0], sizes = [8, 128], strides = [1, 1]} : vector<8x512xf32> to vector<8x128xf32>
    %cst_72 = arith.constant 5.000000e-01 : f32
    %198 = vector.broadcast %cst_72 : f32 to vector<8x128xf32>
    %199 = arith.mulf %198, %197 : vector<8x128xf32>
    %200 = math.tanh %199 : vector<8x128xf32>
    %cst_73 = arith.constant 5.000000e-01 : f32
    %201 = vector.broadcast %cst_73 : f32 to vector<8x128xf32>
    %202 = arith.mulf %201, %200 : vector<8x128xf32>
    %cst_74 = arith.constant 5.000000e-01 : f32
    %203 = vector.broadcast %cst_74 : f32 to vector<8x128xf32>
    %204 = arith.addf %202, %203 : vector<8x128xf32>
    %205 = vector.extract_strided_slice %196 {offsets = [0, 128], sizes = [8, 128], strides = [1, 1]} : vector<8x512xf32> to vector<8x128xf32>
    %cst_75 = arith.constant 5.000000e-01 : f32
    %206 = vector.broadcast %cst_75 : f32 to vector<8x128xf32>
    %207 = arith.mulf %206, %205 : vector<8x128xf32>
    %208 = math.tanh %207 : vector<8x128xf32>
    %cst_76 = arith.constant 5.000000e-01 : f32
    %209 = vector.broadcast %cst_76 : f32 to vector<8x128xf32>
    %210 = arith.mulf %209, %208 : vector<8x128xf32>
    %cst_77 = arith.constant 5.000000e-01 : f32
    %211 = vector.broadcast %cst_77 : f32 to vector<8x128xf32>
    %212 = arith.addf %210, %211 : vector<8x128xf32>
    %213 = vector.extract_strided_slice %196 {offsets = [0, 256], sizes = [8, 128], strides = [1, 1]} : vector<8x512xf32> to vector<8x128xf32>
    %214 = math.tanh %213 : vector<8x128xf32>
    %215 = vector.extract_strided_slice %196 {offsets = [0, 384], sizes = [8, 128], strides = [1, 1]} : vector<8x512xf32> to vector<8x128xf32>
    %cst_78 = arith.constant 5.000000e-01 : f32
    %216 = vector.broadcast %cst_78 : f32 to vector<8x128xf32>
    %217 = arith.mulf %216, %215 : vector<8x128xf32>
    %218 = math.tanh %217 : vector<8x128xf32>
    %cst_79 = arith.constant 5.000000e-01 : f32
    %219 = vector.broadcast %cst_79 : f32 to vector<8x128xf32>
    %220 = arith.mulf %219, %218 : vector<8x128xf32>
    %cst_80 = arith.constant 5.000000e-01 : f32
    %221 = vector.broadcast %cst_80 : f32 to vector<8x128xf32>
    %222 = arith.addf %220, %221 : vector<8x128xf32>
    %223 = arith.mulf %212, %154 : vector<8x128xf32>
    %224 = arith.mulf %204, %214 : vector<8x128xf32>
    %225 = arith.addf %223, %224 : vector<8x128xf32>
    %226 = math.tanh %225 : vector<8x128xf32>
    %227 = arith.mulf %222, %226 : vector<8x128xf32>
    %228 = vector.extract_strided_slice %193 {offsets = [0, 512], sizes = [8, 512], strides = [1, 1]} : vector<8x1024xf32> to vector<8x512xf32>
    %229 = arith.addf %9, %228 : vector<8x512xf32>
    %230 = vector.extract_strided_slice %229 {offsets = [0, 0], sizes = [8, 128], strides = [1, 1]} : vector<8x512xf32> to vector<8x128xf32>
    %cst_81 = arith.constant 5.000000e-01 : f32
    %231 = vector.broadcast %cst_81 : f32 to vector<8x128xf32>
    %232 = arith.mulf %231, %230 : vector<8x128xf32>
    %233 = math.tanh %232 : vector<8x128xf32>
    %cst_82 = arith.constant 5.000000e-01 : f32
    %234 = vector.broadcast %cst_82 : f32 to vector<8x128xf32>
    %235 = arith.mulf %234, %233 : vector<8x128xf32>
    %cst_83 = arith.constant 5.000000e-01 : f32
    %236 = vector.broadcast %cst_83 : f32 to vector<8x128xf32>
    %237 = arith.addf %235, %236 : vector<8x128xf32>
    %238 = vector.extract_strided_slice %229 {offsets = [0, 128], sizes = [8, 128], strides = [1, 1]} : vector<8x512xf32> to vector<8x128xf32>
    %cst_84 = arith.constant 5.000000e-01 : f32
    %239 = vector.broadcast %cst_84 : f32 to vector<8x128xf32>
    %240 = arith.mulf %239, %238 : vector<8x128xf32>
    %241 = math.tanh %240 : vector<8x128xf32>
    %cst_85 = arith.constant 5.000000e-01 : f32
    %242 = vector.broadcast %cst_85 : f32 to vector<8x128xf32>
    %243 = arith.mulf %242, %241 : vector<8x128xf32>
    %cst_86 = arith.constant 5.000000e-01 : f32
    %244 = vector.broadcast %cst_86 : f32 to vector<8x128xf32>
    %245 = arith.addf %243, %244 : vector<8x128xf32>
    %246 = vector.extract_strided_slice %229 {offsets = [0, 256], sizes = [8, 128], strides = [1, 1]} : vector<8x512xf32> to vector<8x128xf32>
    %247 = math.tanh %246 : vector<8x128xf32>
    %248 = vector.extract_strided_slice %229 {offsets = [0, 384], sizes = [8, 128], strides = [1, 1]} : vector<8x512xf32> to vector<8x128xf32>
    %cst_87 = arith.constant 5.000000e-01 : f32
    %249 = vector.broadcast %cst_87 : f32 to vector<8x128xf32>
    %250 = arith.mulf %249, %248 : vector<8x128xf32>
    %251 = math.tanh %250 : vector<8x128xf32>
    %cst_88 = arith.constant 5.000000e-01 : f32
    %252 = vector.broadcast %cst_88 : f32 to vector<8x128xf32>
    %253 = arith.mulf %252, %251 : vector<8x128xf32>
    %cst_89 = arith.constant 5.000000e-01 : f32
    %254 = vector.broadcast %cst_89 : f32 to vector<8x128xf32>
    %255 = arith.addf %253, %254 : vector<8x128xf32>
    %256 = arith.mulf %245, %187 : vector<8x128xf32>
    %257 = arith.mulf %237, %247 : vector<8x128xf32>
    %258 = arith.addf %256, %257 : vector<8x128xf32>
    %259 = math.tanh %258 : vector<8x128xf32>
    %260 = arith.mulf %255, %259 : vector<8x128xf32>
    %261 = tpu.concatenate %227, %260 in 1 : vector<8x128xf32>, vector<8x128xf32> -> vector<8x256xf32>
    %262 = arith.truncf %261 : vector<8x256xf32> to vector<8x256xbf16>
    %c0_90 = arith.constant 0 : index
    %c0_91 = arith.constant 0 : index
    %263 = vector.load %arg4[%c0_90, %c0_91] : memref<256x1024xbf16, #tpu.memory_space<vmem>>, vector<256x1024xbf16>
    %cst_92 = arith.constant dense<0.000000e+00> : vector<8x1024xf32>
    %264 = tpu.matmul %262, %263, %cst_92 {dimension_numbers = #tpu.dot_dimension_numbers<[1], [0], [0], [1], [0, 0, 1, 1], [], []>} : vector<8x256xbf16>, vector<256x1024xbf16>, vector<8x1024xf32> -> vector<8x1024xf32>
    %c32 = arith.constant 32 : index
    %c0_93 = arith.constant 0 : index
    %265 = vector.load %arg13[%c32, %c0_93] : memref<64x512xf32, #tpu.memory_space<vmem>>, vector<8x512xf32>
    %266 = vector.extract_strided_slice %264 {offsets = [0, 0], sizes = [8, 512], strides = [1, 1]} : vector<8x1024xf32> to vector<8x512xf32>
    %267 = arith.addf %265, %266 : vector<8x512xf32>
    %268 = vector.extract_strided_slice %267 {offsets = [0, 0], sizes = [8, 128], strides = [1, 1]} : vector<8x512xf32> to vector<8x128xf32>
    %cst_94 = arith.constant 5.000000e-01 : f32
    %269 = vector.broadcast %cst_94 : f32 to vector<8x128xf32>
    %270 = arith.mulf %269, %268 : vector<8x128xf32>
    %271 = math.tanh %270 : vector<8x128xf32>
    %cst_95 = arith.constant 5.000000e-01 : f32
    %272 = vector.broadcast %cst_95 : f32 to vector<8x128xf32>
    %273 = arith.mulf %272, %271 : vector<8x128xf32>
    %cst_96 = arith.constant 5.000000e-01 : f32
    %274 = vector.broadcast %cst_96 : f32 to vector<8x128xf32>
    %275 = arith.addf %273, %274 : vector<8x128xf32>
    %276 = vector.extract_strided_slice %267 {offsets = [0, 128], sizes = [8, 128], strides = [1, 1]} : vector<8x512xf32> to vector<8x128xf32>
    %cst_97 = arith.constant 5.000000e-01 : f32
    %277 = vector.broadcast %cst_97 : f32 to vector<8x128xf32>
    %278 = arith.mulf %277, %276 : vector<8x128xf32>
    %279 = math.tanh %278 : vector<8x128xf32>
    %cst_98 = arith.constant 5.000000e-01 : f32
    %280 = vector.broadcast %cst_98 : f32 to vector<8x128xf32>
    %281 = arith.mulf %280, %279 : vector<8x128xf32>
    %cst_99 = arith.constant 5.000000e-01 : f32
    %282 = vector.broadcast %cst_99 : f32 to vector<8x128xf32>
    %283 = arith.addf %281, %282 : vector<8x128xf32>
    %284 = vector.extract_strided_slice %267 {offsets = [0, 256], sizes = [8, 128], strides = [1, 1]} : vector<8x512xf32> to vector<8x128xf32>
    %285 = math.tanh %284 : vector<8x128xf32>
    %286 = vector.extract_strided_slice %267 {offsets = [0, 384], sizes = [8, 128], strides = [1, 1]} : vector<8x512xf32> to vector<8x128xf32>
    %cst_100 = arith.constant 5.000000e-01 : f32
    %287 = vector.broadcast %cst_100 : f32 to vector<8x128xf32>
    %288 = arith.mulf %287, %286 : vector<8x128xf32>
    %289 = math.tanh %288 : vector<8x128xf32>
    %cst_101 = arith.constant 5.000000e-01 : f32
    %290 = vector.broadcast %cst_101 : f32 to vector<8x128xf32>
    %291 = arith.mulf %290, %289 : vector<8x128xf32>
    %cst_102 = arith.constant 5.000000e-01 : f32
    %292 = vector.broadcast %cst_102 : f32 to vector<8x128xf32>
    %293 = arith.addf %291, %292 : vector<8x128xf32>
    %294 = arith.mulf %283, %225 : vector<8x128xf32>
    %295 = arith.mulf %275, %285 : vector<8x128xf32>
    %296 = arith.addf %294, %295 : vector<8x128xf32>
    %297 = math.tanh %296 : vector<8x128xf32>
    %298 = arith.mulf %293, %297 : vector<8x128xf32>
    %299 = vector.extract_strided_slice %264 {offsets = [0, 512], sizes = [8, 512], strides = [1, 1]} : vector<8x1024xf32> to vector<8x512xf32>
    %300 = arith.addf %9, %299 : vector<8x512xf32>
    %301 = vector.extract_strided_slice %300 {offsets = [0, 0], sizes = [8, 128], strides = [1, 1]} : vector<8x512xf32> to vector<8x128xf32>
    %cst_103 = arith.constant 5.000000e-01 : f32
    %302 = vector.broadcast %cst_103 : f32 to vector<8x128xf32>
    %303 = arith.mulf %302, %301 : vector<8x128xf32>
    %304 = math.tanh %303 : vector<8x128xf32>
    %cst_104 = arith.constant 5.000000e-01 : f32
    %305 = vector.broadcast %cst_104 : f32 to vector<8x128xf32>
    %306 = arith.mulf %305, %304 : vector<8x128xf32>
    %cst_105 = arith.constant 5.000000e-01 : f32
    %307 = vector.broadcast %cst_105 : f32 to vector<8x128xf32>
    %308 = arith.addf %306, %307 : vector<8x128xf32>
    %309 = vector.extract_strided_slice %300 {offsets = [0, 128], sizes = [8, 128], strides = [1, 1]} : vector<8x512xf32> to vector<8x128xf32>
    %cst_106 = arith.constant 5.000000e-01 : f32
    %310 = vector.broadcast %cst_106 : f32 to vector<8x128xf32>
    %311 = arith.mulf %310, %309 : vector<8x128xf32>
    %312 = math.tanh %311 : vector<8x128xf32>
    %cst_107 = arith.constant 5.000000e-01 : f32
    %313 = vector.broadcast %cst_107 : f32 to vector<8x128xf32>
    %314 = arith.mulf %313, %312 : vector<8x128xf32>
    %cst_108 = arith.constant 5.000000e-01 : f32
    %315 = vector.broadcast %cst_108 : f32 to vector<8x128xf32>
    %316 = arith.addf %314, %315 : vector<8x128xf32>
    %317 = vector.extract_strided_slice %300 {offsets = [0, 256], sizes = [8, 128], strides = [1, 1]} : vector<8x512xf32> to vector<8x128xf32>
    %318 = math.tanh %317 : vector<8x128xf32>
    %319 = vector.extract_strided_slice %300 {offsets = [0, 384], sizes = [8, 128], strides = [1, 1]} : vector<8x512xf32> to vector<8x128xf32>
    %cst_109 = arith.constant 5.000000e-01 : f32
    %320 = vector.broadcast %cst_109 : f32 to vector<8x128xf32>
    %321 = arith.mulf %320, %319 : vector<8x128xf32>
    %322 = math.tanh %321 : vector<8x128xf32>
    %cst_110 = arith.constant 5.000000e-01 : f32
    %323 = vector.broadcast %cst_110 : f32 to vector<8x128xf32>
    %324 = arith.mulf %323, %322 : vector<8x128xf32>
    %cst_111 = arith.constant 5.000000e-01 : f32
    %325 = vector.broadcast %cst_111 : f32 to vector<8x128xf32>
    %326 = arith.addf %324, %325 : vector<8x128xf32>
    %327 = arith.mulf %316, %258 : vector<8x128xf32>
    %328 = arith.mulf %308, %318 : vector<8x128xf32>
    %329 = arith.addf %327, %328 : vector<8x128xf32>
    %330 = math.tanh %329 : vector<8x128xf32>
    %331 = arith.mulf %326, %330 : vector<8x128xf32>
    %332 = tpu.concatenate %298, %331 in 1 : vector<8x128xf32>, vector<8x128xf32> -> vector<8x256xf32>
    %333 = arith.truncf %332 : vector<8x256xf32> to vector<8x256xbf16>
    %c0_112 = arith.constant 0 : index
    %c0_113 = arith.constant 0 : index
    %334 = vector.load %arg4[%c0_112, %c0_113] : memref<256x1024xbf16, #tpu.memory_space<vmem>>, vector<256x1024xbf16>
    %cst_114 = arith.constant dense<0.000000e+00> : vector<8x1024xf32>
    %335 = tpu.matmul %333, %334, %cst_114 {dimension_numbers = #tpu.dot_dimension_numbers<[1], [0], [0], [1], [0, 0, 1, 1], [], []>} : vector<8x256xbf16>, vector<256x1024xbf16>, vector<8x1024xf32> -> vector<8x1024xf32>
    %c40 = arith.constant 40 : index
    %c0_115 = arith.constant 0 : index
    %336 = vector.load %arg13[%c40, %c0_115] : memref<64x512xf32, #tpu.memory_space<vmem>>, vector<8x512xf32>
    %337 = vector.extract_strided_slice %335 {offsets = [0, 0], sizes = [8, 512], strides = [1, 1]} : vector<8x1024xf32> to vector<8x512xf32>
    %338 = arith.addf %336, %337 : vector<8x512xf32>
    %339 = vector.extract_strided_slice %338 {offsets = [0, 0], sizes = [8, 128], strides = [1, 1]} : vector<8x512xf32> to vector<8x128xf32>
    %cst_116 = arith.constant 5.000000e-01 : f32
    %340 = vector.broadcast %cst_116 : f32 to vector<8x128xf32>
    %341 = arith.mulf %340, %339 : vector<8x128xf32>
    %342 = math.tanh %341 : vector<8x128xf32>
    %cst_117 = arith.constant 5.000000e-01 : f32
    %343 = vector.broadcast %cst_117 : f32 to vector<8x128xf32>
    %344 = arith.mulf %343, %342 : vector<8x128xf32>
    %cst_118 = arith.constant 5.000000e-01 : f32
    %345 = vector.broadcast %cst_118 : f32 to vector<8x128xf32>
    %346 = arith.addf %344, %345 : vector<8x128xf32>
    %347 = vector.extract_strided_slice %338 {offsets = [0, 128], sizes = [8, 128], strides = [1, 1]} : vector<8x512xf32> to vector<8x128xf32>
    %cst_119 = arith.constant 5.000000e-01 : f32
    %348 = vector.broadcast %cst_119 : f32 to vector<8x128xf32>
    %349 = arith.mulf %348, %347 : vector<8x128xf32>
    %350 = math.tanh %349 : vector<8x128xf32>
    %cst_120 = arith.constant 5.000000e-01 : f32
    %351 = vector.broadcast %cst_120 : f32 to vector<8x128xf32>
    %352 = arith.mulf %351, %350 : vector<8x128xf32>
    %cst_121 = arith.constant 5.000000e-01 : f32
    %353 = vector.broadcast %cst_121 : f32 to vector<8x128xf32>
    %354 = arith.addf %352, %353 : vector<8x128xf32>
    %355 = vector.extract_strided_slice %338 {offsets = [0, 256], sizes = [8, 128], strides = [1, 1]} : vector<8x512xf32> to vector<8x128xf32>
    %356 = math.tanh %355 : vector<8x128xf32>
    %357 = vector.extract_strided_slice %338 {offsets = [0, 384], sizes = [8, 128], strides = [1, 1]} : vector<8x512xf32> to vector<8x128xf32>
    %cst_122 = arith.constant 5.000000e-01 : f32
    %358 = vector.broadcast %cst_122 : f32 to vector<8x128xf32>
    %359 = arith.mulf %358, %357 : vector<8x128xf32>
    %360 = math.tanh %359 : vector<8x128xf32>
    %cst_123 = arith.constant 5.000000e-01 : f32
    %361 = vector.broadcast %cst_123 : f32 to vector<8x128xf32>
    %362 = arith.mulf %361, %360 : vector<8x128xf32>
    %cst_124 = arith.constant 5.000000e-01 : f32
    %363 = vector.broadcast %cst_124 : f32 to vector<8x128xf32>
    %364 = arith.addf %362, %363 : vector<8x128xf32>
    %365 = arith.mulf %354, %296 : vector<8x128xf32>
    %366 = arith.mulf %346, %356 : vector<8x128xf32>
    %367 = arith.addf %365, %366 : vector<8x128xf32>
    %368 = math.tanh %367 : vector<8x128xf32>
    %369 = arith.mulf %364, %368 : vector<8x128xf32>
    %370 = vector.extract_strided_slice %335 {offsets = [0, 512], sizes = [8, 512], strides = [1, 1]} : vector<8x1024xf32> to vector<8x512xf32>
    %371 = arith.addf %9, %370 : vector<8x512xf32>
    %372 = vector.extract_strided_slice %371 {offsets = [0, 0], sizes = [8, 128], strides = [1, 1]} : vector<8x512xf32> to vector<8x128xf32>
    %cst_125 = arith.constant 5.000000e-01 : f32
    %373 = vector.broadcast %cst_125 : f32 to vector<8x128xf32>
    %374 = arith.mulf %373, %372 : vector<8x128xf32>
    %375 = math.tanh %374 : vector<8x128xf32>
    %cst_126 = arith.constant 5.000000e-01 : f32
    %376 = vector.broadcast %cst_126 : f32 to vector<8x128xf32>
    %377 = arith.mulf %376, %375 : vector<8x128xf32>
    %cst_127 = arith.constant 5.000000e-01 : f32
    %378 = vector.broadcast %cst_127 : f32 to vector<8x128xf32>
    %379 = arith.addf %377, %378 : vector<8x128xf32>
    %380 = vector.extract_strided_slice %371 {offsets = [0, 128], sizes = [8, 128], strides = [1, 1]} : vector<8x512xf32> to vector<8x128xf32>
    %cst_128 = arith.constant 5.000000e-01 : f32
    %381 = vector.broadcast %cst_128 : f32 to vector<8x128xf32>
    %382 = arith.mulf %381, %380 : vector<8x128xf32>
    %383 = math.tanh %382 : vector<8x128xf32>
    %cst_129 = arith.constant 5.000000e-01 : f32
    %384 = vector.broadcast %cst_129 : f32 to vector<8x128xf32>
    %385 = arith.mulf %384, %383 : vector<8x128xf32>
    %cst_130 = arith.constant 5.000000e-01 : f32
    %386 = vector.broadcast %cst_130 : f32 to vector<8x128xf32>
    %387 = arith.addf %385, %386 : vector<8x128xf32>
    %388 = vector.extract_strided_slice %371 {offsets = [0, 256], sizes = [8, 128], strides = [1, 1]} : vector<8x512xf32> to vector<8x128xf32>
    %389 = math.tanh %388 : vector<8x128xf32>
    %390 = vector.extract_strided_slice %371 {offsets = [0, 384], sizes = [8, 128], strides = [1, 1]} : vector<8x512xf32> to vector<8x128xf32>
    %cst_131 = arith.constant 5.000000e-01 : f32
    %391 = vector.broadcast %cst_131 : f32 to vector<8x128xf32>
    %392 = arith.mulf %391, %390 : vector<8x128xf32>
    %393 = math.tanh %392 : vector<8x128xf32>
    %cst_132 = arith.constant 5.000000e-01 : f32
    %394 = vector.broadcast %cst_132 : f32 to vector<8x128xf32>
    %395 = arith.mulf %394, %393 : vector<8x128xf32>
    %cst_133 = arith.constant 5.000000e-01 : f32
    %396 = vector.broadcast %cst_133 : f32 to vector<8x128xf32>
    %397 = arith.addf %395, %396 : vector<8x128xf32>
    %398 = arith.mulf %387, %329 : vector<8x128xf32>
    %399 = arith.mulf %379, %389 : vector<8x128xf32>
    %400 = arith.addf %398, %399 : vector<8x128xf32>
    %401 = math.tanh %400 : vector<8x128xf32>
    %402 = arith.mulf %397, %401 : vector<8x128xf32>
    %403 = tpu.concatenate %369, %402 in 1 : vector<8x128xf32>, vector<8x128xf32> -> vector<8x256xf32>
    %404 = arith.truncf %403 : vector<8x256xf32> to vector<8x256xbf16>
    %c0_134 = arith.constant 0 : index
    %c0_135 = arith.constant 0 : index
    %405 = vector.load %arg4[%c0_134, %c0_135] : memref<256x1024xbf16, #tpu.memory_space<vmem>>, vector<256x1024xbf16>
    %cst_136 = arith.constant dense<0.000000e+00> : vector<8x1024xf32>
    %406 = tpu.matmul %404, %405, %cst_136 {dimension_numbers = #tpu.dot_dimension_numbers<[1], [0], [0], [1], [0, 0, 1, 1], [], []>} : vector<8x256xbf16>, vector<256x1024xbf16>, vector<8x1024xf32> -> vector<8x1024xf32>
    %c48 = arith.constant 48 : index
    %c0_137 = arith.constant 0 : index
    %407 = vector.load %arg13[%c48, %c0_137] : memref<64x512xf32, #tpu.memory_space<vmem>>, vector<8x512xf32>
    %408 = vector.extract_strided_slice %406 {offsets = [0, 0], sizes = [8, 512], strides = [1, 1]} : vector<8x1024xf32> to vector<8x512xf32>
    %409 = arith.addf %407, %408 : vector<8x512xf32>
    %410 = vector.extract_strided_slice %409 {offsets = [0, 0], sizes = [8, 128], strides = [1, 1]} : vector<8x512xf32> to vector<8x128xf32>
    %cst_138 = arith.constant 5.000000e-01 : f32
    %411 = vector.broadcast %cst_138 : f32 to vector<8x128xf32>
    %412 = arith.mulf %411, %410 : vector<8x128xf32>
    %413 = math.tanh %412 : vector<8x128xf32>
    %cst_139 = arith.constant 5.000000e-01 : f32
    %414 = vector.broadcast %cst_139 : f32 to vector<8x128xf32>
    %415 = arith.mulf %414, %413 : vector<8x128xf32>
    %cst_140 = arith.constant 5.000000e-01 : f32
    %416 = vector.broadcast %cst_140 : f32 to vector<8x128xf32>
    %417 = arith.addf %415, %416 : vector<8x128xf32>
    %418 = vector.extract_strided_slice %409 {offsets = [0, 128], sizes = [8, 128], strides = [1, 1]} : vector<8x512xf32> to vector<8x128xf32>
    %cst_141 = arith.constant 5.000000e-01 : f32
    %419 = vector.broadcast %cst_141 : f32 to vector<8x128xf32>
    %420 = arith.mulf %419, %418 : vector<8x128xf32>
    %421 = math.tanh %420 : vector<8x128xf32>
    %cst_142 = arith.constant 5.000000e-01 : f32
    %422 = vector.broadcast %cst_142 : f32 to vector<8x128xf32>
    %423 = arith.mulf %422, %421 : vector<8x128xf32>
    %cst_143 = arith.constant 5.000000e-01 : f32
    %424 = vector.broadcast %cst_143 : f32 to vector<8x128xf32>
    %425 = arith.addf %423, %424 : vector<8x128xf32>
    %426 = vector.extract_strided_slice %409 {offsets = [0, 256], sizes = [8, 128], strides = [1, 1]} : vector<8x512xf32> to vector<8x128xf32>
    %427 = math.tanh %426 : vector<8x128xf32>
    %428 = vector.extract_strided_slice %409 {offsets = [0, 384], sizes = [8, 128], strides = [1, 1]} : vector<8x512xf32> to vector<8x128xf32>
    %cst_144 = arith.constant 5.000000e-01 : f32
    %429 = vector.broadcast %cst_144 : f32 to vector<8x128xf32>
    %430 = arith.mulf %429, %428 : vector<8x128xf32>
    %431 = math.tanh %430 : vector<8x128xf32>
    %cst_145 = arith.constant 5.000000e-01 : f32
    %432 = vector.broadcast %cst_145 : f32 to vector<8x128xf32>
    %433 = arith.mulf %432, %431 : vector<8x128xf32>
    %cst_146 = arith.constant 5.000000e-01 : f32
    %434 = vector.broadcast %cst_146 : f32 to vector<8x128xf32>
    %435 = arith.addf %433, %434 : vector<8x128xf32>
    %436 = arith.mulf %425, %367 : vector<8x128xf32>
    %437 = arith.mulf %417, %427 : vector<8x128xf32>
    %438 = arith.addf %436, %437 : vector<8x128xf32>
    %439 = math.tanh %438 : vector<8x128xf32>
    %440 = arith.mulf %435, %439 : vector<8x128xf32>
    %441 = vector.extract_strided_slice %406 {offsets = [0, 512], sizes = [8, 512], strides = [1, 1]} : vector<8x1024xf32> to vector<8x512xf32>
    %442 = arith.addf %9, %441 : vector<8x512xf32>
    %443 = vector.extract_strided_slice %442 {offsets = [0, 0], sizes = [8, 128], strides = [1, 1]} : vector<8x512xf32> to vector<8x128xf32>
    %cst_147 = arith.constant 5.000000e-01 : f32
    %444 = vector.broadcast %cst_147 : f32 to vector<8x128xf32>
    %445 = arith.mulf %444, %443 : vector<8x128xf32>
    %446 = math.tanh %445 : vector<8x128xf32>
    %cst_148 = arith.constant 5.000000e-01 : f32
    %447 = vector.broadcast %cst_148 : f32 to vector<8x128xf32>
    %448 = arith.mulf %447, %446 : vector<8x128xf32>
    %cst_149 = arith.constant 5.000000e-01 : f32
    %449 = vector.broadcast %cst_149 : f32 to vector<8x128xf32>
    %450 = arith.addf %448, %449 : vector<8x128xf32>
    %451 = vector.extract_strided_slice %442 {offsets = [0, 128], sizes = [8, 128], strides = [1, 1]} : vector<8x512xf32> to vector<8x128xf32>
    %cst_150 = arith.constant 5.000000e-01 : f32
    %452 = vector.broadcast %cst_150 : f32 to vector<8x128xf32>
    %453 = arith.mulf %452, %451 : vector<8x128xf32>
    %454 = math.tanh %453 : vector<8x128xf32>
    %cst_151 = arith.constant 5.000000e-01 : f32
    %455 = vector.broadcast %cst_151 : f32 to vector<8x128xf32>
    %456 = arith.mulf %455, %454 : vector<8x128xf32>
    %cst_152 = arith.constant 5.000000e-01 : f32
    %457 = vector.broadcast %cst_152 : f32 to vector<8x128xf32>
    %458 = arith.addf %456, %457 : vector<8x128xf32>
    %459 = vector.extract_strided_slice %442 {offsets = [0, 256], sizes = [8, 128], strides = [1, 1]} : vector<8x512xf32> to vector<8x128xf32>
    %460 = math.tanh %459 : vector<8x128xf32>
    %461 = vector.extract_strided_slice %442 {offsets = [0, 384], sizes = [8, 128], strides = [1, 1]} : vector<8x512xf32> to vector<8x128xf32>
    %cst_153 = arith.constant 5.000000e-01 : f32
    %462 = vector.broadcast %cst_153 : f32 to vector<8x128xf32>
    %463 = arith.mulf %462, %461 : vector<8x128xf32>
    %464 = math.tanh %463 : vector<8x128xf32>
    %cst_154 = arith.constant 5.000000e-01 : f32
    %465 = vector.broadcast %cst_154 : f32 to vector<8x128xf32>
    %466 = arith.mulf %465, %464 : vector<8x128xf32>
    %cst_155 = arith.constant 5.000000e-01 : f32
    %467 = vector.broadcast %cst_155 : f32 to vector<8x128xf32>
    %468 = arith.addf %466, %467 : vector<8x128xf32>
    %469 = arith.mulf %458, %400 : vector<8x128xf32>
    %470 = arith.mulf %450, %460 : vector<8x128xf32>
    %471 = arith.addf %469, %470 : vector<8x128xf32>
    %472 = math.tanh %471 : vector<8x128xf32>
    %473 = arith.mulf %468, %472 : vector<8x128xf32>
    %474 = tpu.concatenate %440, %473 in 1 : vector<8x128xf32>, vector<8x128xf32> -> vector<8x256xf32>
    %475 = arith.truncf %474 : vector<8x256xf32> to vector<8x256xbf16>
    %c0_156 = arith.constant 0 : index
    %c0_157 = arith.constant 0 : index
    %476 = vector.load %arg4[%c0_156, %c0_157] : memref<256x1024xbf16, #tpu.memory_space<vmem>>, vector<256x1024xbf16>
    %cst_158 = arith.constant dense<0.000000e+00> : vector<8x1024xf32>
    %477 = tpu.matmul %475, %476, %cst_158 {dimension_numbers = #tpu.dot_dimension_numbers<[1], [0], [0], [1], [0, 0, 1, 1], [], []>} : vector<8x256xbf16>, vector<256x1024xbf16>, vector<8x1024xf32> -> vector<8x1024xf32>
    %c56 = arith.constant 56 : index
    %c0_159 = arith.constant 0 : index
    %478 = vector.load %arg13[%c56, %c0_159] : memref<64x512xf32, #tpu.memory_space<vmem>>, vector<8x512xf32>
    %479 = vector.extract_strided_slice %477 {offsets = [0, 0], sizes = [8, 512], strides = [1, 1]} : vector<8x1024xf32> to vector<8x512xf32>
    %480 = arith.addf %478, %479 : vector<8x512xf32>
    %481 = vector.extract_strided_slice %480 {offsets = [0, 0], sizes = [8, 128], strides = [1, 1]} : vector<8x512xf32> to vector<8x128xf32>
    %cst_160 = arith.constant 5.000000e-01 : f32
    %482 = vector.broadcast %cst_160 : f32 to vector<8x128xf32>
    %483 = arith.mulf %482, %481 : vector<8x128xf32>
    %484 = math.tanh %483 : vector<8x128xf32>
    %cst_161 = arith.constant 5.000000e-01 : f32
    %485 = vector.broadcast %cst_161 : f32 to vector<8x128xf32>
    %486 = arith.mulf %485, %484 : vector<8x128xf32>
    %cst_162 = arith.constant 5.000000e-01 : f32
    %487 = vector.broadcast %cst_162 : f32 to vector<8x128xf32>
    %488 = arith.addf %486, %487 : vector<8x128xf32>
    %489 = vector.extract_strided_slice %480 {offsets = [0, 128], sizes = [8, 128], strides = [1, 1]} : vector<8x512xf32> to vector<8x128xf32>
    %cst_163 = arith.constant 5.000000e-01 : f32
    %490 = vector.broadcast %cst_163 : f32 to vector<8x128xf32>
    %491 = arith.mulf %490, %489 : vector<8x128xf32>
    %492 = math.tanh %491 : vector<8x128xf32>
    %cst_164 = arith.constant 5.000000e-01 : f32
    %493 = vector.broadcast %cst_164 : f32 to vector<8x128xf32>
    %494 = arith.mulf %493, %492 : vector<8x128xf32>
    %cst_165 = arith.constant 5.000000e-01 : f32
    %495 = vector.broadcast %cst_165 : f32 to vector<8x128xf32>
    %496 = arith.addf %494, %495 : vector<8x128xf32>
    %497 = vector.extract_strided_slice %480 {offsets = [0, 256], sizes = [8, 128], strides = [1, 1]} : vector<8x512xf32> to vector<8x128xf32>
    %498 = math.tanh %497 : vector<8x128xf32>
    %499 = vector.extract_strided_slice %480 {offsets = [0, 384], sizes = [8, 128], strides = [1, 1]} : vector<8x512xf32> to vector<8x128xf32>
    %cst_166 = arith.constant 5.000000e-01 : f32
    %500 = vector.broadcast %cst_166 : f32 to vector<8x128xf32>
    %501 = arith.mulf %500, %499 : vector<8x128xf32>
    %502 = math.tanh %501 : vector<8x128xf32>
    %cst_167 = arith.constant 5.000000e-01 : f32
    %503 = vector.broadcast %cst_167 : f32 to vector<8x128xf32>
    %504 = arith.mulf %503, %502 : vector<8x128xf32>
    %cst_168 = arith.constant 5.000000e-01 : f32
    %505 = vector.broadcast %cst_168 : f32 to vector<8x128xf32>
    %506 = arith.addf %504, %505 : vector<8x128xf32>
    %507 = arith.mulf %496, %438 : vector<8x128xf32>
    %508 = arith.mulf %488, %498 : vector<8x128xf32>
    %509 = arith.addf %507, %508 : vector<8x128xf32>
    %510 = math.tanh %509 : vector<8x128xf32>
    %511 = arith.mulf %506, %510 : vector<8x128xf32>
    %512 = vector.extract_strided_slice %477 {offsets = [0, 512], sizes = [8, 512], strides = [1, 1]} : vector<8x1024xf32> to vector<8x512xf32>
    %513 = arith.addf %9, %512 : vector<8x512xf32>
    %514 = vector.extract_strided_slice %513 {offsets = [0, 0], sizes = [8, 128], strides = [1, 1]} : vector<8x512xf32> to vector<8x128xf32>
    %cst_169 = arith.constant 5.000000e-01 : f32
    %515 = vector.broadcast %cst_169 : f32 to vector<8x128xf32>
    %516 = arith.mulf %515, %514 : vector<8x128xf32>
    %517 = math.tanh %516 : vector<8x128xf32>
    %cst_170 = arith.constant 5.000000e-01 : f32
    %518 = vector.broadcast %cst_170 : f32 to vector<8x128xf32>
    %519 = arith.mulf %518, %517 : vector<8x128xf32>
    %cst_171 = arith.constant 5.000000e-01 : f32
    %520 = vector.broadcast %cst_171 : f32 to vector<8x128xf32>
    %521 = arith.addf %519, %520 : vector<8x128xf32>
    %522 = vector.extract_strided_slice %513 {offsets = [0, 128], sizes = [8, 128], strides = [1, 1]} : vector<8x512xf32> to vector<8x128xf32>
    %cst_172 = arith.constant 5.000000e-01 : f32
    %523 = vector.broadcast %cst_172 : f32 to vector<8x128xf32>
    %524 = arith.mulf %523, %522 : vector<8x128xf32>
    %525 = math.tanh %524 : vector<8x128xf32>
    %cst_173 = arith.constant 5.000000e-01 : f32
    %526 = vector.broadcast %cst_173 : f32 to vector<8x128xf32>
    %527 = arith.mulf %526, %525 : vector<8x128xf32>
    %cst_174 = arith.constant 5.000000e-01 : f32
    %528 = vector.broadcast %cst_174 : f32 to vector<8x128xf32>
    %529 = arith.addf %527, %528 : vector<8x128xf32>
    %530 = vector.extract_strided_slice %513 {offsets = [0, 256], sizes = [8, 128], strides = [1, 1]} : vector<8x512xf32> to vector<8x128xf32>
    %531 = math.tanh %530 : vector<8x128xf32>
    %532 = vector.extract_strided_slice %513 {offsets = [0, 384], sizes = [8, 128], strides = [1, 1]} : vector<8x512xf32> to vector<8x128xf32>
    %cst_175 = arith.constant 5.000000e-01 : f32
    %533 = vector.broadcast %cst_175 : f32 to vector<8x128xf32>
    %534 = arith.mulf %533, %532 : vector<8x128xf32>
    %535 = math.tanh %534 : vector<8x128xf32>
    %cst_176 = arith.constant 5.000000e-01 : f32
    %536 = vector.broadcast %cst_176 : f32 to vector<8x128xf32>
    %537 = arith.mulf %536, %535 : vector<8x128xf32>
    %cst_177 = arith.constant 5.000000e-01 : f32
    %538 = vector.broadcast %cst_177 : f32 to vector<8x128xf32>
    %539 = arith.addf %537, %538 : vector<8x128xf32>
    %540 = arith.mulf %529, %471 : vector<8x128xf32>
    %541 = arith.mulf %521, %531 : vector<8x128xf32>
    %542 = arith.addf %540, %541 : vector<8x128xf32>
    %543 = math.tanh %542 : vector<8x128xf32>
    %544 = arith.mulf %539, %543 : vector<8x128xf32>
    %545 = tpu.concatenate %511, %544 in 1 : vector<8x128xf32>, vector<8x128xf32> -> vector<8x256xf32>
    %546 = arith.truncf %545 : vector<8x256xf32> to vector<8x256xbf16>
    %c0_178 = arith.constant 0 : index
    %c0_179 = arith.constant 0 : index
    %547 = vector.load %arg4[%c0_178, %c0_179] : memref<256x1024xbf16, #tpu.memory_space<vmem>>, vector<256x1024xbf16>
    %cst_180 = arith.constant dense<0.000000e+00> : vector<8x1024xf32>
    %548 = tpu.matmul %546, %547, %cst_180 {dimension_numbers = #tpu.dot_dimension_numbers<[1], [0], [0], [1], [0, 0, 1, 1], [], []>} : vector<8x256xbf16>, vector<256x1024xbf16>, vector<8x1024xf32> -> vector<8x1024xf32>
    %549 = vector.extract_strided_slice %548 {offsets = [0, 512], sizes = [8, 512], strides = [1, 1]} : vector<8x1024xf32> to vector<8x512xf32>
    %550 = arith.addf %9, %549 : vector<8x512xf32>
    %551 = vector.extract_strided_slice %550 {offsets = [0, 0], sizes = [8, 128], strides = [1, 1]} : vector<8x512xf32> to vector<8x128xf32>
    %cst_181 = arith.constant 5.000000e-01 : f32
    %552 = vector.broadcast %cst_181 : f32 to vector<8x128xf32>
    %553 = arith.mulf %552, %551 : vector<8x128xf32>
    %554 = math.tanh %553 : vector<8x128xf32>
    %cst_182 = arith.constant 5.000000e-01 : f32
    %555 = vector.broadcast %cst_182 : f32 to vector<8x128xf32>
    %556 = arith.mulf %555, %554 : vector<8x128xf32>
    %cst_183 = arith.constant 5.000000e-01 : f32
    %557 = vector.broadcast %cst_183 : f32 to vector<8x128xf32>
    %558 = arith.addf %556, %557 : vector<8x128xf32>
    %559 = vector.extract_strided_slice %550 {offsets = [0, 128], sizes = [8, 128], strides = [1, 1]} : vector<8x512xf32> to vector<8x128xf32>
    %cst_184 = arith.constant 5.000000e-01 : f32
    %560 = vector.broadcast %cst_184 : f32 to vector<8x128xf32>
    %561 = arith.mulf %560, %559 : vector<8x128xf32>
    %562 = math.tanh %561 : vector<8x128xf32>
    %cst_185 = arith.constant 5.000000e-01 : f32
    %563 = vector.broadcast %cst_185 : f32 to vector<8x128xf32>
    %564 = arith.mulf %563, %562 : vector<8x128xf32>
    %cst_186 = arith.constant 5.000000e-01 : f32
    %565 = vector.broadcast %cst_186 : f32 to vector<8x128xf32>
    %566 = arith.addf %564, %565 : vector<8x128xf32>
    %567 = vector.extract_strided_slice %550 {offsets = [0, 256], sizes = [8, 128], strides = [1, 1]} : vector<8x512xf32> to vector<8x128xf32>
    %568 = math.tanh %567 : vector<8x128xf32>
    %569 = vector.extract_strided_slice %550 {offsets = [0, 384], sizes = [8, 128], strides = [1, 1]} : vector<8x512xf32> to vector<8x128xf32>
    %cst_187 = arith.constant 5.000000e-01 : f32
    %570 = vector.broadcast %cst_187 : f32 to vector<8x128xf32>
    %571 = arith.mulf %570, %569 : vector<8x128xf32>
    %572 = math.tanh %571 : vector<8x128xf32>
    %cst_188 = arith.constant 5.000000e-01 : f32
    %573 = vector.broadcast %cst_188 : f32 to vector<8x128xf32>
    %574 = arith.mulf %573, %572 : vector<8x128xf32>
    %cst_189 = arith.constant 5.000000e-01 : f32
    %575 = vector.broadcast %cst_189 : f32 to vector<8x128xf32>
    %576 = arith.addf %574, %575 : vector<8x128xf32>
    %577 = arith.mulf %566, %542 : vector<8x128xf32>
    %578 = arith.mulf %558, %568 : vector<8x128xf32>
    %579 = arith.addf %577, %578 : vector<8x128xf32>
    %580 = math.tanh %579 : vector<8x128xf32>
    %581 = arith.mulf %576, %580 : vector<8x128xf32>
    %c0_190 = arith.constant 0 : index
    %c0_191 = arith.constant 0 : index
    %582 = vector.load %arg1[%c0_190, %c0_191] : memref<8x8xbf16, #tpu.memory_space<vmem>>, vector<8x8xbf16>
    %583 = arith.truncf %581 : vector<8x128xf32> to vector<8x128xbf16>
    %cst_192 = arith.constant dense<0.000000e+00> : vector<8x128xf32>
    %584 = tpu.matmul %582, %583, %cst_192 {dimension_numbers = #tpu.dot_dimension_numbers<[1], [0], [0], [1], [0, 0, 1, 1], [], []>} : vector<8x8xbf16>, vector<8x128xbf16>, vector<8x128xf32> -> vector<8x128xf32>
    %585 = arith.truncf %584 : vector<8x128xf32> to vector<8x128xbf16>
    %c0_193 = arith.constant 0 : index
    %c0_194 = arith.constant 0 : index
    %586 = vector.load %arg6[%c0_193, %c0_194] : memref<128x512xbf16, #tpu.memory_space<vmem>>, vector<128x512xbf16>
    %cst_195 = arith.constant dense<0.000000e+00> : vector<8x512xf32>
    %587 = tpu.matmul %585, %586, %cst_195 {dimension_numbers = #tpu.dot_dimension_numbers<[1], [0], [0], [1], [0, 0, 1, 1], [], []>} : vector<8x128xbf16>, vector<128x512xbf16>, vector<8x512xf32> -> vector<8x512xf32>
    %c0_196 = arith.constant 0 : index
    %c0_197 = arith.constant 0 : index
    %588 = vector.load %arg7[%c0_196, %c0_197] : memref<1x512xf32, #tpu.memory_space<vmem>>, vector<1x512xf32>
    %589 = vector.broadcast %588 : vector<1x512xf32> to vector<8x512xf32>
    %590 = arith.addf %587, %589 : vector<8x512xf32>
    %c0_198 = arith.constant 0 : index
    %c0_199 = arith.constant 0 : index
    %591 = vector.load %arg9[%c0_198, %c0_199] : memref<1x512xf32, #tpu.memory_space<vmem>>, vector<1x512xf32>
    %592 = vector.shape_cast %591 : vector<1x512xf32> to vector<1x512xf32>
    %593 = vector.broadcast %592 : vector<1x512xf32> to vector<8x512xf32>
    %cst_200 = arith.constant 0.000000e+00 : f32
    %594 = vector.broadcast %cst_200 : f32 to vector<8x128xf32>
    %cst_201 = arith.constant 0.000000e+00 : f32
    %595 = vector.broadcast %cst_201 : f32 to vector<8x128xf32>
    %cst_202 = arith.constant 0.000000e+00 : f32
    %596 = vector.broadcast %cst_202 : f32 to vector<8x128xf32>
    %cst_203 = arith.constant 0.000000e+00 : f32
    %597 = vector.broadcast %cst_203 : f32 to vector<8x1024xf32>
    %598 = vector.extract_strided_slice %597 {offsets = [0, 0], sizes = [8, 512], strides = [1, 1]} : vector<8x1024xf32> to vector<8x512xf32>
    %599 = arith.addf %590, %598 : vector<8x512xf32>
    %600 = vector.extract_strided_slice %599 {offsets = [0, 0], sizes = [8, 128], strides = [1, 1]} : vector<8x512xf32> to vector<8x128xf32>
    %cst_204 = arith.constant 5.000000e-01 : f32
    %601 = vector.broadcast %cst_204 : f32 to vector<8x128xf32>
    %602 = arith.mulf %601, %600 : vector<8x128xf32>
    %603 = math.tanh %602 : vector<8x128xf32>
    %cst_205 = arith.constant 5.000000e-01 : f32
    %604 = vector.broadcast %cst_205 : f32 to vector<8x128xf32>
    %605 = arith.mulf %604, %603 : vector<8x128xf32>
    %cst_206 = arith.constant 5.000000e-01 : f32
    %606 = vector.broadcast %cst_206 : f32 to vector<8x128xf32>
    %607 = arith.addf %605, %606 : vector<8x128xf32>
    %608 = vector.extract_strided_slice %599 {offsets = [0, 128], sizes = [8, 128], strides = [1, 1]} : vector<8x512xf32> to vector<8x128xf32>
    %cst_207 = arith.constant 5.000000e-01 : f32
    %609 = vector.broadcast %cst_207 : f32 to vector<8x128xf32>
    %610 = arith.mulf %609, %608 : vector<8x128xf32>
    %611 = math.tanh %610 : vector<8x128xf32>
    %cst_208 = arith.constant 5.000000e-01 : f32
    %612 = vector.broadcast %cst_208 : f32 to vector<8x128xf32>
    %613 = arith.mulf %612, %611 : vector<8x128xf32>
    %cst_209 = arith.constant 5.000000e-01 : f32
    %614 = vector.broadcast %cst_209 : f32 to vector<8x128xf32>
    %615 = arith.addf %613, %614 : vector<8x128xf32>
    %616 = vector.extract_strided_slice %599 {offsets = [0, 256], sizes = [8, 128], strides = [1, 1]} : vector<8x512xf32> to vector<8x128xf32>
    %617 = math.tanh %616 : vector<8x128xf32>
    %618 = vector.extract_strided_slice %599 {offsets = [0, 384], sizes = [8, 128], strides = [1, 1]} : vector<8x512xf32> to vector<8x128xf32>
    %cst_210 = arith.constant 5.000000e-01 : f32
    %619 = vector.broadcast %cst_210 : f32 to vector<8x128xf32>
    %620 = arith.mulf %619, %618 : vector<8x128xf32>
    %621 = math.tanh %620 : vector<8x128xf32>
    %cst_211 = arith.constant 5.000000e-01 : f32
    %622 = vector.broadcast %cst_211 : f32 to vector<8x128xf32>
    %623 = arith.mulf %622, %621 : vector<8x128xf32>
    %cst_212 = arith.constant 5.000000e-01 : f32
    %624 = vector.broadcast %cst_212 : f32 to vector<8x128xf32>
    %625 = arith.addf %623, %624 : vector<8x128xf32>
    %626 = arith.mulf %615, %594 : vector<8x128xf32>
    %627 = arith.mulf %607, %617 : vector<8x128xf32>
    %628 = arith.addf %626, %627 : vector<8x128xf32>
    %629 = math.tanh %628 : vector<8x128xf32>
    %630 = arith.mulf %625, %629 : vector<8x128xf32>
    %631 = tpu.concatenate %630, %595 in 1 : vector<8x128xf32>, vector<8x128xf32> -> vector<8x256xf32>
    %632 = arith.truncf %631 : vector<8x256xf32> to vector<8x256xbf16>
    %c0_213 = arith.constant 0 : index
    %c0_214 = arith.constant 0 : index
    %633 = vector.load %arg8[%c0_213, %c0_214] : memref<256x1024xbf16, #tpu.memory_space<vmem>>, vector<256x1024xbf16>
    %cst_215 = arith.constant dense<0.000000e+00> : vector<8x1024xf32>
    %634 = tpu.matmul %632, %633, %cst_215 {dimension_numbers = #tpu.dot_dimension_numbers<[1], [0], [0], [1], [0, 0, 1, 1], [], []>} : vector<8x256xbf16>, vector<256x1024xbf16>, vector<8x1024xf32> -> vector<8x1024xf32>
    %635 = vector.extract_strided_slice %634 {offsets = [0, 0], sizes = [8, 512], strides = [1, 1]} : vector<8x1024xf32> to vector<8x512xf32>
    %636 = arith.addf %590, %635 : vector<8x512xf32>
    %637 = vector.extract_strided_slice %636 {offsets = [0, 0], sizes = [8, 128], strides = [1, 1]} : vector<8x512xf32> to vector<8x128xf32>
    %cst_216 = arith.constant 5.000000e-01 : f32
    %638 = vector.broadcast %cst_216 : f32 to vector<8x128xf32>
    %639 = arith.mulf %638, %637 : vector<8x128xf32>
    %640 = math.tanh %639 : vector<8x128xf32>
    %cst_217 = arith.constant 5.000000e-01 : f32
    %641 = vector.broadcast %cst_217 : f32 to vector<8x128xf32>
    %642 = arith.mulf %641, %640 : vector<8x128xf32>
    %cst_218 = arith.constant 5.000000e-01 : f32
    %643 = vector.broadcast %cst_218 : f32 to vector<8x128xf32>
    %644 = arith.addf %642, %643 : vector<8x128xf32>
    %645 = vector.extract_strided_slice %636 {offsets = [0, 128], sizes = [8, 128], strides = [1, 1]} : vector<8x512xf32> to vector<8x128xf32>
    %cst_219 = arith.constant 5.000000e-01 : f32
    %646 = vector.broadcast %cst_219 : f32 to vector<8x128xf32>
    %647 = arith.mulf %646, %645 : vector<8x128xf32>
    %648 = math.tanh %647 : vector<8x128xf32>
    %cst_220 = arith.constant 5.000000e-01 : f32
    %649 = vector.broadcast %cst_220 : f32 to vector<8x128xf32>
    %650 = arith.mulf %649, %648 : vector<8x128xf32>
    %cst_221 = arith.constant 5.000000e-01 : f32
    %651 = vector.broadcast %cst_221 : f32 to vector<8x128xf32>
    %652 = arith.addf %650, %651 : vector<8x128xf32>
    %653 = vector.extract_strided_slice %636 {offsets = [0, 256], sizes = [8, 128], strides = [1, 1]} : vector<8x512xf32> to vector<8x128xf32>
    %654 = math.tanh %653 : vector<8x128xf32>
    %655 = vector.extract_strided_slice %636 {offsets = [0, 384], sizes = [8, 128], strides = [1, 1]} : vector<8x512xf32> to vector<8x128xf32>
    %cst_222 = arith.constant 5.000000e-01 : f32
    %656 = vector.broadcast %cst_222 : f32 to vector<8x128xf32>
    %657 = arith.mulf %656, %655 : vector<8x128xf32>
    %658 = math.tanh %657 : vector<8x128xf32>
    %cst_223 = arith.constant 5.000000e-01 : f32
    %659 = vector.broadcast %cst_223 : f32 to vector<8x128xf32>
    %660 = arith.mulf %659, %658 : vector<8x128xf32>
    %cst_224 = arith.constant 5.000000e-01 : f32
    %661 = vector.broadcast %cst_224 : f32 to vector<8x128xf32>
    %662 = arith.addf %660, %661 : vector<8x128xf32>
    %663 = arith.mulf %652, %628 : vector<8x128xf32>
    %664 = arith.mulf %644, %654 : vector<8x128xf32>
    %665 = arith.addf %663, %664 : vector<8x128xf32>
    %666 = math.tanh %665 : vector<8x128xf32>
    %667 = arith.mulf %662, %666 : vector<8x128xf32>
    %668 = vector.extract_strided_slice %634 {offsets = [0, 512], sizes = [8, 512], strides = [1, 1]} : vector<8x1024xf32> to vector<8x512xf32>
    %669 = arith.addf %593, %668 : vector<8x512xf32>
    %670 = vector.extract_strided_slice %669 {offsets = [0, 0], sizes = [8, 128], strides = [1, 1]} : vector<8x512xf32> to vector<8x128xf32>
    %cst_225 = arith.constant 5.000000e-01 : f32
    %671 = vector.broadcast %cst_225 : f32 to vector<8x128xf32>
    %672 = arith.mulf %671, %670 : vector<8x128xf32>
    %673 = math.tanh %672 : vector<8x128xf32>
    %cst_226 = arith.constant 5.000000e-01 : f32
    %674 = vector.broadcast %cst_226 : f32 to vector<8x128xf32>
    %675 = arith.mulf %674, %673 : vector<8x128xf32>
    %cst_227 = arith.constant 5.000000e-01 : f32
    %676 = vector.broadcast %cst_227 : f32 to vector<8x128xf32>
    %677 = arith.addf %675, %676 : vector<8x128xf32>
    %678 = vector.extract_strided_slice %669 {offsets = [0, 128], sizes = [8, 128], strides = [1, 1]} : vector<8x512xf32> to vector<8x128xf32>
    %cst_228 = arith.constant 5.000000e-01 : f32
    %679 = vector.broadcast %cst_228 : f32 to vector<8x128xf32>
    %680 = arith.mulf %679, %678 : vector<8x128xf32>
    %681 = math.tanh %680 : vector<8x128xf32>
    %cst_229 = arith.constant 5.000000e-01 : f32
    %682 = vector.broadcast %cst_229 : f32 to vector<8x128xf32>
    %683 = arith.mulf %682, %681 : vector<8x128xf32>
    %cst_230 = arith.constant 5.000000e-01 : f32
    %684 = vector.broadcast %cst_230 : f32 to vector<8x128xf32>
    %685 = arith.addf %683, %684 : vector<8x128xf32>
    %686 = vector.extract_strided_slice %669 {offsets = [0, 256], sizes = [8, 128], strides = [1, 1]} : vector<8x512xf32> to vector<8x128xf32>
    %687 = math.tanh %686 : vector<8x128xf32>
    %688 = vector.extract_strided_slice %669 {offsets = [0, 384], sizes = [8, 128], strides = [1, 1]} : vector<8x512xf32> to vector<8x128xf32>
    %cst_231 = arith.constant 5.000000e-01 : f32
    %689 = vector.broadcast %cst_231 : f32 to vector<8x128xf32>
    %690 = arith.mulf %689, %688 : vector<8x128xf32>
    %691 = math.tanh %690 : vector<8x128xf32>
    %cst_232 = arith.constant 5.000000e-01 : f32
    %692 = vector.broadcast %cst_232 : f32 to vector<8x128xf32>
    %693 = arith.mulf %692, %691 : vector<8x128xf32>
    %cst_233 = arith.constant 5.000000e-01 : f32
    %694 = vector.broadcast %cst_233 : f32 to vector<8x128xf32>
    %695 = arith.addf %693, %694 : vector<8x128xf32>
    %696 = arith.mulf %685, %596 : vector<8x128xf32>
    %697 = arith.mulf %677, %687 : vector<8x128xf32>
    %698 = arith.addf %696, %697 : vector<8x128xf32>
    %699 = math.tanh %698 : vector<8x128xf32>
    %700 = arith.mulf %695, %699 : vector<8x128xf32>
    %c0_234 = arith.constant 0 : index
    %c0_235 = arith.constant 0 : index
    %701 = vector.load %arg14[%c0_234, %c0_235] : memref<64x128xf32, #tpu.memory_space<vmem>>, vector<8x128xf32>
    tpu.vector_store %arg14[%c0_234, %c0_235], %700 {strides = array<i32>} : memref<64x128xf32, #tpu.memory_space<vmem>>, vector<8x128xf32>,
    %702 = tpu.concatenate %667, %700 in 1 : vector<8x128xf32>, vector<8x128xf32> -> vector<8x256xf32>
    %703 = arith.truncf %702 : vector<8x256xf32> to vector<8x256xbf16>
    %c0_236 = arith.constant 0 : index
    %c0_237 = arith.constant 0 : index
    %704 = vector.load %arg8[%c0_236, %c0_237] : memref<256x1024xbf16, #tpu.memory_space<vmem>>, vector<256x1024xbf16>
    %cst_238 = arith.constant dense<0.000000e+00> : vector<8x1024xf32>
    %705 = tpu.matmul %703, %704, %cst_238 {dimension_numbers = #tpu.dot_dimension_numbers<[1], [0], [0], [1], [0, 0, 1, 1], [], []>} : vector<8x256xbf16>, vector<256x1024xbf16>, vector<8x1024xf32> -> vector<8x1024xf32>
    %706 = vector.extract_strided_slice %705 {offsets = [0, 0], sizes = [8, 512], strides = [1, 1]} : vector<8x1024xf32> to vector<8x512xf32>
    %707 = arith.addf %590, %706 : vector<8x512xf32>
    %708 = vector.extract_strided_slice %707 {offsets = [0, 0], sizes = [8, 128], strides = [1, 1]} : vector<8x512xf32> to vector<8x128xf32>
    %cst_239 = arith.constant 5.000000e-01 : f32
    %709 = vector.broadcast %cst_239 : f32 to vector<8x128xf32>
    %710 = arith.mulf %709, %708 : vector<8x128xf32>
    %711 = math.tanh %710 : vector<8x128xf32>
    %cst_240 = arith.constant 5.000000e-01 : f32
    %712 = vector.broadcast %cst_240 : f32 to vector<8x128xf32>
    %713 = arith.mulf %712, %711 : vector<8x128xf32>
    %cst_241 = arith.constant 5.000000e-01 : f32
    %714 = vector.broadcast %cst_241 : f32 to vector<8x128xf32>
    %715 = arith.addf %713, %714 : vector<8x128xf32>
    %716 = vector.extract_strided_slice %707 {offsets = [0, 128], sizes = [8, 128], strides = [1, 1]} : vector<8x512xf32> to vector<8x128xf32>
    %cst_242 = arith.constant 5.000000e-01 : f32
    %717 = vector.broadcast %cst_242 : f32 to vector<8x128xf32>
    %718 = arith.mulf %717, %716 : vector<8x128xf32>
    %719 = math.tanh %718 : vector<8x128xf32>
    %cst_243 = arith.constant 5.000000e-01 : f32
    %720 = vector.broadcast %cst_243 : f32 to vector<8x128xf32>
    %721 = arith.mulf %720, %719 : vector<8x128xf32>
    %cst_244 = arith.constant 5.000000e-01 : f32
    %722 = vector.broadcast %cst_244 : f32 to vector<8x128xf32>
    %723 = arith.addf %721, %722 : vector<8x128xf32>
    %724 = vector.extract_strided_slice %707 {offsets = [0, 256], sizes = [8, 128], strides = [1, 1]} : vector<8x512xf32> to vector<8x128xf32>
    %725 = math.tanh %724 : vector<8x128xf32>
    %726 = vector.extract_strided_slice %707 {offsets = [0, 384], sizes = [8, 128], strides = [1, 1]} : vector<8x512xf32> to vector<8x128xf32>
    %cst_245 = arith.constant 5.000000e-01 : f32
    %727 = vector.broadcast %cst_245 : f32 to vector<8x128xf32>
    %728 = arith.mulf %727, %726 : vector<8x128xf32>
    %729 = math.tanh %728 : vector<8x128xf32>
    %cst_246 = arith.constant 5.000000e-01 : f32
    %730 = vector.broadcast %cst_246 : f32 to vector<8x128xf32>
    %731 = arith.mulf %730, %729 : vector<8x128xf32>
    %cst_247 = arith.constant 5.000000e-01 : f32
    %732 = vector.broadcast %cst_247 : f32 to vector<8x128xf32>
    %733 = arith.addf %731, %732 : vector<8x128xf32>
    %734 = arith.mulf %723, %665 : vector<8x128xf32>
    %735 = arith.mulf %715, %725 : vector<8x128xf32>
    %736 = arith.addf %734, %735 : vector<8x128xf32>
    %737 = math.tanh %736 : vector<8x128xf32>
    %738 = arith.mulf %733, %737 : vector<8x128xf32>
    %739 = vector.extract_strided_slice %705 {offsets = [0, 512], sizes = [8, 512], strides = [1, 1]} : vector<8x1024xf32> to vector<8x512xf32>
    %740 = arith.addf %593, %739 : vector<8x512xf32>
    %741 = vector.extract_strided_slice %740 {offsets = [0, 0], sizes = [8, 128], strides = [1, 1]} : vector<8x512xf32> to vector<8x128xf32>
    %cst_248 = arith.constant 5.000000e-01 : f32
    %742 = vector.broadcast %cst_248 : f32 to vector<8x128xf32>
    %743 = arith.mulf %742, %741 : vector<8x128xf32>
    %744 = math.tanh %743 : vector<8x128xf32>
    %cst_249 = arith.constant 5.000000e-01 : f32
    %745 = vector.broadcast %cst_249 : f32 to vector<8x128xf32>
    %746 = arith.mulf %745, %744 : vector<8x128xf32>
    %cst_250 = arith.constant 5.000000e-01 : f32
    %747 = vector.broadcast %cst_250 : f32 to vector<8x128xf32>
    %748 = arith.addf %746, %747 : vector<8x128xf32>
    %749 = vector.extract_strided_slice %740 {offsets = [0, 128], sizes = [8, 128], strides = [1, 1]} : vector<8x512xf32> to vector<8x128xf32>
    %cst_251 = arith.constant 5.000000e-01 : f32
    %750 = vector.broadcast %cst_251 : f32 to vector<8x128xf32>
    %751 = arith.mulf %750, %749 : vector<8x128xf32>
    %752 = math.tanh %751 : vector<8x128xf32>
    %cst_252 = arith.constant 5.000000e-01 : f32
    %753 = vector.broadcast %cst_252 : f32 to vector<8x128xf32>
    %754 = arith.mulf %753, %752 : vector<8x128xf32>
    %cst_253 = arith.constant 5.000000e-01 : f32
    %755 = vector.broadcast %cst_253 : f32 to vector<8x128xf32>
    %756 = arith.addf %754, %755 : vector<8x128xf32>
    %757 = vector.extract_strided_slice %740 {offsets = [0, 256], sizes = [8, 128], strides = [1, 1]} : vector<8x512xf32> to vector<8x128xf32>
    %758 = math.tanh %757 : vector<8x128xf32>
    %759 = vector.extract_strided_slice %740 {offsets = [0, 384], sizes = [8, 128], strides = [1, 1]} : vector<8x512xf32> to vector<8x128xf32>
    %cst_254 = arith.constant 5.000000e-01 : f32
    %760 = vector.broadcast %cst_254 : f32 to vector<8x128xf32>
    %761 = arith.mulf %760, %759 : vector<8x128xf32>
    %762 = math.tanh %761 : vector<8x128xf32>
    %cst_255 = arith.constant 5.000000e-01 : f32
    %763 = vector.broadcast %cst_255 : f32 to vector<8x128xf32>
    %764 = arith.mulf %763, %762 : vector<8x128xf32>
    %cst_256 = arith.constant 5.000000e-01 : f32
    %765 = vector.broadcast %cst_256 : f32 to vector<8x128xf32>
    %766 = arith.addf %764, %765 : vector<8x128xf32>
    %767 = arith.mulf %756, %698 : vector<8x128xf32>
    %768 = arith.mulf %748, %758 : vector<8x128xf32>
    %769 = arith.addf %767, %768 : vector<8x128xf32>
    %770 = math.tanh %769 : vector<8x128xf32>
    %771 = arith.mulf %766, %770 : vector<8x128xf32>
    %c8_257 = arith.constant 8 : index
    %c0_258 = arith.constant 0 : index
    %772 = vector.load %arg14[%c8_257, %c0_258] : memref<64x128xf32, #tpu.memory_space<vmem>>, vector<8x128xf32>
    tpu.vector_store %arg14[%c8_257, %c0_258], %771 {strides = array<i32>} : memref<64x128xf32, #tpu.memory_space<vmem>>, vector<8x128xf32>,
    %773 = tpu.concatenate %738, %771 in 1 : vector<8x128xf32>, vector<8x128xf32> -> vector<8x256xf32>
    %774 = arith.truncf %773 : vector<8x256xf32> to vector<8x256xbf16>
    %c0_259 = arith.constant 0 : index
    %c0_260 = arith.constant 0 : index
    %775 = vector.load %arg8[%c0_259, %c0_260] : memref<256x1024xbf16, #tpu.memory_space<vmem>>, vector<256x1024xbf16>
    %cst_261 = arith.constant dense<0.000000e+00> : vector<8x1024xf32>
    %776 = tpu.matmul %774, %775, %cst_261 {dimension_numbers = #tpu.dot_dimension_numbers<[1], [0], [0], [1], [0, 0, 1, 1], [], []>} : vector<8x256xbf16>, vector<256x1024xbf16>, vector<8x1024xf32> -> vector<8x1024xf32>
    %777 = vector.extract_strided_slice %776 {offsets = [0, 0], sizes = [8, 512], strides = [1, 1]} : vector<8x1024xf32> to vector<8x512xf32>
    %778 = arith.addf %590, %777 : vector<8x512xf32>
    %779 = vector.extract_strided_slice %778 {offsets = [0, 0], sizes = [8, 128], strides = [1, 1]} : vector<8x512xf32> to vector<8x128xf32>
    %cst_262 = arith.constant 5.000000e-01 : f32
    %780 = vector.broadcast %cst_262 : f32 to vector<8x128xf32>
    %781 = arith.mulf %780, %779 : vector<8x128xf32>
    %782 = math.tanh %781 : vector<8x128xf32>
    %cst_263 = arith.constant 5.000000e-01 : f32
    %783 = vector.broadcast %cst_263 : f32 to vector<8x128xf32>
    %784 = arith.mulf %783, %782 : vector<8x128xf32>
    %cst_264 = arith.constant 5.000000e-01 : f32
    %785 = vector.broadcast %cst_264 : f32 to vector<8x128xf32>
    %786 = arith.addf %784, %785 : vector<8x128xf32>
    %787 = vector.extract_strided_slice %778 {offsets = [0, 128], sizes = [8, 128], strides = [1, 1]} : vector<8x512xf32> to vector<8x128xf32>
    %cst_265 = arith.constant 5.000000e-01 : f32
    %788 = vector.broadcast %cst_265 : f32 to vector<8x128xf32>
    %789 = arith.mulf %788, %787 : vector<8x128xf32>
    %790 = math.tanh %789 : vector<8x128xf32>
    %cst_266 = arith.constant 5.000000e-01 : f32
    %791 = vector.broadcast %cst_266 : f32 to vector<8x128xf32>
    %792 = arith.mulf %791, %790 : vector<8x128xf32>
    %cst_267 = arith.constant 5.000000e-01 : f32
    %793 = vector.broadcast %cst_267 : f32 to vector<8x128xf32>
    %794 = arith.addf %792, %793 : vector<8x128xf32>
    %795 = vector.extract_strided_slice %778 {offsets = [0, 256], sizes = [8, 128], strides = [1, 1]} : vector<8x512xf32> to vector<8x128xf32>
    %796 = math.tanh %795 : vector<8x128xf32>
    %797 = vector.extract_strided_slice %778 {offsets = [0, 384], sizes = [8, 128], strides = [1, 1]} : vector<8x512xf32> to vector<8x128xf32>
    %cst_268 = arith.constant 5.000000e-01 : f32
    %798 = vector.broadcast %cst_268 : f32 to vector<8x128xf32>
    %799 = arith.mulf %798, %797 : vector<8x128xf32>
    %800 = math.tanh %799 : vector<8x128xf32>
    %cst_269 = arith.constant 5.000000e-01 : f32
    %801 = vector.broadcast %cst_269 : f32 to vector<8x128xf32>
    %802 = arith.mulf %801, %800 : vector<8x128xf32>
    %cst_270 = arith.constant 5.000000e-01 : f32
    %803 = vector.broadcast %cst_270 : f32 to vector<8x128xf32>
    %804 = arith.addf %802, %803 : vector<8x128xf32>
    %805 = arith.mulf %794, %736 : vector<8x128xf32>
    %806 = arith.mulf %786, %796 : vector<8x128xf32>
    %807 = arith.addf %805, %806 : vector<8x128xf32>
    %808 = math.tanh %807 : vector<8x128xf32>
    %809 = arith.mulf %804, %808 : vector<8x128xf32>
    %810 = vector.extract_strided_slice %776 {offsets = [0, 512], sizes = [8, 512], strides = [1, 1]} : vector<8x1024xf32> to vector<8x512xf32>
    %811 = arith.addf %593, %810 : vector<8x512xf32>
    %812 = vector.extract_strided_slice %811 {offsets = [0, 0], sizes = [8, 128], strides = [1, 1]} : vector<8x512xf32> to vector<8x128xf32>
    %cst_271 = arith.constant 5.000000e-01 : f32
    %813 = vector.broadcast %cst_271 : f32 to vector<8x128xf32>
    %814 = arith.mulf %813, %812 : vector<8x128xf32>
    %815 = math.tanh %814 : vector<8x128xf32>
    %cst_272 = arith.constant 5.000000e-01 : f32
    %816 = vector.broadcast %cst_272 : f32 to vector<8x128xf32>
    %817 = arith.mulf %816, %815 : vector<8x128xf32>
    %cst_273 = arith.constant 5.000000e-01 : f32
    %818 = vector.broadcast %cst_273 : f32 to vector<8x128xf32>
    %819 = arith.addf %817, %818 : vector<8x128xf32>
    %820 = vector.extract_strided_slice %811 {offsets = [0, 128], sizes = [8, 128], strides = [1, 1]} : vector<8x512xf32> to vector<8x128xf32>
    %cst_274 = arith.constant 5.000000e-01 : f32
    %821 = vector.broadcast %cst_274 : f32 to vector<8x128xf32>
    %822 = arith.mulf %821, %820 : vector<8x128xf32>
    %823 = math.tanh %822 : vector<8x128xf32>
    %cst_275 = arith.constant 5.000000e-01 : f32
    %824 = vector.broadcast %cst_275 : f32 to vector<8x128xf32>
    %825 = arith.mulf %824, %823 : vector<8x128xf32>
    %cst_276 = arith.constant 5.000000e-01 : f32
    %826 = vector.broadcast %cst_276 : f32 to vector<8x128xf32>
    %827 = arith.addf %825, %826 : vector<8x128xf32>
    %828 = vector.extract_strided_slice %811 {offsets = [0, 256], sizes = [8, 128], strides = [1, 1]} : vector<8x512xf32> to vector<8x128xf32>
    %829 = math.tanh %828 : vector<8x128xf32>
    %830 = vector.extract_strided_slice %811 {offsets = [0, 384], sizes = [8, 128], strides = [1, 1]} : vector<8x512xf32> to vector<8x128xf32>
    %cst_277 = arith.constant 5.000000e-01 : f32
    %831 = vector.broadcast %cst_277 : f32 to vector<8x128xf32>
    %832 = arith.mulf %831, %830 : vector<8x128xf32>
    %833 = math.tanh %832 : vector<8x128xf32>
    %cst_278 = arith.constant 5.000000e-01 : f32
    %834 = vector.broadcast %cst_278 : f32 to vector<8x128xf32>
    %835 = arith.mulf %834, %833 : vector<8x128xf32>
    %cst_279 = arith.constant 5.000000e-01 : f32
    %836 = vector.broadcast %cst_279 : f32 to vector<8x128xf32>
    %837 = arith.addf %835, %836 : vector<8x128xf32>
    %838 = arith.mulf %827, %769 : vector<8x128xf32>
    %839 = arith.mulf %819, %829 : vector<8x128xf32>
    %840 = arith.addf %838, %839 : vector<8x128xf32>
    %841 = math.tanh %840 : vector<8x128xf32>
    %842 = arith.mulf %837, %841 : vector<8x128xf32>
    %c16_280 = arith.constant 16 : index
    %c0_281 = arith.constant 0 : index
    %843 = vector.load %arg14[%c16_280, %c0_281] : memref<64x128xf32, #tpu.memory_space<vmem>>, vector<8x128xf32>
    tpu.vector_store %arg14[%c16_280, %c0_281], %842 {strides = array<i32>} : memref<64x128xf32, #tpu.memory_space<vmem>>, vector<8x128xf32>,
    %844 = tpu.concatenate %809, %842 in 1 : vector<8x128xf32>, vector<8x128xf32> -> vector<8x256xf32>
    %845 = arith.truncf %844 : vector<8x256xf32> to vector<8x256xbf16>
    %c0_282 = arith.constant 0 : index
    %c0_283 = arith.constant 0 : index
    %846 = vector.load %arg8[%c0_282, %c0_283] : memref<256x1024xbf16, #tpu.memory_space<vmem>>, vector<256x1024xbf16>
    %cst_284 = arith.constant dense<0.000000e+00> : vector<8x1024xf32>
    %847 = tpu.matmul %845, %846, %cst_284 {dimension_numbers = #tpu.dot_dimension_numbers<[1], [0], [0], [1], [0, 0, 1, 1], [], []>} : vector<8x256xbf16>, vector<256x1024xbf16>, vector<8x1024xf32> -> vector<8x1024xf32>
    %848 = vector.extract_strided_slice %847 {offsets = [0, 0], sizes = [8, 512], strides = [1, 1]} : vector<8x1024xf32> to vector<8x512xf32>
    %849 = arith.addf %590, %848 : vector<8x512xf32>
    %850 = vector.extract_strided_slice %849 {offsets = [0, 0], sizes = [8, 128], strides = [1, 1]} : vector<8x512xf32> to vector<8x128xf32>
    %cst_285 = arith.constant 5.000000e-01 : f32
    %851 = vector.broadcast %cst_285 : f32 to vector<8x128xf32>
    %852 = arith.mulf %851, %850 : vector<8x128xf32>
    %853 = math.tanh %852 : vector<8x128xf32>
    %cst_286 = arith.constant 5.000000e-01 : f32
    %854 = vector.broadcast %cst_286 : f32 to vector<8x128xf32>
    %855 = arith.mulf %854, %853 : vector<8x128xf32>
    %cst_287 = arith.constant 5.000000e-01 : f32
    %856 = vector.broadcast %cst_287 : f32 to vector<8x128xf32>
    %857 = arith.addf %855, %856 : vector<8x128xf32>
    %858 = vector.extract_strided_slice %849 {offsets = [0, 128], sizes = [8, 128], strides = [1, 1]} : vector<8x512xf32> to vector<8x128xf32>
    %cst_288 = arith.constant 5.000000e-01 : f32
    %859 = vector.broadcast %cst_288 : f32 to vector<8x128xf32>
    %860 = arith.mulf %859, %858 : vector<8x128xf32>
    %861 = math.tanh %860 : vector<8x128xf32>
    %cst_289 = arith.constant 5.000000e-01 : f32
    %862 = vector.broadcast %cst_289 : f32 to vector<8x128xf32>
    %863 = arith.mulf %862, %861 : vector<8x128xf32>
    %cst_290 = arith.constant 5.000000e-01 : f32
    %864 = vector.broadcast %cst_290 : f32 to vector<8x128xf32>
    %865 = arith.addf %863, %864 : vector<8x128xf32>
    %866 = vector.extract_strided_slice %849 {offsets = [0, 256], sizes = [8, 128], strides = [1, 1]} : vector<8x512xf32> to vector<8x128xf32>
    %867 = math.tanh %866 : vector<8x128xf32>
    %868 = vector.extract_strided_slice %849 {offsets = [0, 384], sizes = [8, 128], strides = [1, 1]} : vector<8x512xf32> to vector<8x128xf32>
    %cst_291 = arith.constant 5.000000e-01 : f32
    %869 = vector.broadcast %cst_291 : f32 to vector<8x128xf32>
    %870 = arith.mulf %869, %868 : vector<8x128xf32>
    %871 = math.tanh %870 : vector<8x128xf32>
    %cst_292 = arith.constant 5.000000e-01 : f32
    %872 = vector.broadcast %cst_292 : f32 to vector<8x128xf32>
    %873 = arith.mulf %872, %871 : vector<8x128xf32>
    %cst_293 = arith.constant 5.000000e-01 : f32
    %874 = vector.broadcast %cst_293 : f32 to vector<8x128xf32>
    %875 = arith.addf %873, %874 : vector<8x128xf32>
    %876 = arith.mulf %865, %807 : vector<8x128xf32>
    %877 = arith.mulf %857, %867 : vector<8x128xf32>
    %878 = arith.addf %876, %877 : vector<8x128xf32>
    %879 = math.tanh %878 : vector<8x128xf32>
    %880 = arith.mulf %875, %879 : vector<8x128xf32>
    %881 = vector.extract_strided_slice %847 {offsets = [0, 512], sizes = [8, 512], strides = [1, 1]} : vector<8x1024xf32> to vector<8x512xf32>
    %882 = arith.addf %593, %881 : vector<8x512xf32>
    %883 = vector.extract_strided_slice %882 {offsets = [0, 0], sizes = [8, 128], strides = [1, 1]} : vector<8x512xf32> to vector<8x128xf32>
    %cst_294 = arith.constant 5.000000e-01 : f32
    %884 = vector.broadcast %cst_294 : f32 to vector<8x128xf32>
    %885 = arith.mulf %884, %883 : vector<8x128xf32>
    %886 = math.tanh %885 : vector<8x128xf32>
    %cst_295 = arith.constant 5.000000e-01 : f32
    %887 = vector.broadcast %cst_295 : f32 to vector<8x128xf32>
    %888 = arith.mulf %887, %886 : vector<8x128xf32>
    %cst_296 = arith.constant 5.000000e-01 : f32
    %889 = vector.broadcast %cst_296 : f32 to vector<8x128xf32>
    %890 = arith.addf %888, %889 : vector<8x128xf32>
    %891 = vector.extract_strided_slice %882 {offsets = [0, 128], sizes = [8, 128], strides = [1, 1]} : vector<8x512xf32> to vector<8x128xf32>
    %cst_297 = arith.constant 5.000000e-01 : f32
    %892 = vector.broadcast %cst_297 : f32 to vector<8x128xf32>
    %893 = arith.mulf %892, %891 : vector<8x128xf32>
    %894 = math.tanh %893 : vector<8x128xf32>
    %cst_298 = arith.constant 5.000000e-01 : f32
    %895 = vector.broadcast %cst_298 : f32 to vector<8x128xf32>
    %896 = arith.mulf %895, %894 : vector<8x128xf32>
    %cst_299 = arith.constant 5.000000e-01 : f32
    %897 = vector.broadcast %cst_299 : f32 to vector<8x128xf32>
    %898 = arith.addf %896, %897 : vector<8x128xf32>
    %899 = vector.extract_strided_slice %882 {offsets = [0, 256], sizes = [8, 128], strides = [1, 1]} : vector<8x512xf32> to vector<8x128xf32>
    %900 = math.tanh %899 : vector<8x128xf32>
    %901 = vector.extract_strided_slice %882 {offsets = [0, 384], sizes = [8, 128], strides = [1, 1]} : vector<8x512xf32> to vector<8x128xf32>
    %cst_300 = arith.constant 5.000000e-01 : f32
    %902 = vector.broadcast %cst_300 : f32 to vector<8x128xf32>
    %903 = arith.mulf %902, %901 : vector<8x128xf32>
    %904 = math.tanh %903 : vector<8x128xf32>
    %cst_301 = arith.constant 5.000000e-01 : f32
    %905 = vector.broadcast %cst_301 : f32 to vector<8x128xf32>
    %906 = arith.mulf %905, %904 : vector<8x128xf32>
    %cst_302 = arith.constant 5.000000e-01 : f32
    %907 = vector.broadcast %cst_302 : f32 to vector<8x128xf32>
    %908 = arith.addf %906, %907 : vector<8x128xf32>
    %909 = arith.mulf %898, %840 : vector<8x128xf32>
    %910 = arith.mulf %890, %900 : vector<8x128xf32>
    %911 = arith.addf %909, %910 : vector<8x128xf32>
    %912 = math.tanh %911 : vector<8x128xf32>
    %913 = arith.mulf %908, %912 : vector<8x128xf32>
    %c24_303 = arith.constant 24 : index
    %c0_304 = arith.constant 0 : index
    %914 = vector.load %arg14[%c24_303, %c0_304] : memref<64x128xf32, #tpu.memory_space<vmem>>, vector<8x128xf32>
    tpu.vector_store %arg14[%c24_303, %c0_304], %913 {strides = array<i32>} : memref<64x128xf32, #tpu.memory_space<vmem>>, vector<8x128xf32>,
    %915 = tpu.concatenate %880, %913 in 1 : vector<8x128xf32>, vector<8x128xf32> -> vector<8x256xf32>
    %916 = arith.truncf %915 : vector<8x256xf32> to vector<8x256xbf16>
    %c0_305 = arith.constant 0 : index
    %c0_306 = arith.constant 0 : index
    %917 = vector.load %arg8[%c0_305, %c0_306] : memref<256x1024xbf16, #tpu.memory_space<vmem>>, vector<256x1024xbf16>
    %cst_307 = arith.constant dense<0.000000e+00> : vector<8x1024xf32>
    %918 = tpu.matmul %916, %917, %cst_307 {dimension_numbers = #tpu.dot_dimension_numbers<[1], [0], [0], [1], [0, 0, 1, 1], [], []>} : vector<8x256xbf16>, vector<256x1024xbf16>, vector<8x1024xf32> -> vector<8x1024xf32>
    %919 = vector.extract_strided_slice %918 {offsets = [0, 0], sizes = [8, 512], strides = [1, 1]} : vector<8x1024xf32> to vector<8x512xf32>
    %920 = arith.addf %590, %919 : vector<8x512xf32>
    %921 = vector.extract_strided_slice %920 {offsets = [0, 0], sizes = [8, 128], strides = [1, 1]} : vector<8x512xf32> to vector<8x128xf32>
    %cst_308 = arith.constant 5.000000e-01 : f32
    %922 = vector.broadcast %cst_308 : f32 to vector<8x128xf32>
    %923 = arith.mulf %922, %921 : vector<8x128xf32>
    %924 = math.tanh %923 : vector<8x128xf32>
    %cst_309 = arith.constant 5.000000e-01 : f32
    %925 = vector.broadcast %cst_309 : f32 to vector<8x128xf32>
    %926 = arith.mulf %925, %924 : vector<8x128xf32>
    %cst_310 = arith.constant 5.000000e-01 : f32
    %927 = vector.broadcast %cst_310 : f32 to vector<8x128xf32>
    %928 = arith.addf %926, %927 : vector<8x128xf32>
    %929 = vector.extract_strided_slice %920 {offsets = [0, 128], sizes = [8, 128], strides = [1, 1]} : vector<8x512xf32> to vector<8x128xf32>
    %cst_311 = arith.constant 5.000000e-01 : f32
    %930 = vector.broadcast %cst_311 : f32 to vector<8x128xf32>
    %931 = arith.mulf %930, %929 : vector<8x128xf32>
    %932 = math.tanh %931 : vector<8x128xf32>
    %cst_312 = arith.constant 5.000000e-01 : f32
    %933 = vector.broadcast %cst_312 : f32 to vector<8x128xf32>
    %934 = arith.mulf %933, %932 : vector<8x128xf32>
    %cst_313 = arith.constant 5.000000e-01 : f32
    %935 = vector.broadcast %cst_313 : f32 to vector<8x128xf32>
    %936 = arith.addf %934, %935 : vector<8x128xf32>
    %937 = vector.extract_strided_slice %920 {offsets = [0, 256], sizes = [8, 128], strides = [1, 1]} : vector<8x512xf32> to vector<8x128xf32>
    %938 = math.tanh %937 : vector<8x128xf32>
    %939 = vector.extract_strided_slice %920 {offsets = [0, 384], sizes = [8, 128], strides = [1, 1]} : vector<8x512xf32> to vector<8x128xf32>
    %cst_314 = arith.constant 5.000000e-01 : f32
    %940 = vector.broadcast %cst_314 : f32 to vector<8x128xf32>
    %941 = arith.mulf %940, %939 : vector<8x128xf32>
    %942 = math.tanh %941 : vector<8x128xf32>
    %cst_315 = arith.constant 5.000000e-01 : f32
    %943 = vector.broadcast %cst_315 : f32 to vector<8x128xf32>
    %944 = arith.mulf %943, %942 : vector<8x128xf32>
    %cst_316 = arith.constant 5.000000e-01 : f32
    %945 = vector.broadcast %cst_316 : f32 to vector<8x128xf32>
    %946 = arith.addf %944, %945 : vector<8x128xf32>
    %947 = arith.mulf %936, %878 : vector<8x128xf32>
    %948 = arith.mulf %928, %938 : vector<8x128xf32>
    %949 = arith.addf %947, %948 : vector<8x128xf32>
    %950 = math.tanh %949 : vector<8x128xf32>
    %951 = arith.mulf %946, %950 : vector<8x128xf32>
    %952 = vector.extract_strided_slice %918 {offsets = [0, 512], sizes = [8, 512], strides = [1, 1]} : vector<8x1024xf32> to vector<8x512xf32>
    %953 = arith.addf %593, %952 : vector<8x512xf32>
    %954 = vector.extract_strided_slice %953 {offsets = [0, 0], sizes = [8, 128], strides = [1, 1]} : vector<8x512xf32> to vector<8x128xf32>
    %cst_317 = arith.constant 5.000000e-01 : f32
    %955 = vector.broadcast %cst_317 : f32 to vector<8x128xf32>
    %956 = arith.mulf %955, %954 : vector<8x128xf32>
    %957 = math.tanh %956 : vector<8x128xf32>
    %cst_318 = arith.constant 5.000000e-01 : f32
    %958 = vector.broadcast %cst_318 : f32 to vector<8x128xf32>
    %959 = arith.mulf %958, %957 : vector<8x128xf32>
    %cst_319 = arith.constant 5.000000e-01 : f32
    %960 = vector.broadcast %cst_319 : f32 to vector<8x128xf32>
    %961 = arith.addf %959, %960 : vector<8x128xf32>
    %962 = vector.extract_strided_slice %953 {offsets = [0, 128], sizes = [8, 128], strides = [1, 1]} : vector<8x512xf32> to vector<8x128xf32>
    %cst_320 = arith.constant 5.000000e-01 : f32
    %963 = vector.broadcast %cst_320 : f32 to vector<8x128xf32>
    %964 = arith.mulf %963, %962 : vector<8x128xf32>
    %965 = math.tanh %964 : vector<8x128xf32>
    %cst_321 = arith.constant 5.000000e-01 : f32
    %966 = vector.broadcast %cst_321 : f32 to vector<8x128xf32>
    %967 = arith.mulf %966, %965 : vector<8x128xf32>
    %cst_322 = arith.constant 5.000000e-01 : f32
    %968 = vector.broadcast %cst_322 : f32 to vector<8x128xf32>
    %969 = arith.addf %967, %968 : vector<8x128xf32>
    %970 = vector.extract_strided_slice %953 {offsets = [0, 256], sizes = [8, 128], strides = [1, 1]} : vector<8x512xf32> to vector<8x128xf32>
    %971 = math.tanh %970 : vector<8x128xf32>
    %972 = vector.extract_strided_slice %953 {offsets = [0, 384], sizes = [8, 128], strides = [1, 1]} : vector<8x512xf32> to vector<8x128xf32>
    %cst_323 = arith.constant 5.000000e-01 : f32
    %973 = vector.broadcast %cst_323 : f32 to vector<8x128xf32>
    %974 = arith.mulf %973, %972 : vector<8x128xf32>
    %975 = math.tanh %974 : vector<8x128xf32>
    %cst_324 = arith.constant 5.000000e-01 : f32
    %976 = vector.broadcast %cst_324 : f32 to vector<8x128xf32>
    %977 = arith.mulf %976, %975 : vector<8x128xf32>
    %cst_325 = arith.constant 5.000000e-01 : f32
    %978 = vector.broadcast %cst_325 : f32 to vector<8x128xf32>
    %979 = arith.addf %977, %978 : vector<8x128xf32>
    %980 = arith.mulf %969, %911 : vector<8x128xf32>
    %981 = arith.mulf %961, %971 : vector<8x128xf32>
    %982 = arith.addf %980, %981 : vector<8x128xf32>
    %983 = math.tanh %982 : vector<8x128xf32>
    %984 = arith.mulf %979, %983 : vector<8x128xf32>
    %c32_326 = arith.constant 32 : index
    %c0_327 = arith.constant 0 : index
    %985 = vector.load %arg14[%c32_326, %c0_327] : memref<64x128xf32, #tpu.memory_space<vmem>>, vector<8x128xf32>
    tpu.vector_store %arg14[%c32_326, %c0_327], %984 {strides = array<i32>} : memref<64x128xf32, #tpu.memory_space<vmem>>, vector<8x128xf32>,
    %986 = tpu.concatenate %951, %984 in 1 : vector<8x128xf32>, vector<8x128xf32> -> vector<8x256xf32>
    %987 = arith.truncf %986 : vector<8x256xf32> to vector<8x256xbf16>
    %c0_328 = arith.constant 0 : index
    %c0_329 = arith.constant 0 : index
    %988 = vector.load %arg8[%c0_328, %c0_329] : memref<256x1024xbf16, #tpu.memory_space<vmem>>, vector<256x1024xbf16>
    %cst_330 = arith.constant dense<0.000000e+00> : vector<8x1024xf32>
    %989 = tpu.matmul %987, %988, %cst_330 {dimension_numbers = #tpu.dot_dimension_numbers<[1], [0], [0], [1], [0, 0, 1, 1], [], []>} : vector<8x256xbf16>, vector<256x1024xbf16>, vector<8x1024xf32> -> vector<8x1024xf32>
    %990 = vector.extract_strided_slice %989 {offsets = [0, 0], sizes = [8, 512], strides = [1, 1]} : vector<8x1024xf32> to vector<8x512xf32>
    %991 = arith.addf %590, %990 : vector<8x512xf32>
    %992 = vector.extract_strided_slice %991 {offsets = [0, 0], sizes = [8, 128], strides = [1, 1]} : vector<8x512xf32> to vector<8x128xf32>
    %cst_331 = arith.constant 5.000000e-01 : f32
    %993 = vector.broadcast %cst_331 : f32 to vector<8x128xf32>
    %994 = arith.mulf %993, %992 : vector<8x128xf32>
    %995 = math.tanh %994 : vector<8x128xf32>
    %cst_332 = arith.constant 5.000000e-01 : f32
    %996 = vector.broadcast %cst_332 : f32 to vector<8x128xf32>
    %997 = arith.mulf %996, %995 : vector<8x128xf32>
    %cst_333 = arith.constant 5.000000e-01 : f32
    %998 = vector.broadcast %cst_333 : f32 to vector<8x128xf32>
    %999 = arith.addf %997, %998 : vector<8x128xf32>
    %1000 = vector.extract_strided_slice %991 {offsets = [0, 128], sizes = [8, 128], strides = [1, 1]} : vector<8x512xf32> to vector<8x128xf32>
    %cst_334 = arith.constant 5.000000e-01 : f32
    %1001 = vector.broadcast %cst_334 : f32 to vector<8x128xf32>
    %1002 = arith.mulf %1001, %1000 : vector<8x128xf32>
    %1003 = math.tanh %1002 : vector<8x128xf32>
    %cst_335 = arith.constant 5.000000e-01 : f32
    %1004 = vector.broadcast %cst_335 : f32 to vector<8x128xf32>
    %1005 = arith.mulf %1004, %1003 : vector<8x128xf32>
    %cst_336 = arith.constant 5.000000e-01 : f32
    %1006 = vector.broadcast %cst_336 : f32 to vector<8x128xf32>
    %1007 = arith.addf %1005, %1006 : vector<8x128xf32>
    %1008 = vector.extract_strided_slice %991 {offsets = [0, 256], sizes = [8, 128], strides = [1, 1]} : vector<8x512xf32> to vector<8x128xf32>
    %1009 = math.tanh %1008 : vector<8x128xf32>
    %1010 = vector.extract_strided_slice %991 {offsets = [0, 384], sizes = [8, 128], strides = [1, 1]} : vector<8x512xf32> to vector<8x128xf32>
    %cst_337 = arith.constant 5.000000e-01 : f32
    %1011 = vector.broadcast %cst_337 : f32 to vector<8x128xf32>
    %1012 = arith.mulf %1011, %1010 : vector<8x128xf32>
    %1013 = math.tanh %1012 : vector<8x128xf32>
    %cst_338 = arith.constant 5.000000e-01 : f32
    %1014 = vector.broadcast %cst_338 : f32 to vector<8x128xf32>
    %1015 = arith.mulf %1014, %1013 : vector<8x128xf32>
    %cst_339 = arith.constant 5.000000e-01 : f32
    %1016 = vector.broadcast %cst_339 : f32 to vector<8x128xf32>
    %1017 = arith.addf %1015, %1016 : vector<8x128xf32>
    %1018 = arith.mulf %1007, %949 : vector<8x128xf32>
    %1019 = arith.mulf %999, %1009 : vector<8x128xf32>
    %1020 = arith.addf %1018, %1019 : vector<8x128xf32>
    %1021 = math.tanh %1020 : vector<8x128xf32>
    %1022 = arith.mulf %1017, %1021 : vector<8x128xf32>
    %1023 = vector.extract_strided_slice %989 {offsets = [0, 512], sizes = [8, 512], strides = [1, 1]} : vector<8x1024xf32> to vector<8x512xf32>
    %1024 = arith.addf %593, %1023 : vector<8x512xf32>
    %1025 = vector.extract_strided_slice %1024 {offsets = [0, 0], sizes = [8, 128], strides = [1, 1]} : vector<8x512xf32> to vector<8x128xf32>
    %cst_340 = arith.constant 5.000000e-01 : f32
    %1026 = vector.broadcast %cst_340 : f32 to vector<8x128xf32>
    %1027 = arith.mulf %1026, %1025 : vector<8x128xf32>
    %1028 = math.tanh %1027 : vector<8x128xf32>
    %cst_341 = arith.constant 5.000000e-01 : f32
    %1029 = vector.broadcast %cst_341 : f32 to vector<8x128xf32>
    %1030 = arith.mulf %1029, %1028 : vector<8x128xf32>
    %cst_342 = arith.constant 5.000000e-01 : f32
    %1031 = vector.broadcast %cst_342 : f32 to vector<8x128xf32>
    %1032 = arith.addf %1030, %1031 : vector<8x128xf32>
    %1033 = vector.extract_strided_slice %1024 {offsets = [0, 128], sizes = [8, 128], strides = [1, 1]} : vector<8x512xf32> to vector<8x128xf32>
    %cst_343 = arith.constant 5.000000e-01 : f32
    %1034 = vector.broadcast %cst_343 : f32 to vector<8x128xf32>
    %1035 = arith.mulf %1034, %1033 : vector<8x128xf32>
    %1036 = math.tanh %1035 : vector<8x128xf32>
    %cst_344 = arith.constant 5.000000e-01 : f32
    %1037 = vector.broadcast %cst_344 : f32 to vector<8x128xf32>
    %1038 = arith.mulf %1037, %1036 : vector<8x128xf32>
    %cst_345 = arith.constant 5.000000e-01 : f32
    %1039 = vector.broadcast %cst_345 : f32 to vector<8x128xf32>
    %1040 = arith.addf %1038, %1039 : vector<8x128xf32>
    %1041 = vector.extract_strided_slice %1024 {offsets = [0, 256], sizes = [8, 128], strides = [1, 1]} : vector<8x512xf32> to vector<8x128xf32>
    %1042 = math.tanh %1041 : vector<8x128xf32>
    %1043 = vector.extract_strided_slice %1024 {offsets = [0, 384], sizes = [8, 128], strides = [1, 1]} : vector<8x512xf32> to vector<8x128xf32>
    %cst_346 = arith.constant 5.000000e-01 : f32
    %1044 = vector.broadcast %cst_346 : f32 to vector<8x128xf32>
    %1045 = arith.mulf %1044, %1043 : vector<8x128xf32>
    %1046 = math.tanh %1045 : vector<8x128xf32>
    %cst_347 = arith.constant 5.000000e-01 : f32
    %1047 = vector.broadcast %cst_347 : f32 to vector<8x128xf32>
    %1048 = arith.mulf %1047, %1046 : vector<8x128xf32>
    %cst_348 = arith.constant 5.000000e-01 : f32
    %1049 = vector.broadcast %cst_348 : f32 to vector<8x128xf32>
    %1050 = arith.addf %1048, %1049 : vector<8x128xf32>
    %1051 = arith.mulf %1040, %982 : vector<8x128xf32>
    %1052 = arith.mulf %1032, %1042 : vector<8x128xf32>
    %1053 = arith.addf %1051, %1052 : vector<8x128xf32>
    %1054 = math.tanh %1053 : vector<8x128xf32>
    %1055 = arith.mulf %1050, %1054 : vector<8x128xf32>
    %c40_349 = arith.constant 40 : index
    %c0_350 = arith.constant 0 : index
    %1056 = vector.load %arg14[%c40_349, %c0_350] : memref<64x128xf32, #tpu.memory_space<vmem>>, vector<8x128xf32>
    tpu.vector_store %arg14[%c40_349, %c0_350], %1055 {strides = array<i32>} : memref<64x128xf32, #tpu.memory_space<vmem>>, vector<8x128xf32>,
    %1057 = tpu.concatenate %1022, %1055 in 1 : vector<8x128xf32>, vector<8x128xf32> -> vector<8x256xf32>
    %1058 = arith.truncf %1057 : vector<8x256xf32> to vector<8x256xbf16>
    %c0_351 = arith.constant 0 : index
    %c0_352 = arith.constant 0 : index
    %1059 = vector.load %arg8[%c0_351, %c0_352] : memref<256x1024xbf16, #tpu.memory_space<vmem>>, vector<256x1024xbf16>
    %cst_353 = arith.constant dense<0.000000e+00> : vector<8x1024xf32>
    %1060 = tpu.matmul %1058, %1059, %cst_353 {dimension_numbers = #tpu.dot_dimension_numbers<[1], [0], [0], [1], [0, 0, 1, 1], [], []>} : vector<8x256xbf16>, vector<256x1024xbf16>, vector<8x1024xf32> -> vector<8x1024xf32>
    %1061 = vector.extract_strided_slice %1060 {offsets = [0, 0], sizes = [8, 512], strides = [1, 1]} : vector<8x1024xf32> to vector<8x512xf32>
    %1062 = arith.addf %590, %1061 : vector<8x512xf32>
    %1063 = vector.extract_strided_slice %1062 {offsets = [0, 0], sizes = [8, 128], strides = [1, 1]} : vector<8x512xf32> to vector<8x128xf32>
    %cst_354 = arith.constant 5.000000e-01 : f32
    %1064 = vector.broadcast %cst_354 : f32 to vector<8x128xf32>
    %1065 = arith.mulf %1064, %1063 : vector<8x128xf32>
    %1066 = math.tanh %1065 : vector<8x128xf32>
    %cst_355 = arith.constant 5.000000e-01 : f32
    %1067 = vector.broadcast %cst_355 : f32 to vector<8x128xf32>
    %1068 = arith.mulf %1067, %1066 : vector<8x128xf32>
    %cst_356 = arith.constant 5.000000e-01 : f32
    %1069 = vector.broadcast %cst_356 : f32 to vector<8x128xf32>
    %1070 = arith.addf %1068, %1069 : vector<8x128xf32>
    %1071 = vector.extract_strided_slice %1062 {offsets = [0, 128], sizes = [8, 128], strides = [1, 1]} : vector<8x512xf32> to vector<8x128xf32>
    %cst_357 = arith.constant 5.000000e-01 : f32
    %1072 = vector.broadcast %cst_357 : f32 to vector<8x128xf32>
    %1073 = arith.mulf %1072, %1071 : vector<8x128xf32>
    %1074 = math.tanh %1073 : vector<8x128xf32>
    %cst_358 = arith.constant 5.000000e-01 : f32
    %1075 = vector.broadcast %cst_358 : f32 to vector<8x128xf32>
    %1076 = arith.mulf %1075, %1074 : vector<8x128xf32>
    %cst_359 = arith.constant 5.000000e-01 : f32
    %1077 = vector.broadcast %cst_359 : f32 to vector<8x128xf32>
    %1078 = arith.addf %1076, %1077 : vector<8x128xf32>
    %1079 = vector.extract_strided_slice %1062 {offsets = [0, 256], sizes = [8, 128], strides = [1, 1]} : vector<8x512xf32> to vector<8x128xf32>
    %1080 = math.tanh %1079 : vector<8x128xf32>
    %1081 = vector.extract_strided_slice %1062 {offsets = [0, 384], sizes = [8, 128], strides = [1, 1]} : vector<8x512xf32> to vector<8x128xf32>
    %cst_360 = arith.constant 5.000000e-01 : f32
    %1082 = vector.broadcast %cst_360 : f32 to vector<8x128xf32>
    %1083 = arith.mulf %1082, %1081 : vector<8x128xf32>
    %1084 = math.tanh %1083 : vector<8x128xf32>
    %cst_361 = arith.constant 5.000000e-01 : f32
    %1085 = vector.broadcast %cst_361 : f32 to vector<8x128xf32>
    %1086 = arith.mulf %1085, %1084 : vector<8x128xf32>
    %cst_362 = arith.constant 5.000000e-01 : f32
    %1087 = vector.broadcast %cst_362 : f32 to vector<8x128xf32>
    %1088 = arith.addf %1086, %1087 : vector<8x128xf32>
    %1089 = arith.mulf %1078, %1020 : vector<8x128xf32>
    %1090 = arith.mulf %1070, %1080 : vector<8x128xf32>
    %1091 = arith.addf %1089, %1090 : vector<8x128xf32>
    %1092 = math.tanh %1091 : vector<8x128xf32>
    %1093 = arith.mulf %1088, %1092 : vector<8x128xf32>
    %1094 = vector.extract_strided_slice %1060 {offsets = [0, 512], sizes = [8, 512], strides = [1, 1]} : vector<8x1024xf32> to vector<8x512xf32>
    %1095 = arith.addf %593, %1094 : vector<8x512xf32>
    %1096 = vector.extract_strided_slice %1095 {offsets = [0, 0], sizes = [8, 128], strides = [1, 1]} : vector<8x512xf32> to vector<8x128xf32>
    %cst_363 = arith.constant 5.000000e-01 : f32
    %1097 = vector.broadcast %cst_363 : f32 to vector<8x128xf32>
    %1098 = arith.mulf %1097, %1096 : vector<8x128xf32>
    %1099 = math.tanh %1098 : vector<8x128xf32>
    %cst_364 = arith.constant 5.000000e-01 : f32
    %1100 = vector.broadcast %cst_364 : f32 to vector<8x128xf32>
    %1101 = arith.mulf %1100, %1099 : vector<8x128xf32>
    %cst_365 = arith.constant 5.000000e-01 : f32
    %1102 = vector.broadcast %cst_365 : f32 to vector<8x128xf32>
    %1103 = arith.addf %1101, %1102 : vector<8x128xf32>
    %1104 = vector.extract_strided_slice %1095 {offsets = [0, 128], sizes = [8, 128], strides = [1, 1]} : vector<8x512xf32> to vector<8x128xf32>
    %cst_366 = arith.constant 5.000000e-01 : f32
    %1105 = vector.broadcast %cst_366 : f32 to vector<8x128xf32>
    %1106 = arith.mulf %1105, %1104 : vector<8x128xf32>
    %1107 = math.tanh %1106 : vector<8x128xf32>
    %cst_367 = arith.constant 5.000000e-01 : f32
    %1108 = vector.broadcast %cst_367 : f32 to vector<8x128xf32>
    %1109 = arith.mulf %1108, %1107 : vector<8x128xf32>
    %cst_368 = arith.constant 5.000000e-01 : f32
    %1110 = vector.broadcast %cst_368 : f32 to vector<8x128xf32>
    %1111 = arith.addf %1109, %1110 : vector<8x128xf32>
    %1112 = vector.extract_strided_slice %1095 {offsets = [0, 256], sizes = [8, 128], strides = [1, 1]} : vector<8x512xf32> to vector<8x128xf32>
    %1113 = math.tanh %1112 : vector<8x128xf32>
    %1114 = vector.extract_strided_slice %1095 {offsets = [0, 384], sizes = [8, 128], strides = [1, 1]} : vector<8x512xf32> to vector<8x128xf32>
    %cst_369 = arith.constant 5.000000e-01 : f32
    %1115 = vector.broadcast %cst_369 : f32 to vector<8x128xf32>
    %1116 = arith.mulf %1115, %1114 : vector<8x128xf32>
    %1117 = math.tanh %1116 : vector<8x128xf32>
    %cst_370 = arith.constant 5.000000e-01 : f32
    %1118 = vector.broadcast %cst_370 : f32 to vector<8x128xf32>
    %1119 = arith.mulf %1118, %1117 : vector<8x128xf32>
    %cst_371 = arith.constant 5.000000e-01 : f32
    %1120 = vector.broadcast %cst_371 : f32 to vector<8x128xf32>
    %1121 = arith.addf %1119, %1120 : vector<8x128xf32>
    %1122 = arith.mulf %1111, %1053 : vector<8x128xf32>
    %1123 = arith.mulf %1103, %1113 : vector<8x128xf32>
    %1124 = arith.addf %1122, %1123 : vector<8x128xf32>
    %1125 = math.tanh %1124 : vector<8x128xf32>
    %1126 = arith.mulf %1121, %1125 : vector<8x128xf32>
    %c48_372 = arith.constant 48 : index
    %c0_373 = arith.constant 0 : index
    %1127 = vector.load %arg14[%c48_372, %c0_373] : memref<64x128xf32, #tpu.memory_space<vmem>>, vector<8x128xf32>
    tpu.vector_store %arg14[%c48_372, %c0_373], %1126 {strides = array<i32>} : memref<64x128xf32, #tpu.memory_space<vmem>>, vector<8x128xf32>,
    %1128 = tpu.concatenate %1093, %1126 in 1 : vector<8x128xf32>, vector<8x128xf32> -> vector<8x256xf32>
    %1129 = arith.truncf %1128 : vector<8x256xf32> to vector<8x256xbf16>
    %c0_374 = arith.constant 0 : index
    %c0_375 = arith.constant 0 : index
    %1130 = vector.load %arg8[%c0_374, %c0_375] : memref<256x1024xbf16, #tpu.memory_space<vmem>>, vector<256x1024xbf16>
    %cst_376 = arith.constant dense<0.000000e+00> : vector<8x1024xf32>
    %1131 = tpu.matmul %1129, %1130, %cst_376 {dimension_numbers = #tpu.dot_dimension_numbers<[1], [0], [0], [1], [0, 0, 1, 1], [], []>} : vector<8x256xbf16>, vector<256x1024xbf16>, vector<8x1024xf32> -> vector<8x1024xf32>
    %1132 = vector.extract_strided_slice %1131 {offsets = [0, 512], sizes = [8, 512], strides = [1, 1]} : vector<8x1024xf32> to vector<8x512xf32>
    %1133 = arith.addf %593, %1132 : vector<8x512xf32>
    %1134 = vector.extract_strided_slice %1133 {offsets = [0, 0], sizes = [8, 128], strides = [1, 1]} : vector<8x512xf32> to vector<8x128xf32>
    %cst_377 = arith.constant 5.000000e-01 : f32
    %1135 = vector.broadcast %cst_377 : f32 to vector<8x128xf32>
    %1136 = arith.mulf %1135, %1134 : vector<8x128xf32>
    %1137 = math.tanh %1136 : vector<8x128xf32>
    %cst_378 = arith.constant 5.000000e-01 : f32
    %1138 = vector.broadcast %cst_378 : f32 to vector<8x128xf32>
    %1139 = arith.mulf %1138, %1137 : vector<8x128xf32>
    %cst_379 = arith.constant 5.000000e-01 : f32
    %1140 = vector.broadcast %cst_379 : f32 to vector<8x128xf32>
    %1141 = arith.addf %1139, %1140 : vector<8x128xf32>
    %1142 = vector.extract_strided_slice %1133 {offsets = [0, 128], sizes = [8, 128], strides = [1, 1]} : vector<8x512xf32> to vector<8x128xf32>
    %cst_380 = arith.constant 5.000000e-01 : f32
    %1143 = vector.broadcast %cst_380 : f32 to vector<8x128xf32>
    %1144 = arith.mulf %1143, %1142 : vector<8x128xf32>
    %1145 = math.tanh %1144 : vector<8x128xf32>
    %cst_381 = arith.constant 5.000000e-01 : f32
    %1146 = vector.broadcast %cst_381 : f32 to vector<8x128xf32>
    %1147 = arith.mulf %1146, %1145 : vector<8x128xf32>
    %cst_382 = arith.constant 5.000000e-01 : f32
    %1148 = vector.broadcast %cst_382 : f32 to vector<8x128xf32>
    %1149 = arith.addf %1147, %1148 : vector<8x128xf32>
    %1150 = vector.extract_strided_slice %1133 {offsets = [0, 256], sizes = [8, 128], strides = [1, 1]} : vector<8x512xf32> to vector<8x128xf32>
    %1151 = math.tanh %1150 : vector<8x128xf32>
    %1152 = vector.extract_strided_slice %1133 {offsets = [0, 384], sizes = [8, 128], strides = [1, 1]} : vector<8x512xf32> to vector<8x128xf32>
    %cst_383 = arith.constant 5.000000e-01 : f32
    %1153 = vector.broadcast %cst_383 : f32 to vector<8x128xf32>
    %1154 = arith.mulf %1153, %1152 : vector<8x128xf32>
    %1155 = math.tanh %1154 : vector<8x128xf32>
    %cst_384 = arith.constant 5.000000e-01 : f32
    %1156 = vector.broadcast %cst_384 : f32 to vector<8x128xf32>
    %1157 = arith.mulf %1156, %1155 : vector<8x128xf32>
    %cst_385 = arith.constant 5.000000e-01 : f32
    %1158 = vector.broadcast %cst_385 : f32 to vector<8x128xf32>
    %1159 = arith.addf %1157, %1158 : vector<8x128xf32>
    %1160 = arith.mulf %1149, %1124 : vector<8x128xf32>
    %1161 = arith.mulf %1141, %1151 : vector<8x128xf32>
    %1162 = arith.addf %1160, %1161 : vector<8x128xf32>
    %1163 = math.tanh %1162 : vector<8x128xf32>
    %1164 = arith.mulf %1159, %1163 : vector<8x128xf32>
    %c56_386 = arith.constant 56 : index
    %c0_387 = arith.constant 0 : index
    %1165 = vector.load %arg14[%c56_386, %c0_387] : memref<64x128xf32, #tpu.memory_space<vmem>>, vector<8x128xf32>
    tpu.vector_store %arg14[%c56_386, %c0_387], %1164 {strides = array<i32>} : memref<64x128xf32, #tpu.memory_space<vmem>>, vector<8x128xf32>,
    %c0_388 = arith.constant 0 : index
    %c0_389 = arith.constant 0 : index
    %1166 = vector.load %arg14[%c0_388, %c0_389] : memref<64x128xf32, #tpu.memory_space<vmem>>, vector<64x128xf32>
    %1167 = arith.truncf %1166 : vector<64x128xf32> to vector<64x128xbf16>
    %c0_390 = arith.constant 0 : index
    %c0_391 = arith.constant 0 : index
    %1168 = vector.load %arg10[%c0_390, %c0_391] : memref<128x128xbf16, #tpu.memory_space<vmem>>, vector<128x128xbf16>
    %cst_392 = arith.constant dense<0.000000e+00> : vector<64x128xf32>
    %1169 = tpu.matmul %1167, %1168, %cst_392 {dimension_numbers = #tpu.dot_dimension_numbers<[1], [0], [0], [1], [0, 0, 1, 1], [], []>} : vector<64x128xbf16>, vector<128x128xbf16>, vector<64x128xf32> -> vector<64x128xf32>
    %c0_393 = arith.constant 0 : index
    %c0_394 = arith.constant 0 : index
    %1170 = vector.load %arg11[%c0_393, %c0_394] : memref<1x128xf32, #tpu.memory_space<vmem>>, vector<1x128xf32>
    %1171 = vector.broadcast %1170 : vector<1x128xf32> to vector<64x128xf32>
    %1172 = arith.addf %1169, %1171 : vector<64x128xf32>
    %c0_395 = arith.constant 0 : index
    %c0_396 = arith.constant 0 : index
    %1173 = vector.load %arg12[%c0_395, %c0_396] : memref<64x128xf32, #tpu.memory_space<vmem>>, vector<64x128xf32>
    tpu.vector_store %arg12[%c0_395, %c0_396], %1172 {strides = array<i32>} : memref<64x128xf32, #tpu.memory_space<vmem>>, vector<64x128xf32>,
    return
  }
}

</mosaic_0001>

<llo_original>
// kernel: recurrent_autoencoder_forward.1
$region0: #{recurrent_autoencoder_forward.1}
  #allocation0 [shape = 'u32[]', space=smem, size = 0x4, offset = 0x4, fixed_abs, tag = 'smem constant byte address 0x4 - core index']
  #allocation1 [shape = 'u32[144,128]{1,0:T(1,128)}', space=vmem, size = 0x12000, scoped, tag = 'internal scratch']
  #allocation2 [shape = 'f32[64,512]{1,0:T(8,128)}', space=vmem, size = 0x20000, scoped, tag = 'scratch operand']
  #allocation3 [shape = 'f32[64,128]{1,0:T(8,128)}', space=vmem, size = 0x8000, scoped, tag = 'scratch operand']
  %s0 = inlined_call_operand.vmem [shape: bf16[64,128], index: 0, kind: input, shape index: {}]
  %s1 = inlined_call_operand.vmem [shape: bf16[8,8], index: 1, kind: input, shape index: {}]
  %s2 = inlined_call_operand.vmem [shape: bf16[128,512], index: 2, kind: input, shape index: {}]
  %s3 = inlined_call_operand.vmem [shape: f32[1,512], index: 3, kind: input, shape index: {}]
  %s4 = inlined_call_operand.vmem [shape: bf16[256,1024], index: 4, kind: input, shape index: {}]
  %s5 = inlined_call_operand.vmem [shape: f32[1,512], index: 5, kind: input, shape index: {}]
  %s6 = inlined_call_operand.vmem [shape: bf16[128,512], index: 6, kind: input, shape index: {}]
  %s7 = inlined_call_operand.vmem [shape: f32[1,512], index: 7, kind: input, shape index: {}]
  %s8 = inlined_call_operand.vmem [shape: bf16[256,1024], index: 8, kind: input, shape index: {}]
  %s9 = inlined_call_operand.vmem [shape: f32[1,512], index: 9, kind: input, shape index: {}]
  %s10 = inlined_call_operand.vmem [shape: bf16[128,128], index: 10, kind: input, shape index: {}]
  %s11 = inlined_call_operand.vmem [shape: f32[1,128], index: 11, kind: input, shape index: {}]
  %s12 = inlined_call_operand.vmem [shape: f32[64,128], index: 12, kind: output, shape index: {}]
  %s13 = sld [smem:[#allocation0]]
  $region58: #{recurrent_autoencoder_forward.1} parent=0
    _
  %s15 = ssub.s32 1, %s13
  %s16 = scalar_select 0, %s15, %s13
  // Predicated region
  $region2: #{recurrent_autoencoder_forward.1} parent=0 // pred_check
    _
  $region3: #{recurrent_autoencoder_forward.1} parent=0 // pred_check_branch
    %18 = sbr.rel (0) target = $region5
  $region4: #{recurrent_autoencoder_forward.1} parent=0 // pred_region
    _
  $region5: #{recurrent_autoencoder_forward.1} parent=0 // pred_fallthru
    _
  // Predicated region
  $region6: #{recurrent_autoencoder_forward.1} parent=0 // pred_check
    _
  $region7: #{recurrent_autoencoder_forward.1} parent=0 // pred_check_branch
    %20 = sbr.rel (0) target = $region9
  $region8: #{recurrent_autoencoder_forward.1} parent=0 // pred_region
    _
  $region9: #{recurrent_autoencoder_forward.1} parent=0 // pred_fallthru
    _
  // Predicated region
  $region10: #{recurrent_autoencoder_forward.1} parent=0 // pred_check
    _
  $region11: #{recurrent_autoencoder_forward.1} parent=0 // pred_check_branch
    %22 = sbr.rel (0) target = $region13
  $region12: #{recurrent_autoencoder_forward.1} parent=0 // pred_region
    _
  $region13: #{recurrent_autoencoder_forward.1} parent=0 // pred_fallthru
    _
  // Predicated region
  $region14: #{recurrent_autoencoder_forward.1} parent=0 // pred_check
    _
  $region15: #{recurrent_autoencoder_forward.1} parent=0 // pred_check_branch
    %24 = sbr.rel (0) target = $region17
  $region16: #{recurrent_autoencoder_forward.1} parent=0 // pred_region
    _
  $region17: #{recurrent_autoencoder_forward.1} parent=0 // pred_fallthru
    _
  // Predicated region
  $region18: #{recurrent_autoencoder_forward.1} parent=0 // pred_check
    _
  $region19: #{recurrent_autoencoder_forward.1} parent=0 // pred_check_branch
    %26 = sbr.rel (0) target = $region21
  $region20: #{recurrent_autoencoder_forward.1} parent=0 // pred_region
    _
  $region21: #{recurrent_autoencoder_forward.1} parent=0 // pred_fallthru
    _
  // Predicated region
  $region22: #{recurrent_autoencoder_forward.1} parent=0 // pred_check
    _
  $region23: #{recurrent_autoencoder_forward.1} parent=0 // pred_check_branch
    %28 = sbr.rel (0) target = $region25
  $region24: #{recurrent_autoencoder_forward.1} parent=0 // pred_region
    _
  $region25: #{recurrent_autoencoder_forward.1} parent=0 // pred_fallthru
    _
  // Predicated region
  $region26: #{recurrent_autoencoder_forward.1} parent=0 // pred_check
    _
  $region27: #{recurrent_autoencoder_forward.1} parent=0 // pred_check_branch
    %30 = sbr.rel (0) target = $region29
  $region28: #{recurrent_autoencoder_forward.1} parent=0 // pred_region
    _
  $region29: #{recurrent_autoencoder_forward.1} parent=0 // pred_fallthru
    _
  // Predicated region
  $region30: #{recurrent_autoencoder_forward.1} parent=0 // pred_check
    _
  $region31: #{recurrent_autoencoder_forward.1} parent=0 // pred_check_branch
    %32 = sbr.rel (0) target = $region33
  $region32: #{recurrent_autoencoder_forward.1} parent=0 // pred_region
    _
  $region33: #{recurrent_autoencoder_forward.1} parent=0 // pred_fallthru
    _
  // Predicated region
  $region34: #{recurrent_autoencoder_forward.1} parent=0 // pred_check
    _
  $region35: #{recurrent_autoencoder_forward.1} parent=0 // pred_check_branch
    %34 = sbr.rel (0) target = $region37
  $region36: #{recurrent_autoencoder_forward.1} parent=0 // pred_region
    _
  $region37: #{recurrent_autoencoder_forward.1} parent=0 // pred_fallthru
    _
  // Predicated region
  $region38: #{recurrent_autoencoder_forward.1} parent=0 // pred_check
    _
  $region39: #{recurrent_autoencoder_forward.1} parent=0 // pred_check_branch
    %36 = sbr.rel (0) target = $region41
  $region40: #{recurrent_autoencoder_forward.1} parent=0 // pred_region
    _
  $region41: #{recurrent_autoencoder_forward.1} parent=0 // pred_fallthru
    _
  // Predicated region
  $region42: #{recurrent_autoencoder_forward.1} parent=0 // pred_check
    _
  $region43: #{recurrent_autoencoder_forward.1} parent=0 // pred_check_branch
    %38 = sbr.rel (0) target = $region45
  $region44: #{recurrent_autoencoder_forward.1} parent=0 // pred_region
    _
  $region45: #{recurrent_autoencoder_forward.1} parent=0 // pred_fallthru
    _
  // Predicated region
  $region46: #{recurrent_autoencoder_forward.1} parent=0 // pred_check
    _
  $region47: #{recurrent_autoencoder_forward.1} parent=0 // pred_check_branch
    %40 = sbr.rel (0) target = $region49
  $region48: #{recurrent_autoencoder_forward.1} parent=0 // pred_region
    _
  $region49: #{recurrent_autoencoder_forward.1} parent=0 // pred_fallthru
    _
  %v42 = vld [vmem:[%s0] sm:$0xf]
  %v43 = vld [vmem:[%s0 + $0x4] sm:$0xf]
  %v44 = vld [vmem:[%s0 + $0x8] sm:$0xf]
  %v45 = vld [vmem:[%s0 + $0xc] sm:$0xf]
  %v46 = vld [vmem:[%s0 + $0x10] sm:$0xf]
  %v47 = vld [vmem:[%s0 + $0x14] sm:$0xf]
  %v48 = vld [vmem:[%s0 + $0x18] sm:$0xf]
  %v49 = vld [vmem:[%s0 + $0x1c] sm:$0xf]
  %v50 = vld [vmem:[%s2] sm:$0xff]
  %v51 = vld [vmem:[%s2 + $0x8] sm:$0xff]
  %v52 = vld [vmem:[%s2 + $0x10] sm:$0xff]
  %v53 = vld [vmem:[%s2 + $0x18] sm:$0xff]
  %v54 = vld [vmem:[%s2 + $0x20] sm:$0xff]
  %v55 = vld [vmem:[%s2 + $0x28] sm:$0xff]
  %v56 = vld [vmem:[%s2 + $0x30] sm:$0xff]
  %v57 = vld [vmem:[%s2 + $0x38] sm:$0xff]
  %v58 = vld [vmem:[%s2 + $0x40] sm:$0xff]
  %v59 = vld [vmem:[%s2 + $0x48] sm:$0xff]
  %v60 = vld [vmem:[%s2 + $0x50] sm:$0xff]
  %v61 = vld [vmem:[%s2 + $0x58] sm:$0xff]
  %v62 = vld [vmem:[%s2 + $0x60] sm:$0xff]
  %v63 = vld [vmem:[%s2 + $0x68] sm:$0xff]
  %v64 = vld [vmem:[%s2 + $0x70] sm:$0xff]
  %v65 = vld [vmem:[%s2 + $0x78] sm:$0xff]
  %v66 = vld [vmem:[%s2 + $0x80] sm:$0xff]
  %v67 = vld [vmem:[%s2 + $0x88] sm:$0xff]
  %v68 = vld [vmem:[%s2 + $0x90] sm:$0xff]
  %v69 = vld [vmem:[%s2 + $0x98] sm:$0xff]
  %v70 = vld [vmem:[%s2 + $0xa0] sm:$0xff]
  %v71 = vld [vmem:[%s2 + $0xa8] sm:$0xff]
  %v72 = vld [vmem:[%s2 + $0xb0] sm:$0xff]
  %v73 = vld [vmem:[%s2 + $0xb8] sm:$0xff]
  %v74 = vld [vmem:[%s2 + $0xc0] sm:$0xff]
  %v75 = vld [vmem:[%s2 + $0xc8] sm:$0xff]
  %v76 = vld [vmem:[%s2 + $0xd0] sm:$0xff]
  %v77 = vld [vmem:[%s2 + $0xd8] sm:$0xff]
  %v78 = vld [vmem:[%s2 + $0xe0] sm:$0xff]
  %v79 = vld [vmem:[%s2 + $0xe8] sm:$0xff]
  %v80 = vld [vmem:[%s2 + $0xf0] sm:$0xff]
  %v81 = vld [vmem:[%s2 + $0xf8] sm:$0xff]
  %v82 = vld [vmem:[%s3] sm:$0xf]
  %v84 = vlaneseq
  %v85 = vshrl.u32 %v84, 7
  %v86 = vsub.s32 0, %v85
  %v87 = vrot.slane %v82, %v86
  %v88 = vlaneseq
  %v89 = vshrl.u32 %v88, 7
  %v90 = vsub.s32 1, %v89
  %v91 = vrot.slane %v82, %v90
  %v92 = vlaneseq
  %v93 = vshrl.u32 %v92, 7
  %v94 = vsub.s32 2, %v93
  %v95 = vrot.slane %v82, %v94
  %v96 = vlaneseq
  %v97 = vshrl.u32 %v96, 7
  %v98 = vsub.s32 3, %v97
  %v99 = vrot.slane %v82, %v98
  %v112 = vunpack.c.l.b16 %v42
  %v113 = vunpack.c.l.b16 %v43
  %v114 = vunpack.c.l.b16 %v44
  %v115 = vunpack.c.l.b16 %v45
  %v116 = vunpack.c.l.b16 %v46
  %v117 = vunpack.c.l.b16 %v47
  %v118 = vunpack.c.l.b16 %v48
  %v119 = vunpack.c.l.b16 %v49
  %v120 = vpack.c.b16 %v113, %v112
  %v121 = vpack.c.b16 %v115, %v114
  %v122 = vpack.c.b16 %v117, %v116
  %v123 = vpack.c.b16 %v119, %v118
  %v160 = vunpack.c.l.b16 %v50
  %v161 = vunpack.c.h.b16 %v50
  %v162 = vunpack.c.l.b16 %v51
  %v163 = vunpack.c.h.b16 %v51
  %v164 = vunpack.c.l.b16 %v52
  %v165 = vunpack.c.h.b16 %v52
  %v166 = vunpack.c.l.b16 %v53
  %v167 = vunpack.c.h.b16 %v53
  %v168 = vunpack.c.l.b16 %v54
  %v169 = vunpack.c.h.b16 %v54
  %v170 = vunpack.c.l.b16 %v55
  %v171 = vunpack.c.h.b16 %v55
  %v172 = vunpack.c.l.b16 %v56
  %v173 = vunpack.c.h.b16 %v56
  %v174 = vunpack.c.l.b16 %v57
  %v175 = vunpack.c.h.b16 %v57
  %v176 = vunpack.c.l.b16 %v58
  %v177 = vunpack.c.h.b16 %v58
  %v178 = vunpack.c.l.b16 %v59
  %v179 = vunpack.c.h.b16 %v59
  %v180 = vunpack.c.l.b16 %v60
  %v181 = vunpack.c.h.b16 %v60
  %v182 = vunpack.c.l.b16 %v61
  %v183 = vunpack.c.h.b16 %v61
  %v184 = vunpack.c.l.b16 %v62
  %v185 = vunpack.c.h.b16 %v62
  %v186 = vunpack.c.l.b16 %v63
  %v187 = vunpack.c.h.b16 %v63
  %v188 = vunpack.c.l.b16 %v64
  %v189 = vunpack.c.h.b16 %v64
  %v190 = vunpack.c.l.b16 %v65
  %v191 = vunpack.c.h.b16 %v65
  %v192 = vunpack.c.l.b16 %v66
  %v193 = vunpack.c.h.b16 %v66
  %v194 = vunpack.c.l.b16 %v67
  %v195 = vunpack.c.h.b16 %v67
  %v196 = vunpack.c.l.b16 %v68
  %v197 = vunpack.c.h.b16 %v68
  %v198 = vunpack.c.l.b16 %v69
  %v199 = vunpack.c.h.b16 %v69
  %v200 = vunpack.c.l.b16 %v70
  %v201 = vunpack.c.h.b16 %v70
  %v202 = vunpack.c.l.b16 %v71
  %v203 = vunpack.c.h.b16 %v71
  %v204 = vunpack.c.l.b16 %v72
  %v205 = vunpack.c.h.b16 %v72
  %v206 = vunpack.c.l.b16 %v73
  %v207 = vunpack.c.h.b16 %v73
  %v208 = vunpack.c.l.b16 %v74
  %v209 = vunpack.c.h.b16 %v74
  %v210 = vunpack.c.l.b16 %v75
  %v211 = vunpack.c.h.b16 %v75
  %v212 = vunpack.c.l.b16 %v76
  %v213 = vunpack.c.h.b16 %v76
  %v214 = vunpack.c.l.b16 %v77
  %v215 = vunpack.c.h.b16 %v77
  %v216 = vunpack.c.l.b16 %v78
  %v217 = vunpack.c.h.b16 %v78
  %v218 = vunpack.c.l.b16 %v79
  %v219 = vunpack.c.h.b16 %v79
  %v220 = vunpack.c.l.b16 %v80
  %v221 = vunpack.c.h.b16 %v80
  %v222 = vunpack.c.l.b16 %v81
  %v223 = vunpack.c.h.b16 %v81
  %v224 = vpack.c.b16 %v164, %v160
  %v225 = vpack.c.b16 %v165, %v161
  %v226 = vpack.c.b16 %v166, %v162
  %v227 = vpack.c.b16 %v167, %v163
  %v228 = vpack.c.b16 %v172, %v168
  %v229 = vpack.c.b16 %v173, %v169
  %v230 = vpack.c.b16 %v174, %v170
  %v231 = vpack.c.b16 %v175, %v171
  %v232 = vpack.c.b16 %v180, %v176
  %v233 = vpack.c.b16 %v181, %v177
  %v234 = vpack.c.b16 %v182, %v178
  %v235 = vpack.c.b16 %v183, %v179
  %v236 = vpack.c.b16 %v188, %v184
  %v237 = vpack.c.b16 %v189, %v185
  %v238 = vpack.c.b16 %v190, %v186
  %v239 = vpack.c.b16 %v191, %v187
  %v240 = vpack.c.b16 %v196, %v192
  %v241 = vpack.c.b16 %v197, %v193
  %v242 = vpack.c.b16 %v198, %v194
  %v243 = vpack.c.b16 %v199, %v195
  %v244 = vpack.c.b16 %v204, %v200
  %v245 = vpack.c.b16 %v205, %v201
  %v246 = vpack.c.b16 %v206, %v202
  %v247 = vpack.c.b16 %v207, %v203
  %v248 = vpack.c.b16 %v212, %v208
  %v249 = vpack.c.b16 %v213, %v209
  %v250 = vpack.c.b16 %v214, %v210
  %v251 = vpack.c.b16 %v215, %v211
  %v252 = vpack.c.b16 %v220, %v216
  %v253 = vpack.c.b16 %v221, %v217
  %v254 = vpack.c.b16 %v222, %v218
  %v255 = vpack.c.b16 %v223, %v219
  %288 = vmatprep.subr.bf16.mxu0 %v225
  %289 = vmatpush1.bf16.msra.mxu0 %v224
  %290 = vmatprep.subr.bf16.mxu0 %v229
  %291 = vmatpush1.bf16.msra.mxu0 %v228
  %292 = vmatprep.subr.bf16.mxu0 %v233
  %293 = vmatpush1.bf16.msra.mxu0 %v232
  %294 = vmatprep.subr.bf16.mxu0 %v237
  %295 = vmatpush1.bf16.msra.mxu0 %v236
  %296 = vmatprep.subr.bf16.mxu0 %v241
  %297 = vmatpush1.bf16.msra.mxu0 %v240
  %298 = vmatprep.subr.bf16.mxu0 %v245
  %299 = vmatpush1.bf16.msra.mxu0 %v244
  %300 = vmatprep.subr.bf16.mxu0 %v249
  %301 = vmatpush1.bf16.msra.mxu0 %v248
  %302 = vmatprep.subr.bf16.mxu0 %v253
  %303 = vmatpush1.bf16.msra.mxu0 %v252
  %304 = vmatprep.subr.bf16.mxu0 0
  %305 = vmatpush1.bf16.msra.mxu0 0
  %306 = vmatprep.subr.bf16.mxu0 0
  %307 = vmatpush1.bf16.msra.mxu0 0
  %308 = vmatprep.subr.bf16.mxu0 0
  %309 = vmatpush1.bf16.msra.mxu0 0
  %310 = vmatprep.subr.bf16.mxu0 0
  %311 = vmatpush1.bf16.msra.mxu0 0
  %312 = vmatprep.subr.bf16.mxu0 0
  %313 = vmatpush1.bf16.msra.mxu0 0
  %314 = vmatprep.subr.bf16.mxu0 0
  %315 = vmatpush1.bf16.msra.mxu0 0
  %316 = vmatprep.subr.bf16.mxu0 0
  %317 = vmatpush1.bf16.msra.mxu0 0
  %318 = vmatprep.subr.bf16.mxu0 0
  %319 = vmatpush1.bf16.msra.mxu0 0
  %320 = vmatprep.mubr.bf16.mxu0 0
  %321 = vmatmul.mubr.bf16.gmra.mrb[0].mxu0 %v120
  %v322 = vpop.f32.mrb[0].mxu0
  %v323 = vadd.f32 %v87, %v322
  %v324 = vpop.f32.mrb[0].mxu0
  %v325 = vadd.f32 %v91, %v324
  %v326 = vpop.f32.mrb[0].mxu0
  %v327 = vadd.f32 %v87, %v326
  %v328 = vpop.f32.mrb[0].mxu0
  %v329 = vadd.f32 %v91, %v328
  %330 = vmatprep.mubr.bf16.mxu0 0
  %331 = vmatmul.mubr.bf16.gmra.mrb[0].mxu0 %v121
  %v332 = vpop.f32.mrb[0].mxu0
  %v333 = vadd.f32 %v87, %v332
  %v334 = vpop.f32.mrb[0].mxu0
  %v335 = vadd.f32 %v91, %v334
  %v336 = vpop.f32.mrb[0].mxu0
  %v337 = vadd.f32 %v87, %v336
  %v338 = vpop.f32.mrb[0].mxu0
  %v339 = vadd.f32 %v91, %v338
  %340 = vmatprep.mubr.bf16.mxu0 0
  %341 = vmatmul.mubr.bf16.gmra.mrb[0].mxu0 %v122
  %v342 = vpop.f32.mrb[0].mxu0
  %v343 = vadd.f32 %v87, %v342
  %v344 = vpop.f32.mrb[0].mxu0
  %v345 = vadd.f32 %v91, %v344
  %v346 = vpop.f32.mrb[0].mxu0
  %v347 = vadd.f32 %v87, %v346
  %v348 = vpop.f32.mrb[0].mxu0
  %v349 = vadd.f32 %v91, %v348
  %350 = vmatprep.mubr.bf16.mxu0 0
  %351 = vmatmul.mubr.bf16.gmra.mrb[0].mxu0 %v123
  %v352 = vpop.f32.mrb[0].mxu0
  %v353 = vadd.f32 %v87, %v352
  %v354 = vpop.f32.mrb[0].mxu0
  %v355 = vadd.f32 %v91, %v354
  %v356 = vpop.f32.mrb[0].mxu0
  %v357 = vadd.f32 %v87, %v356
  %v358 = vpop.f32.mrb[0].mxu0
  %v359 = vadd.f32 %v91, %v358
  %360 = vdwg.mxu0
  %361 = vmatprep.subr.bf16.mxu0 %v227
  %362 = vmatpush1.bf16.msra.mxu0 %v226
  %363 = vmatprep.subr.bf16.mxu0 %v231
  %364 = vmatpush1.bf16.msra.mxu0 %v230
  %365 = vmatprep.subr.bf16.mxu0 %v235
  %366 = vmatpush1.bf16.msra.mxu0 %v234
  %367 = vmatprep.subr.bf16.mxu0 %v239
  %368 = vmatpush1.bf16.msra.mxu0 %v238
  %369 = vmatprep.subr.bf16.mxu0 %v243
  %370 = vmatpush1.bf16.msra.mxu0 %v242
  %371 = vmatprep.subr.bf16.mxu0 %v247
  %372 = vmatpush1.bf16.msra.mxu0 %v246
  %373 = vmatprep.subr.bf16.mxu0 %v251
  %374 = vmatpush1.bf16.msra.mxu0 %v250
  %375 = vmatprep.subr.bf16.mxu0 %v255
  %376 = vmatpush1.bf16.msra.mxu0 %v254
  %377 = vmatprep.subr.bf16.mxu0 0
  %378 = vmatpush1.bf16.msra.mxu0 0
  %379 = vmatprep.subr.bf16.mxu0 0
  %380 = vmatpush1.bf16.msra.mxu0 0
  %381 = vmatprep.subr.bf16.mxu0 0
  %382 = vmatpush1.bf16.msra.mxu0 0
  %383 = vmatprep.subr.bf16.mxu0 0
  %384 = vmatpush1.bf16.msra.mxu0 0
  %385 = vmatprep.subr.bf16.mxu0 0
  %386 = vmatpush1.bf16.msra.mxu0 0
  %387 = vmatprep.subr.bf16.mxu0 0
  %388 = vmatpush1.bf16.msra.mxu0 0
  %389 = vmatprep.subr.bf16.mxu0 0
  %390 = vmatpush1.bf16.msra.mxu0 0
  %391 = vmatprep.subr.bf16.mxu0 0
  %392 = vmatpush1.bf16.msra.mxu0 0
  %393 = vmatprep.mubr.bf16.mxu0 0
  %394 = vmatmul.mubr.bf16.gmra.mrb[0].mxu0 %v120
  %v395 = vpop.f32.mrb[0].mxu0
  %v396 = vadd.f32 %v95, %v395
  %v397 = vpop.f32.mrb[0].mxu0
  %v398 = vadd.f32 %v99, %v397
  %v399 = vpop.f32.mrb[0].mxu0
  %v400 = vadd.f32 %v95, %v399
  %v401 = vpop.f32.mrb[0].mxu0
  %v402 = vadd.f32 %v99, %v401
  %403 = vmatprep.mubr.bf16.mxu0 0
  %404 = vmatmul.mubr.bf16.gmra.mrb[0].mxu0 %v121
  %v405 = vpop.f32.mrb[0].mxu0
  %v406 = vadd.f32 %v95, %v405
  %v407 = vpop.f32.mrb[0].mxu0
  %v408 = vadd.f32 %v99, %v407
  %v409 = vpop.f32.mrb[0].mxu0
  %v410 = vadd.f32 %v95, %v409
  %v411 = vpop.f32.mrb[0].mxu0
  %v412 = vadd.f32 %v99, %v411
  %413 = vmatprep.mubr.bf16.mxu0 0
  %414 = vmatmul.mubr.bf16.gmra.mrb[0].mxu0 %v122
  %v415 = vpop.f32.mrb[0].mxu0
  %v416 = vadd.f32 %v95, %v415
  %v417 = vpop.f32.mrb[0].mxu0
  %v418 = vadd.f32 %v99, %v417
  %v419 = vpop.f32.mrb[0].mxu0
  %v420 = vadd.f32 %v95, %v419
  %v421 = vpop.f32.mrb[0].mxu0
  %v422 = vadd.f32 %v99, %v421
  %423 = vmatprep.mubr.bf16.mxu0 0
  %424 = vmatmul.mubr.bf16.gmra.mrb[0].mxu0 %v123
  %v425 = vpop.f32.mrb[0].mxu0
  %v426 = vadd.f32 %v95, %v425
  %v427 = vpop.f32.mrb[0].mxu0
  %v428 = vadd.f32 %v99, %v427
  %v429 = vpop.f32.mrb[0].mxu0
  %v430 = vadd.f32 %v95, %v429
  %v431 = vpop.f32.mrb[0].mxu0
  %v432 = vadd.f32 %v99, %v431
  %433 = vdwg.mxu0
  %434 = vst [vmem:[#allocation2] sm:$0xff] %v323
  %435 = vst [vmem:[#allocation2 + $0x8] sm:$0xff] %v325
  %436 = vst [vmem:[#allocation2 + $0x10] sm:$0xff] %v396
  %437 = vst [vmem:[#allocation2 + $0x18] sm:$0xff] %v398
  %438 = vst [vmem:[#allocation2 + $0x20] sm:$0xff] %v327
  %439 = vst [vmem:[#allocation2 + $0x28] sm:$0xff] %v329
  %440 = vst [vmem:[#allocation2 + $0x30] sm:$0xff] %v400
  %441 = vst [vmem:[#allocation2 + $0x38] sm:$0xff] %v402
  %442 = vst [vmem:[#allocation2 + $0x40] sm:$0xff] %v333
  %443 = vst [vmem:[#allocation2 + $0x48] sm:$0xff] %v335
  %444 = vst [vmem:[#allocation2 + $0x50] sm:$0xff] %v406
  %445 = vst [vmem:[#allocation2 + $0x58] sm:$0xff] %v408
  %446 = vst [vmem:[#allocation2 + $0x60] sm:$0xff] %v337
  %447 = vst [vmem:[#allocation2 + $0x68] sm:$0xff] %v339
  %448 = vst [vmem:[#allocation2 + $0x70] sm:$0xff] %v410
  %449 = vst [vmem:[#allocation2 + $0x78] sm:$0xff] %v412
  %450 = vst [vmem:[#allocation2 + $0x80] sm:$0xff] %v343
  %451 = vst [vmem:[#allocation2 + $0x88] sm:$0xff] %v345
  %452 = vst [vmem:[#allocation2 + $0x90] sm:$0xff] %v416
  %453 = vst [vmem:[#allocation2 + $0x98] sm:$0xff] %v418
  %454 = vst [vmem:[#allocation2 + $0xa0] sm:$0xff] %v347
  %455 = vst [vmem:[#allocation2 + $0xa8] sm:$0xff] %v349
  %456 = vst [vmem:[#allocation2 + $0xb0] sm:$0xff] %v420
  %457 = vst [vmem:[#allocation2 + $0xb8] sm:$0xff] %v422
  %458 = vst [vmem:[#allocation2 + $0xc0] sm:$0xff] %v353
  %459 = vst [vmem:[#allocation2 + $0xc8] sm:$0xff] %v355
  %460 = vst [vmem:[#allocation2 + $0xd0] sm:$0xff] %v426
  %461 = vst [vmem:[#allocation2 + $0xd8] sm:$0xff] %v428
  %462 = vst [vmem:[#allocation2 + $0xe0] sm:$0xff] %v357
  %463 = vst [vmem:[#allocation2 + $0xe8] sm:$0xff] %v359
  %464 = vst [vmem:[#allocation2 + $0xf0] sm:$0xff] %v430
  %465 = vst [vmem:[#allocation2 + $0xf8] sm:$0xff] %v432
  %v466 = vld [vmem:[%s5] sm:$0xf]
  %v468 = vlaneseq
  %v469 = vshrl.u32 %v468, 7
  %v470 = vsub.s32 0, %v469
  %v471 = vrot.slane %v466, %v470
  %v472 = vlaneseq
  %v473 = vshrl.u32 %v472, 7
  %v474 = vsub.s32 1, %v473
  %v475 = vrot.slane %v466, %v474
  %v476 = vlaneseq
  %v477 = vshrl.u32 %v476, 7
  %v478 = vsub.s32 2, %v477
  %v479 = vrot.slane %v466, %v478
  %v480 = vlaneseq
  %v481 = vshrl.u32 %v480, 7
  %v482 = vsub.s32 3, %v481
  %v483 = vrot.slane %v466, %v482
  %v488 = vld [vmem:[#allocation2] sm:$0xff]
  %v489 = vld [vmem:[#allocation2 + $0x8] sm:$0xff]
  %v490 = vld [vmem:[#allocation2 + $0x10] sm:$0xff]
  %v491 = vld [vmem:[#allocation2 + $0x18] sm:$0xff]
  %v492 = vadd.f32 %v488, 0.0
  %v493 = vadd.f32 %v489, 0.0
  %v494 = vadd.f32 %v490, 0.0
  %v495 = vadd.f32 %v491, 0.0
  %v496 = vmul.f32 %v492, 0.5
  %v497 = vtanh.pop %v496
  %v498 = vmul.f32 %v497, 0.5
  %v499 = vadd.f32 %v498, 0.5
  %v500 = vmul.f32 %v493, 0.5
  %v501 = vtanh.pop %v500
  %v502 = vmul.f32 %v501, 0.5
  %v503 = vadd.f32 %v502, 0.5
  %v504 = vtanh.pop %v494
  %v505 = vmul.f32 %v495, 0.5
  %v506 = vtanh.pop %v505
  %v507 = vmul.f32 %v506, 0.5
  %v508 = vadd.f32 %v507, 0.5
  %v509 = vmul.f32 %v503, 0.0
  %v510 = vmul.f32 %v499, %v504
  %v511 = vadd.f32 %v509, %v510
  %v512 = vtanh.pop %v511
  %v513 = vmul.f32 %v508, %v512
  %v514 = vpack.c.bf16 %v513, %v513
  %v515 = vpack.c.bf16 0.0, 0.0
  %v516 = vld [vmem:[%s4] sm:$0xff]
  %v517 = vld [vmem:[%s4 + $0x8] sm:$0xff]
  %v518 = vld [vmem:[%s4 + $0x10] sm:$0xff]
  %v519 = vld [vmem:[%s4 + $0x18] sm:$0xff]
  %v520 = vld [vmem:[%s4 + $0x20] sm:$0xff]
  %v521 = vld [vmem:[%s4 + $0x28] sm:$0xff]
  %v522 = vld [vmem:[%s4 + $0x30] sm:$0xff]
  %v523 = vld [vmem:[%s4 + $0x38] sm:$0xff]
  %v524 = vld [vmem:[%s4 + $0x40] sm:$0xff]
  %v525 = vld [vmem:[%s4 + $0x48] sm:$0xff]
  %v526 = vld [vmem:[%s4 + $0x50] sm:$0xff]
  %v527 = vld [vmem:[%s4 + $0x58] sm:$0xff]
  %v528 = vld [vmem:[%s4 + $0x60] sm:$0xff]
  %v529 = vld [vmem:[%s4 + $0x68] sm:$0xff]
  %v530 = vld [vmem:[%s4 + $0x70] sm:$0xff]
  %v531 = vld [vmem:[%s4 + $0x78] sm:$0xff]
  %v532 = vld [vmem:[%s4 + $0x80] sm:$0xff]
  %v533 = vld [vmem:[%s4 + $0x88] sm:$0xff]
  %v534 = vld [vmem:[%s4 + $0x90] sm:$0xff]
  %v535 = vld [vmem:[%s4 + $0x98] sm:$0xff]
  %v536 = vld [vmem:[%s4 + $0xa0] sm:$0xff]
  %v537 = vld [vmem:[%s4 + $0xa8] sm:$0xff]
  %v538 = vld [vmem:[%s4 + $0xb0] sm:$0xff]
  %v539 = vld [vmem:[%s4 + $0xb8] sm:$0xff]
  %v540 = vld [vmem:[%s4 + $0xc0] sm:$0xff]
  %v541 = vld [vmem:[%s4 + $0xc8] sm:$0xff]
  %v542 = vld [vmem:[%s4 + $0xd0] sm:$0xff]
  %v543 = vld [vmem:[%s4 + $0xd8] sm:$0xff]
  %v544 = vld [vmem:[%s4 + $0xe0] sm:$0xff]
  %v545 = vld [vmem:[%s4 + $0xe8] sm:$0xff]
  %v546 = vld [vmem:[%s4 + $0xf0] sm:$0xff]
  %v547 = vld [vmem:[%s4 + $0xf8] sm:$0xff]
  %v548 = vld [vmem:[%s4 + $0x100] sm:$0xff]
  %v549 = vld [vmem:[%s4 + $0x108] sm:$0xff]
  %v550 = vld [vmem:[%s4 + $0x110] sm:$0xff]
  %v551 = vld [vmem:[%s4 + $0x118] sm:$0xff]
  %v552 = vld [vmem:[%s4 + $0x120] sm:$0xff]
  %v553 = vld [vmem:[%s4 + $0x128] sm:$0xff]
  %v554 = vld [vmem:[%s4 + $0x130] sm:$0xff]
  %v555 = vld [vmem:[%s4 + $0x138] sm:$0xff]
  %v556 = vld [vmem:[%s4 + $0x140] sm:$0xff]
  %v557 = vld [vmem:[%s4 + $0x148] sm:$0xff]
  %v558 = vld [vmem:[%s4 + $0x150] sm:$0xff]
  %v559 = vld [vmem:[%s4 + $0x158] sm:$0xff]
  %v560 = vld [vmem:[%s4 + $0x160] sm:$0xff]
  %v561 = vld [vmem:[%s4 + $0x168] sm:$0xff]
  %v562 = vld [vmem:[%s4 + $0x170] sm:$0xff]
  %v563 = vld [vmem:[%s4 + $0x178] sm:$0xff]
  %v564 = vld [vmem:[%s4 + $0x180] sm:$0xff]
  %v565 = vld [vmem:[%s4 + $0x188] sm:$0xff]
  %v566 = vld [vmem:[%s4 + $0x190] sm:$0xff]
  %v567 = vld [vmem:[%s4 + $0x198] sm:$0xff]
  %v568 = vld [vmem:[%s4 + $0x1a0] sm:$0xff]
  %v569 = vld [vmem:[%s4 + $0x1a8] sm:$0xff]
  %v570 = vld [vmem:[%s4 + $0x1b0] sm:$0xff]
  %v571 = vld [vmem:[%s4 + $0x1b8] sm:$0xff]
  %v572 = vld [vmem:[%s4 + $0x1c0] sm:$0xff]
  %v573 = vld [vmem:[%s4 + $0x1c8] sm:$0xff]
  %v574 = vld [vmem:[%s4 + $0x1d0] sm:$0xff]
  %v575 = vld [vmem:[%s4 + $0x1d8] sm:$0xff]
  %v576 = vld [vmem:[%s4 + $0x1e0] sm:$0xff]
  %v577 = vld [vmem:[%s4 + $0x1e8] sm:$0xff]
  %v578 = vld [vmem:[%s4 + $0x1f0] sm:$0xff]
  %v579 = vld [vmem:[%s4 + $0x1f8] sm:$0xff]
  %v580 = vld [vmem:[%s4 + $0x200] sm:$0xff]
  %v581 = vld [vmem:[%s4 + $0x208] sm:$0xff]
  %v582 = vld [vmem:[%s4 + $0x210] sm:$0xff]
  %v583 = vld [vmem:[%s4 + $0x218] sm:$0xff]
  %v584 = vld [vmem:[%s4 + $0x220] sm:$0xff]
  %v585 = vld [vmem:[%s4 + $0x228] sm:$0xff]
  %v586 = vld [vmem:[%s4 + $0x230] sm:$0xff]
  %v587 = vld [vmem:[%s4 + $0x238] sm:$0xff]
  %v588 = vld [vmem:[%s4 + $0x240] sm:$0xff]
  %v589 = vld [vmem:[%s4 + $0x248] sm:$0xff]
  %v590 = vld [vmem:[%s4 + $0x250] sm:$0xff]
  %v591 = vld [vmem:[%s4 + $0x258] sm:$0xff]
  %v592 = vld [vmem:[%s4 + $0x260] sm:$0xff]
  %v593 = vld [vmem:[%s4 + $0x268] sm:$0xff]
  %v594 = vld [vmem:[%s4 + $0x270] sm:$0xff]
  %v595 = vld [vmem:[%s4 + $0x278] sm:$0xff]
  %v596 = vld [vmem:[%s4 + $0x280] sm:$0xff]
  %v597 = vld [vmem:[%s4 + $0x288] sm:$0xff]
  %v598 = vld [vmem:[%s4 + $0x290] sm:$0xff]
  %v599 = vld [vmem:[%s4 + $0x298] sm:$0xff]
  %v600 = vld [vmem:[%s4 + $0x2a0] sm:$0xff]
  %v601 = vld [vmem:[%s4 + $0x2a8] sm:$0xff]
  %v602 = vld [vmem:[%s4 + $0x2b0] sm:$0xff]
  %v603 = vld [vmem:[%s4 + $0x2b8] sm:$0xff]
  %v604 = vld [vmem:[%s4 + $0x2c0] sm:$0xff]
  %v605 = vld [vmem:[%s4 + $0x2c8] sm:$0xff]
  %v606 = vld [vmem:[%s4 + $0x2d0] sm:$0xff]
  %v607 = vld [vmem:[%s4 + $0x2d8] sm:$0xff]
  %v608 = vld [vmem:[%s4 + $0x2e0] sm:$0xff]
  %v609 = vld [vmem:[%s4 + $0x2e8] sm:$0xff]
  %v610 = vld [vmem:[%s4 + $0x2f0] sm:$0xff]
  %v611 = vld [vmem:[%s4 + $0x2f8] sm:$0xff]
  %v612 = vld [vmem:[%s4 + $0x300] sm:$0xff]
  %v613 = vld [vmem:[%s4 + $0x308] sm:$0xff]
  %v614 = vld [vmem:[%s4 + $0x310] sm:$0xff]
  %v615 = vld [vmem:[%s4 + $0x318] sm:$0xff]
  %v616 = vld [vmem:[%s4 + $0x320] sm:$0xff]
  %v617 = vld [vmem:[%s4 + $0x328] sm:$0xff]
  %v618 = vld [vmem:[%s4 + $0x330] sm:$0xff]
  %v619 = vld [vmem:[%s4 + $0x338] sm:$0xff]
  %v620 = vld [vmem:[%s4 + $0x340] sm:$0xff]
  %v621 = vld [vmem:[%s4 + $0x348] sm:$0xff]
  %v622 = vld [vmem:[%s4 + $0x350] sm:$0xff]
  %v623 = vld [vmem:[%s4 + $0x358] sm:$0xff]
  %v624 = vld [vmem:[%s4 + $0x360] sm:$0xff]
  %v625 = vld [vmem:[%s4 + $0x368] sm:$0xff]
  %v626 = vld [vmem:[%s4 + $0x370] sm:$0xff]
  %v627 = vld [vmem:[%s4 + $0x378] sm:$0xff]
  %v628 = vld [vmem:[%s4 + $0x380] sm:$0xff]
  %v629 = vld [vmem:[%s4 + $0x388] sm:$0xff]
  %v630 = vld [vmem:[%s4 + $0x390] sm:$0xff]
  %v631 = vld [vmem:[%s4 + $0x398] sm:$0xff]
  %v632 = vld [vmem:[%s4 + $0x3a0] sm:$0xff]
  %v633 = vld [vmem:[%s4 + $0x3a8] sm:$0xff]
  %v634 = vld [vmem:[%s4 + $0x3b0] sm:$0xff]
  %v635 = vld [vmem:[%s4 + $0x3b8] sm:$0xff]
  %v636 = vld [vmem:[%s4 + $0x3c0] sm:$0xff]
  %v637 = vld [vmem:[%s4 + $0x3c8] sm:$0xff]
  %v638 = vld [vmem:[%s4 + $0x3d0] sm:$0xff]
  %v639 = vld [vmem:[%s4 + $0x3d8] sm:$0xff]
  %v640 = vld [vmem:[%s4 + $0x3e0] sm:$0xff]
  %v641 = vld [vmem:[%s4 + $0x3e8] sm:$0xff]
  %v642 = vld [vmem:[%s4 + $0x3f0] sm:$0xff]
  %v643 = vld [vmem:[%s4 + $0x3f8] sm:$0xff]
  %v772 = vunpack.c.l.b16 %v516
  %v773 = vunpack.c.h.b16 %v516
  %v774 = vunpack.c.l.b16 %v517
  %v775 = vunpack.c.h.b16 %v517
  %v776 = vunpack.c.l.b16 %v518
  %v777 = vunpack.c.h.b16 %v518
  %v778 = vunpack.c.l.b16 %v519
  %v779 = vunpack.c.h.b16 %v519
  %v780 = vunpack.c.l.b16 %v520
  %v781 = vunpack.c.h.b16 %v520
  %v782 = vunpack.c.l.b16 %v521
  %v783 = vunpack.c.h.b16 %v521
  %v784 = vunpack.c.l.b16 %v522
  %v785 = vunpack.c.h.b16 %v522
  %v786 = vunpack.c.l.b16 %v523
  %v787 = vunpack.c.h.b16 %v523
  %v788 = vunpack.c.l.b16 %v524
  %v789 = vunpack.c.h.b16 %v524
  %v790 = vunpack.c.l.b16 %v525
  %v791 = vunpack.c.h.b16 %v525
  %v792 = vunpack.c.l.b16 %v526
  %v793 = vunpack.c.h.b16 %v526
  %v794 = vunpack.c.l.b16 %v527
  %v795 = vunpack.c.h.b16 %v527
  %v796 = vunpack.c.l.b16 %v528
  %v797 = vunpack.c.h.b16 %v528
  %v798 = vunpack.c.l.b16 %v529
  %v799 = vunpack.c.h.b16 %v529
  %v800 = vunpack.c.l.b16 %v530
  %v801 = vunpack.c.h.b16 %v530
  %v802 = vunpack.c.l.b16 %v531
  %v803 = vunpack.c.h.b16 %v531
  %v804 = vunpack.c.l.b16 %v532
  %v805 = vunpack.c.h.b16 %v532
  %v806 = vunpack.c.l.b16 %v533
  %v807 = vunpack.c.h.b16 %v533
  %v808 = vunpack.c.l.b16 %v534
  %v809 = vunpack.c.h.b16 %v534
  %v810 = vunpack.c.l.b16 %v535
  %v811 = vunpack.c.h.b16 %v535
  %v812 = vunpack.c.l.b16 %v536
  %v813 = vunpack.c.h.b16 %v536
  %v814 = vunpack.c.l.b16 %v537
  %v815 = vunpack.c.h.b16 %v537
  %v816 = vunpack.c.l.b16 %v538
  %v817 = vunpack.c.h.b16 %v538
  %v818 = vunpack.c.l.b16 %v539
  %v819 = vunpack.c.h.b16 %v539
  %v820 = vunpack.c.l.b16 %v540
  %v821 = vunpack.c.h.b16 %v540
  %v822 = vunpack.c.l.b16 %v541
  %v823 = vunpack.c.h.b16 %v541
  %v824 = vunpack.c.l.b16 %v542
  %v825 = vunpack.c.h.b16 %v542
  %v826 = vunpack.c.l.b16 %v543
  %v827 = vunpack.c.h.b16 %v543
  %v828 = vunpack.c.l.b16 %v544
  %v829 = vunpack.c.h.b16 %v544
  %v830 = vunpack.c.l.b16 %v545
  %v831 = vunpack.c.h.b16 %v545
  %v832 = vunpack.c.l.b16 %v546
  %v833 = vunpack.c.h.b16 %v546
  %v834 = vunpack.c.l.b16 %v547
  %v835 = vunpack.c.h.b16 %v547
  %v836 = vunpack.c.l.b16 %v548
  %v837 = vunpack.c.h.b16 %v548
  %v838 = vunpack.c.l.b16 %v549
  %v839 = vunpack.c.h.b16 %v549
  %v840 = vunpack.c.l.b16 %v550
  %v841 = vunpack.c.h.b16 %v550
  %v842 = vunpack.c.l.b16 %v551
  %v843 = vunpack.c.h.b16 %v551
  %v844 = vunpack.c.l.b16 %v552
  %v845 = vunpack.c.h.b16 %v552
  %v846 = vunpack.c.l.b16 %v553
  %v847 = vunpack.c.h.b16 %v553
  %v848 = vunpack.c.l.b16 %v554
  %v849 = vunpack.c.h.b16 %v554
  %v850 = vunpack.c.l.b16 %v555
  %v851 = vunpack.c.h.b16 %v555
  %v852 = vunpack.c.l.b16 %v556
  %v853 = vunpack.c.h.b16 %v556
  %v854 = vunpack.c.l.b16 %v557
  %v855 = vunpack.c.h.b16 %v557
  %v856 = vunpack.c.l.b16 %v558
  %v857 = vunpack.c.h.b16 %v558
  %v858 = vunpack.c.l.b16 %v559
  %v859 = vunpack.c.h.b16 %v559
  %v860 = vunpack.c.l.b16 %v560
  %v861 = vunpack.c.h.b16 %v560
  %v862 = vunpack.c.l.b16 %v561
  %v863 = vunpack.c.h.b16 %v561
  %v864 = vunpack.c.l.b16 %v562
  %v865 = vunpack.c.h.b16 %v562
  %v866 = vunpack.c.l.b16 %v563
  %v867 = vunpack.c.h.b16 %v563
  %v868 = vunpack.c.l.b16 %v564
  %v869 = vunpack.c.h.b16 %v564
  %v870 = vunpack.c.l.b16 %v565
  %v871 = vunpack.c.h.b16 %v565
  %v872 = vunpack.c.l.b16 %v566
  %v873 = vunpack.c.h.b16 %v566
  %v874 = vunpack.c.l.b16 %v567
  %v875 = vunpack.c.h.b16 %v567
  %v876 = vunpack.c.l.b16 %v568
  %v877 = vunpack.c.h.b16 %v568
  %v878 = vunpack.c.l.b16 %v569
  %v879 = vunpack.c.h.b16 %v569
  %v880 = vunpack.c.l.b16 %v570
  %v881 = vunpack.c.h.b16 %v570
  %v882 = vunpack.c.l.b16 %v571
  %v883 = vunpack.c.h.b16 %v571
  %v884 = vunpack.c.l.b16 %v572
  %v885 = vunpack.c.h.b16 %v572
  %v886 = vunpack.c.l.b16 %v573
  %v887 = vunpack.c.h.b16 %v573
  %v888 = vunpack.c.l.b16 %v574
  %v889 = vunpack.c.h.b16 %v574
  %v890 = vunpack.c.l.b16 %v575
  %v891 = vunpack.c.h.b16 %v575
  %v892 = vunpack.c.l.b16 %v576
  %v893 = vunpack.c.h.b16 %v576
  %v894 = vunpack.c.l.b16 %v577
  %v895 = vunpack.c.h.b16 %v577
  %v896 = vunpack.c.l.b16 %v578
  %v897 = vunpack.c.h.b16 %v578
  %v898 = vunpack.c.l.b16 %v579
  %v899 = vunpack.c.h.b16 %v579
  %v900 = vunpack.c.l.b16 %v580
  %v901 = vunpack.c.h.b16 %v580
  %v902 = vunpack.c.l.b16 %v581
  %v903 = vunpack.c.h.b16 %v581
  %v904 = vunpack.c.l.b16 %v582
  %v905 = vunpack.c.h.b16 %v582
  %v906 = vunpack.c.l.b16 %v583
  %v907 = vunpack.c.h.b16 %v583
  %v908 = vunpack.c.l.b16 %v584
  %v909 = vunpack.c.h.b16 %v584
  %v910 = vunpack.c.l.b16 %v585
  %v911 = vunpack.c.h.b16 %v585
  %v912 = vunpack.c.l.b16 %v586
  %v913 = vunpack.c.h.b16 %v586
  %v914 = vunpack.c.l.b16 %v587
  %v915 = vunpack.c.h.b16 %v587
  %v916 = vunpack.c.l.b16 %v588
  %v917 = vunpack.c.h.b16 %v588
  %v918 = vunpack.c.l.b16 %v589
  %v919 = vunpack.c.h.b16 %v589
  %v920 = vunpack.c.l.b16 %v590
  %v921 = vunpack.c.h.b16 %v590
  %v922 = vunpack.c.l.b16 %v591
  %v923 = vunpack.c.h.b16 %v591
  %v924 = vunpack.c.l.b16 %v592
  %v925 = vunpack.c.h.b16 %v592
  %v926 = vunpack.c.l.b16 %v593
  %v927 = vunpack.c.h.b16 %v593
  %v928 = vunpack.c.l.b16 %v594
  %v929 = vunpack.c.h.b16 %v594
  %v930 = vunpack.c.l.b16 %v595
  %v931 = vunpack.c.h.b16 %v595
  %v932 = vunpack.c.l.b16 %v596
  %v933 = vunpack.c.h.b16 %v596
  %v934 = vunpack.c.l.b16 %v597
  %v935 = vunpack.c.h.b16 %v597
  %v936 = vunpack.c.l.b16 %v598
  %v937 = vunpack.c.h.b16 %v598
  %v938 = vunpack.c.l.b16 %v599
  %v939 = vunpack.c.h.b16 %v599
  %v940 = vunpack.c.l.b16 %v600
  %v941 = vunpack.c.h.b16 %v600
  %v942 = vunpack.c.l.b16 %v601
  %v943 = vunpack.c.h.b16 %v601
  %v944 = vunpack.c.l.b16 %v602
  %v945 = vunpack.c.h.b16 %v602
  %v946 = vunpack.c.l.b16 %v603
  %v947 = vunpack.c.h.b16 %v603
  %v948 = vunpack.c.l.b16 %v604
  %v949 = vunpack.c.h.b16 %v604
  %v950 = vunpack.c.l.b16 %v605
  %v951 = vunpack.c.h.b16 %v605
  %v952 = vunpack.c.l.b16 %v606
  %v953 = vunpack.c.h.b16 %v606
  %v954 = vunpack.c.l.b16 %v607
  %v955 = vunpack.c.h.b16 %v607
  %v956 = vunpack.c.l.b16 %v608
  %v957 = vunpack.c.h.b16 %v608
  %v958 = vunpack.c.l.b16 %v609
  %v959 = vunpack.c.h.b16 %v609
  %v960 = vunpack.c.l.b16 %v610
  %v961 = vunpack.c.h.b16 %v610
  %v962 = vunpack.c.l.b16 %v611
  %v963 = vunpack.c.h.b16 %v611
  %v964 = vunpack.c.l.b16 %v612
  %v965 = vunpack.c.h.b16 %v612
  %v966 = vunpack.c.l.b16 %v613
  %v967 = vunpack.c.h.b16 %v613
  %v968 = vunpack.c.l.b16 %v614
  %v969 = vunpack.c.h.b16 %v614
  %v970 = vunpack.c.l.b16 %v615
  %v971 = vunpack.c.h.b16 %v615
  %v972 = vunpack.c.l.b16 %v616
  %v973 = vunpack.c.h.b16 %v616
  %v974 = vunpack.c.l.b16 %v617
  %v975 = vunpack.c.h.b16 %v617
  %v976 = vunpack.c.l.b16 %v618
  %v977 = vunpack.c.h.b16 %v618
  %v978 = vunpack.c.l.b16 %v619
  %v979 = vunpack.c.h.b16 %v619
  %v980 = vunpack.c.l.b16 %v620
  %v981 = vunpack.c.h.b16 %v620
  %v982 = vunpack.c.l.b16 %v621
  %v983 = vunpack.c.h.b16 %v621
  %v984 = vunpack.c.l.b16 %v622
  %v985 = vunpack.c.h.b16 %v622
  %v986 = vunpack.c.l.b16 %v623
  %v987 = vunpack.c.h.b16 %v623
  %v988 = vunpack.c.l.b16 %v624
  %v989 = vunpack.c.h.b16 %v624
  %v990 = vunpack.c.l.b16 %v625
  %v991 = vunpack.c.h.b16 %v625
  %v992 = vunpack.c.l.b16 %v626
  %v993 = vunpack.c.h.b16 %v626
  %v994 = vunpack.c.l.b16 %v627
  %v995 = vunpack.c.h.b16 %v627
  %v996 = vunpack.c.l.b16 %v628
  %v997 = vunpack.c.h.b16 %v628
  %v998 = vunpack.c.l.b16 %v629
  %v999 = vunpack.c.h.b16 %v629
  %v1000 = vunpack.c.l.b16 %v630
  %v1001 = vunpack.c.h.b16 %v630
  %v1002 = vunpack.c.l.b16 %v631
  %v1003 = vunpack.c.h.b16 %v631
  %v1004 = vunpack.c.l.b16 %v632
  %v1005 = vunpack.c.h.b16 %v632
  %v1006 = vunpack.c.l.b16 %v633
  %v1007 = vunpack.c.h.b16 %v633
  %v1008 = vunpack.c.l.b16 %v634
  %v1009 = vunpack.c.h.b16 %v634
  %v1010 = vunpack.c.l.b16 %v635
  %v1011 = vunpack.c.h.b16 %v635
  %v1012 = vunpack.c.l.b16 %v636
  %v1013 = vunpack.c.h.b16 %v636
  %v1014 = vunpack.c.l.b16 %v637
  %v1015 = vunpack.c.h.b16 %v637
  %v1016 = vunpack.c.l.b16 %v638
  %v1017 = vunpack.c.h.b16 %v638
  %v1018 = vunpack.c.l.b16 %v639
  %v1019 = vunpack.c.h.b16 %v639
  %v1020 = vunpack.c.l.b16 %v640
  %v1021 = vunpack.c.h.b16 %v640
  %v1022 = vunpack.c.l.b16 %v641
  %v1023 = vunpack.c.h.b16 %v641
  %v1024 = vunpack.c.l.b16 %v642
  %v1025 = vunpack.c.h.b16 %v642
  %v1026 = vunpack.c.l.b16 %v643
  %v1027 = vunpack.c.h.b16 %v643
  %v1028 = vpack.c.b16 %v780, %v772
  %v1029 = vpack.c.b16 %v781, %v773
  %v1030 = vpack.c.b16 %v782, %v774
  %v1031 = vpack.c.b16 %v783, %v775
  %v1032 = vpack.c.b16 %v784, %v776
  %v1033 = vpack.c.b16 %v785, %v777
  %v1034 = vpack.c.b16 %v786, %v778
  %v1035 = vpack.c.b16 %v787, %v779
  %v1036 = vpack.c.b16 %v796, %v788
  %v1037 = vpack.c.b16 %v797, %v789
  %v1038 = vpack.c.b16 %v798, %v790
  %v1039 = vpack.c.b16 %v799, %v791
  %v1040 = vpack.c.b16 %v800, %v792
  %v1041 = vpack.c.b16 %v801, %v793
  %v1042 = vpack.c.b16 %v802, %v794
  %v1043 = vpack.c.b16 %v803, %v795
  %v1044 = vpack.c.b16 %v812, %v804
  %v1045 = vpack.c.b16 %v813, %v805
  %v1046 = vpack.c.b16 %v814, %v806
  %v1047 = vpack.c.b16 %v815, %v807
  %v1048 = vpack.c.b16 %v816, %v808
  %v1049 = vpack.c.b16 %v817, %v809
  %v1050 = vpack.c.b16 %v818, %v810
  %v1051 = vpack.c.b16 %v819, %v811
  %v1052 = vpack.c.b16 %v828, %v820
  %v1053 = vpack.c.b16 %v829, %v821
  %v1054 = vpack.c.b16 %v830, %v822
  %v1055 = vpack.c.b16 %v831, %v823
  %v1056 = vpack.c.b16 %v832, %v824
  %v1057 = vpack.c.b16 %v833, %v825
  %v1058 = vpack.c.b16 %v834, %v826
  %v1059 = vpack.c.b16 %v835, %v827
  %v1060 = vpack.c.b16 %v844, %v836
  %v1061 = vpack.c.b16 %v845, %v837
  %v1062 = vpack.c.b16 %v846, %v838
  %v1063 = vpack.c.b16 %v847, %v839
  %v1064 = vpack.c.b16 %v848, %v840
  %v1065 = vpack.c.b16 %v849, %v841
  %v1066 = vpack.c.b16 %v850, %v842
  %v1067 = vpack.c.b16 %v851, %v843
  %v1068 = vpack.c.b16 %v860, %v852
  %v1069 = vpack.c.b16 %v861, %v853
  %v1070 = vpack.c.b16 %v862, %v854
  %v1071 = vpack.c.b16 %v863, %v855
  %v1072 = vpack.c.b16 %v864, %v856
  %v1073 = vpack.c.b16 %v865, %v857
  %v1074 = vpack.c.b16 %v866, %v858
  %v1075 = vpack.c.b16 %v867, %v859
  %v1076 = vpack.c.b16 %v876, %v868
  %v1077 = vpack.c.b16 %v877, %v869
  %v1078 = vpack.c.b16 %v878, %v870
  %v1079 = vpack.c.b16 %v879, %v871
  %v1080 = vpack.c.b16 %v880, %v872
  %v1081 = vpack.c.b16 %v881, %v873
  %v1082 = vpack.c.b16 %v882, %v874
  %v1083 = vpack.c.b16 %v883, %v875
  %v1084 = vpack.c.b16 %v892, %v884
  %v1085 = vpack.c.b16 %v893, %v885
  %v1086 = vpack.c.b16 %v894, %v886
  %v1087 = vpack.c.b16 %v895, %v887
  %v1088 = vpack.c.b16 %v896, %v888
  %v1089 = vpack.c.b16 %v897, %v889
  %v1090 = vpack.c.b16 %v898, %v890
  %v1091 = vpack.c.b16 %v899, %v891
  %v1092 = vpack.c.b16 %v908, %v900
  %v1093 = vpack.c.b16 %v909, %v901
  %v1094 = vpack.c.b16 %v910, %v902
  %v1095 = vpack.c.b16 %v911, %v903
  %v1096 = vpack.c.b16 %v912, %v904
  %v1097 = vpack.c.b16 %v913, %v905
  %v1098 = vpack.c.b16 %v914, %v906
  %v1099 = vpack.c.b16 %v915, %v907
  %v1100 = vpack.c.b16 %v924, %v916
  %v1101 = vpack.c.b16 %v925, %v917
  %v1102 = vpack.c.b16 %v926, %v918
  %v1103 = vpack.c.b16 %v927, %v919
  %v1104 = vpack.c.b16 %v928, %v920
  %v1105 = vpack.c.b16 %v929, %v921
  %v1106 = vpack.c.b16 %v930, %v922
  %v1107 = vpack.c.b16 %v931, %v923
  %v1108 = vpack.c.b16 %v940, %v932
  %v1109 = vpack.c.b16 %v941, %v933
  %v1110 = vpack.c.b16 %v942, %v934
  %v1111 = vpack.c.b16 %v943, %v935
  %v1112 = vpack.c.b16 %v944, %v936
  %v1113 = vpack.c.b16 %v945, %v937
  %v1114 = vpack.c.b16 %v946, %v938
  %v1115 = vpack.c.b16 %v947, %v939
  %v1116 = vpack.c.b16 %v956, %v948
  %v1117 = vpack.c.b16 %v957, %v949
  %v1118 = vpack.c.b16 %v958, %v950
  %v1119 = vpack.c.b16 %v959, %v951
  %v1120 = vpack.c.b16 %v960, %v952
  %v1121 = vpack.c.b16 %v961, %v953
  %v1122 = vpack.c.b16 %v962, %v954
  %v1123 = vpack.c.b16 %v963, %v955
  %v1124 = vpack.c.b16 %v972, %v964
  %v1125 = vpack.c.b16 %v973, %v965
  %v1126 = vpack.c.b16 %v974, %v966
  %v1127 = vpack.c.b16 %v975, %v967
  %v1128 = vpack.c.b16 %v976, %v968
  %v1129 = vpack.c.b16 %v977, %v969
  %v1130 = vpack.c.b16 %v978, %v970
  %v1131 = vpack.c.b16 %v979, %v971
  %v1132 = vpack.c.b16 %v988, %v980
  %v1133 = vpack.c.b16 %v989, %v981
  %v1134 = vpack.c.b16 %v990, %v982
  %v1135 = vpack.c.b16 %v991, %v983
  %v1136 = vpack.c.b16 %v992, %v984
  %v1137 = vpack.c.b16 %v993, %v985
  %v1138 = vpack.c.b16 %v994, %v986
  %v1139 = vpack.c.b16 %v995, %v987
  %v1140 = vpack.c.b16 %v1004, %v996
  %v1141 = vpack.c.b16 %v1005, %v997
  %v1142 = vpack.c.b16 %v1006, %v998
  %v1143 = vpack.c.b16 %v1007, %v999
  %v1144 = vpack.c.b16 %v1008, %v1000
  %v1145 = vpack.c.b16 %v1009, %v1001
  %v1146 = vpack.c.b16 %v1010, %v1002
  %v1147 = vpack.c.b16 %v1011, %v1003
  %v1148 = vpack.c.b16 %v1020, %v1012
  %v1149 = vpack.c.b16 %v1021, %v1013
  %v1150 = vpack.c.b16 %v1022, %v1014
  %v1151 = vpack.c.b16 %v1023, %v1015
  %v1152 = vpack.c.b16 %v1024, %v1016
  %v1153 = vpack.c.b16 %v1025, %v1017
  %v1154 = vpack.c.b16 %v1026, %v1018
  %v1155 = vpack.c.b16 %v1027, %v1019
  %1284 = vmatprep.subr.bf16.mxu0 %v1029
  %1285 = vmatpush1.bf16.msra.mxu0 %v1028
  %1286 = vmatprep.subr.bf16.mxu0 %v1037
  %1287 = vmatpush1.bf16.msra.mxu0 %v1036
  %1288 = vmatprep.subr.bf16.mxu0 %v1045
  %1289 = vmatpush1.bf16.msra.mxu0 %v1044
  %1290 = vmatprep.subr.bf16.mxu0 %v1053
  %1291 = vmatpush1.bf16.msra.mxu0 %v1052
  %1292 = vmatprep.subr.bf16.mxu0 %v1061
  %1293 = vmatpush1.bf16.msra.mxu0 %v1060
  %1294 = vmatprep.subr.bf16.mxu0 %v1069
  %1295 = vmatpush1.bf16.msra.mxu0 %v1068
  %1296 = vmatprep.subr.bf16.mxu0 %v1077
  %1297 = vmatpush1.bf16.msra.mxu0 %v1076
  %1298 = vmatprep.subr.bf16.mxu0 %v1085
  %1299 = vmatpush1.bf16.msra.mxu0 %v1084
  %1300 = vmatprep.subr.bf16.mxu0 %v1093
  %1301 = vmatpush1.bf16.msra.mxu0 %v1092
  %1302 = vmatprep.subr.bf16.mxu0 %v1101
  %1303 = vmatpush1.bf16.msra.mxu0 %v1100
  %1304 = vmatprep.subr.bf16.mxu0 %v1109
  %1305 = vmatpush1.bf16.msra.mxu0 %v1108
  %1306 = vmatprep.subr.bf16.mxu0 %v1117
  %1307 = vmatpush1.bf16.msra.mxu0 %v1116
  %1308 = vmatprep.subr.bf16.mxu0 %v1125
  %1309 = vmatpush1.bf16.msra.mxu0 %v1124
  %1310 = vmatprep.subr.bf16.mxu0 %v1133
  %1311 = vmatpush1.bf16.msra.mxu0 %v1132
  %1312 = vmatprep.subr.bf16.mxu0 %v1141
  %1313 = vmatpush1.bf16.msra.mxu0 %v1140
  %1314 = vmatprep.subr.bf16.mxu0 %v1149
  %1315 = vmatpush1.bf16.msra.mxu0 %v1148
  %1316 = vmatprep.mubr.bf16.mxu0 %v515
  %1317 = vmatmul.mubr.bf16.gmra.mrb[0].mxu0 %v514
  %v1318 = vpop.f32.mrb[0].mxu0
  %v1319 = vadd.f32 0.0, %v1318
  %v1320 = vpop.f32.mrb[0].mxu0
  %v1321 = vadd.f32 0.0, %v1320
  %v1322 = vpop.f32.mrb[0].mxu0
  %v1323 = vpop.f32.mrb[0].mxu0
  %1324 = vdwg.mxu0
  %1325 = vmatprep.subr.bf16.mxu0 %v1031
  %1326 = vmatpush1.bf16.msra.mxu0 %v1030
  %1327 = vmatprep.subr.bf16.mxu0 %v1039
  %1328 = vmatpush1.bf16.msra.mxu0 %v1038
  %1329 = vmatprep.subr.bf16.mxu0 %v1047
  %1330 = vmatpush1.bf16.msra.mxu0 %v1046
  %1331 = vmatprep.subr.bf16.mxu0 %v1055
  %1332 = vmatpush1.bf16.msra.mxu0 %v1054
  %1333 = vmatprep.subr.bf16.mxu0 %v1063
  %1334 = vmatpush1.bf16.msra.mxu0 %v1062
  %1335 = vmatprep.subr.bf16.mxu0 %v1071
  %1336 = vmatpush1.bf16.msra.mxu0 %v1070
  %1337 = vmatprep.subr.bf16.mxu0 %v1079
  %1338 = vmatpush1.bf16.msra.mxu0 %v1078
  %1339 = vmatprep.subr.bf16.mxu0 %v1087
  %1340 = vmatpush1.bf16.msra.mxu0 %v1086
  %1341 = vmatprep.subr.bf16.mxu0 %v1095
  %1342 = vmatpush1.bf16.msra.mxu0 %v1094
  %1343 = vmatprep.subr.bf16.mxu0 %v1103
  %1344 = vmatpush1.bf16.msra.mxu0 %v1102
  %1345 = vmatprep.subr.bf16.mxu0 %v1111
  %1346 = vmatpush1.bf16.msra.mxu0 %v1110
  %1347 = vmatprep.subr.bf16.mxu0 %v1119
  %1348 = vmatpush1.bf16.msra.mxu0 %v1118
  %1349 = vmatprep.subr.bf16.mxu0 %v1127
  %1350 = vmatpush1.bf16.msra.mxu0 %v1126
  %1351 = vmatprep.subr.bf16.mxu0 %v1135
  %1352 = vmatpush1.bf16.msra.mxu0 %v1134
  %1353 = vmatprep.subr.bf16.mxu0 %v1143
  %1354 = vmatpush1.bf16.msra.mxu0 %v1142
  %1355 = vmatprep.subr.bf16.mxu0 %v1151
  %1356 = vmatpush1.bf16.msra.mxu0 %v1150
  %1357 = vmatprep.mubr.bf16.mxu0 %v515
  %1358 = vmatmul.mubr.bf16.gmra.mrb[0].mxu0 %v514
  %v1359 = vpop.f32.mrb[0].mxu0
  %v1360 = vadd.f32 0.0, %v1359
  %v1361 = vpop.f32.mrb[0].mxu0
  %v1362 = vadd.f32 0.0, %v1361
  %v1363 = vpop.f32.mrb[0].mxu0
  %v1364 = vpop.f32.mrb[0].mxu0
  %1365 = vdwg.mxu0
  %1366 = vmatprep.subr.bf16.mxu0 %v1033
  %1367 = vmatpush1.bf16.msra.mxu0 %v1032
  %1368 = vmatprep.subr.bf16.mxu0 %v1041
  %1369 = vmatpush1.bf16.msra.mxu0 %v1040
  %1370 = vmatprep.subr.bf16.mxu0 %v1049
  %1371 = vmatpush1.bf16.msra.mxu0 %v1048
  %1372 = vmatprep.subr.bf16.mxu0 %v1057
  %1373 = vmatpush1.bf16.msra.mxu0 %v1056
  %1374 = vmatprep.subr.bf16.mxu0 %v1065
  %1375 = vmatpush1.bf16.msra.mxu0 %v1064
  %1376 = vmatprep.subr.bf16.mxu0 %v1073
  %1377 = vmatpush1.bf16.msra.mxu0 %v1072
  %1378 = vmatprep.subr.bf16.mxu0 %v1081
  %1379 = vmatpush1.bf16.msra.mxu0 %v1080
  %1380 = vmatprep.subr.bf16.mxu0 %v1089
  %1381 = vmatpush1.bf16.msra.mxu0 %v1088
  %1382 = vmatprep.subr.bf16.mxu0 %v1097
  %1383 = vmatpush1.bf16.msra.mxu0 %v1096
  %1384 = vmatprep.subr.bf16.mxu0 %v1105
  %1385 = vmatpush1.bf16.msra.mxu0 %v1104
  %1386 = vmatprep.subr.bf16.mxu0 %v1113
  %1387 = vmatpush1.bf16.msra.mxu0 %v1112
  %1388 = vmatprep.subr.bf16.mxu0 %v1121
  %1389 = vmatpush1.bf16.msra.mxu0 %v1120
  %1390 = vmatprep.subr.bf16.mxu0 %v1129
  %1391 = vmatpush1.bf16.msra.mxu0 %v1128
  %1392 = vmatprep.subr.bf16.mxu0 %v1137
  %1393 = vmatpush1.bf16.msra.mxu0 %v1136
  %1394 = vmatprep.subr.bf16.mxu0 %v1145
  %1395 = vmatpush1.bf16.msra.mxu0 %v1144
  %1396 = vmatprep.subr.bf16.mxu0 %v1153
  %1397 = vmatpush1.bf16.msra.mxu0 %v1152
  %1398 = vmatprep.mubr.bf16.mxu0 %v515
  %1399 = vmatmul.mubr.bf16.gmra.mrb[0].mxu0 %v514
  %v1400 = vpop.f32.mrb[0].mxu0
  %v1401 = vadd.f32 0.0, %v1400
  %v1402 = vpop.f32.mrb[0].mxu0
  %v1403 = vadd.f32 0.0, %v1402
  %v1404 = vpop.f32.mrb[0].mxu0
  %v1405 = vpop.f32.mrb[0].mxu0
  %1406 = vdwg.mxu0
  %1407 = vmatprep.subr.bf16.mxu0 %v1035
  %1408 = vmatpush1.bf16.msra.mxu0 %v1034
  %1409 = vmatprep.subr.bf16.mxu0 %v1043
  %1410 = vmatpush1.bf16.msra.mxu0 %v1042
  %1411 = vmatprep.subr.bf16.mxu0 %v1051
  %1412 = vmatpush1.bf16.msra.mxu0 %v1050
  %1413 = vmatprep.subr.bf16.mxu0 %v1059
  %1414 = vmatpush1.bf16.msra.mxu0 %v1058
  %1415 = vmatprep.subr.bf16.mxu0 %v1067
  %1416 = vmatpush1.bf16.msra.mxu0 %v1066
  %1417 = vmatprep.subr.bf16.mxu0 %v1075
  %1418 = vmatpush1.bf16.msra.mxu0 %v1074
  %1419 = vmatprep.subr.bf16.mxu0 %v1083
  %1420 = vmatpush1.bf16.msra.mxu0 %v1082
  %1421 = vmatprep.subr.bf16.mxu0 %v1091
  %1422 = vmatpush1.bf16.msra.mxu0 %v1090
  %1423 = vmatprep.subr.bf16.mxu0 %v1099
  %1424 = vmatpush1.bf16.msra.mxu0 %v1098
  %1425 = vmatprep.subr.bf16.mxu0 %v1107
  %1426 = vmatpush1.bf16.msra.mxu0 %v1106
  %1427 = vmatprep.subr.bf16.mxu0 %v1115
  %1428 = vmatpush1.bf16.msra.mxu0 %v1114
  %1429 = vmatprep.subr.bf16.mxu0 %v1123
  %1430 = vmatpush1.bf16.msra.mxu0 %v1122
  %1431 = vmatprep.subr.bf16.mxu0 %v1131
  %1432 = vmatpush1.bf16.msra.mxu0 %v1130
  %1433 = vmatprep.subr.bf16.mxu0 %v1139
  %1434 = vmatpush1.bf16.msra.mxu0 %v1138
  %1435 = vmatprep.subr.bf16.mxu0 %v1147
  %1436 = vmatpush1.bf16.msra.mxu0 %v1146
  %1437 = vmatprep.subr.bf16.mxu0 %v1155
  %1438 = vmatpush1.bf16.msra.mxu0 %v1154
  %1439 = vmatprep.mubr.bf16.mxu0 %v515
  %1440 = vmatmul.mubr.bf16.gmra.mrb[0].mxu0 %v514
  %v1441 = vpop.f32.mrb[0].mxu0
  %v1442 = vadd.f32 0.0, %v1441
  %v1443 = vpop.f32.mrb[0].mxu0
  %v1444 = vadd.f32 0.0, %v1443
  %v1445 = vpop.f32.mrb[0].mxu0
  %v1446 = vpop.f32.mrb[0].mxu0
  %1447 = vdwg.mxu0
  %v1448 = vld [vmem:[#allocation2 + $0x20] sm:$0xff]
  %v1449 = vld [vmem:[#allocation2 + $0x28] sm:$0xff]
  %v1450 = vld [vmem:[#allocation2 + $0x30] sm:$0xff]
  %v1451 = vld [vmem:[#allocation2 + $0x38] sm:$0xff]
  %v1452 = vadd.f32 %v1448, %v1319
  %v1453 = vadd.f32 %v1449, %v1321
  %v1454 = vadd.f32 %v1450, %v1360
  %v1455 = vadd.f32 %v1451, %v1362
  %v1456 = vmul.f32 %v1452, 0.5
  %v1457 = vtanh.pop %v1456
  %v1458 = vmul.f32 %v1457, 0.5
  %v1459 = vadd.f32 %v1458, 0.5
  %v1460 = vmul.f32 %v1453, 0.5
  %v1461 = vtanh.pop %v1460
  %v1462 = vmul.f32 %v1461, 0.5
  %v1463 = vadd.f32 %v1462, 0.5
  %v1464 = vtanh.pop %v1454
  %v1465 = vmul.f32 %v1455, 0.5
  %v1466 = vtanh.pop %v1465
  %v1467 = vmul.f32 %v1466, 0.5
  %v1468 = vadd.f32 %v1467, 0.5
  %v1469 = vmul.f32 %v1463, %v511
  %v1470 = vmul.f32 %v1459, %v1464
  %v1471 = vadd.f32 %v1469, %v1470
  %v1472 = vtanh.pop %v1471
  %v1473 = vmul.f32 %v1468, %v1472
  %v1474 = vadd.f32 %v471, %v1401
  %v1475 = vadd.f32 %v475, %v1403
  %v1476 = vadd.f32 %v479, %v1442
  %v1477 = vadd.f32 %v483, %v1444
  %v1478 = vmul.f32 %v1474, 0.5
  %v1479 = vtanh.pop %v1478
  %v1480 = vmul.f32 %v1479, 0.5
  %v1481 = vadd.f32 %v1480, 0.5
  %v1482 = vmul.f32 %v1475, 0.5
  %v1483 = vtanh.pop %v1482
  %v1484 = vmul.f32 %v1483, 0.5
  %v1485 = vadd.f32 %v1484, 0.5
  %v1486 = vtanh.pop %v1476
  %v1487 = vmul.f32 %v1477, 0.5
  %v1488 = vtanh.pop %v1487
  %v1489 = vmul.f32 %v1488, 0.5
  %v1490 = vadd.f32 %v1489, 0.5
  %v1491 = vmul.f32 %v1485, 0.0
  %v1492 = vmul.f32 %v1481, %v1486
  %v1493 = vadd.f32 %v1491, %v1492
  %v1494 = vtanh.pop %v1493
  %v1495 = vmul.f32 %v1490, %v1494
  %v1496 = vpack.c.bf16 %v1473, %v1473
  %v1497 = vpack.c.bf16 %v1495, %v1495
  %1498 = vmatprep.subr.bf16.mxu0 %v1029
  %1499 = vmatpush1.bf16.msra.mxu0 %v1028
  %1500 = vmatprep.subr.bf16.mxu0 %v1037
  %1501 = vmatpush1.bf16.msra.mxu0 %v1036
  %1502 = vmatprep.subr.bf16.mxu0 %v1045
  %1503 = vmatpush1.bf16.msra.mxu0 %v1044
  %1504 = vmatprep.subr.bf16.mxu0 %v1053
  %1505 = vmatpush1.bf16.msra.mxu0 %v1052
  %1506 = vmatprep.subr.bf16.mxu0 %v1061
  %1507 = vmatpush1.bf16.msra.mxu0 %v1060
  %1508 = vmatprep.subr.bf16.mxu0 %v1069
  %1509 = vmatpush1.bf16.msra.mxu0 %v1068
  %1510 = vmatprep.subr.bf16.mxu0 %v1077
  %1511 = vmatpush1.bf16.msra.mxu0 %v1076
  %1512 = vmatprep.subr.bf16.mxu0 %v1085
  %1513 = vmatpush1.bf16.msra.mxu0 %v1084
  %1514 = vmatprep.subr.bf16.mxu0 %v1093
  %1515 = vmatpush1.bf16.msra.mxu0 %v1092
  %1516 = vmatprep.subr.bf16.mxu0 %v1101
  %1517 = vmatpush1.bf16.msra.mxu0 %v1100
  %1518 = vmatprep.subr.bf16.mxu0 %v1109
  %1519 = vmatpush1.bf16.msra.mxu0 %v1108
  %1520 = vmatprep.subr.bf16.mxu0 %v1117
  %1521 = vmatpush1.bf16.msra.mxu0 %v1116
  %1522 = vmatprep.subr.bf16.mxu0 %v1125
  %1523 = vmatpush1.bf16.msra.mxu0 %v1124
  %1524 = vmatprep.subr.bf16.mxu0 %v1133
  %1525 = vmatpush1.bf16.msra.mxu0 %v1132
  %1526 = vmatprep.subr.bf16.mxu0 %v1141
  %1527 = vmatpush1.bf16.msra.mxu0 %v1140
  %1528 = vmatprep.subr.bf16.mxu0 %v1149
  %1529 = vmatpush1.bf16.msra.mxu0 %v1148
  %1530 = vmatprep.mubr.bf16.mxu0 %v1497
  %1531 = vmatmul.mubr.bf16.gmra.mrb[0].mxu0 %v1496
  %v1532 = vpop.f32.mrb[0].mxu0
  %v1533 = vadd.f32 0.0, %v1532
  %v1534 = vpop.f32.mrb[0].mxu0
  %v1535 = vadd.f32 0.0, %v1534
  %v1536 = vpop.f32.mrb[0].mxu0
  %v1537 = vpop.f32.mrb[0].mxu0
  %1538 = vdwg.mxu0
  %1539 = vmatprep.subr.bf16.mxu0 %v1031
  %1540 = vmatpush1.bf16.msra.mxu0 %v1030
  %1541 = vmatprep.subr.bf16.mxu0 %v1039
  %1542 = vmatpush1.bf16.msra.mxu0 %v1038
  %1543 = vmatprep.subr.bf16.mxu0 %v1047
  %1544 = vmatpush1.bf16.msra.mxu0 %v1046
  %1545 = vmatprep.subr.bf16.mxu0 %v1055
  %1546 = vmatpush1.bf16.msra.mxu0 %v1054
  %1547 = vmatprep.subr.bf16.mxu0 %v1063
  %1548 = vmatpush1.bf16.msra.mxu0 %v1062
  %1549 = vmatprep.subr.bf16.mxu0 %v1071
  %1550 = vmatpush1.bf16.msra.mxu0 %v1070
  %1551 = vmatprep.subr.bf16.mxu0 %v1079
  %1552 = vmatpush1.bf16.msra.mxu0 %v1078
  %1553 = vmatprep.subr.bf16.mxu0 %v1087
  %1554 = vmatpush1.bf16.msra.mxu0 %v1086
  %1555 = vmatprep.subr.bf16.mxu0 %v1095
  %1556 = vmatpush1.bf16.msra.mxu0 %v1094
  %1557 = vmatprep.subr.bf16.mxu0 %v1103
  %1558 = vmatpush1.bf16.msra.mxu0 %v1102
  %1559 = vmatprep.subr.bf16.mxu0 %v1111
  %1560 = vmatpush1.bf16.msra.mxu0 %v1110
  %1561 = vmatprep.subr.bf16.mxu0 %v1119
  %1562 = vmatpush1.bf16.msra.mxu0 %v1118
  %1563 = vmatprep.subr.bf16.mxu0 %v1127
  %1564 = vmatpush1.bf16.msra.mxu0 %v1126
  %1565 = vmatprep.subr.bf16.mxu0 %v1135
  %1566 = vmatpush1.bf16.msra.mxu0 %v1134
  %1567 = vmatprep.subr.bf16.mxu0 %v1143
  %1568 = vmatpush1.bf16.msra.mxu0 %v1142
  %1569 = vmatprep.subr.bf16.mxu0 %v1151
  %1570 = vmatpush1.bf16.msra.mxu0 %v1150
  %1571 = vmatprep.mubr.bf16.mxu0 %v1497
  %1572 = vmatmul.mubr.bf16.gmra.mrb[0].mxu0 %v1496
  %v1573 = vpop.f32.mrb[0].mxu0
  %v1574 = vadd.f32 0.0, %v1573
  %v1575 = vpop.f32.mrb[0].mxu0
  %v1576 = vadd.f32 0.0, %v1575
  %v1577 = vpop.f32.mrb[0].mxu0
  %v1578 = vpop.f32.mrb[0].mxu0
  %1579 = vdwg.mxu0
  %1580 = vmatprep.subr.bf16.mxu0 %v1033
  %1581 = vmatpush1.bf16.msra.mxu0 %v1032
  %1582 = vmatprep.subr.bf16.mxu0 %v1041
  %1583 = vmatpush1.bf16.msra.mxu0 %v1040
  %1584 = vmatprep.subr.bf16.mxu0 %v1049
  %1585 = vmatpush1.bf16.msra.mxu0 %v1048
  %1586 = vmatprep.subr.bf16.mxu0 %v1057
  %1587 = vmatpush1.bf16.msra.mxu0 %v1056
  %1588 = vmatprep.subr.bf16.mxu0 %v1065
  %1589 = vmatpush1.bf16.msra.mxu0 %v1064
  %1590 = vmatprep.subr.bf16.mxu0 %v1073
  %1591 = vmatpush1.bf16.msra.mxu0 %v1072
  %1592 = vmatprep.subr.bf16.mxu0 %v1081
  %1593 = vmatpush1.bf16.msra.mxu0 %v1080
  %1594 = vmatprep.subr.bf16.mxu0 %v1089
  %1595 = vmatpush1.bf16.msra.mxu0 %v1088
  %1596 = vmatprep.subr.bf16.mxu0 %v1097
  %1597 = vmatpush1.bf16.msra.mxu0 %v1096
  %1598 = vmatprep.subr.bf16.mxu0 %v1105
  %1599 = vmatpush1.bf16.msra.mxu0 %v1104
  %1600 = vmatprep.subr.bf16.mxu0 %v1113
  %1601 = vmatpush1.bf16.msra.mxu0 %v1112
  %1602 = vmatprep.subr.bf16.mxu0 %v1121
  %1603 = vmatpush1.bf16.msra.mxu0 %v1120
  %1604 = vmatprep.subr.bf16.mxu0 %v1129
  %1605 = vmatpush1.bf16.msra.mxu0 %v1128
  %1606 = vmatprep.subr.bf16.mxu0 %v1137
  %1607 = vmatpush1.bf16.msra.mxu0 %v1136
  %1608 = vmatprep.subr.bf16.mxu0 %v1145
  %1609 = vmatpush1.bf16.msra.mxu0 %v1144
  %1610 = vmatprep.subr.bf16.mxu0 %v1153
  %1611 = vmatpush1.bf16.msra.mxu0 %v1152
  %1612 = vmatprep.mubr.bf16.mxu0 %v1497
  %1613 = vmatmul.mubr.bf16.gmra.mrb[0].mxu0 %v1496
  %v1614 = vpop.f32.mrb[0].mxu0
  %v1615 = vadd.f32 0.0, %v1614
  %v1616 = vpop.f32.mrb[0].mxu0
  %v1617 = vadd.f32 0.0, %v1616
  %v1618 = vpop.f32.mrb[0].mxu0
  %v1619 = vpop.f32.mrb[0].mxu0
  %1620 = vdwg.mxu0
  %1621 = vmatprep.subr.bf16.mxu0 %v1035
  %1622 = vmatpush1.bf16.msra.mxu0 %v1034
  %1623 = vmatprep.subr.bf16.mxu0 %v1043
  %1624 = vmatpush1.bf16.msra.mxu0 %v1042
  %1625 = vmatprep.subr.bf16.mxu0 %v1051
  %1626 = vmatpush1.bf16.msra.mxu0 %v1050
  %1627 = vmatprep.subr.bf16.mxu0 %v1059
  %1628 = vmatpush1.bf16.msra.mxu0 %v1058
  %1629 = vmatprep.subr.bf16.mxu0 %v1067
  %1630 = vmatpush1.bf16.msra.mxu0 %v1066
  %1631 = vmatprep.subr.bf16.mxu0 %v1075
  %1632 = vmatpush1.bf16.msra.mxu0 %v1074
  %1633 = vmatprep.subr.bf16.mxu0 %v1083
  %1634 = vmatpush1.bf16.msra.mxu0 %v1082
  %1635 = vmatprep.subr.bf16.mxu0 %v1091
  %1636 = vmatpush1.bf16.msra.mxu0 %v1090
  %1637 = vmatprep.subr.bf16.mxu0 %v1099
  %1638 = vmatpush1.bf16.msra.mxu0 %v1098
  %1639 = vmatprep.subr.bf16.mxu0 %v1107
  %1640 = vmatpush1.bf16.msra.mxu0 %v1106
  %1641 = vmatprep.subr.bf16.mxu0 %v1115
  %1642 = vmatpush1.bf16.msra.mxu0 %v1114
  %1643 = vmatprep.subr.bf16.mxu0 %v1123
  %1644 = vmatpush1.bf16.msra.mxu0 %v1122
  %1645 = vmatprep.subr.bf16.mxu0 %v1131
  %1646 = vmatpush1.bf16.msra.mxu0 %v1130
  %1647 = vmatprep.subr.bf16.mxu0 %v1139
  %1648 = vmatpush1.bf16.msra.mxu0 %v1138
  %1649 = vmatprep.subr.bf16.mxu0 %v1147
  %1650 = vmatpush1.bf16.msra.mxu0 %v1146
  %1651 = vmatprep.subr.bf16.mxu0 %v1155
  %1652 = vmatpush1.bf16.msra.mxu0 %v1154
  %1653 = vmatprep.mubr.bf16.mxu0 %v1497
  %1654 = vmatmul.mubr.bf16.gmra.mrb[0].mxu0 %v1496
  %v1655 = vpop.f32.mrb[0].mxu0
  %v1656 = vadd.f32 0.0, %v1655
  %v1657 = vpop.f32.mrb[0].mxu0
  %v1658 = vadd.f32 0.0, %v1657
  %v1659 = vpop.f32.mrb[0].mxu0
  %v1660 = vpop.f32.mrb[0].mxu0
  %1661 = vdwg.mxu0
  %v1662 = vld [vmem:[#allocation2 + $0x40] sm:$0xff]
  %v1663 = vld [vmem:[#allocation2 + $0x48] sm:$0xff]
  %v1664 = vld [vmem:[#allocation2 + $0x50] sm:$0xff]
  %v1665 = vld [vmem:[#allocation2 + $0x58] sm:$0xff]
  %v1666 = vadd.f32 %v1662, %v1533
  %v1667 = vadd.f32 %v1663, %v1535
  %v1668 = vadd.f32 %v1664, %v1574
  %v1669 = vadd.f32 %v1665, %v1576
  %v1670 = vmul.f32 %v1666, 0.5
  %v1671 = vtanh.pop %v1670
  %v1672 = vmul.f32 %v1671, 0.5
  %v1673 = vadd.f32 %v1672, 0.5
  %v1674 = vmul.f32 %v1667, 0.5
  %v1675 = vtanh.pop %v1674
  %v1676 = vmul.f32 %v1675, 0.5
  %v1677 = vadd.f32 %v1676, 0.5
  %v1678 = vtanh.pop %v1668
  %v1679 = vmul.f32 %v1669, 0.5
  %v1680 = vtanh.pop %v1679
  %v1681 = vmul.f32 %v1680, 0.5
  %v1682 = vadd.f32 %v1681, 0.5
  %v1683 = vmul.f32 %v1677, %v1471
  %v1684 = vmul.f32 %v1673, %v1678
  %v1685 = vadd.f32 %v1683, %v1684
  %v1686 = vtanh.pop %v1685
  %v1687 = vmul.f32 %v1682, %v1686
  %v1688 = vadd.f32 %v471, %v1615
  %v1689 = vadd.f32 %v475, %v1617
  %v1690 = vadd.f32 %v479, %v1656
  %v1691 = vadd.f32 %v483, %v1658
  %v1692 = vmul.f32 %v1688, 0.5
  %v1693 = vtanh.pop %v1692
  %v1694 = vmul.f32 %v1693, 0.5
  %v1695 = vadd.f32 %v1694, 0.5
  %v1696 = vmul.f32 %v1689, 0.5
  %v1697 = vtanh.pop %v1696
  %v1698 = vmul.f32 %v1697, 0.5
  %v1699 = vadd.f32 %v1698, 0.5
  %v1700 = vtanh.pop %v1690
  %v1701 = vmul.f32 %v1691, 0.5
  %v1702 = vtanh.pop %v1701
  %v1703 = vmul.f32 %v1702, 0.5
  %v1704 = vadd.f32 %v1703, 0.5
  %v1705 = vmul.f32 %v1699, %v1493
  %v1706 = vmul.f32 %v1695, %v1700
  %v1707 = vadd.f32 %v1705, %v1706
  %v1708 = vtanh.pop %v1707
  %v1709 = vmul.f32 %v1704, %v1708
  %v1710 = vpack.c.bf16 %v1687, %v1687
  %v1711 = vpack.c.bf16 %v1709, %v1709
  %1712 = vmatprep.subr.bf16.mxu0 %v1029
  %1713 = vmatpush1.bf16.msra.mxu0 %v1028
  %1714 = vmatprep.subr.bf16.mxu0 %v1037
  %1715 = vmatpush1.bf16.msra.mxu0 %v1036
  %1716 = vmatprep.subr.bf16.mxu0 %v1045
  %1717 = vmatpush1.bf16.msra.mxu0 %v1044
  %1718 = vmatprep.subr.bf16.mxu0 %v1053
  %1719 = vmatpush1.bf16.msra.mxu0 %v1052
  %1720 = vmatprep.subr.bf16.mxu0 %v1061
  %1721 = vmatpush1.bf16.msra.mxu0 %v1060
  %1722 = vmatprep.subr.bf16.mxu0 %v1069
  %1723 = vmatpush1.bf16.msra.mxu0 %v1068
  %1724 = vmatprep.subr.bf16.mxu0 %v1077
  %1725 = vmatpush1.bf16.msra.mxu0 %v1076
  %1726 = vmatprep.subr.bf16.mxu0 %v1085
  %1727 = vmatpush1.bf16.msra.mxu0 %v1084
  %1728 = vmatprep.subr.bf16.mxu0 %v1093
  %1729 = vmatpush1.bf16.msra.mxu0 %v1092
  %1730 = vmatprep.subr.bf16.mxu0 %v1101
  %1731 = vmatpush1.bf16.msra.mxu0 %v1100
  %1732 = vmatprep.subr.bf16.mxu0 %v1109
  %1733 = vmatpush1.bf16.msra.mxu0 %v1108
  %1734 = vmatprep.subr.bf16.mxu0 %v1117
  %1735 = vmatpush1.bf16.msra.mxu0 %v1116
  %1736 = vmatprep.subr.bf16.mxu0 %v1125
  %1737 = vmatpush1.bf16.msra.mxu0 %v1124
  %1738 = vmatprep.subr.bf16.mxu0 %v1133
  %1739 = vmatpush1.bf16.msra.mxu0 %v1132
  %1740 = vmatprep.subr.bf16.mxu0 %v1141
  %1741 = vmatpush1.bf16.msra.mxu0 %v1140
  %1742 = vmatprep.subr.bf16.mxu0 %v1149
  %1743 = vmatpush1.bf16.msra.mxu0 %v1148
  %1744 = vmatprep.mubr.bf16.mxu0 %v1711
  %1745 = vmatmul.mubr.bf16.gmra.mrb[0].mxu0 %v1710
  %v1746 = vpop.f32.mrb[0].mxu0
  %v1747 = vadd.f32 0.0, %v1746
  %v1748 = vpop.f32.mrb[0].mxu0
  %v1749 = vadd.f32 0.0, %v1748
  %v1750 = vpop.f32.mrb[0].mxu0
  %v1751 = vpop.f32.mrb[0].mxu0
  %1752 = vdwg.mxu0
  %1753 = vmatprep.subr.bf16.mxu0 %v1031
  %1754 = vmatpush1.bf16.msra.mxu0 %v1030
  %1755 = vmatprep.subr.bf16.mxu0 %v1039
  %1756 = vmatpush1.bf16.msra.mxu0 %v1038
  %1757 = vmatprep.subr.bf16.mxu0 %v1047
  %1758 = vmatpush1.bf16.msra.mxu0 %v1046
  %1759 = vmatprep.subr.bf16.mxu0 %v1055
  %1760 = vmatpush1.bf16.msra.mxu0 %v1054
  %1761 = vmatprep.subr.bf16.mxu0 %v1063
  %1762 = vmatpush1.bf16.msra.mxu0 %v1062
  %1763 = vmatprep.subr.bf16.mxu0 %v1071
  %1764 = vmatpush1.bf16.msra.mxu0 %v1070
  %1765 = vmatprep.subr.bf16.mxu0 %v1079
  %1766 = vmatpush1.bf16.msra.mxu0 %v1078
  %1767 = vmatprep.subr.bf16.mxu0 %v1087
  %1768 = vmatpush1.bf16.msra.mxu0 %v1086
  %1769 = vmatprep.subr.bf16.mxu0 %v1095
  %1770 = vmatpush1.bf16.msra.mxu0 %v1094
  %1771 = vmatprep.subr.bf16.mxu0 %v1103
  %1772 = vmatpush1.bf16.msra.mxu0 %v1102
  %1773 = vmatprep.subr.bf16.mxu0 %v1111
  %1774 = vmatpush1.bf16.msra.mxu0 %v1110
  %1775 = vmatprep.subr.bf16.mxu0 %v1119
  %1776 = vmatpush1.bf16.msra.mxu0 %v1118
  %1777 = vmatprep.subr.bf16.mxu0 %v1127
  %1778 = vmatpush1.bf16.msra.mxu0 %v1126
  %1779 = vmatprep.subr.bf16.mxu0 %v1135
  %1780 = vmatpush1.bf16.msra.mxu0 %v1134
  %1781 = vmatprep.subr.bf16.mxu0 %v1143
  %1782 = vmatpush1.bf16.msra.mxu0 %v1142
  %1783 = vmatprep.subr.bf16.mxu0 %v1151
  %1784 = vmatpush1.bf16.msra.mxu0 %v1150
  %1785 = vmatprep.mubr.bf16.mxu0 %v1711
  %1786 = vmatmul.mubr.bf16.gmra.mrb[0].mxu0 %v1710
  %v1787 = vpop.f32.mrb[0].mxu0
  %v1788 = vadd.f32 0.0, %v1787
  %v1789 = vpop.f32.mrb[0].mxu0
  %v1790 = vadd.f32 0.0, %v1789
  %v1791 = vpop.f32.mrb[0].mxu0
  %v1792 = vpop.f32.mrb[0].mxu0
  %1793 = vdwg.mxu0
  %1794 = vmatprep.subr.bf16.mxu0 %v1033
  %1795 = vmatpush1.bf16.msra.mxu0 %v1032
  %1796 = vmatprep.subr.bf16.mxu0 %v1041
  %1797 = vmatpush1.bf16.msra.mxu0 %v1040
  %1798 = vmatprep.subr.bf16.mxu0 %v1049
  %1799 = vmatpush1.bf16.msra.mxu0 %v1048
  %1800 = vmatprep.subr.bf16.mxu0 %v1057
  %1801 = vmatpush1.bf16.msra.mxu0 %v1056
  %1802 = vmatprep.subr.bf16.mxu0 %v1065
  %1803 = vmatpush1.bf16.msra.mxu0 %v1064
  %1804 = vmatprep.subr.bf16.mxu0 %v1073
  %1805 = vmatpush1.bf16.msra.mxu0 %v1072
  %1806 = vmatprep.subr.bf16.mxu0 %v1081
  %1807 = vmatpush1.bf16.msra.mxu0 %v1080
  %1808 = vmatprep.subr.bf16.mxu0 %v1089
  %1809 = vmatpush1.bf16.msra.mxu0 %v1088
  %1810 = vmatprep.subr.bf16.mxu0 %v1097
  %1811 = vmatpush1.bf16.msra.mxu0 %v1096
  %1812 = vmatprep.subr.bf16.mxu0 %v1105
  %1813 = vmatpush1.bf16.msra.mxu0 %v1104
  %1814 = vmatprep.subr.bf16.mxu0 %v1113
  %1815 = vmatpush1.bf16.msra.mxu0 %v1112
  %1816 = vmatprep.subr.bf16.mxu0 %v1121
  %1817 = vmatpush1.bf16.msra.mxu0 %v1120
  %1818 = vmatprep.subr.bf16.mxu0 %v1129
  %1819 = vmatpush1.bf16.msra.mxu0 %v1128
  %1820 = vmatprep.subr.bf16.mxu0 %v1137
  %1821 = vmatpush1.bf16.msra.mxu0 %v1136
  %1822 = vmatprep.subr.bf16.mxu0 %v1145
  %1823 = vmatpush1.bf16.msra.mxu0 %v1144
  %1824 = vmatprep.subr.bf16.mxu0 %v1153
  %1825 = vmatpush1.bf16.msra.mxu0 %v1152
  %1826 = vmatprep.mubr.bf16.mxu0 %v1711
  %1827 = vmatmul.mubr.bf16.gmra.mrb[0].mxu0 %v1710
  %v1828 = vpop.f32.mrb[0].mxu0
  %v1829 = vadd.f32 0.0, %v1828
  %v1830 = vpop.f32.mrb[0].mxu0
  %v1831 = vadd.f32 0.0, %v1830
  %v1832 = vpop.f32.mrb[0].mxu0
  %v1833 = vpop.f32.mrb[0].mxu0
  %1834 = vdwg.mxu0
  %1835 = vmatprep.subr.bf16.mxu0 %v1035
  %1836 = vmatpush1.bf16.msra.mxu0 %v1034
  %1837 = vmatprep.subr.bf16.mxu0 %v1043
  %1838 = vmatpush1.bf16.msra.mxu0 %v1042
  %1839 = vmatprep.subr.bf16.mxu0 %v1051
  %1840 = vmatpush1.bf16.msra.mxu0 %v1050
  %1841 = vmatprep.subr.bf16.mxu0 %v1059
  %1842 = vmatpush1.bf16.msra.mxu0 %v1058
  %1843 = vmatprep.subr.bf16.mxu0 %v1067
  %1844 = vmatpush1.bf16.msra.mxu0 %v1066
  %1845 = vmatprep.subr.bf16.mxu0 %v1075
  %1846 = vmatpush1.bf16.msra.mxu0 %v1074
  %1847 = vmatprep.subr.bf16.mxu0 %v1083
  %1848 = vmatpush1.bf16.msra.mxu0 %v1082
  %1849 = vmatprep.subr.bf16.mxu0 %v1091
  %1850 = vmatpush1.bf16.msra.mxu0 %v1090
  %1851 = vmatprep.subr.bf16.mxu0 %v1099
  %1852 = vmatpush1.bf16.msra.mxu0 %v1098
  %1853 = vmatprep.subr.bf16.mxu0 %v1107
  %1854 = vmatpush1.bf16.msra.mxu0 %v1106
  %1855 = vmatprep.subr.bf16.mxu0 %v1115
  %1856 = vmatpush1.bf16.msra.mxu0 %v1114
  %1857 = vmatprep.subr.bf16.mxu0 %v1123
  %1858 = vmatpush1.bf16.msra.mxu0 %v1122
  %1859 = vmatprep.subr.bf16.mxu0 %v1131
  %1860 = vmatpush1.bf16.msra.mxu0 %v1130
  %1861 = vmatprep.subr.bf16.mxu0 %v1139
  %1862 = vmatpush1.bf16.msra.mxu0 %v1138
  %1863 = vmatprep.subr.bf16.mxu0 %v1147
  %1864 = vmatpush1.bf16.msra.mxu0 %v1146
  %1865 = vmatprep.subr.bf16.mxu0 %v1155
  %1866 = vmatpush1.bf16.msra.mxu0 %v1154
  %1867 = vmatprep.mubr.bf16.mxu0 %v1711
  %1868 = vmatmul.mubr.bf16.gmra.mrb[0].mxu0 %v1710
  %v1869 = vpop.f32.mrb[0].mxu0
  %v1870 = vadd.f32 0.0, %v1869
  %v1871 = vpop.f32.mrb[0].mxu0
  %v1872 = vadd.f32 0.0, %v1871
  %v1873 = vpop.f32.mrb[0].mxu0
  %v1874 = vpop.f32.mrb[0].mxu0
  %1875 = vdwg.mxu0
  %v1876 = vld [vmem:[#allocation2 + $0x60] sm:$0xff]
  %v1877 = vld [vmem:[#allocation2 + $0x68] sm:$0xff]
  %v1878 = vld [vmem:[#allocation2 + $0x70] sm:$0xff]
  %v1879 = vld [vmem:[#allocation2 + $0x78] sm:$0xff]
  %v1880 = vadd.f32 %v1876, %v1747
  %v1881 = vadd.f32 %v1877, %v1749
  %v1882 = vadd.f32 %v1878, %v1788
  %v1883 = vadd.f32 %v1879, %v1790
  %v1884 = vmul.f32 %v1880, 0.5
  %v1885 = vtanh.pop %v1884
  %v1886 = vmul.f32 %v1885, 0.5
  %v1887 = vadd.f32 %v1886, 0.5
  %v1888 = vmul.f32 %v1881, 0.5
  %v1889 = vtanh.pop %v1888
  %v1890 = vmul.f32 %v1889, 0.5
  %v1891 = vadd.f32 %v1890, 0.5
  %v1892 = vtanh.pop %v1882
  %v1893 = vmul.f32 %v1883, 0.5
  %v1894 = vtanh.pop %v1893
  %v1895 = vmul.f32 %v1894, 0.5
  %v1896 = vadd.f32 %v1895, 0.5
  %v1897 = vmul.f32 %v1891, %v1685
  %v1898 = vmul.f32 %v1887, %v1892
  %v1899 = vadd.f32 %v1897, %v1898
  %v1900 = vtanh.pop %v1899
  %v1901 = vmul.f32 %v1896, %v1900
  %v1902 = vadd.f32 %v471, %v1829
  %v1903 = vadd.f32 %v475, %v1831
  %v1904 = vadd.f32 %v479, %v1870
  %v1905 = vadd.f32 %v483, %v1872
  %v1906 = vmul.f32 %v1902, 0.5
  %v1907 = vtanh.pop %v1906
  %v1908 = vmul.f32 %v1907, 0.5
  %v1909 = vadd.f32 %v1908, 0.5
  %v1910 = vmul.f32 %v1903, 0.5
  %v1911 = vtanh.pop %v1910
  %v1912 = vmul.f32 %v1911, 0.5
  %v1913 = vadd.f32 %v1912, 0.5
  %v1914 = vtanh.pop %v1904
  %v1915 = vmul.f32 %v1905, 0.5
  %v1916 = vtanh.pop %v1915
  %v1917 = vmul.f32 %v1916, 0.5
  %v1918 = vadd.f32 %v1917, 0.5
  %v1919 = vmul.f32 %v1913, %v1707
  %v1920 = vmul.f32 %v1909, %v1914
  %v1921 = vadd.f32 %v1919, %v1920
  %v1922 = vtanh.pop %v1921
  %v1923 = vmul.f32 %v1918, %v1922
  %v1924 = vpack.c.bf16 %v1901, %v1901
  %v1925 = vpack.c.bf16 %v1923, %v1923
  %1926 = vmatprep.subr.bf16.mxu0 %v1029
  %1927 = vmatpush1.bf16.msra.mxu0 %v1028
  %1928 = vmatprep.subr.bf16.mxu0 %v1037
  %1929 = vmatpush1.bf16.msra.mxu0 %v1036
  %1930 = vmatprep.subr.bf16.mxu0 %v1045
  %1931 = vmatpush1.bf16.msra.mxu0 %v1044
  %1932 = vmatprep.subr.bf16.mxu0 %v1053
  %1933 = vmatpush1.bf16.msra.mxu0 %v1052
  %1934 = vmatprep.subr.bf16.mxu0 %v1061
  %1935 = vmatpush1.bf16.msra.mxu0 %v1060
  %1936 = vmatprep.subr.bf16.mxu0 %v1069
  %1937 = vmatpush1.bf16.msra.mxu0 %v1068
  %1938 = vmatprep.subr.bf16.mxu0 %v1077
  %1939 = vmatpush1.bf16.msra.mxu0 %v1076
  %1940 = vmatprep.subr.bf16.mxu0 %v1085
  %1941 = vmatpush1.bf16.msra.mxu0 %v1084
  %1942 = vmatprep.subr.bf16.mxu0 %v1093
  %1943 = vmatpush1.bf16.msra.mxu0 %v1092
  %1944 = vmatprep.subr.bf16.mxu0 %v1101
  %1945 = vmatpush1.bf16.msra.mxu0 %v1100
  %1946 = vmatprep.subr.bf16.mxu0 %v1109
  %1947 = vmatpush1.bf16.msra.mxu0 %v1108
  %1948 = vmatprep.subr.bf16.mxu0 %v1117
  %1949 = vmatpush1.bf16.msra.mxu0 %v1116
  %1950 = vmatprep.subr.bf16.mxu0 %v1125
  %1951 = vmatpush1.bf16.msra.mxu0 %v1124
  %1952 = vmatprep.subr.bf16.mxu0 %v1133
  %1953 = vmatpush1.bf16.msra.mxu0 %v1132
  %1954 = vmatprep.subr.bf16.mxu0 %v1141
  %1955 = vmatpush1.bf16.msra.mxu0 %v1140
  %1956 = vmatprep.subr.bf16.mxu0 %v1149
  %1957 = vmatpush1.bf16.msra.mxu0 %v1148
  %1958 = vmatprep.mubr.bf16.mxu0 %v1925
  %1959 = vmatmul.mubr.bf16.gmra.mrb[0].mxu0 %v1924
  %v1960 = vpop.f32.mrb[0].mxu0
  %v1961 = vadd.f32 0.0, %v1960
  %v1962 = vpop.f32.mrb[0].mxu0
  %v1963 = vadd.f32 0.0, %v1962
  %v1964 = vpop.f32.mrb[0].mxu0
  %v1965 = vpop.f32.mrb[0].mxu0
  %1966 = vdwg.mxu0
  %1967 = vmatprep.subr.bf16.mxu0 %v1031
  %1968 = vmatpush1.bf16.msra.mxu0 %v1030
  %1969 = vmatprep.subr.bf16.mxu0 %v1039
  %1970 = vmatpush1.bf16.msra.mxu0 %v1038
  %1971 = vmatprep.subr.bf16.mxu0 %v1047
  %1972 = vmatpush1.bf16.msra.mxu0 %v1046
  %1973 = vmatprep.subr.bf16.mxu0 %v1055
  %1974 = vmatpush1.bf16.msra.mxu0 %v1054
  %1975 = vmatprep.subr.bf16.mxu0 %v1063
  %1976 = vmatpush1.bf16.msra.mxu0 %v1062
  %1977 = vmatprep.subr.bf16.mxu0 %v1071
  %1978 = vmatpush1.bf16.msra.mxu0 %v1070
  %1979 = vmatprep.subr.bf16.mxu0 %v1079
  %1980 = vmatpush1.bf16.msra.mxu0 %v1078
  %1981 = vmatprep.subr.bf16.mxu0 %v1087
  %1982 = vmatpush1.bf16.msra.mxu0 %v1086
  %1983 = vmatprep.subr.bf16.mxu0 %v1095
  %1984 = vmatpush1.bf16.msra.mxu0 %v1094
  %1985 = vmatprep.subr.bf16.mxu0 %v1103
  %1986 = vmatpush1.bf16.msra.mxu0 %v1102
  %1987 = vmatprep.subr.bf16.mxu0 %v1111
  %1988 = vmatpush1.bf16.msra.mxu0 %v1110
  %1989 = vmatprep.subr.bf16.mxu0 %v1119
  %1990 = vmatpush1.bf16.msra.mxu0 %v1118
  %1991 = vmatprep.subr.bf16.mxu0 %v1127
  %1992 = vmatpush1.bf16.msra.mxu0 %v1126
  %1993 = vmatprep.subr.bf16.mxu0 %v1135
  %1994 = vmatpush1.bf16.msra.mxu0 %v1134
  %1995 = vmatprep.subr.bf16.mxu0 %v1143
  %1996 = vmatpush1.bf16.msra.mxu0 %v1142
  %1997 = vmatprep.subr.bf16.mxu0 %v1151
  %1998 = vmatpush1.bf16.msra.mxu0 %v1150
  %1999 = vmatprep.mubr.bf16.mxu0 %v1925
  %2000 = vmatmul.mubr.bf16.gmra.mrb[0].mxu0 %v1924
  %v2001 = vpop.f32.mrb[0].mxu0
  %v2002 = vadd.f32 0.0, %v2001
  %v2003 = vpop.f32.mrb[0].mxu0
  %v2004 = vadd.f32 0.0, %v2003
  %v2005 = vpop.f32.mrb[0].mxu0
  %v2006 = vpop.f32.mrb[0].mxu0
  %2007 = vdwg.mxu0
  %2008 = vmatprep.subr.bf16.mxu0 %v1033
  %2009 = vmatpush1.bf16.msra.mxu0 %v1032
  %2010 = vmatprep.subr.bf16.mxu0 %v1041
  %2011 = vmatpush1.bf16.msra.mxu0 %v1040
  %2012 = vmatprep.subr.bf16.mxu0 %v1049
  %2013 = vmatpush1.bf16.msra.mxu0 %v1048
  %2014 = vmatprep.subr.bf16.mxu0 %v1057
  %2015 = vmatpush1.bf16.msra.mxu0 %v1056
  %2016 = vmatprep.subr.bf16.mxu0 %v1065
  %2017 = vmatpush1.bf16.msra.mxu0 %v1064
  %2018 = vmatprep.subr.bf16.mxu0 %v1073
  %2019 = vmatpush1.bf16.msra.mxu0 %v1072
  %2020 = vmatprep.subr.bf16.mxu0 %v1081
  %2021 = vmatpush1.bf16.msra.mxu0 %v1080
  %2022 = vmatprep.subr.bf16.mxu0 %v1089
  %2023 = vmatpush1.bf16.msra.mxu0 %v1088
  %2024 = vmatprep.subr.bf16.mxu0 %v1097
  %2025 = vmatpush1.bf16.msra.mxu0 %v1096
  %2026 = vmatprep.subr.bf16.mxu0 %v1105
  %2027 = vmatpush1.bf16.msra.mxu0 %v1104
  %2028 = vmatprep.subr.bf16.mxu0 %v1113
  %2029 = vmatpush1.bf16.msra.mxu0 %v1112
  %2030 = vmatprep.subr.bf16.mxu0 %v1121
  %2031 = vmatpush1.bf16.msra.mxu0 %v1120
  %2032 = vmatprep.subr.bf16.mxu0 %v1129
  %2033 = vmatpush1.bf16.msra.mxu0 %v1128
  %2034 = vmatprep.subr.bf16.mxu0 %v1137
  %2035 = vmatpush1.bf16.msra.mxu0 %v1136
  %2036 = vmatprep.subr.bf16.mxu0 %v1145
  %2037 = vmatpush1.bf16.msra.mxu0 %v1144
  %2038 = vmatprep.subr.bf16.mxu0 %v1153
  %2039 = vmatpush1.bf16.msra.mxu0 %v1152
  %2040 = vmatprep.mubr.bf16.mxu0 %v1925
  %2041 = vmatmul.mubr.bf16.gmra.mrb[0].mxu0 %v1924
  %v2042 = vpop.f32.mrb[0].mxu0
  %v2043 = vadd.f32 0.0, %v2042
  %v2044 = vpop.f32.mrb[0].mxu0
  %v2045 = vadd.f32 0.0, %v2044
  %v2046 = vpop.f32.mrb[0].mxu0
  %v2047 = vpop.f32.mrb[0].mxu0
  %2048 = vdwg.mxu0
  %2049 = vmatprep.subr.bf16.mxu0 %v1035
  %2050 = vmatpush1.bf16.msra.mxu0 %v1034
  %2051 = vmatprep.subr.bf16.mxu0 %v1043
  %2052 = vmatpush1.bf16.msra.mxu0 %v1042
  %2053 = vmatprep.subr.bf16.mxu0 %v1051
  %2054 = vmatpush1.bf16.msra.mxu0 %v1050
  %2055 = vmatprep.subr.bf16.mxu0 %v1059
  %2056 = vmatpush1.bf16.msra.mxu0 %v1058
  %2057 = vmatprep.subr.bf16.mxu0 %v1067
  %2058 = vmatpush1.bf16.msra.mxu0 %v1066
  %2059 = vmatprep.subr.bf16.mxu0 %v1075
  %2060 = vmatpush1.bf16.msra.mxu0 %v1074
  %2061 = vmatprep.subr.bf16.mxu0 %v1083
  %2062 = vmatpush1.bf16.msra.mxu0 %v1082
  %2063 = vmatprep.subr.bf16.mxu0 %v1091
  %2064 = vmatpush1.bf16.msra.mxu0 %v1090
  %2065 = vmatprep.subr.bf16.mxu0 %v1099
  %2066 = vmatpush1.bf16.msra.mxu0 %v1098
  %2067 = vmatprep.subr.bf16.mxu0 %v1107
  %2068 = vmatpush1.bf16.msra.mxu0 %v1106
  %2069 = vmatprep.subr.bf16.mxu0 %v1115
  %2070 = vmatpush1.bf16.msra.mxu0 %v1114
  %2071 = vmatprep.subr.bf16.mxu0 %v1123
  %2072 = vmatpush1.bf16.msra.mxu0 %v1122
  %2073 = vmatprep.subr.bf16.mxu0 %v1131
  %2074 = vmatpush1.bf16.msra.mxu0 %v1130
  %2075 = vmatprep.subr.bf16.mxu0 %v1139
  %2076 = vmatpush1.bf16.msra.mxu0 %v1138
  %2077 = vmatprep.subr.bf16.mxu0 %v1147
  %2078 = vmatpush1.bf16.msra.mxu0 %v1146
  %2079 = vmatprep.subr.bf16.mxu0 %v1155
  %2080 = vmatpush1.bf16.msra.mxu0 %v1154
  %2081 = vmatprep.mubr.bf16.mxu0 %v1925
  %2082 = vmatmul.mubr.bf16.gmra.mrb[0].mxu0 %v1924
  %v2083 = vpop.f32.mrb[0].mxu0
  %v2084 = vadd.f32 0.0, %v2083
  %v2085 = vpop.f32.mrb[0].mxu0
  %v2086 = vadd.f32 0.0, %v2085
  %v2087 = vpop.f32.mrb[0].mxu0
  %v2088 = vpop.f32.mrb[0].mxu0
  %2089 = vdwg.mxu0
  %v2090 = vld [vmem:[#allocation2 + $0x80] sm:$0xff]
  %v2091 = vld [vmem:[#allocation2 + $0x88] sm:$0xff]
  %v2092 = vld [vmem:[#allocation2 + $0x90] sm:$0xff]
  %v2093 = vld [vmem:[#allocation2 + $0x98] sm:$0xff]
  %v2094 = vadd.f32 %v2090, %v1961
  %v2095 = vadd.f32 %v2091, %v1963
  %v2096 = vadd.f32 %v2092, %v2002
  %v2097 = vadd.f32 %v2093, %v2004
  %v2098 = vmul.f32 %v2094, 0.5
  %v2099 = vtanh.pop %v2098
  %v2100 = vmul.f32 %v2099, 0.5
  %v2101 = vadd.f32 %v2100, 0.5
  %v2102 = vmul.f32 %v2095, 0.5
  %v2103 = vtanh.pop %v2102
  %v2104 = vmul.f32 %v2103, 0.5
  %v2105 = vadd.f32 %v2104, 0.5
  %v2106 = vtanh.pop %v2096
  %v2107 = vmul.f32 %v2097, 0.5
  %v2108 = vtanh.pop %v2107
  %v2109 = vmul.f32 %v2108, 0.5
  %v2110 = vadd.f32 %v2109, 0.5
  %v2111 = vmul.f32 %v2105, %v1899
  %v2112 = vmul.f32 %v2101, %v2106
  %v2113 = vadd.f32 %v2111, %v2112
  %v2114 = vtanh.pop %v2113
  %v2115 = vmul.f32 %v2110, %v2114
  %v2116 = vadd.f32 %v471, %v2043
  %v2117 = vadd.f32 %v475, %v2045
  %v2118 = vadd.f32 %v479, %v2084
  %v2119 = vadd.f32 %v483, %v2086
  %v2120 = vmul.f32 %v2116, 0.5
  %v2121 = vtanh.pop %v2120
  %v2122 = vmul.f32 %v2121, 0.5
  %v2123 = vadd.f32 %v2122, 0.5
  %v2124 = vmul.f32 %v2117, 0.5
  %v2125 = vtanh.pop %v2124
  %v2126 = vmul.f32 %v2125, 0.5
  %v2127 = vadd.f32 %v2126, 0.5
  %v2128 = vtanh.pop %v2118
  %v2129 = vmul.f32 %v2119, 0.5
  %v2130 = vtanh.pop %v2129
  %v2131 = vmul.f32 %v2130, 0.5
  %v2132 = vadd.f32 %v2131, 0.5
  %v2133 = vmul.f32 %v2127, %v1921
  %v2134 = vmul.f32 %v2123, %v2128
  %v2135 = vadd.f32 %v2133, %v2134
  %v2136 = vtanh.pop %v2135
  %v2137 = vmul.f32 %v2132, %v2136
  %v2138 = vpack.c.bf16 %v2115, %v2115
  %v2139 = vpack.c.bf16 %v2137, %v2137
  %2140 = vmatprep.subr.bf16.mxu0 %v1029
  %2141 = vmatpush1.bf16.msra.mxu0 %v1028
  %2142 = vmatprep.subr.bf16.mxu0 %v1037
  %2143 = vmatpush1.bf16.msra.mxu0 %v1036
  %2144 = vmatprep.subr.bf16.mxu0 %v1045
  %2145 = vmatpush1.bf16.msra.mxu0 %v1044
  %2146 = vmatprep.subr.bf16.mxu0 %v1053
  %2147 = vmatpush1.bf16.msra.mxu0 %v1052
  %2148 = vmatprep.subr.bf16.mxu0 %v1061
  %2149 = vmatpush1.bf16.msra.mxu0 %v1060
  %2150 = vmatprep.subr.bf16.mxu0 %v1069
  %2151 = vmatpush1.bf16.msra.mxu0 %v1068
  %2152 = vmatprep.subr.bf16.mxu0 %v1077
  %2153 = vmatpush1.bf16.msra.mxu0 %v1076
  %2154 = vmatprep.subr.bf16.mxu0 %v1085
  %2155 = vmatpush1.bf16.msra.mxu0 %v1084
  %2156 = vmatprep.subr.bf16.mxu0 %v1093
  %2157 = vmatpush1.bf16.msra.mxu0 %v1092
  %2158 = vmatprep.subr.bf16.mxu0 %v1101
  %2159 = vmatpush1.bf16.msra.mxu0 %v1100
  %2160 = vmatprep.subr.bf16.mxu0 %v1109
  %2161 = vmatpush1.bf16.msra.mxu0 %v1108
  %2162 = vmatprep.subr.bf16.mxu0 %v1117
  %2163 = vmatpush1.bf16.msra.mxu0 %v1116
  %2164 = vmatprep.subr.bf16.mxu0 %v1125
  %2165 = vmatpush1.bf16.msra.mxu0 %v1124
  %2166 = vmatprep.subr.bf16.mxu0 %v1133
  %2167 = vmatpush1.bf16.msra.mxu0 %v1132
  %2168 = vmatprep.subr.bf16.mxu0 %v1141
  %2169 = vmatpush1.bf16.msra.mxu0 %v1140
  %2170 = vmatprep.subr.bf16.mxu0 %v1149
  %2171 = vmatpush1.bf16.msra.mxu0 %v1148
  %2172 = vmatprep.mubr.bf16.mxu0 %v2139
  %2173 = vmatmul.mubr.bf16.gmra.mrb[0].mxu0 %v2138
  %v2174 = vpop.f32.mrb[0].mxu0
  %v2175 = vadd.f32 0.0, %v2174
  %v2176 = vpop.f32.mrb[0].mxu0
  %v2177 = vadd.f32 0.0, %v2176
  %v2178 = vpop.f32.mrb[0].mxu0
  %v2179 = vpop.f32.mrb[0].mxu0
  %2180 = vdwg.mxu0
  %2181 = vmatprep.subr.bf16.mxu0 %v1031
  %2182 = vmatpush1.bf16.msra.mxu0 %v1030
  %2183 = vmatprep.subr.bf16.mxu0 %v1039
  %2184 = vmatpush1.bf16.msra.mxu0 %v1038
  %2185 = vmatprep.subr.bf16.mxu0 %v1047
  %2186 = vmatpush1.bf16.msra.mxu0 %v1046
  %2187 = vmatprep.subr.bf16.mxu0 %v1055
  %2188 = vmatpush1.bf16.msra.mxu0 %v1054
  %2189 = vmatprep.subr.bf16.mxu0 %v1063
  %2190 = vmatpush1.bf16.msra.mxu0 %v1062
  %2191 = vmatprep.subr.bf16.mxu0 %v1071
  %2192 = vmatpush1.bf16.msra.mxu0 %v1070
  %2193 = vmatprep.subr.bf16.mxu0 %v1079
  %2194 = vmatpush1.bf16.msra.mxu0 %v1078
  %2195 = vmatprep.subr.bf16.mxu0 %v1087
  %2196 = vmatpush1.bf16.msra.mxu0 %v1086
  %2197 = vmatprep.subr.bf16.mxu0 %v1095
  %2198 = vmatpush1.bf16.msra.mxu0 %v1094
  %2199 = vmatprep.subr.bf16.mxu0 %v1103
  %2200 = vmatpush1.bf16.msra.mxu0 %v1102
  %2201 = vmatprep.subr.bf16.mxu0 %v1111
  %2202 = vmatpush1.bf16.msra.mxu0 %v1110
  %2203 = vmatprep.subr.bf16.mxu0 %v1119
  %2204 = vmatpush1.bf16.msra.mxu0 %v1118
  %2205 = vmatprep.subr.bf16.mxu0 %v1127
  %2206 = vmatpush1.bf16.msra.mxu0 %v1126
  %2207 = vmatprep.subr.bf16.mxu0 %v1135
  %2208 = vmatpush1.bf16.msra.mxu0 %v1134
  %2209 = vmatprep.subr.bf16.mxu0 %v1143
  %2210 = vmatpush1.bf16.msra.mxu0 %v1142
  %2211 = vmatprep.subr.bf16.mxu0 %v1151
  %2212 = vmatpush1.bf16.msra.mxu0 %v1150
  %2213 = vmatprep.mubr.bf16.mxu0 %v2139
  %2214 = vmatmul.mubr.bf16.gmra.mrb[0].mxu0 %v2138
  %v2215 = vpop.f32.mrb[0].mxu0
  %v2216 = vadd.f32 0.0, %v2215
  %v2217 = vpop.f32.mrb[0].mxu0
  %v2218 = vadd.f32 0.0, %v2217
  %v2219 = vpop.f32.mrb[0].mxu0
  %v2220 = vpop.f32.mrb[0].mxu0
  %2221 = vdwg.mxu0
  %2222 = vmatprep.subr.bf16.mxu0 %v1033
  %2223 = vmatpush1.bf16.msra.mxu0 %v1032
  %2224 = vmatprep.subr.bf16.mxu0 %v1041
  %2225 = vmatpush1.bf16.msra.mxu0 %v1040
  %2226 = vmatprep.subr.bf16.mxu0 %v1049
  %2227 = vmatpush1.bf16.msra.mxu0 %v1048
  %2228 = vmatprep.subr.bf16.mxu0 %v1057
  %2229 = vmatpush1.bf16.msra.mxu0 %v1056
  %2230 = vmatprep.subr.bf16.mxu0 %v1065
  %2231 = vmatpush1.bf16.msra.mxu0 %v1064
  %2232 = vmatprep.subr.bf16.mxu0 %v1073
  %2233 = vmatpush1.bf16.msra.mxu0 %v1072
  %2234 = vmatprep.subr.bf16.mxu0 %v1081
  %2235 = vmatpush1.bf16.msra.mxu0 %v1080
  %2236 = vmatprep.subr.bf16.mxu0 %v1089
  %2237 = vmatpush1.bf16.msra.mxu0 %v1088
  %2238 = vmatprep.subr.bf16.mxu0 %v1097
  %2239 = vmatpush1.bf16.msra.mxu0 %v1096
  %2240 = vmatprep.subr.bf16.mxu0 %v1105
  %2241 = vmatpush1.bf16.msra.mxu0 %v1104
  %2242 = vmatprep.subr.bf16.mxu0 %v1113
  %2243 = vmatpush1.bf16.msra.mxu0 %v1112
  %2244 = vmatprep.subr.bf16.mxu0 %v1121
  %2245 = vmatpush1.bf16.msra.mxu0 %v1120
  %2246 = vmatprep.subr.bf16.mxu0 %v1129
  %2247 = vmatpush1.bf16.msra.mxu0 %v1128
  %2248 = vmatprep.subr.bf16.mxu0 %v1137
  %2249 = vmatpush1.bf16.msra.mxu0 %v1136
  %2250 = vmatprep.subr.bf16.mxu0 %v1145
  %2251 = vmatpush1.bf16.msra.mxu0 %v1144
  %2252 = vmatprep.subr.bf16.mxu0 %v1153
  %2253 = vmatpush1.bf16.msra.mxu0 %v1152
  %2254 = vmatprep.mubr.bf16.mxu0 %v2139
  %2255 = vmatmul.mubr.bf16.gmra.mrb[0].mxu0 %v2138
  %v2256 = vpop.f32.mrb[0].mxu0
  %v2257 = vadd.f32 0.0, %v2256
  %v2258 = vpop.f32.mrb[0].mxu0
  %v2259 = vadd.f32 0.0, %v2258
  %v2260 = vpop.f32.mrb[0].mxu0
  %v2261 = vpop.f32.mrb[0].mxu0
  %2262 = vdwg.mxu0
  %2263 = vmatprep.subr.bf16.mxu0 %v1035
  %2264 = vmatpush1.bf16.msra.mxu0 %v1034
  %2265 = vmatprep.subr.bf16.mxu0 %v1043
  %2266 = vmatpush1.bf16.msra.mxu0 %v1042
  %2267 = vmatprep.subr.bf16.mxu0 %v1051
  %2268 = vmatpush1.bf16.msra.mxu0 %v1050
  %2269 = vmatprep.subr.bf16.mxu0 %v1059
  %2270 = vmatpush1.bf16.msra.mxu0 %v1058
  %2271 = vmatprep.subr.bf16.mxu0 %v1067
  %2272 = vmatpush1.bf16.msra.mxu0 %v1066
  %2273 = vmatprep.subr.bf16.mxu0 %v1075
  %2274 = vmatpush1.bf16.msra.mxu0 %v1074
  %2275 = vmatprep.subr.bf16.mxu0 %v1083
  %2276 = vmatpush1.bf16.msra.mxu0 %v1082
  %2277 = vmatprep.subr.bf16.mxu0 %v1091
  %2278 = vmatpush1.bf16.msra.mxu0 %v1090
  %2279 = vmatprep.subr.bf16.mxu0 %v1099
  %2280 = vmatpush1.bf16.msra.mxu0 %v1098
  %2281 = vmatprep.subr.bf16.mxu0 %v1107
  %2282 = vmatpush1.bf16.msra.mxu0 %v1106
  %2283 = vmatprep.subr.bf16.mxu0 %v1115
  %2284 = vmatpush1.bf16.msra.mxu0 %v1114
  %2285 = vmatprep.subr.bf16.mxu0 %v1123
  %2286 = vmatpush1.bf16.msra.mxu0 %v1122
  %2287 = vmatprep.subr.bf16.mxu0 %v1131
  %2288 = vmatpush1.bf16.msra.mxu0 %v1130
  %2289 = vmatprep.subr.bf16.mxu0 %v1139
  %2290 = vmatpush1.bf16.msra.mxu0 %v1138
  %2291 = vmatprep.subr.bf16.mxu0 %v1147
  %2292 = vmatpush1.bf16.msra.mxu0 %v1146
  %2293 = vmatprep.subr.bf16.mxu0 %v1155
  %2294 = vmatpush1.bf16.msra.mxu0 %v1154
  %2295 = vmatprep.mubr.bf16.mxu0 %v2139
  %2296 = vmatmul.mubr.bf16.gmra.mrb[0].mxu0 %v2138
  %v2297 = vpop.f32.mrb[0].mxu0
  %v2298 = vadd.f32 0.0, %v2297
  %v2299 = vpop.f32.mrb[0].mxu0
  %v2300 = vadd.f32 0.0, %v2299
  %v2301 = vpop.f32.mrb[0].mxu0
  %v2302 = vpop.f32.mrb[0].mxu0
  %2303 = vdwg.mxu0
  %v2304 = vld [vmem:[#allocation2 + $0xa0] sm:$0xff]
  %v2305 = vld [vmem:[#allocation2 + $0xa8] sm:$0xff]
  %v2306 = vld [vmem:[#allocation2 + $0xb0] sm:$0xff]
  %v2307 = vld [vmem:[#allocation2 + $0xb8] sm:$0xff]
  %v2308 = vadd.f32 %v2304, %v2175
  %v2309 = vadd.f32 %v2305, %v2177
  %v2310 = vadd.f32 %v2306, %v2216
  %v2311 = vadd.f32 %v2307, %v2218
  %v2312 = vmul.f32 %v2308, 0.5
  %v2313 = vtanh.pop %v2312
  %v2314 = vmul.f32 %v2313, 0.5
  %v2315 = vadd.f32 %v2314, 0.5
  %v2316 = vmul.f32 %v2309, 0.5
  %v2317 = vtanh.pop %v2316
  %v2318 = vmul.f32 %v2317, 0.5
  %v2319 = vadd.f32 %v2318, 0.5
  %v2320 = vtanh.pop %v2310
  %v2321 = vmul.f32 %v2311, 0.5
  %v2322 = vtanh.pop %v2321
  %v2323 = vmul.f32 %v2322, 0.5
  %v2324 = vadd.f32 %v2323, 0.5
  %v2325 = vmul.f32 %v2319, %v2113
  %v2326 = vmul.f32 %v2315, %v2320
  %v2327 = vadd.f32 %v2325, %v2326
  %v2328 = vtanh.pop %v2327
  %v2329 = vmul.f32 %v2324, %v2328
  %v2330 = vadd.f32 %v471, %v2257
  %v2331 = vadd.f32 %v475, %v2259
  %v2332 = vadd.f32 %v479, %v2298
  %v2333 = vadd.f32 %v483, %v2300
  %v2334 = vmul.f32 %v2330, 0.5
  %v2335 = vtanh.pop %v2334
  %v2336 = vmul.f32 %v2335, 0.5
  %v2337 = vadd.f32 %v2336, 0.5
  %v2338 = vmul.f32 %v2331, 0.5
  %v2339 = vtanh.pop %v2338
  %v2340 = vmul.f32 %v2339, 0.5
  %v2341 = vadd.f32 %v2340, 0.5
  %v2342 = vtanh.pop %v2332
  %v2343 = vmul.f32 %v2333, 0.5
  %v2344 = vtanh.pop %v2343
  %v2345 = vmul.f32 %v2344, 0.5
  %v2346 = vadd.f32 %v2345, 0.5
  %v2347 = vmul.f32 %v2341, %v2135
  %v2348 = vmul.f32 %v2337, %v2342
  %v2349 = vadd.f32 %v2347, %v2348
  %v2350 = vtanh.pop %v2349
  %v2351 = vmul.f32 %v2346, %v2350
  %v2352 = vpack.c.bf16 %v2329, %v2329
  %v2353 = vpack.c.bf16 %v2351, %v2351
  %2354 = vmatprep.subr.bf16.mxu0 %v1029
  %2355 = vmatpush1.bf16.msra.mxu0 %v1028
  %2356 = vmatprep.subr.bf16.mxu0 %v1037
  %2357 = vmatpush1.bf16.msra.mxu0 %v1036
  %2358 = vmatprep.subr.bf16.mxu0 %v1045
  %2359 = vmatpush1.bf16.msra.mxu0 %v1044
  %2360 = vmatprep.subr.bf16.mxu0 %v1053
  %2361 = vmatpush1.bf16.msra.mxu0 %v1052
  %2362 = vmatprep.subr.bf16.mxu0 %v1061
  %2363 = vmatpush1.bf16.msra.mxu0 %v1060
  %2364 = vmatprep.subr.bf16.mxu0 %v1069
  %2365 = vmatpush1.bf16.msra.mxu0 %v1068
  %2366 = vmatprep.subr.bf16.mxu0 %v1077
  %2367 = vmatpush1.bf16.msra.mxu0 %v1076
  %2368 = vmatprep.subr.bf16.mxu0 %v1085
  %2369 = vmatpush1.bf16.msra.mxu0 %v1084
  %2370 = vmatprep.subr.bf16.mxu0 %v1093
  %2371 = vmatpush1.bf16.msra.mxu0 %v1092
  %2372 = vmatprep.subr.bf16.mxu0 %v1101
  %2373 = vmatpush1.bf16.msra.mxu0 %v1100
  %2374 = vmatprep.subr.bf16.mxu0 %v1109
  %2375 = vmatpush1.bf16.msra.mxu0 %v1108
  %2376 = vmatprep.subr.bf16.mxu0 %v1117
  %2377 = vmatpush1.bf16.msra.mxu0 %v1116
  %2378 = vmatprep.subr.bf16.mxu0 %v1125
  %2379 = vmatpush1.bf16.msra.mxu0 %v1124
  %2380 = vmatprep.subr.bf16.mxu0 %v1133
  %2381 = vmatpush1.bf16.msra.mxu0 %v1132
  %2382 = vmatprep.subr.bf16.mxu0 %v1141
  %2383 = vmatpush1.bf16.msra.mxu0 %v1140
  %2384 = vmatprep.subr.bf16.mxu0 %v1149
  %2385 = vmatpush1.bf16.msra.mxu0 %v1148
  %2386 = vmatprep.mubr.bf16.mxu0 %v2353
  %2387 = vmatmul.mubr.bf16.gmra.mrb[0].mxu0 %v2352
  %v2388 = vpop.f32.mrb[0].mxu0
  %v2389 = vadd.f32 0.0, %v2388
  %v2390 = vpop.f32.mrb[0].mxu0
  %v2391 = vadd.f32 0.0, %v2390
  %v2392 = vpop.f32.mrb[0].mxu0
  %v2393 = vpop.f32.mrb[0].mxu0
  %2394 = vdwg.mxu0
  %2395 = vmatprep.subr.bf16.mxu0 %v1031
  %2396 = vmatpush1.bf16.msra.mxu0 %v1030
  %2397 = vmatprep.subr.bf16.mxu0 %v1039
  %2398 = vmatpush1.bf16.msra.mxu0 %v1038
  %2399 = vmatprep.subr.bf16.mxu0 %v1047
  %2400 = vmatpush1.bf16.msra.mxu0 %v1046
  %2401 = vmatprep.subr.bf16.mxu0 %v1055
  %2402 = vmatpush1.bf16.msra.mxu0 %v1054
  %2403 = vmatprep.subr.bf16.mxu0 %v1063
  %2404 = vmatpush1.bf16.msra.mxu0 %v1062
  %2405 = vmatprep.subr.bf16.mxu0 %v1071
  %2406 = vmatpush1.bf16.msra.mxu0 %v1070
  %2407 = vmatprep.subr.bf16.mxu0 %v1079
  %2408 = vmatpush1.bf16.msra.mxu0 %v1078
  %2409 = vmatprep.subr.bf16.mxu0 %v1087
  %2410 = vmatpush1.bf16.msra.mxu0 %v1086
  %2411 = vmatprep.subr.bf16.mxu0 %v1095
  %2412 = vmatpush1.bf16.msra.mxu0 %v1094
  %2413 = vmatprep.subr.bf16.mxu0 %v1103
  %2414 = vmatpush1.bf16.msra.mxu0 %v1102
  %2415 = vmatprep.subr.bf16.mxu0 %v1111
  %2416 = vmatpush1.bf16.msra.mxu0 %v1110
  %2417 = vmatprep.subr.bf16.mxu0 %v1119
  %2418 = vmatpush1.bf16.msra.mxu0 %v1118
  %2419 = vmatprep.subr.bf16.mxu0 %v1127
  %2420 = vmatpush1.bf16.msra.mxu0 %v1126
  %2421 = vmatprep.subr.bf16.mxu0 %v1135
  %2422 = vmatpush1.bf16.msra.mxu0 %v1134
  %2423 = vmatprep.subr.bf16.mxu0 %v1143
  %2424 = vmatpush1.bf16.msra.mxu0 %v1142
  %2425 = vmatprep.subr.bf16.mxu0 %v1151
  %2426 = vmatpush1.bf16.msra.mxu0 %v1150
  %2427 = vmatprep.mubr.bf16.mxu0 %v2353
  %2428 = vmatmul.mubr.bf16.gmra.mrb[0].mxu0 %v2352
  %v2429 = vpop.f32.mrb[0].mxu0
  %v2430 = vadd.f32 0.0, %v2429
  %v2431 = vpop.f32.mrb[0].mxu0
  %v2432 = vadd.f32 0.0, %v2431
  %v2433 = vpop.f32.mrb[0].mxu0
  %v2434 = vpop.f32.mrb[0].mxu0
  %2435 = vdwg.mxu0
  %2436 = vmatprep.subr.bf16.mxu0 %v1033
  %2437 = vmatpush1.bf16.msra.mxu0 %v1032
  %2438 = vmatprep.subr.bf16.mxu0 %v1041
  %2439 = vmatpush1.bf16.msra.mxu0 %v1040
  %2440 = vmatprep.subr.bf16.mxu0 %v1049
  %2441 = vmatpush1.bf16.msra.mxu0 %v1048
  %2442 = vmatprep.subr.bf16.mxu0 %v1057
  %2443 = vmatpush1.bf16.msra.mxu0 %v1056
  %2444 = vmatprep.subr.bf16.mxu0 %v1065
  %2445 = vmatpush1.bf16.msra.mxu0 %v1064
  %2446 = vmatprep.subr.bf16.mxu0 %v1073
  %2447 = vmatpush1.bf16.msra.mxu0 %v1072
  %2448 = vmatprep.subr.bf16.mxu0 %v1081
  %2449 = vmatpush1.bf16.msra.mxu0 %v1080
  %2450 = vmatprep.subr.bf16.mxu0 %v1089
  %2451 = vmatpush1.bf16.msra.mxu0 %v1088
  %2452 = vmatprep.subr.bf16.mxu0 %v1097
  %2453 = vmatpush1.bf16.msra.mxu0 %v1096
  %2454 = vmatprep.subr.bf16.mxu0 %v1105
  %2455 = vmatpush1.bf16.msra.mxu0 %v1104
  %2456 = vmatprep.subr.bf16.mxu0 %v1113
  %2457 = vmatpush1.bf16.msra.mxu0 %v1112
  %2458 = vmatprep.subr.bf16.mxu0 %v1121
  %2459 = vmatpush1.bf16.msra.mxu0 %v1120
  %2460 = vmatprep.subr.bf16.mxu0 %v1129
  %2461 = vmatpush1.bf16.msra.mxu0 %v1128
  %2462 = vmatprep.subr.bf16.mxu0 %v1137
  %2463 = vmatpush1.bf16.msra.mxu0 %v1136
  %2464 = vmatprep.subr.bf16.mxu0 %v1145
  %2465 = vmatpush1.bf16.msra.mxu0 %v1144
  %2466 = vmatprep.subr.bf16.mxu0 %v1153
  %2467 = vmatpush1.bf16.msra.mxu0 %v1152
  %2468 = vmatprep.mubr.bf16.mxu0 %v2353
  %2469 = vmatmul.mubr.bf16.gmra.mrb[0].mxu0 %v2352
  %v2470 = vpop.f32.mrb[0].mxu0
  %v2471 = vadd.f32 0.0, %v2470
  %v2472 = vpop.f32.mrb[0].mxu0
  %v2473 = vadd.f32 0.0, %v2472
  %v2474 = vpop.f32.mrb[0].mxu0
  %v2475 = vpop.f32.mrb[0].mxu0
  %2476 = vdwg.mxu0
  %2477 = vmatprep.subr.bf16.mxu0 %v1035
  %2478 = vmatpush1.bf16.msra.mxu0 %v1034
  %2479 = vmatprep.subr.bf16.mxu0 %v1043
  %2480 = vmatpush1.bf16.msra.mxu0 %v1042
  %2481 = vmatprep.subr.bf16.mxu0 %v1051
  %2482 = vmatpush1.bf16.msra.mxu0 %v1050
  %2483 = vmatprep.subr.bf16.mxu0 %v1059
  %2484 = vmatpush1.bf16.msra.mxu0 %v1058
  %2485 = vmatprep.subr.bf16.mxu0 %v1067
  %2486 = vmatpush1.bf16.msra.mxu0 %v1066
  %2487 = vmatprep.subr.bf16.mxu0 %v1075
  %2488 = vmatpush1.bf16.msra.mxu0 %v1074
  %2489 = vmatprep.subr.bf16.mxu0 %v1083
  %2490 = vmatpush1.bf16.msra.mxu0 %v1082
  %2491 = vmatprep.subr.bf16.mxu0 %v1091
  %2492 = vmatpush1.bf16.msra.mxu0 %v1090
  %2493 = vmatprep.subr.bf16.mxu0 %v1099
  %2494 = vmatpush1.bf16.msra.mxu0 %v1098
  %2495 = vmatprep.subr.bf16.mxu0 %v1107
  %2496 = vmatpush1.bf16.msra.mxu0 %v1106
  %2497 = vmatprep.subr.bf16.mxu0 %v1115
  %2498 = vmatpush1.bf16.msra.mxu0 %v1114
  %2499 = vmatprep.subr.bf16.mxu0 %v1123
  %2500 = vmatpush1.bf16.msra.mxu0 %v1122
  %2501 = vmatprep.subr.bf16.mxu0 %v1131
  %2502 = vmatpush1.bf16.msra.mxu0 %v1130
  %2503 = vmatprep.subr.bf16.mxu0 %v1139
  %2504 = vmatpush1.bf16.msra.mxu0 %v1138
  %2505 = vmatprep.subr.bf16.mxu0 %v1147
  %2506 = vmatpush1.bf16.msra.mxu0 %v1146
  %2507 = vmatprep.subr.bf16.mxu0 %v1155
  %2508 = vmatpush1.bf16.msra.mxu0 %v1154
  %2509 = vmatprep.mubr.bf16.mxu0 %v2353
  %2510 = vmatmul.mubr.bf16.gmra.mrb[0].mxu0 %v2352
  %v2511 = vpop.f32.mrb[0].mxu0
  %v2512 = vadd.f32 0.0, %v2511
  %v2513 = vpop.f32.mrb[0].mxu0
  %v2514 = vadd.f32 0.0, %v2513
  %v2515 = vpop.f32.mrb[0].mxu0
  %v2516 = vpop.f32.mrb[0].mxu0
  %2517 = vdwg.mxu0
  %v2518 = vld [vmem:[#allocation2 + $0xc0] sm:$0xff]
  %v2519 = vld [vmem:[#allocation2 + $0xc8] sm:$0xff]
  %v2520 = vld [vmem:[#allocation2 + $0xd0] sm:$0xff]
  %v2521 = vld [vmem:[#allocation2 + $0xd8] sm:$0xff]
  %v2522 = vadd.f32 %v2518, %v2389
  %v2523 = vadd.f32 %v2519, %v2391
  %v2524 = vadd.f32 %v2520, %v2430
  %v2525 = vadd.f32 %v2521, %v2432
  %v2526 = vmul.f32 %v2522, 0.5
  %v2527 = vtanh.pop %v2526
  %v2528 = vmul.f32 %v2527, 0.5
  %v2529 = vadd.f32 %v2528, 0.5
  %v2530 = vmul.f32 %v2523, 0.5
  %v2531 = vtanh.pop %v2530
  %v2532 = vmul.f32 %v2531, 0.5
  %v2533 = vadd.f32 %v2532, 0.5
  %v2534 = vtanh.pop %v2524
  %v2535 = vmul.f32 %v2525, 0.5
  %v2536 = vtanh.pop %v2535
  %v2537 = vmul.f32 %v2536, 0.5
  %v2538 = vadd.f32 %v2537, 0.5
  %v2539 = vmul.f32 %v2533, %v2327
  %v2540 = vmul.f32 %v2529, %v2534
  %v2541 = vadd.f32 %v2539, %v2540
  %v2542 = vtanh.pop %v2541
  %v2543 = vmul.f32 %v2538, %v2542
  %v2544 = vadd.f32 %v471, %v2471
  %v2545 = vadd.f32 %v475, %v2473
  %v2546 = vadd.f32 %v479, %v2512
  %v2547 = vadd.f32 %v483, %v2514
  %v2548 = vmul.f32 %v2544, 0.5
  %v2549 = vtanh.pop %v2548
  %v2550 = vmul.f32 %v2549, 0.5
  %v2551 = vadd.f32 %v2550, 0.5
  %v2552 = vmul.f32 %v2545, 0.5
  %v2553 = vtanh.pop %v2552
  %v2554 = vmul.f32 %v2553, 0.5
  %v2555 = vadd.f32 %v2554, 0.5
  %v2556 = vtanh.pop %v2546
  %v2557 = vmul.f32 %v2547, 0.5
  %v2558 = vtanh.pop %v2557
  %v2559 = vmul.f32 %v2558, 0.5
  %v2560 = vadd.f32 %v2559, 0.5
  %v2561 = vmul.f32 %v2555, %v2349
  %v2562 = vmul.f32 %v2551, %v2556
  %v2563 = vadd.f32 %v2561, %v2562
  %v2564 = vtanh.pop %v2563
  %v2565 = vmul.f32 %v2560, %v2564
  %v2566 = vpack.c.bf16 %v2543, %v2543
  %v2567 = vpack.c.bf16 %v2565, %v2565
  %2568 = vmatprep.subr.bf16.mxu0 %v1029
  %2569 = vmatpush1.bf16.msra.mxu0 %v1028
  %2570 = vmatprep.subr.bf16.mxu0 %v1037
  %2571 = vmatpush1.bf16.msra.mxu0 %v1036
  %2572 = vmatprep.subr.bf16.mxu0 %v1045
  %2573 = vmatpush1.bf16.msra.mxu0 %v1044
  %2574 = vmatprep.subr.bf16.mxu0 %v1053
  %2575 = vmatpush1.bf16.msra.mxu0 %v1052
  %2576 = vmatprep.subr.bf16.mxu0 %v1061
  %2577 = vmatpush1.bf16.msra.mxu0 %v1060
  %2578 = vmatprep.subr.bf16.mxu0 %v1069
  %2579 = vmatpush1.bf16.msra.mxu0 %v1068
  %2580 = vmatprep.subr.bf16.mxu0 %v1077
  %2581 = vmatpush1.bf16.msra.mxu0 %v1076
  %2582 = vmatprep.subr.bf16.mxu0 %v1085
  %2583 = vmatpush1.bf16.msra.mxu0 %v1084
  %2584 = vmatprep.subr.bf16.mxu0 %v1093
  %2585 = vmatpush1.bf16.msra.mxu0 %v1092
  %2586 = vmatprep.subr.bf16.mxu0 %v1101
  %2587 = vmatpush1.bf16.msra.mxu0 %v1100
  %2588 = vmatprep.subr.bf16.mxu0 %v1109
  %2589 = vmatpush1.bf16.msra.mxu0 %v1108
  %2590 = vmatprep.subr.bf16.mxu0 %v1117
  %2591 = vmatpush1.bf16.msra.mxu0 %v1116
  %2592 = vmatprep.subr.bf16.mxu0 %v1125
  %2593 = vmatpush1.bf16.msra.mxu0 %v1124
  %2594 = vmatprep.subr.bf16.mxu0 %v1133
  %2595 = vmatpush1.bf16.msra.mxu0 %v1132
  %2596 = vmatprep.subr.bf16.mxu0 %v1141
  %2597 = vmatpush1.bf16.msra.mxu0 %v1140
  %2598 = vmatprep.subr.bf16.mxu0 %v1149
  %2599 = vmatpush1.bf16.msra.mxu0 %v1148
  %2600 = vmatprep.mubr.bf16.mxu0 %v2567
  %2601 = vmatmul.mubr.bf16.gmra.mrb[0].mxu0 %v2566
  %v2602 = vpop.f32.mrb[0].mxu0
  %v2603 = vadd.f32 0.0, %v2602
  %v2604 = vpop.f32.mrb[0].mxu0
  %v2605 = vadd.f32 0.0, %v2604
  %v2606 = vpop.f32.mrb[0].mxu0
  %v2607 = vpop.f32.mrb[0].mxu0
  %2608 = vdwg.mxu0
  %2609 = vmatprep.subr.bf16.mxu0 %v1031
  %2610 = vmatpush1.bf16.msra.mxu0 %v1030
  %2611 = vmatprep.subr.bf16.mxu0 %v1039
  %2612 = vmatpush1.bf16.msra.mxu0 %v1038
  %2613 = vmatprep.subr.bf16.mxu0 %v1047
  %2614 = vmatpush1.bf16.msra.mxu0 %v1046
  %2615 = vmatprep.subr.bf16.mxu0 %v1055
  %2616 = vmatpush1.bf16.msra.mxu0 %v1054
  %2617 = vmatprep.subr.bf16.mxu0 %v1063
  %2618 = vmatpush1.bf16.msra.mxu0 %v1062
  %2619 = vmatprep.subr.bf16.mxu0 %v1071
  %2620 = vmatpush1.bf16.msra.mxu0 %v1070
  %2621 = vmatprep.subr.bf16.mxu0 %v1079
  %2622 = vmatpush1.bf16.msra.mxu0 %v1078
  %2623 = vmatprep.subr.bf16.mxu0 %v1087
  %2624 = vmatpush1.bf16.msra.mxu0 %v1086
  %2625 = vmatprep.subr.bf16.mxu0 %v1095
  %2626 = vmatpush1.bf16.msra.mxu0 %v1094
  %2627 = vmatprep.subr.bf16.mxu0 %v1103
  %2628 = vmatpush1.bf16.msra.mxu0 %v1102
  %2629 = vmatprep.subr.bf16.mxu0 %v1111
  %2630 = vmatpush1.bf16.msra.mxu0 %v1110
  %2631 = vmatprep.subr.bf16.mxu0 %v1119
  %2632 = vmatpush1.bf16.msra.mxu0 %v1118
  %2633 = vmatprep.subr.bf16.mxu0 %v1127
  %2634 = vmatpush1.bf16.msra.mxu0 %v1126
  %2635 = vmatprep.subr.bf16.mxu0 %v1135
  %2636 = vmatpush1.bf16.msra.mxu0 %v1134
  %2637 = vmatprep.subr.bf16.mxu0 %v1143
  %2638 = vmatpush1.bf16.msra.mxu0 %v1142
  %2639 = vmatprep.subr.bf16.mxu0 %v1151
  %2640 = vmatpush1.bf16.msra.mxu0 %v1150
  %2641 = vmatprep.mubr.bf16.mxu0 %v2567
  %2642 = vmatmul.mubr.bf16.gmra.mrb[0].mxu0 %v2566
  %v2643 = vpop.f32.mrb[0].mxu0
  %v2644 = vadd.f32 0.0, %v2643
  %v2645 = vpop.f32.mrb[0].mxu0
  %v2646 = vadd.f32 0.0, %v2645
  %v2647 = vpop.f32.mrb[0].mxu0
  %v2648 = vpop.f32.mrb[0].mxu0
  %2649 = vdwg.mxu0
  %2650 = vmatprep.subr.bf16.mxu0 %v1033
  %2651 = vmatpush1.bf16.msra.mxu0 %v1032
  %2652 = vmatprep.subr.bf16.mxu0 %v1041
  %2653 = vmatpush1.bf16.msra.mxu0 %v1040
  %2654 = vmatprep.subr.bf16.mxu0 %v1049
  %2655 = vmatpush1.bf16.msra.mxu0 %v1048
  %2656 = vmatprep.subr.bf16.mxu0 %v1057
  %2657 = vmatpush1.bf16.msra.mxu0 %v1056
  %2658 = vmatprep.subr.bf16.mxu0 %v1065
  %2659 = vmatpush1.bf16.msra.mxu0 %v1064
  %2660 = vmatprep.subr.bf16.mxu0 %v1073
  %2661 = vmatpush1.bf16.msra.mxu0 %v1072
  %2662 = vmatprep.subr.bf16.mxu0 %v1081
  %2663 = vmatpush1.bf16.msra.mxu0 %v1080
  %2664 = vmatprep.subr.bf16.mxu0 %v1089
  %2665 = vmatpush1.bf16.msra.mxu0 %v1088
  %2666 = vmatprep.subr.bf16.mxu0 %v1097
  %2667 = vmatpush1.bf16.msra.mxu0 %v1096
  %2668 = vmatprep.subr.bf16.mxu0 %v1105
  %2669 = vmatpush1.bf16.msra.mxu0 %v1104
  %2670 = vmatprep.subr.bf16.mxu0 %v1113
  %2671 = vmatpush1.bf16.msra.mxu0 %v1112
  %2672 = vmatprep.subr.bf16.mxu0 %v1121
  %2673 = vmatpush1.bf16.msra.mxu0 %v1120
  %2674 = vmatprep.subr.bf16.mxu0 %v1129
  %2675 = vmatpush1.bf16.msra.mxu0 %v1128
  %2676 = vmatprep.subr.bf16.mxu0 %v1137
  %2677 = vmatpush1.bf16.msra.mxu0 %v1136
  %2678 = vmatprep.subr.bf16.mxu0 %v1145
  %2679 = vmatpush1.bf16.msra.mxu0 %v1144
  %2680 = vmatprep.subr.bf16.mxu0 %v1153
  %2681 = vmatpush1.bf16.msra.mxu0 %v1152
  %2682 = vmatprep.mubr.bf16.mxu0 %v2567
  %2683 = vmatmul.mubr.bf16.gmra.mrb[0].mxu0 %v2566
  %v2684 = vpop.f32.mrb[0].mxu0
  %v2685 = vadd.f32 0.0, %v2684
  %v2686 = vpop.f32.mrb[0].mxu0
  %v2687 = vadd.f32 0.0, %v2686
  %v2688 = vpop.f32.mrb[0].mxu0
  %v2689 = vpop.f32.mrb[0].mxu0
  %2690 = vdwg.mxu0
  %2691 = vmatprep.subr.bf16.mxu0 %v1035
  %2692 = vmatpush1.bf16.msra.mxu0 %v1034
  %2693 = vmatprep.subr.bf16.mxu0 %v1043
  %2694 = vmatpush1.bf16.msra.mxu0 %v1042
  %2695 = vmatprep.subr.bf16.mxu0 %v1051
  %2696 = vmatpush1.bf16.msra.mxu0 %v1050
  %2697 = vmatprep.subr.bf16.mxu0 %v1059
  %2698 = vmatpush1.bf16.msra.mxu0 %v1058
  %2699 = vmatprep.subr.bf16.mxu0 %v1067
  %2700 = vmatpush1.bf16.msra.mxu0 %v1066
  %2701 = vmatprep.subr.bf16.mxu0 %v1075
  %2702 = vmatpush1.bf16.msra.mxu0 %v1074
  %2703 = vmatprep.subr.bf16.mxu0 %v1083
  %2704 = vmatpush1.bf16.msra.mxu0 %v1082
  %2705 = vmatprep.subr.bf16.mxu0 %v1091
  %2706 = vmatpush1.bf16.msra.mxu0 %v1090
  %2707 = vmatprep.subr.bf16.mxu0 %v1099
  %2708 = vmatpush1.bf16.msra.mxu0 %v1098
  %2709 = vmatprep.subr.bf16.mxu0 %v1107
  %2710 = vmatpush1.bf16.msra.mxu0 %v1106
  %2711 = vmatprep.subr.bf16.mxu0 %v1115
  %2712 = vmatpush1.bf16.msra.mxu0 %v1114
  %2713 = vmatprep.subr.bf16.mxu0 %v1123
  %2714 = vmatpush1.bf16.msra.mxu0 %v1122
  %2715 = vmatprep.subr.bf16.mxu0 %v1131
  %2716 = vmatpush1.bf16.msra.mxu0 %v1130
  %2717 = vmatprep.subr.bf16.mxu0 %v1139
  %2718 = vmatpush1.bf16.msra.mxu0 %v1138
  %2719 = vmatprep.subr.bf16.mxu0 %v1147
  %2720 = vmatpush1.bf16.msra.mxu0 %v1146
  %2721 = vmatprep.subr.bf16.mxu0 %v1155
  %2722 = vmatpush1.bf16.msra.mxu0 %v1154
  %2723 = vmatprep.mubr.bf16.mxu0 %v2567
  %2724 = vmatmul.mubr.bf16.gmra.mrb[0].mxu0 %v2566
  %v2725 = vpop.f32.mrb[0].mxu0
  %v2726 = vadd.f32 0.0, %v2725
  %v2727 = vpop.f32.mrb[0].mxu0
  %v2728 = vadd.f32 0.0, %v2727
  %v2729 = vpop.f32.mrb[0].mxu0
  %v2730 = vpop.f32.mrb[0].mxu0
  %2731 = vdwg.mxu0
  %v2732 = vld [vmem:[#allocation2 + $0xe0] sm:$0xff]
  %v2733 = vld [vmem:[#allocation2 + $0xe8] sm:$0xff]
  %v2734 = vld [vmem:[#allocation2 + $0xf0] sm:$0xff]
  %v2735 = vld [vmem:[#allocation2 + $0xf8] sm:$0xff]
  %v2736 = vadd.f32 %v2732, %v2603
  %v2737 = vadd.f32 %v2733, %v2605
  %v2738 = vadd.f32 %v2734, %v2644
  %v2739 = vadd.f32 %v2735, %v2646
  %v2740 = vmul.f32 %v2736, 0.5
  %v2741 = vtanh.pop %v2740
  %v2742 = vmul.f32 %v2741, 0.5
  %v2743 = vadd.f32 %v2742, 0.5
  %v2744 = vmul.f32 %v2737, 0.5
  %v2745 = vtanh.pop %v2744
  %v2746 = vmul.f32 %v2745, 0.5
  %v2747 = vadd.f32 %v2746, 0.5
  %v2748 = vtanh.pop %v2738
  %v2749 = vmul.f32 %v2739, 0.5
  %v2750 = vtanh.pop %v2749
  %v2751 = vmul.f32 %v2750, 0.5
  %v2752 = vadd.f32 %v2751, 0.5
  %v2753 = vmul.f32 %v2747, %v2541
  %v2754 = vmul.f32 %v2743, %v2748
  %v2755 = vadd.f32 %v2753, %v2754
  %v2756 = vtanh.pop %v2755
  %v2757 = vmul.f32 %v2752, %v2756
  %v2758 = vadd.f32 %v471, %v2685
  %v2759 = vadd.f32 %v475, %v2687
  %v2760 = vadd.f32 %v479, %v2726
  %v2761 = vadd.f32 %v483, %v2728
  %v2762 = vmul.f32 %v2758, 0.5
  %v2763 = vtanh.pop %v2762
  %v2764 = vmul.f32 %v2763, 0.5
  %v2765 = vadd.f32 %v2764, 0.5
  %v2766 = vmul.f32 %v2759, 0.5
  %v2767 = vtanh.pop %v2766
  %v2768 = vmul.f32 %v2767, 0.5
  %v2769 = vadd.f32 %v2768, 0.5
  %v2770 = vtanh.pop %v2760
  %v2771 = vmul.f32 %v2761, 0.5
  %v2772 = vtanh.pop %v2771
  %v2773 = vmul.f32 %v2772, 0.5
  %v2774 = vadd.f32 %v2773, 0.5
  %v2775 = vmul.f32 %v2769, %v2563
  %v2776 = vmul.f32 %v2765, %v2770
  %v2777 = vadd.f32 %v2775, %v2776
  %v2778 = vtanh.pop %v2777
  %v2779 = vmul.f32 %v2774, %v2778
  %v2780 = vpack.c.bf16 %v2757, %v2757
  %v2781 = vpack.c.bf16 %v2779, %v2779
  %2782 = vmatprep.subr.bf16.mxu0 %v1033
  %2783 = vmatpush1.bf16.msra.mxu0 %v1032
  %2784 = vmatprep.subr.bf16.mxu0 %v1041
  %2785 = vmatpush1.bf16.msra.mxu0 %v1040
  %2786 = vmatprep.subr.bf16.mxu0 %v1049
  %2787 = vmatpush1.bf16.msra.mxu0 %v1048
  %2788 = vmatprep.subr.bf16.mxu0 %v1057
  %2789 = vmatpush1.bf16.msra.mxu0 %v1056
  %2790 = vmatprep.subr.bf16.mxu0 %v1065
  %2791 = vmatpush1.bf16.msra.mxu0 %v1064
  %2792 = vmatprep.subr.bf16.mxu0 %v1073
  %2793 = vmatpush1.bf16.msra.mxu0 %v1072
  %2794 = vmatprep.subr.bf16.mxu0 %v1081
  %2795 = vmatpush1.bf16.msra.mxu0 %v1080
  %2796 = vmatprep.subr.bf16.mxu0 %v1089
  %2797 = vmatpush1.bf16.msra.mxu0 %v1088
  %2798 = vmatprep.subr.bf16.mxu0 %v1097
  %2799 = vmatpush1.bf16.msra.mxu0 %v1096
  %2800 = vmatprep.subr.bf16.mxu0 %v1105
  %2801 = vmatpush1.bf16.msra.mxu0 %v1104
  %2802 = vmatprep.subr.bf16.mxu0 %v1113
  %2803 = vmatpush1.bf16.msra.mxu0 %v1112
  %2804 = vmatprep.subr.bf16.mxu0 %v1121
  %2805 = vmatpush1.bf16.msra.mxu0 %v1120
  %2806 = vmatprep.subr.bf16.mxu0 %v1129
  %2807 = vmatpush1.bf16.msra.mxu0 %v1128
  %2808 = vmatprep.subr.bf16.mxu0 %v1137
  %2809 = vmatpush1.bf16.msra.mxu0 %v1136
  %2810 = vmatprep.subr.bf16.mxu0 %v1145
  %2811 = vmatpush1.bf16.msra.mxu0 %v1144
  %2812 = vmatprep.subr.bf16.mxu0 %v1153
  %2813 = vmatpush1.bf16.msra.mxu0 %v1152
  %2814 = vmatprep.mubr.bf16.mxu0 %v2781
  %2815 = vmatmul.mubr.bf16.gmra.mrb[0].mxu0 %v2780
  %v2816 = vpop.f32.mrb[0].mxu0
  %v2817 = vadd.f32 0.0, %v2816
  %v2818 = vpop.f32.mrb[0].mxu0
  %v2819 = vadd.f32 0.0, %v2818
  %v2820 = vpop.f32.mrb[0].mxu0
  %v2821 = vpop.f32.mrb[0].mxu0
  %2822 = vdwg.mxu0
  %2823 = vmatprep.subr.bf16.mxu0 %v1035
  %2824 = vmatpush1.bf16.msra.mxu0 %v1034
  %2825 = vmatprep.subr.bf16.mxu0 %v1043
  %2826 = vmatpush1.bf16.msra.mxu0 %v1042
  %2827 = vmatprep.subr.bf16.mxu0 %v1051
  %2828 = vmatpush1.bf16.msra.mxu0 %v1050
  %2829 = vmatprep.subr.bf16.mxu0 %v1059
  %2830 = vmatpush1.bf16.msra.mxu0 %v1058
  %2831 = vmatprep.subr.bf16.mxu0 %v1067
  %2832 = vmatpush1.bf16.msra.mxu0 %v1066
  %2833 = vmatprep.subr.bf16.mxu0 %v1075
  %2834 = vmatpush1.bf16.msra.mxu0 %v1074
  %2835 = vmatprep.subr.bf16.mxu0 %v1083
  %2836 = vmatpush1.bf16.msra.mxu0 %v1082
  %2837 = vmatprep.subr.bf16.mxu0 %v1091
  %2838 = vmatpush1.bf16.msra.mxu0 %v1090
  %2839 = vmatprep.subr.bf16.mxu0 %v1099
  %2840 = vmatpush1.bf16.msra.mxu0 %v1098
  %2841 = vmatprep.subr.bf16.mxu0 %v1107
  %2842 = vmatpush1.bf16.msra.mxu0 %v1106
  %2843 = vmatprep.subr.bf16.mxu0 %v1115
  %2844 = vmatpush1.bf16.msra.mxu0 %v1114
  %2845 = vmatprep.subr.bf16.mxu0 %v1123
  %2846 = vmatpush1.bf16.msra.mxu0 %v1122
  %2847 = vmatprep.subr.bf16.mxu0 %v1131
  %2848 = vmatpush1.bf16.msra.mxu0 %v1130
  %2849 = vmatprep.subr.bf16.mxu0 %v1139
  %2850 = vmatpush1.bf16.msra.mxu0 %v1138
  %2851 = vmatprep.subr.bf16.mxu0 %v1147
  %2852 = vmatpush1.bf16.msra.mxu0 %v1146
  %2853 = vmatprep.subr.bf16.mxu0 %v1155
  %2854 = vmatpush1.bf16.msra.mxu0 %v1154
  %2855 = vmatprep.mubr.bf16.mxu0 %v2781
  %2856 = vmatmul.mubr.bf16.gmra.mrb[0].mxu0 %v2780
  %v2857 = vpop.f32.mrb[0].mxu0
  %v2858 = vadd.f32 0.0, %v2857
  %v2859 = vpop.f32.mrb[0].mxu0
  %v2860 = vadd.f32 0.0, %v2859
  %v2861 = vpop.f32.mrb[0].mxu0
  %v2862 = vpop.f32.mrb[0].mxu0
  %2863 = vdwg.mxu0
  %v2864 = vadd.f32 %v471, %v2817
  %v2865 = vadd.f32 %v475, %v2819
  %v2866 = vadd.f32 %v479, %v2858
  %v2867 = vadd.f32 %v483, %v2860
  %v2868 = vmul.f32 %v2864, 0.5
  %v2869 = vtanh.pop %v2868
  %v2870 = vmul.f32 %v2869, 0.5
  %v2871 = vadd.f32 %v2870, 0.5
  %v2872 = vmul.f32 %v2865, 0.5
  %v2873 = vtanh.pop %v2872
  %v2874 = vmul.f32 %v2873, 0.5
  %v2875 = vadd.f32 %v2874, 0.5
  %v2876 = vtanh.pop %v2866
  %v2877 = vmul.f32 %v2867, 0.5
  %v2878 = vtanh.pop %v2877
  %v2879 = vmul.f32 %v2878, 0.5
  %v2880 = vadd.f32 %v2879, 0.5
  %v2881 = vmul.f32 %v2875, %v2777
  %v2882 = vmul.f32 %v2871, %v2876
  %v2883 = vadd.f32 %v2881, %v2882
  %v2884 = vtanh.pop %v2883
  %v2885 = vmul.f32 %v2880, %v2884
  %v2886 = vld [vmem:[%s1] sm:$0xf]
  %v2887 = vpack.c.bf16 %v2885, %v2885
  %vm2888 = vcmask 64512
  %v2890 = vsel %vm2888, %v2886, 0
  %vm2892 = vcmask 1043456
  %v2894 = vsel %vm2892, %v2887, 0
  %2896 = vmatprep.subr.bf16.mxu0 0
  %2897 = vmatpush1.bf16.msra.mxu0 %v2894
  %2898 = vmatprep.subr.bf16.mxu0 0
  %2899 = vmatpush1.bf16.msra.mxu0 0
  %2900 = vmatprep.subr.bf16.mxu0 0
  %2901 = vmatpush1.bf16.msra.mxu0 0
  %2902 = vmatprep.subr.bf16.mxu0 0
  %2903 = vmatpush1.bf16.msra.mxu0 0
  %2904 = vmatprep.subr.bf16.mxu0 0
  %2905 = vmatpush1.bf16.msra.mxu0 0
  %2906 = vmatprep.subr.bf16.mxu0 0
  %2907 = vmatpush1.bf16.msra.mxu0 0
  %2908 = vmatprep.subr.bf16.mxu0 0
  %2909 = vmatpush1.bf16.msra.mxu0 0
  %2910 = vmatprep.subr.bf16.mxu0 0
  %2911 = vmatpush1.bf16.msra.mxu0 0
  %2912 = vmatprep.subr.bf16.mxu0 0
  %2913 = vmatpush1.bf16.msra.mxu0 0
  %2914 = vmatprep.subr.bf16.mxu0 0
  %2915 = vmatpush1.bf16.msra.mxu0 0
  %2916 = vmatprep.subr.bf16.mxu0 0
  %2917 = vmatpush1.bf16.msra.mxu0 0
  %2918 = vmatprep.subr.bf16.mxu0 0
  %2919 = vmatpush1.bf16.msra.mxu0 0
  %2920 = vmatprep.subr.bf16.mxu0 0
  %2921 = vmatpush1.bf16.msra.mxu0 0
  %2922 = vmatprep.subr.bf16.mxu0 0
  %2923 = vmatpush1.bf16.msra.mxu0 0
  %2924 = vmatprep.subr.bf16.mxu0 0
  %2925 = vmatpush1.bf16.msra.mxu0 0
  %2926 = vmatprep.subr.bf16.mxu0 0
  %2927 = vmatpush1.bf16.msra.mxu0 0
  %2928 = vmatprep.mubr.bf16.mxu0 0
  %2929 = vmatmul.mubr.bf16.gmra.mrb[0].mxu0 %v2890
  %v2930 = vpop.f32.mrb[0].mxu0
  %v2931 = vadd.f32 0.0, %v2930
  %v2932 = vpop.f32.mrb[0].mxu0
  %v2933 = vpop.f32.mrb[0].mxu0
  %v2934 = vpop.f32.mrb[0].mxu0
  %2935 = vdwg.mxu0
  %v2936 = vpack.c.bf16 %v2931, %v2931
  %v2937 = vld [vmem:[%s6] sm:$0xff]
  %v2938 = vld [vmem:[%s6 + $0x8] sm:$0xff]
  %v2939 = vld [vmem:[%s6 + $0x10] sm:$0xff]
  %v2940 = vld [vmem:[%s6 + $0x18] sm:$0xff]
  %v2941 = vld [vmem:[%s6 + $0x20] sm:$0xff]
  %v2942 = vld [vmem:[%s6 + $0x28] sm:$0xff]
  %v2943 = vld [vmem:[%s6 + $0x30] sm:$0xff]
  %v2944 = vld [vmem:[%s6 + $0x38] sm:$0xff]
  %v2945 = vld [vmem:[%s6 + $0x40] sm:$0xff]
  %v2946 = vld [vmem:[%s6 + $0x48] sm:$0xff]
  %v2947 = vld [vmem:[%s6 + $0x50] sm:$0xff]
  %v2948 = vld [vmem:[%s6 + $0x58] sm:$0xff]
  %v2949 = vld [vmem:[%s6 + $0x60] sm:$0xff]
  %v2950 = vld [vmem:[%s6 + $0x68] sm:$0xff]
  %v2951 = vld [vmem:[%s6 + $0x70] sm:$0xff]
  %v2952 = vld [vmem:[%s6 + $0x78] sm:$0xff]
  %v2953 = vld [vmem:[%s6 + $0x80] sm:$0xff]
  %v2954 = vld [vmem:[%s6 + $0x88] sm:$0xff]
  %v2955 = vld [vmem:[%s6 + $0x90] sm:$0xff]
  %v2956 = vld [vmem:[%s6 + $0x98] sm:$0xff]
  %v2957 = vld [vmem:[%s6 + $0xa0] sm:$0xff]
  %v2958 = vld [vmem:[%s6 + $0xa8] sm:$0xff]
  %v2959 = vld [vmem:[%s6 + $0xb0] sm:$0xff]
  %v2960 = vld [vmem:[%s6 + $0xb8] sm:$0xff]
  %v2961 = vld [vmem:[%s6 + $0xc0] sm:$0xff]
  %v2962 = vld [vmem:[%s6 + $0xc8] sm:$0xff]
  %v2963 = vld [vmem:[%s6 + $0xd0] sm:$0xff]
  %v2964 = vld [vmem:[%s6 + $0xd8] sm:$0xff]
  %v2965 = vld [vmem:[%s6 + $0xe0] sm:$0xff]
  %v2966 = vld [vmem:[%s6 + $0xe8] sm:$0xff]
  %v2967 = vld [vmem:[%s6 + $0xf0] sm:$0xff]
  %v2968 = vld [vmem:[%s6 + $0xf8] sm:$0xff]
  %v2969 = vld [vmem:[%s7] sm:$0xf]
  %v2971 = vlaneseq
  %v2972 = vshrl.u32 %v2971, 7
  %v2973 = vsub.s32 0, %v2972
  %v2974 = vrot.slane %v2969, %v2973
  %v2975 = vlaneseq
  %v2976 = vshrl.u32 %v2975, 7
  %v2977 = vsub.s32 1, %v2976
  %v2978 = vrot.slane %v2969, %v2977
  %v2979 = vlaneseq
  %v2980 = vshrl.u32 %v2979, 7
  %v2981 = vsub.s32 2, %v2980
  %v2982 = vrot.slane %v2969, %v2981
  %v2983 = vlaneseq
  %v2984 = vshrl.u32 %v2983, 7
  %v2985 = vsub.s32 3, %v2984
  %v2986 = vrot.slane %v2969, %v2985
  %v3023 = vunpack.c.l.b16 %v2937
  %v3024 = vunpack.c.h.b16 %v2937
  %v3025 = vunpack.c.l.b16 %v2938
  %v3026 = vunpack.c.h.b16 %v2938
  %v3027 = vunpack.c.l.b16 %v2939
  %v3028 = vunpack.c.h.b16 %v2939
  %v3029 = vunpack.c.l.b16 %v2940
  %v3030 = vunpack.c.h.b16 %v2940
  %v3031 = vunpack.c.l.b16 %v2941
  %v3032 = vunpack.c.h.b16 %v2941
  %v3033 = vunpack.c.l.b16 %v2942
  %v3034 = vunpack.c.h.b16 %v2942
  %v3035 = vunpack.c.l.b16 %v2943
  %v3036 = vunpack.c.h.b16 %v2943
  %v3037 = vunpack.c.l.b16 %v2944
  %v3038 = vunpack.c.h.b16 %v2944
  %v3039 = vunpack.c.l.b16 %v2945
  %v3040 = vunpack.c.h.b16 %v2945
  %v3041 = vunpack.c.l.b16 %v2946
  %v3042 = vunpack.c.h.b16 %v2946
  %v3043 = vunpack.c.l.b16 %v2947
  %v3044 = vunpack.c.h.b16 %v2947
  %v3045 = vunpack.c.l.b16 %v2948
  %v3046 = vunpack.c.h.b16 %v2948
  %v3047 = vunpack.c.l.b16 %v2949
  %v3048 = vunpack.c.h.b16 %v2949
  %v3049 = vunpack.c.l.b16 %v2950
  %v3050 = vunpack.c.h.b16 %v2950
  %v3051 = vunpack.c.l.b16 %v2951
  %v3052 = vunpack.c.h.b16 %v2951
  %v3053 = vunpack.c.l.b16 %v2952
  %v3054 = vunpack.c.h.b16 %v2952
  %v3055 = vunpack.c.l.b16 %v2953
  %v3056 = vunpack.c.h.b16 %v2953
  %v3057 = vunpack.c.l.b16 %v2954
  %v3058 = vunpack.c.h.b16 %v2954
  %v3059 = vunpack.c.l.b16 %v2955
  %v3060 = vunpack.c.h.b16 %v2955
  %v3061 = vunpack.c.l.b16 %v2956
  %v3062 = vunpack.c.h.b16 %v2956
  %v3063 = vunpack.c.l.b16 %v2957
  %v3064 = vunpack.c.h.b16 %v2957
  %v3065 = vunpack.c.l.b16 %v2958
  %v3066 = vunpack.c.h.b16 %v2958
  %v3067 = vunpack.c.l.b16 %v2959
  %v3068 = vunpack.c.h.b16 %v2959
  %v3069 = vunpack.c.l.b16 %v2960
  %v3070 = vunpack.c.h.b16 %v2960
  %v3071 = vunpack.c.l.b16 %v2961
  %v3072 = vunpack.c.h.b16 %v2961
  %v3073 = vunpack.c.l.b16 %v2962
  %v3074 = vunpack.c.h.b16 %v2962
  %v3075 = vunpack.c.l.b16 %v2963
  %v3076 = vunpack.c.h.b16 %v2963
  %v3077 = vunpack.c.l.b16 %v2964
  %v3078 = vunpack.c.h.b16 %v2964
  %v3079 = vunpack.c.l.b16 %v2965
  %v3080 = vunpack.c.h.b16 %v2965
  %v3081 = vunpack.c.l.b16 %v2966
  %v3082 = vunpack.c.h.b16 %v2966
  %v3083 = vunpack.c.l.b16 %v2967
  %v3084 = vunpack.c.h.b16 %v2967
  %v3085 = vunpack.c.l.b16 %v2968
  %v3086 = vunpack.c.h.b16 %v2968
  %v3087 = vpack.c.b16 %v3027, %v3023
  %v3088 = vpack.c.b16 %v3028, %v3024
  %v3089 = vpack.c.b16 %v3029, %v3025
  %v3090 = vpack.c.b16 %v3030, %v3026
  %v3091 = vpack.c.b16 %v3035, %v3031
  %v3092 = vpack.c.b16 %v3036, %v3032
  %v3093 = vpack.c.b16 %v3037, %v3033
  %v3094 = vpack.c.b16 %v3038, %v3034
  %v3095 = vpack.c.b16 %v3043, %v3039
  %v3096 = vpack.c.b16 %v3044, %v3040
  %v3097 = vpack.c.b16 %v3045, %v3041
  %v3098 = vpack.c.b16 %v3046, %v3042
  %v3099 = vpack.c.b16 %v3051, %v3047
  %v3100 = vpack.c.b16 %v3052, %v3048
  %v3101 = vpack.c.b16 %v3053, %v3049
  %v3102 = vpack.c.b16 %v3054, %v3050
  %v3103 = vpack.c.b16 %v3059, %v3055
  %v3104 = vpack.c.b16 %v3060, %v3056
  %v3105 = vpack.c.b16 %v3061, %v3057
  %v3106 = vpack.c.b16 %v3062, %v3058
  %v3107 = vpack.c.b16 %v3067, %v3063
  %v3108 = vpack.c.b16 %v3068, %v3064
  %v3109 = vpack.c.b16 %v3069, %v3065
  %v3110 = vpack.c.b16 %v3070, %v3066
  %v3111 = vpack.c.b16 %v3075, %v3071
  %v3112 = vpack.c.b16 %v3076, %v3072
  %v3113 = vpack.c.b16 %v3077, %v3073
  %v3114 = vpack.c.b16 %v3078, %v3074
  %v3115 = vpack.c.b16 %v3083, %v3079
  %v3116 = vpack.c.b16 %v3084, %v3080
  %v3117 = vpack.c.b16 %v3085, %v3081
  %v3118 = vpack.c.b16 %v3086, %v3082
  %3151 = vmatprep.subr.bf16.mxu0 %v3088
  %3152 = vmatpush1.bf16.msra.mxu0 %v3087
  %3153 = vmatprep.subr.bf16.mxu0 %v3092
  %3154 = vmatpush1.bf16.msra.mxu0 %v3091
  %3155 = vmatprep.subr.bf16.mxu0 %v3096
  %3156 = vmatpush1.bf16.msra.mxu0 %v3095
  %3157 = vmatprep.subr.bf16.mxu0 %v3100
  %3158 = vmatpush1.bf16.msra.mxu0 %v3099
  %3159 = vmatprep.subr.bf16.mxu0 %v3104
  %3160 = vmatpush1.bf16.msra.mxu0 %v3103
  %3161 = vmatprep.subr.bf16.mxu0 %v3108
  %3162 = vmatpush1.bf16.msra.mxu0 %v3107
  %3163 = vmatprep.subr.bf16.mxu0 %v3112
  %3164 = vmatpush1.bf16.msra.mxu0 %v3111
  %3165 = vmatprep.subr.bf16.mxu0 %v3116
  %3166 = vmatpush1.bf16.msra.mxu0 %v3115
  %3167 = vmatprep.subr.bf16.mxu0 0
  %3168 = vmatpush1.bf16.msra.mxu0 0
  %3169 = vmatprep.subr.bf16.mxu0 0
  %3170 = vmatpush1.bf16.msra.mxu0 0
  %3171 = vmatprep.subr.bf16.mxu0 0
  %3172 = vmatpush1.bf16.msra.mxu0 0
  %3173 = vmatprep.subr.bf16.mxu0 0
  %3174 = vmatpush1.bf16.msra.mxu0 0
  %3175 = vmatprep.subr.bf16.mxu0 0
  %3176 = vmatpush1.bf16.msra.mxu0 0
  %3177 = vmatprep.subr.bf16.mxu0 0
  %3178 = vmatpush1.bf16.msra.mxu0 0
  %3179 = vmatprep.subr.bf16.mxu0 0
  %3180 = vmatpush1.bf16.msra.mxu0 0
  %3181 = vmatprep.subr.bf16.mxu0 0
  %3182 = vmatpush1.bf16.msra.mxu0 0
  %3183 = vmatprep.mubr.bf16.mxu0 0
  %3184 = vmatmul.mubr.bf16.gmra.mrb[0].mxu0 %v2936
  %v3185 = vpop.f32.mrb[0].mxu0
  %v3186 = vadd.f32 %v2974, %v3185
  %v3187 = vpop.f32.mrb[0].mxu0
  %v3188 = vadd.f32 %v2978, %v3187
  %v3189 = vpop.f32.mrb[0].mxu0
  %v3190 = vpop.f32.mrb[0].mxu0
  %3191 = vdwg.mxu0
  %3192 = vmatprep.subr.bf16.mxu0 %v3090
  %3193 = vmatpush1.bf16.msra.mxu0 %v3089
  %3194 = vmatprep.subr.bf16.mxu0 %v3094
  %3195 = vmatpush1.bf16.msra.mxu0 %v3093
  %3196 = vmatprep.subr.bf16.mxu0 %v3098
  %3197 = vmatpush1.bf16.msra.mxu0 %v3097
  %3198 = vmatprep.subr.bf16.mxu0 %v3102
  %3199 = vmatpush1.bf16.msra.mxu0 %v3101
  %3200 = vmatprep.subr.bf16.mxu0 %v3106
  %3201 = vmatpush1.bf16.msra.mxu0 %v3105
  %3202 = vmatprep.subr.bf16.mxu0 %v3110
  %3203 = vmatpush1.bf16.msra.mxu0 %v3109
  %3204 = vmatprep.subr.bf16.mxu0 %v3114
  %3205 = vmatpush1.bf16.msra.mxu0 %v3113
  %3206 = vmatprep.subr.bf16.mxu0 %v3118
  %3207 = vmatpush1.bf16.msra.mxu0 %v3117
  %3208 = vmatprep.subr.bf16.mxu0 0
  %3209 = vmatpush1.bf16.msra.mxu0 0
  %3210 = vmatprep.subr.bf16.mxu0 0
  %3211 = vmatpush1.bf16.msra.mxu0 0
  %3212 = vmatprep.subr.bf16.mxu0 0
  %3213 = vmatpush1.bf16.msra.mxu0 0
  %3214 = vmatprep.subr.bf16.mxu0 0
  %3215 = vmatpush1.bf16.msra.mxu0 0
  %3216 = vmatprep.subr.bf16.mxu0 0
  %3217 = vmatpush1.bf16.msra.mxu0 0
  %3218 = vmatprep.subr.bf16.mxu0 0
  %3219 = vmatpush1.bf16.msra.mxu0 0
  %3220 = vmatprep.subr.bf16.mxu0 0
  %3221 = vmatpush1.bf16.msra.mxu0 0
  %3222 = vmatprep.subr.bf16.mxu0 0
  %3223 = vmatpush1.bf16.msra.mxu0 0
  %3224 = vmatprep.mubr.bf16.mxu0 0
  %3225 = vmatmul.mubr.bf16.gmra.mrb[0].mxu0 %v2936
  %v3226 = vpop.f32.mrb[0].mxu0
  %v3227 = vadd.f32 %v2982, %v3226
  %v3228 = vpop.f32.mrb[0].mxu0
  %v3229 = vadd.f32 %v2986, %v3228
  %v3230 = vpop.f32.mrb[0].mxu0
  %v3231 = vpop.f32.mrb[0].mxu0
  %3232 = vdwg.mxu0
  %v3233 = vld [vmem:[%s9] sm:$0xf]
  %v3235 = vlaneseq
  %v3236 = vshrl.u32 %v3235, 7
  %v3237 = vsub.s32 0, %v3236
  %v3238 = vrot.slane %v3233, %v3237
  %v3239 = vlaneseq
  %v3240 = vshrl.u32 %v3239, 7
  %v3241 = vsub.s32 1, %v3240
  %v3242 = vrot.slane %v3233, %v3241
  %v3243 = vlaneseq
  %v3244 = vshrl.u32 %v3243, 7
  %v3245 = vsub.s32 2, %v3244
  %v3246 = vrot.slane %v3233, %v3245
  %v3247 = vlaneseq
  %v3248 = vshrl.u32 %v3247, 7
  %v3249 = vsub.s32 3, %v3248
  %v3250 = vrot.slane %v3233, %v3249
  %v3255 = vadd.f32 %v3186, 0.0
  %v3256 = vadd.f32 %v3188, 0.0
  %v3257 = vadd.f32 %v3227, 0.0
  %v3258 = vadd.f32 %v3229, 0.0
  %v3259 = vmul.f32 %v3255, 0.5
  %v3260 = vtanh.pop %v3259
  %v3261 = vmul.f32 %v3260, 0.5
  %v3262 = vadd.f32 %v3261, 0.5
  %v3263 = vmul.f32 %v3256, 0.5
  %v3264 = vtanh.pop %v3263
  %v3265 = vmul.f32 %v3264, 0.5
  %v3266 = vadd.f32 %v3265, 0.5
  %v3267 = vtanh.pop %v3257
  %v3268 = vmul.f32 %v3258, 0.5
  %v3269 = vtanh.pop %v3268
  %v3270 = vmul.f32 %v3269, 0.5
  %v3271 = vadd.f32 %v3270, 0.5
  %v3272 = vmul.f32 %v3266, 0.0
  %v3273 = vmul.f32 %v3262, %v3267
  %v3274 = vadd.f32 %v3272, %v3273
  %v3275 = vtanh.pop %v3274
  %v3276 = vmul.f32 %v3271, %v3275
  %v3277 = vpack.c.bf16 %v3276, %v3276
  %v3278 = vld [vmem:[%s8] sm:$0xff]
  %v3279 = vld [vmem:[%s8 + $0x8] sm:$0xff]
  %v3280 = vld [vmem:[%s8 + $0x10] sm:$0xff]
  %v3281 = vld [vmem:[%s8 + $0x18] sm:$0xff]
  %v3282 = vld [vmem:[%s8 + $0x20] sm:$0xff]
  %v3283 = vld [vmem:[%s8 + $0x28] sm:$0xff]
  %v3284 = vld [vmem:[%s8 + $0x30] sm:$0xff]
  %v3285 = vld [vmem:[%s8 + $0x38] sm:$0xff]
  %v3286 = vld [vmem:[%s8 + $0x40] sm:$0xff]
  %v3287 = vld [vmem:[%s8 + $0x48] sm:$0xff]
  %v3288 = vld [vmem:[%s8 + $0x50] sm:$0xff]
  %v3289 = vld [vmem:[%s8 + $0x58] sm:$0xff]
  %v3290 = vld [vmem:[%s8 + $0x60] sm:$0xff]
  %v3291 = vld [vmem:[%s8 + $0x68] sm:$0xff]
  %v3292 = vld [vmem:[%s8 + $0x70] sm:$0xff]
  %v3293 = vld [vmem:[%s8 + $0x78] sm:$0xff]
  %v3294 = vld [vmem:[%s8 + $0x80] sm:$0xff]
  %v3295 = vld [vmem:[%s8 + $0x88] sm:$0xff]
  %v3296 = vld [vmem:[%s8 + $0x90] sm:$0xff]
  %v3297 = vld [vmem:[%s8 + $0x98] sm:$0xff]
  %v3298 = vld [vmem:[%s8 + $0xa0] sm:$0xff]
  %v3299 = vld [vmem:[%s8 + $0xa8] sm:$0xff]
  %v3300 = vld [vmem:[%s8 + $0xb0] sm:$0xff]
  %v3301 = vld [vmem:[%s8 + $0xb8] sm:$0xff]
  %v3302 = vld [vmem:[%s8 + $0xc0] sm:$0xff]
  %v3303 = vld [vmem:[%s8 + $0xc8] sm:$0xff]
  %v3304 = vld [vmem:[%s8 + $0xd0] sm:$0xff]
  %v3305 = vld [vmem:[%s8 + $0xd8] sm:$0xff]
  %v3306 = vld [vmem:[%s8 + $0xe0] sm:$0xff]
  %v3307 = vld [vmem:[%s8 + $0xe8] sm:$0xff]
  %v3308 = vld [vmem:[%s8 + $0xf0] sm:$0xff]
  %v3309 = vld [vmem:[%s8 + $0xf8] sm:$0xff]
  %v3310 = vld [vmem:[%s8 + $0x100] sm:$0xff]
  %v3311 = vld [vmem:[%s8 + $0x108] sm:$0xff]
  %v3312 = vld [vmem:[%s8 + $0x110] sm:$0xff]
  %v3313 = vld [vmem:[%s8 + $0x118] sm:$0xff]
  %v3314 = vld [vmem:[%s8 + $0x120] sm:$0xff]
  %v3315 = vld [vmem:[%s8 + $0x128] sm:$0xff]
  %v3316 = vld [vmem:[%s8 + $0x130] sm:$0xff]
  %v3317 = vld [vmem:[%s8 + $0x138] sm:$0xff]
  %v3318 = vld [vmem:[%s8 + $0x140] sm:$0xff]
  %v3319 = vld [vmem:[%s8 + $0x148] sm:$0xff]
  %v3320 = vld [vmem:[%s8 + $0x150] sm:$0xff]
  %v3321 = vld [vmem:[%s8 + $0x158] sm:$0xff]
  %v3322 = vld [vmem:[%s8 + $0x160] sm:$0xff]
  %v3323 = vld [vmem:[%s8 + $0x168] sm:$0xff]
  %v3324 = vld [vmem:[%s8 + $0x170] sm:$0xff]
  %v3325 = vld [vmem:[%s8 + $0x178] sm:$0xff]
  %v3326 = vld [vmem:[%s8 + $0x180] sm:$0xff]
  %v3327 = vld [vmem:[%s8 + $0x188] sm:$0xff]
  %v3328 = vld [vmem:[%s8 + $0x190] sm:$0xff]
  %v3329 = vld [vmem:[%s8 + $0x198] sm:$0xff]
  %v3330 = vld [vmem:[%s8 + $0x1a0] sm:$0xff]
  %v3331 = vld [vmem:[%s8 + $0x1a8] sm:$0xff]
  %v3332 = vld [vmem:[%s8 + $0x1b0] sm:$0xff]
  %v3333 = vld [vmem:[%s8 + $0x1b8] sm:$0xff]
  %v3334 = vld [vmem:[%s8 + $0x1c0] sm:$0xff]
  %v3335 = vld [vmem:[%s8 + $0x1c8] sm:$0xff]
  %v3336 = vld [vmem:[%s8 + $0x1d0] sm:$0xff]
  %v3337 = vld [vmem:[%s8 + $0x1d8] sm:$0xff]
  %v3338 = vld [vmem:[%s8 + $0x1e0] sm:$0xff]
  %v3339 = vld [vmem:[%s8 + $0x1e8] sm:$0xff]
  %v3340 = vld [vmem:[%s8 + $0x1f0] sm:$0xff]
  %v3341 = vld [vmem:[%s8 + $0x1f8] sm:$0xff]
  %v3342 = vld [vmem:[%s8 + $0x200] sm:$0xff]
  %v3343 = vld [vmem:[%s8 + $0x208] sm:$0xff]
  %v3344 = vld [vmem:[%s8 + $0x210] sm:$0xff]
  %v3345 = vld [vmem:[%s8 + $0x218] sm:$0xff]
  %v3346 = vld [vmem:[%s8 + $0x220] sm:$0xff]
  %v3347 = vld [vmem:[%s8 + $0x228] sm:$0xff]
  %v3348 = vld [vmem:[%s8 + $0x230] sm:$0xff]
  %v3349 = vld [vmem:[%s8 + $0x238] sm:$0xff]
  %v3350 = vld [vmem:[%s8 + $0x240] sm:$0xff]
  %v3351 = vld [vmem:[%s8 + $0x248] sm:$0xff]
  %v3352 = vld [vmem:[%s8 + $0x250] sm:$0xff]
  %v3353 = vld [vmem:[%s8 + $0x258] sm:$0xff]
  %v3354 = vld [vmem:[%s8 + $0x260] sm:$0xff]
  %v3355 = vld [vmem:[%s8 + $0x268] sm:$0xff]
  %v3356 = vld [vmem:[%s8 + $0x270] sm:$0xff]
  %v3357 = vld [vmem:[%s8 + $0x278] sm:$0xff]
  %v3358 = vld [vmem:[%s8 + $0x280] sm:$0xff]
  %v3359 = vld [vmem:[%s8 + $0x288] sm:$0xff]
  %v3360 = vld [vmem:[%s8 + $0x290] sm:$0xff]
  %v3361 = vld [vmem:[%s8 + $0x298] sm:$0xff]
  %v3362 = vld [vmem:[%s8 + $0x2a0] sm:$0xff]
  %v3363 = vld [vmem:[%s8 + $0x2a8] sm:$0xff]
  %v3364 = vld [vmem:[%s8 + $0x2b0] sm:$0xff]
  %v3365 = vld [vmem:[%s8 + $0x2b8] sm:$0xff]
  %v3366 = vld [vmem:[%s8 + $0x2c0] sm:$0xff]
  %v3367 = vld [vmem:[%s8 + $0x2c8] sm:$0xff]
  %v3368 = vld [vmem:[%s8 + $0x2d0] sm:$0xff]
  %v3369 = vld [vmem:[%s8 + $0x2d8] sm:$0xff]
  %v3370 = vld [vmem:[%s8 + $0x2e0] sm:$0xff]
  %v3371 = vld [vmem:[%s8 + $0x2e8] sm:$0xff]
  %v3372 = vld [vmem:[%s8 + $0x2f0] sm:$0xff]
  %v3373 = vld [vmem:[%s8 + $0x2f8] sm:$0xff]
  %v3374 = vld [vmem:[%s8 + $0x300] sm:$0xff]
  %v3375 = vld [vmem:[%s8 + $0x308] sm:$0xff]
  %v3376 = vld [vmem:[%s8 + $0x310] sm:$0xff]
  %v3377 = vld [vmem:[%s8 + $0x318] sm:$0xff]
  %v3378 = vld [vmem:[%s8 + $0x320] sm:$0xff]
  %v3379 = vld [vmem:[%s8 + $0x328] sm:$0xff]
  %v3380 = vld [vmem:[%s8 + $0x330] sm:$0xff]
  %v3381 = vld [vmem:[%s8 + $0x338] sm:$0xff]
  %v3382 = vld [vmem:[%s8 + $0x340] sm:$0xff]
  %v3383 = vld [vmem:[%s8 + $0x348] sm:$0xff]
  %v3384 = vld [vmem:[%s8 + $0x350] sm:$0xff]
  %v3385 = vld [vmem:[%s8 + $0x358] sm:$0xff]
  %v3386 = vld [vmem:[%s8 + $0x360] sm:$0xff]
  %v3387 = vld [vmem:[%s8 + $0x368] sm:$0xff]
  %v3388 = vld [vmem:[%s8 + $0x370] sm:$0xff]
  %v3389 = vld [vmem:[%s8 + $0x378] sm:$0xff]
  %v3390 = vld [vmem:[%s8 + $0x380] sm:$0xff]
  %v3391 = vld [vmem:[%s8 + $0x388] sm:$0xff]
  %v3392 = vld [vmem:[%s8 + $0x390] sm:$0xff]
  %v3393 = vld [vmem:[%s8 + $0x398] sm:$0xff]
  %v3394 = vld [vmem:[%s8 + $0x3a0] sm:$0xff]
  %v3395 = vld [vmem:[%s8 + $0x3a8] sm:$0xff]
  %v3396 = vld [vmem:[%s8 + $0x3b0] sm:$0xff]
  %v3397 = vld [vmem:[%s8 + $0x3b8] sm:$0xff]
  %v3398 = vld [vmem:[%s8 + $0x3c0] sm:$0xff]
  %v3399 = vld [vmem:[%s8 + $0x3c8] sm:$0xff]
  %v3400 = vld [vmem:[%s8 + $0x3d0] sm:$0xff]
  %v3401 = vld [vmem:[%s8 + $0x3d8] sm:$0xff]
  %v3402 = vld [vmem:[%s8 + $0x3e0] sm:$0xff]
  %v3403 = vld [vmem:[%s8 + $0x3e8] sm:$0xff]
  %v3404 = vld [vmem:[%s8 + $0x3f0] sm:$0xff]
  %v3405 = vld [vmem:[%s8 + $0x3f8] sm:$0xff]
  %v3534 = vunpack.c.l.b16 %v3278
  %v3535 = vunpack.c.h.b16 %v3278
  %v3536 = vunpack.c.l.b16 %v3279
  %v3537 = vunpack.c.h.b16 %v3279
  %v3538 = vunpack.c.l.b16 %v3280
  %v3539 = vunpack.c.h.b16 %v3280
  %v3540 = vunpack.c.l.b16 %v3281
  %v3541 = vunpack.c.h.b16 %v3281
  %v3542 = vunpack.c.l.b16 %v3282
  %v3543 = vunpack.c.h.b16 %v3282
  %v3544 = vunpack.c.l.b16 %v3283
  %v3545 = vunpack.c.h.b16 %v3283
  %v3546 = vunpack.c.l.b16 %v3284
  %v3547 = vunpack.c.h.b16 %v3284
  %v3548 = vunpack.c.l.b16 %v3285
  %v3549 = vunpack.c.h.b16 %v3285
  %v3550 = vunpack.c.l.b16 %v3286
  %v3551 = vunpack.c.h.b16 %v3286
  %v3552 = vunpack.c.l.b16 %v3287
  %v3553 = vunpack.c.h.b16 %v3287
  %v3554 = vunpack.c.l.b16 %v3288
  %v3555 = vunpack.c.h.b16 %v3288
  %v3556 = vunpack.c.l.b16 %v3289
  %v3557 = vunpack.c.h.b16 %v3289
  %v3558 = vunpack.c.l.b16 %v3290
  %v3559 = vunpack.c.h.b16 %v3290
  %v3560 = vunpack.c.l.b16 %v3291
  %v3561 = vunpack.c.h.b16 %v3291
  %v3562 = vunpack.c.l.b16 %v3292
  %v3563 = vunpack.c.h.b16 %v3292
  %v3564 = vunpack.c.l.b16 %v3293
  %v3565 = vunpack.c.h.b16 %v3293
  %v3566 = vunpack.c.l.b16 %v3294
  %v3567 = vunpack.c.h.b16 %v3294
  %v3568 = vunpack.c.l.b16 %v3295
  %v3569 = vunpack.c.h.b16 %v3295
  %v3570 = vunpack.c.l.b16 %v3296
  %v3571 = vunpack.c.h.b16 %v3296
  %v3572 = vunpack.c.l.b16 %v3297
  %v3573 = vunpack.c.h.b16 %v3297
  %v3574 = vunpack.c.l.b16 %v3298
  %v3575 = vunpack.c.h.b16 %v3298
  %v3576 = vunpack.c.l.b16 %v3299
  %v3577 = vunpack.c.h.b16 %v3299
  %v3578 = vunpack.c.l.b16 %v3300
  %v3579 = vunpack.c.h.b16 %v3300
  %v3580 = vunpack.c.l.b16 %v3301
  %v3581 = vunpack.c.h.b16 %v3301
  %v3582 = vunpack.c.l.b16 %v3302
  %v3583 = vunpack.c.h.b16 %v3302
  %v3584 = vunpack.c.l.b16 %v3303
  %v3585 = vunpack.c.h.b16 %v3303
  %v3586 = vunpack.c.l.b16 %v3304
  %v3587 = vunpack.c.h.b16 %v3304
  %v3588 = vunpack.c.l.b16 %v3305
  %v3589 = vunpack.c.h.b16 %v3305
  %v3590 = vunpack.c.l.b16 %v3306
  %v3591 = vunpack.c.h.b16 %v3306
  %v3592 = vunpack.c.l.b16 %v3307
  %v3593 = vunpack.c.h.b16 %v3307
  %v3594 = vunpack.c.l.b16 %v3308
  %v3595 = vunpack.c.h.b16 %v3308
  %v3596 = vunpack.c.l.b16 %v3309
  %v3597 = vunpack.c.h.b16 %v3309
  %v3598 = vunpack.c.l.b16 %v3310
  %v3599 = vunpack.c.h.b16 %v3310
  %v3600 = vunpack.c.l.b16 %v3311
  %v3601 = vunpack.c.h.b16 %v3311
  %v3602 = vunpack.c.l.b16 %v3312
  %v3603 = vunpack.c.h.b16 %v3312
  %v3604 = vunpack.c.l.b16 %v3313
  %v3605 = vunpack.c.h.b16 %v3313
  %v3606 = vunpack.c.l.b16 %v3314
  %v3607 = vunpack.c.h.b16 %v3314
  %v3608 = vunpack.c.l.b16 %v3315
  %v3609 = vunpack.c.h.b16 %v3315
  %v3610 = vunpack.c.l.b16 %v3316
  %v3611 = vunpack.c.h.b16 %v3316
  %v3612 = vunpack.c.l.b16 %v3317
  %v3613 = vunpack.c.h.b16 %v3317
  %v3614 = vunpack.c.l.b16 %v3318
  %v3615 = vunpack.c.h.b16 %v3318
  %v3616 = vunpack.c.l.b16 %v3319
  %v3617 = vunpack.c.h.b16 %v3319
  %v3618 = vunpack.c.l.b16 %v3320
  %v3619 = vunpack.c.h.b16 %v3320
  %v3620 = vunpack.c.l.b16 %v3321
  %v3621 = vunpack.c.h.b16 %v3321
  %v3622 = vunpack.c.l.b16 %v3322
  %v3623 = vunpack.c.h.b16 %v3322
  %v3624 = vunpack.c.l.b16 %v3323
  %v3625 = vunpack.c.h.b16 %v3323
  %v3626 = vunpack.c.l.b16 %v3324
  %v3627 = vunpack.c.h.b16 %v3324
  %v3628 = vunpack.c.l.b16 %v3325
  %v3629 = vunpack.c.h.b16 %v3325
  %v3630 = vunpack.c.l.b16 %v3326
  %v3631 = vunpack.c.h.b16 %v3326
  %v3632 = vunpack.c.l.b16 %v3327
  %v3633 = vunpack.c.h.b16 %v3327
  %v3634 = vunpack.c.l.b16 %v3328
  %v3635 = vunpack.c.h.b16 %v3328
  %v3636 = vunpack.c.l.b16 %v3329
  %v3637 = vunpack.c.h.b16 %v3329
  %v3638 = vunpack.c.l.b16 %v3330
  %v3639 = vunpack.c.h.b16 %v3330
  %v3640 = vunpack.c.l.b16 %v3331
  %v3641 = vunpack.c.h.b16 %v3331
  %v3642 = vunpack.c.l.b16 %v3332
  %v3643 = vunpack.c.h.b16 %v3332
  %v3644 = vunpack.c.l.b16 %v3333
  %v3645 = vunpack.c.h.b16 %v3333
  %v3646 = vunpack.c.l.b16 %v3334
  %v3647 = vunpack.c.h.b16 %v3334
  %v3648 = vunpack.c.l.b16 %v3335
  %v3649 = vunpack.c.h.b16 %v3335
  %v3650 = vunpack.c.l.b16 %v3336
  %v3651 = vunpack.c.h.b16 %v3336
  %v3652 = vunpack.c.l.b16 %v3337
  %v3653 = vunpack.c.h.b16 %v3337
  %v3654 = vunpack.c.l.b16 %v3338
  %v3655 = vunpack.c.h.b16 %v3338
  %v3656 = vunpack.c.l.b16 %v3339
  %v3657 = vunpack.c.h.b16 %v3339
  %v3658 = vunpack.c.l.b16 %v3340
  %v3659 = vunpack.c.h.b16 %v3340
  %v3660 = vunpack.c.l.b16 %v3341
  %v3661 = vunpack.c.h.b16 %v3341
  %v3662 = vunpack.c.l.b16 %v3342
  %v3663 = vunpack.c.h.b16 %v3342
  %v3664 = vunpack.c.l.b16 %v3343
  %v3665 = vunpack.c.h.b16 %v3343
  %v3666 = vunpack.c.l.b16 %v3344
  %v3667 = vunpack.c.h.b16 %v3344
  %v3668 = vunpack.c.l.b16 %v3345
  %v3669 = vunpack.c.h.b16 %v3345
  %v3670 = vunpack.c.l.b16 %v3346
  %v3671 = vunpack.c.h.b16 %v3346
  %v3672 = vunpack.c.l.b16 %v3347
  %v3673 = vunpack.c.h.b16 %v3347
  %v3674 = vunpack.c.l.b16 %v3348
  %v3675 = vunpack.c.h.b16 %v3348
  %v3676 = vunpack.c.l.b16 %v3349
  %v3677 = vunpack.c.h.b16 %v3349
  %v3678 = vunpack.c.l.b16 %v3350
  %v3679 = vunpack.c.h.b16 %v3350
  %v3680 = vunpack.c.l.b16 %v3351
  %v3681 = vunpack.c.h.b16 %v3351
  %v3682 = vunpack.c.l.b16 %v3352
  %v3683 = vunpack.c.h.b16 %v3352
  %v3684 = vunpack.c.l.b16 %v3353
  %v3685 = vunpack.c.h.b16 %v3353
  %v3686 = vunpack.c.l.b16 %v3354
  %v3687 = vunpack.c.h.b16 %v3354
  %v3688 = vunpack.c.l.b16 %v3355
  %v3689 = vunpack.c.h.b16 %v3355
  %v3690 = vunpack.c.l.b16 %v3356
  %v3691 = vunpack.c.h.b16 %v3356
  %v3692 = vunpack.c.l.b16 %v3357
  %v3693 = vunpack.c.h.b16 %v3357
  %v3694 = vunpack.c.l.b16 %v3358
  %v3695 = vunpack.c.h.b16 %v3358
  %v3696 = vunpack.c.l.b16 %v3359
  %v3697 = vunpack.c.h.b16 %v3359
  %v3698 = vunpack.c.l.b16 %v3360
  %v3699 = vunpack.c.h.b16 %v3360
  %v3700 = vunpack.c.l.b16 %v3361
  %v3701 = vunpack.c.h.b16 %v3361
  %v3702 = vunpack.c.l.b16 %v3362
  %v3703 = vunpack.c.h.b16 %v3362
  %v3704 = vunpack.c.l.b16 %v3363
  %v3705 = vunpack.c.h.b16 %v3363
  %v3706 = vunpack.c.l.b16 %v3364
  %v3707 = vunpack.c.h.b16 %v3364
  %v3708 = vunpack.c.l.b16 %v3365
  %v3709 = vunpack.c.h.b16 %v3365
  %v3710 = vunpack.c.l.b16 %v3366
  %v3711 = vunpack.c.h.b16 %v3366
  %v3712 = vunpack.c.l.b16 %v3367
  %v3713 = vunpack.c.h.b16 %v3367
  %v3714 = vunpack.c.l.b16 %v3368
  %v3715 = vunpack.c.h.b16 %v3368
  %v3716 = vunpack.c.l.b16 %v3369
  %v3717 = vunpack.c.h.b16 %v3369
  %v3718 = vunpack.c.l.b16 %v3370
  %v3719 = vunpack.c.h.b16 %v3370
  %v3720 = vunpack.c.l.b16 %v3371
  %v3721 = vunpack.c.h.b16 %v3371
  %v3722 = vunpack.c.l.b16 %v3372
  %v3723 = vunpack.c.h.b16 %v3372
  %v3724 = vunpack.c.l.b16 %v3373
  %v3725 = vunpack.c.h.b16 %v3373
  %v3726 = vunpack.c.l.b16 %v3374
  %v3727 = vunpack.c.h.b16 %v3374
  %v3728 = vunpack.c.l.b16 %v3375
  %v3729 = vunpack.c.h.b16 %v3375
  %v3730 = vunpack.c.l.b16 %v3376
  %v3731 = vunpack.c.h.b16 %v3376
  %v3732 = vunpack.c.l.b16 %v3377
  %v3733 = vunpack.c.h.b16 %v3377
  %v3734 = vunpack.c.l.b16 %v3378
  %v3735 = vunpack.c.h.b16 %v3378
  %v3736 = vunpack.c.l.b16 %v3379
  %v3737 = vunpack.c.h.b16 %v3379
  %v3738 = vunpack.c.l.b16 %v3380
  %v3739 = vunpack.c.h.b16 %v3380
  %v3740 = vunpack.c.l.b16 %v3381
  %v3741 = vunpack.c.h.b16 %v3381
  %v3742 = vunpack.c.l.b16 %v3382
  %v3743 = vunpack.c.h.b16 %v3382
  %v3744 = vunpack.c.l.b16 %v3383
  %v3745 = vunpack.c.h.b16 %v3383
  %v3746 = vunpack.c.l.b16 %v3384
  %v3747 = vunpack.c.h.b16 %v3384
  %v3748 = vunpack.c.l.b16 %v3385
  %v3749 = vunpack.c.h.b16 %v3385
  %v3750 = vunpack.c.l.b16 %v3386
  %v3751 = vunpack.c.h.b16 %v3386
  %v3752 = vunpack.c.l.b16 %v3387
  %v3753 = vunpack.c.h.b16 %v3387
  %v3754 = vunpack.c.l.b16 %v3388
  %v3755 = vunpack.c.h.b16 %v3388
  %v3756 = vunpack.c.l.b16 %v3389
  %v3757 = vunpack.c.h.b16 %v3389
  %v3758 = vunpack.c.l.b16 %v3390
  %v3759 = vunpack.c.h.b16 %v3390
  %v3760 = vunpack.c.l.b16 %v3391
  %v3761 = vunpack.c.h.b16 %v3391
  %v3762 = vunpack.c.l.b16 %v3392
  %v3763 = vunpack.c.h.b16 %v3392
  %v3764 = vunpack.c.l.b16 %v3393
  %v3765 = vunpack.c.h.b16 %v3393
  %v3766 = vunpack.c.l.b16 %v3394
  %v3767 = vunpack.c.h.b16 %v3394
  %v3768 = vunpack.c.l.b16 %v3395
  %v3769 = vunpack.c.h.b16 %v3395
  %v3770 = vunpack.c.l.b16 %v3396
  %v3771 = vunpack.c.h.b16 %v3396
  %v3772 = vunpack.c.l.b16 %v3397
  %v3773 = vunpack.c.h.b16 %v3397
  %v3774 = vunpack.c.l.b16 %v3398
  %v3775 = vunpack.c.h.b16 %v3398
  %v3776 = vunpack.c.l.b16 %v3399
  %v3777 = vunpack.c.h.b16 %v3399
  %v3778 = vunpack.c.l.b16 %v3400
  %v3779 = vunpack.c.h.b16 %v3400
  %v3780 = vunpack.c.l.b16 %v3401
  %v3781 = vunpack.c.h.b16 %v3401
  %v3782 = vunpack.c.l.b16 %v3402
  %v3783 = vunpack.c.h.b16 %v3402
  %v3784 = vunpack.c.l.b16 %v3403
  %v3785 = vunpack.c.h.b16 %v3403
  %v3786 = vunpack.c.l.b16 %v3404
  %v3787 = vunpack.c.h.b16 %v3404
  %v3788 = vunpack.c.l.b16 %v3405
  %v3789 = vunpack.c.h.b16 %v3405
  %v3790 = vpack.c.b16 %v3542, %v3534
  %v3791 = vpack.c.b16 %v3543, %v3535
  %v3792 = vpack.c.b16 %v3544, %v3536
  %v3793 = vpack.c.b16 %v3545, %v3537
  %v3794 = vpack.c.b16 %v3546, %v3538
  %v3795 = vpack.c.b16 %v3547, %v3539
  %v3796 = vpack.c.b16 %v3548, %v3540
  %v3797 = vpack.c.b16 %v3549, %v3541
  %v3798 = vpack.c.b16 %v3558, %v3550
  %v3799 = vpack.c.b16 %v3559, %v3551
  %v3800 = vpack.c.b16 %v3560, %v3552
  %v3801 = vpack.c.b16 %v3561, %v3553
  %v3802 = vpack.c.b16 %v3562, %v3554
  %v3803 = vpack.c.b16 %v3563, %v3555
  %v3804 = vpack.c.b16 %v3564, %v3556
  %v3805 = vpack.c.b16 %v3565, %v3557
  %v3806 = vpack.c.b16 %v3574, %v3566
  %v3807 = vpack.c.b16 %v3575, %v3567
  %v3808 = vpack.c.b16 %v3576, %v3568
  %v3809 = vpack.c.b16 %v3577, %v3569
  %v3810 = vpack.c.b16 %v3578, %v3570
  %v3811 = vpack.c.b16 %v3579, %v3571
  %v3812 = vpack.c.b16 %v3580, %v3572
  %v3813 = vpack.c.b16 %v3581, %v3573
  %v3814 = vpack.c.b16 %v3590, %v3582
  %v3815 = vpack.c.b16 %v3591, %v3583
  %v3816 = vpack.c.b16 %v3592, %v3584
  %v3817 = vpack.c.b16 %v3593, %v3585
  %v3818 = vpack.c.b16 %v3594, %v3586
  %v3819 = vpack.c.b16 %v3595, %v3587
  %v3820 = vpack.c.b16 %v3596, %v3588
  %v3821 = vpack.c.b16 %v3597, %v3589
  %v3822 = vpack.c.b16 %v3606, %v3598
  %v3823 = vpack.c.b16 %v3607, %v3599
  %v3824 = vpack.c.b16 %v3608, %v3600
  %v3825 = vpack.c.b16 %v3609, %v3601
  %v3826 = vpack.c.b16 %v3610, %v3602
  %v3827 = vpack.c.b16 %v3611, %v3603
  %v3828 = vpack.c.b16 %v3612, %v3604
  %v3829 = vpack.c.b16 %v3613, %v3605
  %v3830 = vpack.c.b16 %v3622, %v3614
  %v3831 = vpack.c.b16 %v3623, %v3615
  %v3832 = vpack.c.b16 %v3624, %v3616
  %v3833 = vpack.c.b16 %v3625, %v3617
  %v3834 = vpack.c.b16 %v3626, %v3618
  %v3835 = vpack.c.b16 %v3627, %v3619
  %v3836 = vpack.c.b16 %v3628, %v3620
  %v3837 = vpack.c.b16 %v3629, %v3621
  %v3838 = vpack.c.b16 %v3638, %v3630
  %v3839 = vpack.c.b16 %v3639, %v3631
  %v3840 = vpack.c.b16 %v3640, %v3632
  %v3841 = vpack.c.b16 %v3641, %v3633
  %v3842 = vpack.c.b16 %v3642, %v3634
  %v3843 = vpack.c.b16 %v3643, %v3635
  %v3844 = vpack.c.b16 %v3644, %v3636
  %v3845 = vpack.c.b16 %v3645, %v3637
  %v3846 = vpack.c.b16 %v3654, %v3646
  %v3847 = vpack.c.b16 %v3655, %v3647
  %v3848 = vpack.c.b16 %v3656, %v3648
  %v3849 = vpack.c.b16 %v3657, %v3649
  %v3850 = vpack.c.b16 %v3658, %v3650
  %v3851 = vpack.c.b16 %v3659, %v3651
  %v3852 = vpack.c.b16 %v3660, %v3652
  %v3853 = vpack.c.b16 %v3661, %v3653
  %v3854 = vpack.c.b16 %v3670, %v3662
  %v3855 = vpack.c.b16 %v3671, %v3663
  %v3856 = vpack.c.b16 %v3672, %v3664
  %v3857 = vpack.c.b16 %v3673, %v3665
  %v3858 = vpack.c.b16 %v3674, %v3666
  %v3859 = vpack.c.b16 %v3675, %v3667
  %v3860 = vpack.c.b16 %v3676, %v3668
  %v3861 = vpack.c.b16 %v3677, %v3669
  %v3862 = vpack.c.b16 %v3686, %v3678
  %v3863 = vpack.c.b16 %v3687, %v3679
  %v3864 = vpack.c.b16 %v3688, %v3680
  %v3865 = vpack.c.b16 %v3689, %v3681
  %v3866 = vpack.c.b16 %v3690, %v3682
  %v3867 = vpack.c.b16 %v3691, %v3683
  %v3868 = vpack.c.b16 %v3692, %v3684
  %v3869 = vpack.c.b16 %v3693, %v3685
  %v3870 = vpack.c.b16 %v3702, %v3694
  %v3871 = vpack.c.b16 %v3703, %v3695
  %v3872 = vpack.c.b16 %v3704, %v3696
  %v3873 = vpack.c.b16 %v3705, %v3697
  %v3874 = vpack.c.b16 %v3706, %v3698
  %v3875 = vpack.c.b16 %v3707, %v3699
  %v3876 = vpack.c.b16 %v3708, %v3700
  %v3877 = vpack.c.b16 %v3709, %v3701
  %v3878 = vpack.c.b16 %v3718, %v3710
  %v3879 = vpack.c.b16 %v3719, %v3711
  %v3880 = vpack.c.b16 %v3720, %v3712
  %v3881 = vpack.c.b16 %v3721, %v3713
  %v3882 = vpack.c.b16 %v3722, %v3714
  %v3883 = vpack.c.b16 %v3723, %v3715
  %v3884 = vpack.c.b16 %v3724, %v3716
  %v3885 = vpack.c.b16 %v3725, %v3717
  %v3886 = vpack.c.b16 %v3734, %v3726
  %v3887 = vpack.c.b16 %v3735, %v3727
  %v3888 = vpack.c.b16 %v3736, %v3728
  %v3889 = vpack.c.b16 %v3737, %v3729
  %v3890 = vpack.c.b16 %v3738, %v3730
  %v3891 = vpack.c.b16 %v3739, %v3731
  %v3892 = vpack.c.b16 %v3740, %v3732
  %v3893 = vpack.c.b16 %v3741, %v3733
  %v3894 = vpack.c.b16 %v3750, %v3742
  %v3895 = vpack.c.b16 %v3751, %v3743
  %v3896 = vpack.c.b16 %v3752, %v3744
  %v3897 = vpack.c.b16 %v3753, %v3745
  %v3898 = vpack.c.b16 %v3754, %v3746
  %v3899 = vpack.c.b16 %v3755, %v3747
  %v3900 = vpack.c.b16 %v3756, %v3748
  %v3901 = vpack.c.b16 %v3757, %v3749
  %v3902 = vpack.c.b16 %v3766, %v3758
  %v3903 = vpack.c.b16 %v3767, %v3759
  %v3904 = vpack.c.b16 %v3768, %v3760
  %v3905 = vpack.c.b16 %v3769, %v3761
  %v3906 = vpack.c.b16 %v3770, %v3762
  %v3907 = vpack.c.b16 %v3771, %v3763
  %v3908 = vpack.c.b16 %v3772, %v3764
  %v3909 = vpack.c.b16 %v3773, %v3765
  %v3910 = vpack.c.b16 %v3782, %v3774
  %v3911 = vpack.c.b16 %v3783, %v3775
  %v3912 = vpack.c.b16 %v3784, %v3776
  %v3913 = vpack.c.b16 %v3785, %v3777
  %v3914 = vpack.c.b16 %v3786, %v3778
  %v3915 = vpack.c.b16 %v3787, %v3779
  %v3916 = vpack.c.b16 %v3788, %v3780
  %v3917 = vpack.c.b16 %v3789, %v3781
  %4046 = vmatprep.subr.bf16.mxu0 %v3791
  %4047 = vmatpush1.bf16.msra.mxu0 %v3790
  %4048 = vmatprep.subr.bf16.mxu0 %v3799
  %4049 = vmatpush1.bf16.msra.mxu0 %v3798
  %4050 = vmatprep.subr.bf16.mxu0 %v3807
  %4051 = vmatpush1.bf16.msra.mxu0 %v3806
  %4052 = vmatprep.subr.bf16.mxu0 %v3815
  %4053 = vmatpush1.bf16.msra.mxu0 %v3814
  %4054 = vmatprep.subr.bf16.mxu0 %v3823
  %4055 = vmatpush1.bf16.msra.mxu0 %v3822
  %4056 = vmatprep.subr.bf16.mxu0 %v3831
  %4057 = vmatpush1.bf16.msra.mxu0 %v3830
  %4058 = vmatprep.subr.bf16.mxu0 %v3839
  %4059 = vmatpush1.bf16.msra.mxu0 %v3838
  %4060 = vmatprep.subr.bf16.mxu0 %v3847
  %4061 = vmatpush1.bf16.msra.mxu0 %v3846
  %4062 = vmatprep.subr.bf16.mxu0 %v3855
  %4063 = vmatpush1.bf16.msra.mxu0 %v3854
  %4064 = vmatprep.subr.bf16.mxu0 %v3863
  %4065 = vmatpush1.bf16.msra.mxu0 %v3862
  %4066 = vmatprep.subr.bf16.mxu0 %v3871
  %4067 = vmatpush1.bf16.msra.mxu0 %v3870
  %4068 = vmatprep.subr.bf16.mxu0 %v3879
  %4069 = vmatpush1.bf16.msra.mxu0 %v3878
  %4070 = vmatprep.subr.bf16.mxu0 %v3887
  %4071 = vmatpush1.bf16.msra.mxu0 %v3886
  %4072 = vmatprep.subr.bf16.mxu0 %v3895
  %4073 = vmatpush1.bf16.msra.mxu0 %v3894
  %4074 = vmatprep.subr.bf16.mxu0 %v3903
  %4075 = vmatpush1.bf16.msra.mxu0 %v3902
  %4076 = vmatprep.subr.bf16.mxu0 %v3911
  %4077 = vmatpush1.bf16.msra.mxu0 %v3910
  %4078 = vmatprep.mubr.bf16.mxu0 %v515
  %4079 = vmatmul.mubr.bf16.gmra.mrb[0].mxu0 %v3277
  %v4080 = vpop.f32.mrb[0].mxu0
  %v4081 = vadd.f32 0.0, %v4080
  %v4082 = vpop.f32.mrb[0].mxu0
  %v4083 = vadd.f32 0.0, %v4082
  %v4084 = vpop.f32.mrb[0].mxu0
  %v4085 = vpop.f32.mrb[0].mxu0
  %4086 = vdwg.mxu0
  %4087 = vmatprep.subr.bf16.mxu0 %v3793
  %4088 = vmatpush1.bf16.msra.mxu0 %v3792
  %4089 = vmatprep.subr.bf16.mxu0 %v3801
  %4090 = vmatpush1.bf16.msra.mxu0 %v3800
  %4091 = vmatprep.subr.bf16.mxu0 %v3809
  %4092 = vmatpush1.bf16.msra.mxu0 %v3808
  %4093 = vmatprep.subr.bf16.mxu0 %v3817
  %4094 = vmatpush1.bf16.msra.mxu0 %v3816
  %4095 = vmatprep.subr.bf16.mxu0 %v3825
  %4096 = vmatpush1.bf16.msra.mxu0 %v3824
  %4097 = vmatprep.subr.bf16.mxu0 %v3833
  %4098 = vmatpush1.bf16.msra.mxu0 %v3832
  %4099 = vmatprep.subr.bf16.mxu0 %v3841
  %4100 = vmatpush1.bf16.msra.mxu0 %v3840
  %4101 = vmatprep.subr.bf16.mxu0 %v3849
  %4102 = vmatpush1.bf16.msra.mxu0 %v3848
  %4103 = vmatprep.subr.bf16.mxu0 %v3857
  %4104 = vmatpush1.bf16.msra.mxu0 %v3856
  %4105 = vmatprep.subr.bf16.mxu0 %v3865
  %4106 = vmatpush1.bf16.msra.mxu0 %v3864
  %4107 = vmatprep.subr.bf16.mxu0 %v3873
  %4108 = vmatpush1.bf16.msra.mxu0 %v3872
  %4109 = vmatprep.subr.bf16.mxu0 %v3881
  %4110 = vmatpush1.bf16.msra.mxu0 %v3880
  %4111 = vmatprep.subr.bf16.mxu0 %v3889
  %4112 = vmatpush1.bf16.msra.mxu0 %v3888
  %4113 = vmatprep.subr.bf16.mxu0 %v3897
  %4114 = vmatpush1.bf16.msra.mxu0 %v3896
  %4115 = vmatprep.subr.bf16.mxu0 %v3905
  %4116 = vmatpush1.bf16.msra.mxu0 %v3904
  %4117 = vmatprep.subr.bf16.mxu0 %v3913
  %4118 = vmatpush1.bf16.msra.mxu0 %v3912
  %4119 = vmatprep.mubr.bf16.mxu0 %v515
  %4120 = vmatmul.mubr.bf16.gmra.mrb[0].mxu0 %v3277
  %v4121 = vpop.f32.mrb[0].mxu0
  %v4122 = vadd.f32 0.0, %v4121
  %v4123 = vpop.f32.mrb[0].mxu0
  %v4124 = vadd.f32 0.0, %v4123
  %v4125 = vpop.f32.mrb[0].mxu0
  %v4126 = vpop.f32.mrb[0].mxu0
  %4127 = vdwg.mxu0
  %4128 = vmatprep.subr.bf16.mxu0 %v3795
  %4129 = vmatpush1.bf16.msra.mxu0 %v3794
  %4130 = vmatprep.subr.bf16.mxu0 %v3803
  %4131 = vmatpush1.bf16.msra.mxu0 %v3802
  %4132 = vmatprep.subr.bf16.mxu0 %v3811
  %4133 = vmatpush1.bf16.msra.mxu0 %v3810
  %4134 = vmatprep.subr.bf16.mxu0 %v3819
  %4135 = vmatpush1.bf16.msra.mxu0 %v3818
  %4136 = vmatprep.subr.bf16.mxu0 %v3827
  %4137 = vmatpush1.bf16.msra.mxu0 %v3826
  %4138 = vmatprep.subr.bf16.mxu0 %v3835
  %4139 = vmatpush1.bf16.msra.mxu0 %v3834
  %4140 = vmatprep.subr.bf16.mxu0 %v3843
  %4141 = vmatpush1.bf16.msra.mxu0 %v3842
  %4142 = vmatprep.subr.bf16.mxu0 %v3851
  %4143 = vmatpush1.bf16.msra.mxu0 %v3850
  %4144 = vmatprep.subr.bf16.mxu0 %v3859
  %4145 = vmatpush1.bf16.msra.mxu0 %v3858
  %4146 = vmatprep.subr.bf16.mxu0 %v3867
  %4147 = vmatpush1.bf16.msra.mxu0 %v3866
  %4148 = vmatprep.subr.bf16.mxu0 %v3875
  %4149 = vmatpush1.bf16.msra.mxu0 %v3874
  %4150 = vmatprep.subr.bf16.mxu0 %v3883
  %4151 = vmatpush1.bf16.msra.mxu0 %v3882
  %4152 = vmatprep.subr.bf16.mxu0 %v3891
  %4153 = vmatpush1.bf16.msra.mxu0 %v3890
  %4154 = vmatprep.subr.bf16.mxu0 %v3899
  %4155 = vmatpush1.bf16.msra.mxu0 %v3898
  %4156 = vmatprep.subr.bf16.mxu0 %v3907
  %4157 = vmatpush1.bf16.msra.mxu0 %v3906
  %4158 = vmatprep.subr.bf16.mxu0 %v3915
  %4159 = vmatpush1.bf16.msra.mxu0 %v3914
  %4160 = vmatprep.mubr.bf16.mxu0 %v515
  %4161 = vmatmul.mubr.bf16.gmra.mrb[0].mxu0 %v3277
  %v4162 = vpop.f32.mrb[0].mxu0
  %v4163 = vadd.f32 0.0, %v4162
  %v4164 = vpop.f32.mrb[0].mxu0
  %v4165 = vadd.f32 0.0, %v4164
  %v4166 = vpop.f32.mrb[0].mxu0
  %v4167 = vpop.f32.mrb[0].mxu0
  %4168 = vdwg.mxu0
  %4169 = vmatprep.subr.bf16.mxu0 %v3797
  %4170 = vmatpush1.bf16.msra.mxu0 %v3796
  %4171 = vmatprep.subr.bf16.mxu0 %v3805
  %4172 = vmatpush1.bf16.msra.mxu0 %v3804
  %4173 = vmatprep.subr.bf16.mxu0 %v3813
  %4174 = vmatpush1.bf16.msra.mxu0 %v3812
  %4175 = vmatprep.subr.bf16.mxu0 %v3821
  %4176 = vmatpush1.bf16.msra.mxu0 %v3820
  %4177 = vmatprep.subr.bf16.mxu0 %v3829
  %4178 = vmatpush1.bf16.msra.mxu0 %v3828
  %4179 = vmatprep.subr.bf16.mxu0 %v3837
  %4180 = vmatpush1.bf16.msra.mxu0 %v3836
  %4181 = vmatprep.subr.bf16.mxu0 %v3845
  %4182 = vmatpush1.bf16.msra.mxu0 %v3844
  %4183 = vmatprep.subr.bf16.mxu0 %v3853
  %4184 = vmatpush1.bf16.msra.mxu0 %v3852
  %4185 = vmatprep.subr.bf16.mxu0 %v3861
  %4186 = vmatpush1.bf16.msra.mxu0 %v3860
  %4187 = vmatprep.subr.bf16.mxu0 %v3869
  %4188 = vmatpush1.bf16.msra.mxu0 %v3868
  %4189 = vmatprep.subr.bf16.mxu0 %v3877
  %4190 = vmatpush1.bf16.msra.mxu0 %v3876
  %4191 = vmatprep.subr.bf16.mxu0 %v3885
  %4192 = vmatpush1.bf16.msra.mxu0 %v3884
  %4193 = vmatprep.subr.bf16.mxu0 %v3893
  %4194 = vmatpush1.bf16.msra.mxu0 %v3892
  %4195 = vmatprep.subr.bf16.mxu0 %v3901
  %4196 = vmatpush1.bf16.msra.mxu0 %v3900
  %4197 = vmatprep.subr.bf16.mxu0 %v3909
  %4198 = vmatpush1.bf16.msra.mxu0 %v3908
  %4199 = vmatprep.subr.bf16.mxu0 %v3917
  %4200 = vmatpush1.bf16.msra.mxu0 %v3916
  %4201 = vmatprep.mubr.bf16.mxu0 %v515
  %4202 = vmatmul.mubr.bf16.gmra.mrb[0].mxu0 %v3277
  %v4203 = vpop.f32.mrb[0].mxu0
  %v4204 = vadd.f32 0.0, %v4203
  %v4205 = vpop.f32.mrb[0].mxu0
  %v4206 = vadd.f32 0.0, %v4205
  %v4207 = vpop.f32.mrb[0].mxu0
  %v4208 = vpop.f32.mrb[0].mxu0
  %4209 = vdwg.mxu0
  %v4210 = vadd.f32 %v3186, %v4081
  %v4211 = vadd.f32 %v3188, %v4083
  %v4212 = vadd.f32 %v3227, %v4122
  %v4213 = vadd.f32 %v3229, %v4124
  %v4214 = vmul.f32 %v4210, 0.5
  %v4215 = vtanh.pop %v4214
  %v4216 = vmul.f32 %v4215, 0.5
  %v4217 = vadd.f32 %v4216, 0.5
  %v4218 = vmul.f32 %v4211, 0.5
  %v4219 = vtanh.pop %v4218
  %v4220 = vmul.f32 %v4219, 0.5
  %v4221 = vadd.f32 %v4220, 0.5
  %v4222 = vtanh.pop %v4212
  %v4223 = vmul.f32 %v4213, 0.5
  %v4224 = vtanh.pop %v4223
  %v4225 = vmul.f32 %v4224, 0.5
  %v4226 = vadd.f32 %v4225, 0.5
  %v4227 = vmul.f32 %v4221, %v3274
  %v4228 = vmul.f32 %v4217, %v4222
  %v4229 = vadd.f32 %v4227, %v4228
  %v4230 = vtanh.pop %v4229
  %v4231 = vmul.f32 %v4226, %v4230
  %v4232 = vadd.f32 %v3238, %v4163
  %v4233 = vadd.f32 %v3242, %v4165
  %v4234 = vadd.f32 %v3246, %v4204
  %v4235 = vadd.f32 %v3250, %v4206
  %v4236 = vmul.f32 %v4232, 0.5
  %v4237 = vtanh.pop %v4236
  %v4238 = vmul.f32 %v4237, 0.5
  %v4239 = vadd.f32 %v4238, 0.5
  %v4240 = vmul.f32 %v4233, 0.5
  %v4241 = vtanh.pop %v4240
  %v4242 = vmul.f32 %v4241, 0.5
  %v4243 = vadd.f32 %v4242, 0.5
  %v4244 = vtanh.pop %v4234
  %v4245 = vmul.f32 %v4235, 0.5
  %v4246 = vtanh.pop %v4245
  %v4247 = vmul.f32 %v4246, 0.5
  %v4248 = vadd.f32 %v4247, 0.5
  %v4249 = vmul.f32 %v4243, 0.0
  %v4250 = vmul.f32 %v4239, %v4244
  %v4251 = vadd.f32 %v4249, %v4250
  %v4252 = vtanh.pop %v4251
  %v4253 = vmul.f32 %v4248, %v4252
  %4254 = vst [vmem:[#allocation3] sm:$0xff] %v4253
  %v4255 = vpack.c.bf16 %v4231, %v4231
  %v4256 = vpack.c.bf16 %v4253, %v4253
  %v4257 = vld [vmem:[%s8] sm:$0xff]
  %v4258 = vld [vmem:[%s8 + $0x8] sm:$0xff]
  %v4259 = vld [vmem:[%s8 + $0x10] sm:$0xff]
  %v4260 = vld [vmem:[%s8 + $0x18] sm:$0xff]
  %v4261 = vld [vmem:[%s8 + $0x20] sm:$0xff]
  %v4262 = vld [vmem:[%s8 + $0x28] sm:$0xff]
  %v4263 = vld [vmem:[%s8 + $0x30] sm:$0xff]
  %v4264 = vld [vmem:[%s8 + $0x38] sm:$0xff]
  %v4265 = vld [vmem:[%s8 + $0x40] sm:$0xff]
  %v4266 = vld [vmem:[%s8 + $0x48] sm:$0xff]
  %v4267 = vld [vmem:[%s8 + $0x50] sm:$0xff]
  %v4268 = vld [vmem:[%s8 + $0x58] sm:$0xff]
  %v4269 = vld [vmem:[%s8 + $0x60] sm:$0xff]
  %v4270 = vld [vmem:[%s8 + $0x68] sm:$0xff]
  %v4271 = vld [vmem:[%s8 + $0x70] sm:$0xff]
  %v4272 = vld [vmem:[%s8 + $0x78] sm:$0xff]
  %v4273 = vld [vmem:[%s8 + $0x80] sm:$0xff]
  %v4274 = vld [vmem:[%s8 + $0x88] sm:$0xff]
  %v4275 = vld [vmem:[%s8 + $0x90] sm:$0xff]
  %v4276 = vld [vmem:[%s8 + $0x98] sm:$0xff]
  %v4277 = vld [vmem:[%s8 + $0xa0] sm:$0xff]
  %v4278 = vld [vmem:[%s8 + $0xa8] sm:$0xff]
  %v4279 = vld [vmem:[%s8 + $0xb0] sm:$0xff]
  %v4280 = vld [vmem:[%s8 + $0xb8] sm:$0xff]
  %v4281 = vld [vmem:[%s8 + $0xc0] sm:$0xff]
  %v4282 = vld [vmem:[%s8 + $0xc8] sm:$0xff]
  %v4283 = vld [vmem:[%s8 + $0xd0] sm:$0xff]
  %v4284 = vld [vmem:[%s8 + $0xd8] sm:$0xff]
  %v4285 = vld [vmem:[%s8 + $0xe0] sm:$0xff]
  %v4286 = vld [vmem:[%s8 + $0xe8] sm:$0xff]
  %v4287 = vld [vmem:[%s8 + $0xf0] sm:$0xff]
  %v4288 = vld [vmem:[%s8 + $0xf8] sm:$0xff]
  %v4289 = vld [vmem:[%s8 + $0x100] sm:$0xff]
  %v4290 = vld [vmem:[%s8 + $0x108] sm:$0xff]
  %v4291 = vld [vmem:[%s8 + $0x110] sm:$0xff]
  %v4292 = vld [vmem:[%s8 + $0x118] sm:$0xff]
  %v4293 = vld [vmem:[%s8 + $0x120] sm:$0xff]
  %v4294 = vld [vmem:[%s8 + $0x128] sm:$0xff]
  %v4295 = vld [vmem:[%s8 + $0x130] sm:$0xff]
  %v4296 = vld [vmem:[%s8 + $0x138] sm:$0xff]
  %v4297 = vld [vmem:[%s8 + $0x140] sm:$0xff]
  %v4298 = vld [vmem:[%s8 + $0x148] sm:$0xff]
  %v4299 = vld [vmem:[%s8 + $0x150] sm:$0xff]
  %v4300 = vld [vmem:[%s8 + $0x158] sm:$0xff]
  %v4301 = vld [vmem:[%s8 + $0x160] sm:$0xff]
  %v4302 = vld [vmem:[%s8 + $0x168] sm:$0xff]
  %v4303 = vld [vmem:[%s8 + $0x170] sm:$0xff]
  %v4304 = vld [vmem:[%s8 + $0x178] sm:$0xff]
  %v4305 = vld [vmem:[%s8 + $0x180] sm:$0xff]
  %v4306 = vld [vmem:[%s8 + $0x188] sm:$0xff]
  %v4307 = vld [vmem:[%s8 + $0x190] sm:$0xff]
  %v4308 = vld [vmem:[%s8 + $0x198] sm:$0xff]
  %v4309 = vld [vmem:[%s8 + $0x1a0] sm:$0xff]
  %v4310 = vld [vmem:[%s8 + $0x1a8] sm:$0xff]
  %v4311 = vld [vmem:[%s8 + $0x1b0] sm:$0xff]
  %v4312 = vld [vmem:[%s8 + $0x1b8] sm:$0xff]
  %v4313 = vld [vmem:[%s8 + $0x1c0] sm:$0xff]
  %v4314 = vld [vmem:[%s8 + $0x1c8] sm:$0xff]
  %v4315 = vld [vmem:[%s8 + $0x1d0] sm:$0xff]
  %v4316 = vld [vmem:[%s8 + $0x1d8] sm:$0xff]
  %v4317 = vld [vmem:[%s8 + $0x1e0] sm:$0xff]
  %v4318 = vld [vmem:[%s8 + $0x1e8] sm:$0xff]
  %v4319 = vld [vmem:[%s8 + $0x1f0] sm:$0xff]
  %v4320 = vld [vmem:[%s8 + $0x1f8] sm:$0xff]
  %v4321 = vld [vmem:[%s8 + $0x200] sm:$0xff]
  %v4322 = vld [vmem:[%s8 + $0x208] sm:$0xff]
  %v4323 = vld [vmem:[%s8 + $0x210] sm:$0xff]
  %v4324 = vld [vmem:[%s8 + $0x218] sm:$0xff]
  %v4325 = vld [vmem:[%s8 + $0x220] sm:$0xff]
  %v4326 = vld [vmem:[%s8 + $0x228] sm:$0xff]
  %v4327 = vld [vmem:[%s8 + $0x230] sm:$0xff]
  %v4328 = vld [vmem:[%s8 + $0x238] sm:$0xff]
  %v4329 = vld [vmem:[%s8 + $0x240] sm:$0xff]
  %v4330 = vld [vmem:[%s8 + $0x248] sm:$0xff]
  %v4331 = vld [vmem:[%s8 + $0x250] sm:$0xff]
  %v4332 = vld [vmem:[%s8 + $0x258] sm:$0xff]
  %v4333 = vld [vmem:[%s8 + $0x260] sm:$0xff]
  %v4334 = vld [vmem:[%s8 + $0x268] sm:$0xff]
  %v4335 = vld [vmem:[%s8 + $0x270] sm:$0xff]
  %v4336 = vld [vmem:[%s8 + $0x278] sm:$0xff]
  %v4337 = vld [vmem:[%s8 + $0x280] sm:$0xff]
  %v4338 = vld [vmem:[%s8 + $0x288] sm:$0xff]
  %v4339 = vld [vmem:[%s8 + $0x290] sm:$0xff]
  %v4340 = vld [vmem:[%s8 + $0x298] sm:$0xff]
  %v4341 = vld [vmem:[%s8 + $0x2a0] sm:$0xff]
  %v4342 = vld [vmem:[%s8 + $0x2a8] sm:$0xff]
  %v4343 = vld [vmem:[%s8 + $0x2b0] sm:$0xff]
  %v4344 = vld [vmem:[%s8 + $0x2b8] sm:$0xff]
  %v4345 = vld [vmem:[%s8 + $0x2c0] sm:$0xff]
  %v4346 = vld [vmem:[%s8 + $0x2c8] sm:$0xff]
  %v4347 = vld [vmem:[%s8 + $0x2d0] sm:$0xff]
  %v4348 = vld [vmem:[%s8 + $0x2d8] sm:$0xff]
  %v4349 = vld [vmem:[%s8 + $0x2e0] sm:$0xff]
  %v4350 = vld [vmem:[%s8 + $0x2e8] sm:$0xff]
  %v4351 = vld [vmem:[%s8 + $0x2f0] sm:$0xff]
  %v4352 = vld [vmem:[%s8 + $0x2f8] sm:$0xff]
  %v4353 = vld [vmem:[%s8 + $0x300] sm:$0xff]
  %v4354 = vld [vmem:[%s8 + $0x308] sm:$0xff]
  %v4355 = vld [vmem:[%s8 + $0x310] sm:$0xff]
  %v4356 = vld [vmem:[%s8 + $0x318] sm:$0xff]
  %v4357 = vld [vmem:[%s8 + $0x320] sm:$0xff]
  %v4358 = vld [vmem:[%s8 + $0x328] sm:$0xff]
  %v4359 = vld [vmem:[%s8 + $0x330] sm:$0xff]
  %v4360 = vld [vmem:[%s8 + $0x338] sm:$0xff]
  %v4361 = vld [vmem:[%s8 + $0x340] sm:$0xff]
  %v4362 = vld [vmem:[%s8 + $0x348] sm:$0xff]
  %v4363 = vld [vmem:[%s8 + $0x350] sm:$0xff]
  %v4364 = vld [vmem:[%s8 + $0x358] sm:$0xff]
  %v4365 = vld [vmem:[%s8 + $0x360] sm:$0xff]
  %v4366 = vld [vmem:[%s8 + $0x368] sm:$0xff]
  %v4367 = vld [vmem:[%s8 + $0x370] sm:$0xff]
  %v4368 = vld [vmem:[%s8 + $0x378] sm:$0xff]
  %v4369 = vld [vmem:[%s8 + $0x380] sm:$0xff]
  %v4370 = vld [vmem:[%s8 + $0x388] sm:$0xff]
  %v4371 = vld [vmem:[%s8 + $0x390] sm:$0xff]
  %v4372 = vld [vmem:[%s8 + $0x398] sm:$0xff]
  %v4373 = vld [vmem:[%s8 + $0x3a0] sm:$0xff]
  %v4374 = vld [vmem:[%s8 + $0x3a8] sm:$0xff]
  %v4375 = vld [vmem:[%s8 + $0x3b0] sm:$0xff]
  %v4376 = vld [vmem:[%s8 + $0x3b8] sm:$0xff]
  %v4377 = vld [vmem:[%s8 + $0x3c0] sm:$0xff]
  %v4378 = vld [vmem:[%s8 + $0x3c8] sm:$0xff]
  %v4379 = vld [vmem:[%s8 + $0x3d0] sm:$0xff]
  %v4380 = vld [vmem:[%s8 + $0x3d8] sm:$0xff]
  %v4381 = vld [vmem:[%s8 + $0x3e0] sm:$0xff]
  %v4382 = vld [vmem:[%s8 + $0x3e8] sm:$0xff]
  %v4383 = vld [vmem:[%s8 + $0x3f0] sm:$0xff]
  %v4384 = vld [vmem:[%s8 + $0x3f8] sm:$0xff]
  %v4513 = vunpack.c.l.b16 %v4257
  %v4514 = vunpack.c.h.b16 %v4257
  %v4515 = vunpack.c.l.b16 %v4258
  %v4516 = vunpack.c.h.b16 %v4258
  %v4517 = vunpack.c.l.b16 %v4259
  %v4518 = vunpack.c.h.b16 %v4259
  %v4519 = vunpack.c.l.b16 %v4260
  %v4520 = vunpack.c.h.b16 %v4260
  %v4521 = vunpack.c.l.b16 %v4261
  %v4522 = vunpack.c.h.b16 %v4261
  %v4523 = vunpack.c.l.b16 %v4262
  %v4524 = vunpack.c.h.b16 %v4262
  %v4525 = vunpack.c.l.b16 %v4263
  %v4526 = vunpack.c.h.b16 %v4263
  %v4527 = vunpack.c.l.b16 %v4264
  %v4528 = vunpack.c.h.b16 %v4264
  %v4529 = vunpack.c.l.b16 %v4265
  %v4530 = vunpack.c.h.b16 %v4265
  %v4531 = vunpack.c.l.b16 %v4266
  %v4532 = vunpack.c.h.b16 %v4266
  %v4533 = vunpack.c.l.b16 %v4267
  %v4534 = vunpack.c.h.b16 %v4267
  %v4535 = vunpack.c.l.b16 %v4268
  %v4536 = vunpack.c.h.b16 %v4268
  %v4537 = vunpack.c.l.b16 %v4269
  %v4538 = vunpack.c.h.b16 %v4269
  %v4539 = vunpack.c.l.b16 %v4270
  %v4540 = vunpack.c.h.b16 %v4270
  %v4541 = vunpack.c.l.b16 %v4271
  %v4542 = vunpack.c.h.b16 %v4271
  %v4543 = vunpack.c.l.b16 %v4272
  %v4544 = vunpack.c.h.b16 %v4272
  %v4545 = vunpack.c.l.b16 %v4273
  %v4546 = vunpack.c.h.b16 %v4273
  %v4547 = vunpack.c.l.b16 %v4274
  %v4548 = vunpack.c.h.b16 %v4274
  %v4549 = vunpack.c.l.b16 %v4275
  %v4550 = vunpack.c.h.b16 %v4275
  %v4551 = vunpack.c.l.b16 %v4276
  %v4552 = vunpack.c.h.b16 %v4276
  %v4553 = vunpack.c.l.b16 %v4277
  %v4554 = vunpack.c.h.b16 %v4277
  %v4555 = vunpack.c.l.b16 %v4278
  %v4556 = vunpack.c.h.b16 %v4278
  %v4557 = vunpack.c.l.b16 %v4279
  %v4558 = vunpack.c.h.b16 %v4279
  %v4559 = vunpack.c.l.b16 %v4280
  %v4560 = vunpack.c.h.b16 %v4280
  %v4561 = vunpack.c.l.b16 %v4281
  %v4562 = vunpack.c.h.b16 %v4281
  %v4563 = vunpack.c.l.b16 %v4282
  %v4564 = vunpack.c.h.b16 %v4282
  %v4565 = vunpack.c.l.b16 %v4283
  %v4566 = vunpack.c.h.b16 %v4283
  %v4567 = vunpack.c.l.b16 %v4284
  %v4568 = vunpack.c.h.b16 %v4284
  %v4569 = vunpack.c.l.b16 %v4285
  %v4570 = vunpack.c.h.b16 %v4285
  %v4571 = vunpack.c.l.b16 %v4286
  %v4572 = vunpack.c.h.b16 %v4286
  %v4573 = vunpack.c.l.b16 %v4287
  %v4574 = vunpack.c.h.b16 %v4287
  %v4575 = vunpack.c.l.b16 %v4288
  %v4576 = vunpack.c.h.b16 %v4288
  %v4577 = vunpack.c.l.b16 %v4289
  %v4578 = vunpack.c.h.b16 %v4289
  %v4579 = vunpack.c.l.b16 %v4290
  %v4580 = vunpack.c.h.b16 %v4290
  %v4581 = vunpack.c.l.b16 %v4291
  %v4582 = vunpack.c.h.b16 %v4291
  %v4583 = vunpack.c.l.b16 %v4292
  %v4584 = vunpack.c.h.b16 %v4292
  %v4585 = vunpack.c.l.b16 %v4293
  %v4586 = vunpack.c.h.b16 %v4293
  %v4587 = vunpack.c.l.b16 %v4294
  %v4588 = vunpack.c.h.b16 %v4294
  %v4589 = vunpack.c.l.b16 %v4295
  %v4590 = vunpack.c.h.b16 %v4295
  %v4591 = vunpack.c.l.b16 %v4296
  %v4592 = vunpack.c.h.b16 %v4296
  %v4593 = vunpack.c.l.b16 %v4297
  %v4594 = vunpack.c.h.b16 %v4297
  %v4595 = vunpack.c.l.b16 %v4298
  %v4596 = vunpack.c.h.b16 %v4298
  %v4597 = vunpack.c.l.b16 %v4299
  %v4598 = vunpack.c.h.b16 %v4299
  %v4599 = vunpack.c.l.b16 %v4300
  %v4600 = vunpack.c.h.b16 %v4300
  %v4601 = vunpack.c.l.b16 %v4301
  %v4602 = vunpack.c.h.b16 %v4301
  %v4603 = vunpack.c.l.b16 %v4302
  %v4604 = vunpack.c.h.b16 %v4302
  %v4605 = vunpack.c.l.b16 %v4303
  %v4606 = vunpack.c.h.b16 %v4303
  %v4607 = vunpack.c.l.b16 %v4304
  %v4608 = vunpack.c.h.b16 %v4304
  %v4609 = vunpack.c.l.b16 %v4305
  %v4610 = vunpack.c.h.b16 %v4305
  %v4611 = vunpack.c.l.b16 %v4306
  %v4612 = vunpack.c.h.b16 %v4306
  %v4613 = vunpack.c.l.b16 %v4307
  %v4614 = vunpack.c.h.b16 %v4307
  %v4615 = vunpack.c.l.b16 %v4308
  %v4616 = vunpack.c.h.b16 %v4308
  %v4617 = vunpack.c.l.b16 %v4309
  %v4618 = vunpack.c.h.b16 %v4309
  %v4619 = vunpack.c.l.b16 %v4310
  %v4620 = vunpack.c.h.b16 %v4310
  %v4621 = vunpack.c.l.b16 %v4311
  %v4622 = vunpack.c.h.b16 %v4311
  %v4623 = vunpack.c.l.b16 %v4312
  %v4624 = vunpack.c.h.b16 %v4312
  %v4625 = vunpack.c.l.b16 %v4313
  %v4626 = vunpack.c.h.b16 %v4313
  %v4627 = vunpack.c.l.b16 %v4314
  %v4628 = vunpack.c.h.b16 %v4314
  %v4629 = vunpack.c.l.b16 %v4315
  %v4630 = vunpack.c.h.b16 %v4315
  %v4631 = vunpack.c.l.b16 %v4316
  %v4632 = vunpack.c.h.b16 %v4316
  %v4633 = vunpack.c.l.b16 %v4317
  %v4634 = vunpack.c.h.b16 %v4317
  %v4635 = vunpack.c.l.b16 %v4318
  %v4636 = vunpack.c.h.b16 %v4318
  %v4637 = vunpack.c.l.b16 %v4319
  %v4638 = vunpack.c.h.b16 %v4319
  %v4639 = vunpack.c.l.b16 %v4320
  %v4640 = vunpack.c.h.b16 %v4320
  %v4641 = vunpack.c.l.b16 %v4321
  %v4642 = vunpack.c.h.b16 %v4321
  %v4643 = vunpack.c.l.b16 %v4322
  %v4644 = vunpack.c.h.b16 %v4322
  %v4645 = vunpack.c.l.b16 %v4323
  %v4646 = vunpack.c.h.b16 %v4323
  %v4647 = vunpack.c.l.b16 %v4324
  %v4648 = vunpack.c.h.b16 %v4324
  %v4649 = vunpack.c.l.b16 %v4325
  %v4650 = vunpack.c.h.b16 %v4325
  %v4651 = vunpack.c.l.b16 %v4326
  %v4652 = vunpack.c.h.b16 %v4326
  %v4653 = vunpack.c.l.b16 %v4327
  %v4654 = vunpack.c.h.b16 %v4327
  %v4655 = vunpack.c.l.b16 %v4328
  %v4656 = vunpack.c.h.b16 %v4328
  %v4657 = vunpack.c.l.b16 %v4329
  %v4658 = vunpack.c.h.b16 %v4329
  %v4659 = vunpack.c.l.b16 %v4330
  %v4660 = vunpack.c.h.b16 %v4330
  %v4661 = vunpack.c.l.b16 %v4331
  %v4662 = vunpack.c.h.b16 %v4331
  %v4663 = vunpack.c.l.b16 %v4332
  %v4664 = vunpack.c.h.b16 %v4332
  %v4665 = vunpack.c.l.b16 %v4333
  %v4666 = vunpack.c.h.b16 %v4333
  %v4667 = vunpack.c.l.b16 %v4334
  %v4668 = vunpack.c.h.b16 %v4334
  %v4669 = vunpack.c.l.b16 %v4335
  %v4670 = vunpack.c.h.b16 %v4335
  %v4671 = vunpack.c.l.b16 %v4336
  %v4672 = vunpack.c.h.b16 %v4336
  %v4673 = vunpack.c.l.b16 %v4337
  %v4674 = vunpack.c.h.b16 %v4337
  %v4675 = vunpack.c.l.b16 %v4338
  %v4676 = vunpack.c.h.b16 %v4338
  %v4677 = vunpack.c.l.b16 %v4339
  %v4678 = vunpack.c.h.b16 %v4339
  %v4679 = vunpack.c.l.b16 %v4340
  %v4680 = vunpack.c.h.b16 %v4340
  %v4681 = vunpack.c.l.b16 %v4341
  %v4682 = vunpack.c.h.b16 %v4341
  %v4683 = vunpack.c.l.b16 %v4342
  %v4684 = vunpack.c.h.b16 %v4342
  %v4685 = vunpack.c.l.b16 %v4343
  %v4686 = vunpack.c.h.b16 %v4343
  %v4687 = vunpack.c.l.b16 %v4344
  %v4688 = vunpack.c.h.b16 %v4344
  %v4689 = vunpack.c.l.b16 %v4345
  %v4690 = vunpack.c.h.b16 %v4345
  %v4691 = vunpack.c.l.b16 %v4346
  %v4692 = vunpack.c.h.b16 %v4346
  %v4693 = vunpack.c.l.b16 %v4347
  %v4694 = vunpack.c.h.b16 %v4347
  %v4695 = vunpack.c.l.b16 %v4348
  %v4696 = vunpack.c.h.b16 %v4348
  %v4697 = vunpack.c.l.b16 %v4349
  %v4698 = vunpack.c.h.b16 %v4349
  %v4699 = vunpack.c.l.b16 %v4350
  %v4700 = vunpack.c.h.b16 %v4350
  %v4701 = vunpack.c.l.b16 %v4351
  %v4702 = vunpack.c.h.b16 %v4351
  %v4703 = vunpack.c.l.b16 %v4352
  %v4704 = vunpack.c.h.b16 %v4352
  %v4705 = vunpack.c.l.b16 %v4353
  %v4706 = vunpack.c.h.b16 %v4353
  %v4707 = vunpack.c.l.b16 %v4354
  %v4708 = vunpack.c.h.b16 %v4354
  %v4709 = vunpack.c.l.b16 %v4355
  %v4710 = vunpack.c.h.b16 %v4355
  %v4711 = vunpack.c.l.b16 %v4356
  %v4712 = vunpack.c.h.b16 %v4356
  %v4713 = vunpack.c.l.b16 %v4357
  %v4714 = vunpack.c.h.b16 %v4357
  %v4715 = vunpack.c.l.b16 %v4358
  %v4716 = vunpack.c.h.b16 %v4358
  %v4717 = vunpack.c.l.b16 %v4359
  %v4718 = vunpack.c.h.b16 %v4359
  %v4719 = vunpack.c.l.b16 %v4360
  %v4720 = vunpack.c.h.b16 %v4360
  %v4721 = vunpack.c.l.b16 %v4361
  %v4722 = vunpack.c.h.b16 %v4361
  %v4723 = vunpack.c.l.b16 %v4362
  %v4724 = vunpack.c.h.b16 %v4362
  %v4725 = vunpack.c.l.b16 %v4363
  %v4726 = vunpack.c.h.b16 %v4363
  %v4727 = vunpack.c.l.b16 %v4364
  %v4728 = vunpack.c.h.b16 %v4364
  %v4729 = vunpack.c.l.b16 %v4365
  %v4730 = vunpack.c.h.b16 %v4365
  %v4731 = vunpack.c.l.b16 %v4366
  %v4732 = vunpack.c.h.b16 %v4366
  %v4733 = vunpack.c.l.b16 %v4367
  %v4734 = vunpack.c.h.b16 %v4367
  %v4735 = vunpack.c.l.b16 %v4368
  %v4736 = vunpack.c.h.b16 %v4368
  %v4737 = vunpack.c.l.b16 %v4369
  %v4738 = vunpack.c.h.b16 %v4369
  %v4739 = vunpack.c.l.b16 %v4370
  %v4740 = vunpack.c.h.b16 %v4370
  %v4741 = vunpack.c.l.b16 %v4371
  %v4742 = vunpack.c.h.b16 %v4371
  %v4743 = vunpack.c.l.b16 %v4372
  %v4744 = vunpack.c.h.b16 %v4372
  %v4745 = vunpack.c.l.b16 %v4373
  %v4746 = vunpack.c.h.b16 %v4373
  %v4747 = vunpack.c.l.b16 %v4374
  %v4748 = vunpack.c.h.b16 %v4374
  %v4749 = vunpack.c.l.b16 %v4375
  %v4750 = vunpack.c.h.b16 %v4375
  %v4751 = vunpack.c.l.b16 %v4376
  %v4752 = vunpack.c.h.b16 %v4376
  %v4753 = vunpack.c.l.b16 %v4377
  %v4754 = vunpack.c.h.b16 %v4377
  %v4755 = vunpack.c.l.b16 %v4378
  %v4756 = vunpack.c.h.b16 %v4378
  %v4757 = vunpack.c.l.b16 %v4379
  %v4758 = vunpack.c.h.b16 %v4379
  %v4759 = vunpack.c.l.b16 %v4380
  %v4760 = vunpack.c.h.b16 %v4380
  %v4761 = vunpack.c.l.b16 %v4381
  %v4762 = vunpack.c.h.b16 %v4381
  %v4763 = vunpack.c.l.b16 %v4382
  %v4764 = vunpack.c.h.b16 %v4382
  %v4765 = vunpack.c.l.b16 %v4383
  %v4766 = vunpack.c.h.b16 %v4383
  %v4767 = vunpack.c.l.b16 %v4384
  %v4768 = vunpack.c.h.b16 %v4384
  %v4769 = vpack.c.b16 %v4521, %v4513
  %v4770 = vpack.c.b16 %v4522, %v4514
  %v4771 = vpack.c.b16 %v4523, %v4515
  %v4772 = vpack.c.b16 %v4524, %v4516
  %v4773 = vpack.c.b16 %v4525, %v4517
  %v4774 = vpack.c.b16 %v4526, %v4518
  %v4775 = vpack.c.b16 %v4527, %v4519
  %v4776 = vpack.c.b16 %v4528, %v4520
  %v4777 = vpack.c.b16 %v4537, %v4529
  %v4778 = vpack.c.b16 %v4538, %v4530
  %v4779 = vpack.c.b16 %v4539, %v4531
  %v4780 = vpack.c.b16 %v4540, %v4532
  %v4781 = vpack.c.b16 %v4541, %v4533
  %v4782 = vpack.c.b16 %v4542, %v4534
  %v4783 = vpack.c.b16 %v4543, %v4535
  %v4784 = vpack.c.b16 %v4544, %v4536
  %v4785 = vpack.c.b16 %v4553, %v4545
  %v4786 = vpack.c.b16 %v4554, %v4546
  %v4787 = vpack.c.b16 %v4555, %v4547
  %v4788 = vpack.c.b16 %v4556, %v4548
  %v4789 = vpack.c.b16 %v4557, %v4549
  %v4790 = vpack.c.b16 %v4558, %v4550
  %v4791 = vpack.c.b16 %v4559, %v4551
  %v4792 = vpack.c.b16 %v4560, %v4552
  %v4793 = vpack.c.b16 %v4569, %v4561
  %v4794 = vpack.c.b16 %v4570, %v4562
  %v4795 = vpack.c.b16 %v4571, %v4563
  %v4796 = vpack.c.b16 %v4572, %v4564
  %v4797 = vpack.c.b16 %v4573, %v4565
  %v4798 = vpack.c.b16 %v4574, %v4566
  %v4799 = vpack.c.b16 %v4575, %v4567
  %v4800 = vpack.c.b16 %v4576, %v4568
  %v4801 = vpack.c.b16 %v4585, %v4577
  %v4802 = vpack.c.b16 %v4586, %v4578
  %v4803 = vpack.c.b16 %v4587, %v4579
  %v4804 = vpack.c.b16 %v4588, %v4580
  %v4805 = vpack.c.b16 %v4589, %v4581
  %v4806 = vpack.c.b16 %v4590, %v4582
  %v4807 = vpack.c.b16 %v4591, %v4583
  %v4808 = vpack.c.b16 %v4592, %v4584
  %v4809 = vpack.c.b16 %v4601, %v4593
  %v4810 = vpack.c.b16 %v4602, %v4594
  %v4811 = vpack.c.b16 %v4603, %v4595
  %v4812 = vpack.c.b16 %v4604, %v4596
  %v4813 = vpack.c.b16 %v4605, %v4597
  %v4814 = vpack.c.b16 %v4606, %v4598
  %v4815 = vpack.c.b16 %v4607, %v4599
  %v4816 = vpack.c.b16 %v4608, %v4600
  %v4817 = vpack.c.b16 %v4617, %v4609
  %v4818 = vpack.c.b16 %v4618, %v4610
  %v4819 = vpack.c.b16 %v4619, %v4611
  %v4820 = vpack.c.b16 %v4620, %v4612
  %v4821 = vpack.c.b16 %v4621, %v4613
  %v4822 = vpack.c.b16 %v4622, %v4614
  %v4823 = vpack.c.b16 %v4623, %v4615
  %v4824 = vpack.c.b16 %v4624, %v4616
  %v4825 = vpack.c.b16 %v4633, %v4625
  %v4826 = vpack.c.b16 %v4634, %v4626
  %v4827 = vpack.c.b16 %v4635, %v4627
  %v4828 = vpack.c.b16 %v4636, %v4628
  %v4829 = vpack.c.b16 %v4637, %v4629
  %v4830 = vpack.c.b16 %v4638, %v4630
  %v4831 = vpack.c.b16 %v4639, %v4631
  %v4832 = vpack.c.b16 %v4640, %v4632
  %v4833 = vpack.c.b16 %v4649, %v4641
  %v4834 = vpack.c.b16 %v4650, %v4642
  %v4835 = vpack.c.b16 %v4651, %v4643
  %v4836 = vpack.c.b16 %v4652, %v4644
  %v4837 = vpack.c.b16 %v4653, %v4645
  %v4838 = vpack.c.b16 %v4654, %v4646
  %v4839 = vpack.c.b16 %v4655, %v4647
  %v4840 = vpack.c.b16 %v4656, %v4648
  %v4841 = vpack.c.b16 %v4665, %v4657
  %v4842 = vpack.c.b16 %v4666, %v4658
  %v4843 = vpack.c.b16 %v4667, %v4659
  %v4844 = vpack.c.b16 %v4668, %v4660
  %v4845 = vpack.c.b16 %v4669, %v4661
  %v4846 = vpack.c.b16 %v4670, %v4662
  %v4847 = vpack.c.b16 %v4671, %v4663
  %v4848 = vpack.c.b16 %v4672, %v4664
  %v4849 = vpack.c.b16 %v4681, %v4673
  %v4850 = vpack.c.b16 %v4682, %v4674
  %v4851 = vpack.c.b16 %v4683, %v4675
  %v4852 = vpack.c.b16 %v4684, %v4676
  %v4853 = vpack.c.b16 %v4685, %v4677
  %v4854 = vpack.c.b16 %v4686, %v4678
  %v4855 = vpack.c.b16 %v4687, %v4679
  %v4856 = vpack.c.b16 %v4688, %v4680
  %v4857 = vpack.c.b16 %v4697, %v4689
  %v4858 = vpack.c.b16 %v4698, %v4690
  %v4859 = vpack.c.b16 %v4699, %v4691
  %v4860 = vpack.c.b16 %v4700, %v4692
  %v4861 = vpack.c.b16 %v4701, %v4693
  %v4862 = vpack.c.b16 %v4702, %v4694
  %v4863 = vpack.c.b16 %v4703, %v4695
  %v4864 = vpack.c.b16 %v4704, %v4696
  %v4865 = vpack.c.b16 %v4713, %v4705
  %v4866 = vpack.c.b16 %v4714, %v4706
  %v4867 = vpack.c.b16 %v4715, %v4707
  %v4868 = vpack.c.b16 %v4716, %v4708
  %v4869 = vpack.c.b16 %v4717, %v4709
  %v4870 = vpack.c.b16 %v4718, %v4710
  %v4871 = vpack.c.b16 %v4719, %v4711
  %v4872 = vpack.c.b16 %v4720, %v4712
  %v4873 = vpack.c.b16 %v4729, %v4721
  %v4874 = vpack.c.b16 %v4730, %v4722
  %v4875 = vpack.c.b16 %v4731, %v4723
  %v4876 = vpack.c.b16 %v4732, %v4724
  %v4877 = vpack.c.b16 %v4733, %v4725
  %v4878 = vpack.c.b16 %v4734, %v4726
  %v4879 = vpack.c.b16 %v4735, %v4727
  %v4880 = vpack.c.b16 %v4736, %v4728
  %v4881 = vpack.c.b16 %v4745, %v4737
  %v4882 = vpack.c.b16 %v4746, %v4738
  %v4883 = vpack.c.b16 %v4747, %v4739
  %v4884 = vpack.c.b16 %v4748, %v4740
  %v4885 = vpack.c.b16 %v4749, %v4741
  %v4886 = vpack.c.b16 %v4750, %v4742
  %v4887 = vpack.c.b16 %v4751, %v4743
  %v4888 = vpack.c.b16 %v4752, %v4744
  %v4889 = vpack.c.b16 %v4761, %v4753
  %v4890 = vpack.c.b16 %v4762, %v4754
  %v4891 = vpack.c.b16 %v4763, %v4755
  %v4892 = vpack.c.b16 %v4764, %v4756
  %v4893 = vpack.c.b16 %v4765, %v4757
  %v4894 = vpack.c.b16 %v4766, %v4758
  %v4895 = vpack.c.b16 %v4767, %v4759
  %v4896 = vpack.c.b16 %v4768, %v4760
  %5025 = vmatprep.subr.bf16.mxu0 %v4770
  %5026 = vmatpush1.bf16.msra.mxu0 %v4769
  %5027 = vmatprep.subr.bf16.mxu0 %v4778
  %5028 = vmatpush1.bf16.msra.mxu0 %v4777
  %5029 = vmatprep.subr.bf16.mxu0 %v4786
  %5030 = vmatpush1.bf16.msra.mxu0 %v4785
  %5031 = vmatprep.subr.bf16.mxu0 %v4794
  %5032 = vmatpush1.bf16.msra.mxu0 %v4793
  %5033 = vmatprep.subr.bf16.mxu0 %v4802
  %5034 = vmatpush1.bf16.msra.mxu0 %v4801
  %5035 = vmatprep.subr.bf16.mxu0 %v4810
  %5036 = vmatpush1.bf16.msra.mxu0 %v4809
  %5037 = vmatprep.subr.bf16.mxu0 %v4818
  %5038 = vmatpush1.bf16.msra.mxu0 %v4817
  %5039 = vmatprep.subr.bf16.mxu0 %v4826
  %5040 = vmatpush1.bf16.msra.mxu0 %v4825
  %5041 = vmatprep.subr.bf16.mxu0 %v4834
  %5042 = vmatpush1.bf16.msra.mxu0 %v4833
  %5043 = vmatprep.subr.bf16.mxu0 %v4842
  %5044 = vmatpush1.bf16.msra.mxu0 %v4841
  %5045 = vmatprep.subr.bf16.mxu0 %v4850
  %5046 = vmatpush1.bf16.msra.mxu0 %v4849
  %5047 = vmatprep.subr.bf16.mxu0 %v4858
  %5048 = vmatpush1.bf16.msra.mxu0 %v4857
  %5049 = vmatprep.subr.bf16.mxu0 %v4866
  %5050 = vmatpush1.bf16.msra.mxu0 %v4865
  %5051 = vmatprep.subr.bf16.mxu0 %v4874
  %5052 = vmatpush1.bf16.msra.mxu0 %v4873
  %5053 = vmatprep.subr.bf16.mxu0 %v4882
  %5054 = vmatpush1.bf16.msra.mxu0 %v4881
  %5055 = vmatprep.subr.bf16.mxu0 %v4890
  %5056 = vmatpush1.bf16.msra.mxu0 %v4889
  %5057 = vmatprep.mubr.bf16.mxu0 %v4256
  %5058 = vmatmul.mubr.bf16.gmra.mrb[0].mxu0 %v4255
  %v5059 = vpop.f32.mrb[0].mxu0
  %v5060 = vadd.f32 0.0, %v5059
  %v5061 = vpop.f32.mrb[0].mxu0
  %v5062 = vadd.f32 0.0, %v5061
  %v5063 = vpop.f32.mrb[0].mxu0
  %v5064 = vpop.f32.mrb[0].mxu0
  %5065 = vdwg.mxu0
  %5066 = vmatprep.subr.bf16.mxu0 %v4772
  %5067 = vmatpush1.bf16.msra.mxu0 %v4771
  %5068 = vmatprep.subr.bf16.mxu0 %v4780
  %5069 = vmatpush1.bf16.msra.mxu0 %v4779
  %5070 = vmatprep.subr.bf16.mxu0 %v4788
  %5071 = vmatpush1.bf16.msra.mxu0 %v4787
  %5072 = vmatprep.subr.bf16.mxu0 %v4796
  %5073 = vmatpush1.bf16.msra.mxu0 %v4795
  %5074 = vmatprep.subr.bf16.mxu0 %v4804
  %5075 = vmatpush1.bf16.msra.mxu0 %v4803
  %5076 = vmatprep.subr.bf16.mxu0 %v4812
  %5077 = vmatpush1.bf16.msra.mxu0 %v4811
  %5078 = vmatprep.subr.bf16.mxu0 %v4820
  %5079 = vmatpush1.bf16.msra.mxu0 %v4819
  %5080 = vmatprep.subr.bf16.mxu0 %v4828
  %5081 = vmatpush1.bf16.msra.mxu0 %v4827
  %5082 = vmatprep.subr.bf16.mxu0 %v4836
  %5083 = vmatpush1.bf16.msra.mxu0 %v4835
  %5084 = vmatprep.subr.bf16.mxu0 %v4844
  %5085 = vmatpush1.bf16.msra.mxu0 %v4843
  %5086 = vmatprep.subr.bf16.mxu0 %v4852
  %5087 = vmatpush1.bf16.msra.mxu0 %v4851
  %5088 = vmatprep.subr.bf16.mxu0 %v4860
  %5089 = vmatpush1.bf16.msra.mxu0 %v4859
  %5090 = vmatprep.subr.bf16.mxu0 %v4868
  %5091 = vmatpush1.bf16.msra.mxu0 %v4867
  %5092 = vmatprep.subr.bf16.mxu0 %v4876
  %5093 = vmatpush1.bf16.msra.mxu0 %v4875
  %5094 = vmatprep.subr.bf16.mxu0 %v4884
  %5095 = vmatpush1.bf16.msra.mxu0 %v4883
  %5096 = vmatprep.subr.bf16.mxu0 %v4892
  %5097 = vmatpush1.bf16.msra.mxu0 %v4891
  %5098 = vmatprep.mubr.bf16.mxu0 %v4256
  %5099 = vmatmul.mubr.bf16.gmra.mrb[0].mxu0 %v4255
  %v5100 = vpop.f32.mrb[0].mxu0
  %v5101 = vadd.f32 0.0, %v5100
  %v5102 = vpop.f32.mrb[0].mxu0
  %v5103 = vadd.f32 0.0, %v5102
  %v5104 = vpop.f32.mrb[0].mxu0
  %v5105 = vpop.f32.mrb[0].mxu0
  %5106 = vdwg.mxu0
  %5107 = vmatprep.subr.bf16.mxu0 %v4774
  %5108 = vmatpush1.bf16.msra.mxu0 %v4773
  %5109 = vmatprep.subr.bf16.mxu0 %v4782
  %5110 = vmatpush1.bf16.msra.mxu0 %v4781
  %5111 = vmatprep.subr.bf16.mxu0 %v4790
  %5112 = vmatpush1.bf16.msra.mxu0 %v4789
  %5113 = vmatprep.subr.bf16.mxu0 %v4798
  %5114 = vmatpush1.bf16.msra.mxu0 %v4797
  %5115 = vmatprep.subr.bf16.mxu0 %v4806
  %5116 = vmatpush1.bf16.msra.mxu0 %v4805
  %5117 = vmatprep.subr.bf16.mxu0 %v4814
  %5118 = vmatpush1.bf16.msra.mxu0 %v4813
  %5119 = vmatprep.subr.bf16.mxu0 %v4822
  %5120 = vmatpush1.bf16.msra.mxu0 %v4821
  %5121 = vmatprep.subr.bf16.mxu0 %v4830
  %5122 = vmatpush1.bf16.msra.mxu0 %v4829
  %5123 = vmatprep.subr.bf16.mxu0 %v4838
  %5124 = vmatpush1.bf16.msra.mxu0 %v4837
  %5125 = vmatprep.subr.bf16.mxu0 %v4846
  %5126 = vmatpush1.bf16.msra.mxu0 %v4845
  %5127 = vmatprep.subr.bf16.mxu0 %v4854
  %5128 = vmatpush1.bf16.msra.mxu0 %v4853
  %5129 = vmatprep.subr.bf16.mxu0 %v4862
  %5130 = vmatpush1.bf16.msra.mxu0 %v4861
  %5131 = vmatprep.subr.bf16.mxu0 %v4870
  %5132 = vmatpush1.bf16.msra.mxu0 %v4869
  %5133 = vmatprep.subr.bf16.mxu0 %v4878
  %5134 = vmatpush1.bf16.msra.mxu0 %v4877
  %5135 = vmatprep.subr.bf16.mxu0 %v4886
  %5136 = vmatpush1.bf16.msra.mxu0 %v4885
  %5137 = vmatprep.subr.bf16.mxu0 %v4894
  %5138 = vmatpush1.bf16.msra.mxu0 %v4893
  %5139 = vmatprep.mubr.bf16.mxu0 %v4256
  %5140 = vmatmul.mubr.bf16.gmra.mrb[0].mxu0 %v4255
  %v5141 = vpop.f32.mrb[0].mxu0
  %v5142 = vadd.f32 0.0, %v5141
  %v5143 = vpop.f32.mrb[0].mxu0
  %v5144 = vadd.f32 0.0, %v5143
  %v5145 = vpop.f32.mrb[0].mxu0
  %v5146 = vpop.f32.mrb[0].mxu0
  %5147 = vdwg.mxu0
  %5148 = vmatprep.subr.bf16.mxu0 %v4776
  %5149 = vmatpush1.bf16.msra.mxu0 %v4775
  %5150 = vmatprep.subr.bf16.mxu0 %v4784
  %5151 = vmatpush1.bf16.msra.mxu0 %v4783
  %5152 = vmatprep.subr.bf16.mxu0 %v4792
  %5153 = vmatpush1.bf16.msra.mxu0 %v4791
  %5154 = vmatprep.subr.bf16.mxu0 %v4800
  %5155 = vmatpush1.bf16.msra.mxu0 %v4799
  %5156 = vmatprep.subr.bf16.mxu0 %v4808
  %5157 = vmatpush1.bf16.msra.mxu0 %v4807
  %5158 = vmatprep.subr.bf16.mxu0 %v4816
  %5159 = vmatpush1.bf16.msra.mxu0 %v4815
  %5160 = vmatprep.subr.bf16.mxu0 %v4824
  %5161 = vmatpush1.bf16.msra.mxu0 %v4823
  %5162 = vmatprep.subr.bf16.mxu0 %v4832
  %5163 = vmatpush1.bf16.msra.mxu0 %v4831
  %5164 = vmatprep.subr.bf16.mxu0 %v4840
  %5165 = vmatpush1.bf16.msra.mxu0 %v4839
  %5166 = vmatprep.subr.bf16.mxu0 %v4848
  %5167 = vmatpush1.bf16.msra.mxu0 %v4847
  %5168 = vmatprep.subr.bf16.mxu0 %v4856
  %5169 = vmatpush1.bf16.msra.mxu0 %v4855
  %5170 = vmatprep.subr.bf16.mxu0 %v4864
  %5171 = vmatpush1.bf16.msra.mxu0 %v4863
  %5172 = vmatprep.subr.bf16.mxu0 %v4872
  %5173 = vmatpush1.bf16.msra.mxu0 %v4871
  %5174 = vmatprep.subr.bf16.mxu0 %v4880
  %5175 = vmatpush1.bf16.msra.mxu0 %v4879
  %5176 = vmatprep.subr.bf16.mxu0 %v4888
  %5177 = vmatpush1.bf16.msra.mxu0 %v4887
  %5178 = vmatprep.subr.bf16.mxu0 %v4896
  %5179 = vmatpush1.bf16.msra.mxu0 %v4895
  %5180 = vmatprep.mubr.bf16.mxu0 %v4256
  %5181 = vmatmul.mubr.bf16.gmra.mrb[0].mxu0 %v4255
  %v5182 = vpop.f32.mrb[0].mxu0
  %v5183 = vadd.f32 0.0, %v5182
  %v5184 = vpop.f32.mrb[0].mxu0
  %v5185 = vadd.f32 0.0, %v5184
  %v5186 = vpop.f32.mrb[0].mxu0
  %v5187 = vpop.f32.mrb[0].mxu0
  %5188 = vdwg.mxu0
  %v5189 = vadd.f32 %v3186, %v5060
  %v5190 = vadd.f32 %v3188, %v5062
  %v5191 = vadd.f32 %v3227, %v5101
  %v5192 = vadd.f32 %v3229, %v5103
  %v5193 = vmul.f32 %v5189, 0.5
  %v5194 = vtanh.pop %v5193
  %v5195 = vmul.f32 %v5194, 0.5
  %v5196 = vadd.f32 %v5195, 0.5
  %v5197 = vmul.f32 %v5190, 0.5
  %v5198 = vtanh.pop %v5197
  %v5199 = vmul.f32 %v5198, 0.5
  %v5200 = vadd.f32 %v5199, 0.5
  %v5201 = vtanh.pop %v5191
  %v5202 = vmul.f32 %v5192, 0.5
  %v5203 = vtanh.pop %v5202
  %v5204 = vmul.f32 %v5203, 0.5
  %v5205 = vadd.f32 %v5204, 0.5
  %v5206 = vmul.f32 %v5200, %v4229
  %v5207 = vmul.f32 %v5196, %v5201
  %v5208 = vadd.f32 %v5206, %v5207
  %v5209 = vtanh.pop %v5208
  %v5210 = vmul.f32 %v5205, %v5209
  %v5211 = vadd.f32 %v3238, %v5142
  %v5212 = vadd.f32 %v3242, %v5144
  %v5213 = vadd.f32 %v3246, %v5183
  %v5214 = vadd.f32 %v3250, %v5185
  %v5215 = vmul.f32 %v5211, 0.5
  %v5216 = vtanh.pop %v5215
  %v5217 = vmul.f32 %v5216, 0.5
  %v5218 = vadd.f32 %v5217, 0.5
  %v5219 = vmul.f32 %v5212, 0.5
  %v5220 = vtanh.pop %v5219
  %v5221 = vmul.f32 %v5220, 0.5
  %v5222 = vadd.f32 %v5221, 0.5
  %v5223 = vtanh.pop %v5213
  %v5224 = vmul.f32 %v5214, 0.5
  %v5225 = vtanh.pop %v5224
  %v5226 = vmul.f32 %v5225, 0.5
  %v5227 = vadd.f32 %v5226, 0.5
  %v5228 = vmul.f32 %v5222, %v4251
  %v5229 = vmul.f32 %v5218, %v5223
  %v5230 = vadd.f32 %v5228, %v5229
  %v5231 = vtanh.pop %v5230
  %v5232 = vmul.f32 %v5227, %v5231
  %5233 = vst [vmem:[#allocation3 + $0x8] sm:$0xff] %v5232
  %v5234 = vpack.c.bf16 %v5210, %v5210
  %v5235 = vpack.c.bf16 %v5232, %v5232
  %v5236 = vld [vmem:[%s8] sm:$0xff]
  %v5237 = vld [vmem:[%s8 + $0x8] sm:$0xff]
  %v5238 = vld [vmem:[%s8 + $0x10] sm:$0xff]
  %v5239 = vld [vmem:[%s8 + $0x18] sm:$0xff]
  %v5240 = vld [vmem:[%s8 + $0x20] sm:$0xff]
  %v5241 = vld [vmem:[%s8 + $0x28] sm:$0xff]
  %v5242 = vld [vmem:[%s8 + $0x30] sm:$0xff]
  %v5243 = vld [vmem:[%s8 + $0x38] sm:$0xff]
  %v5244 = vld [vmem:[%s8 + $0x40] sm:$0xff]
  %v5245 = vld [vmem:[%s8 + $0x48] sm:$0xff]
  %v5246 = vld [vmem:[%s8 + $0x50] sm:$0xff]
  %v5247 = vld [vmem:[%s8 + $0x58] sm:$0xff]
  %v5248 = vld [vmem:[%s8 + $0x60] sm:$0xff]
  %v5249 = vld [vmem:[%s8 + $0x68] sm:$0xff]
  %v5250 = vld [vmem:[%s8 + $0x70] sm:$0xff]
  %v5251 = vld [vmem:[%s8 + $0x78] sm:$0xff]
  %v5252 = vld [vmem:[%s8 + $0x80] sm:$0xff]
  %v5253 = vld [vmem:[%s8 + $0x88] sm:$0xff]
  %v5254 = vld [vmem:[%s8 + $0x90] sm:$0xff]
  %v5255 = vld [vmem:[%s8 + $0x98] sm:$0xff]
  %v5256 = vld [vmem:[%s8 + $0xa0] sm:$0xff]
  %v5257 = vld [vmem:[%s8 + $0xa8] sm:$0xff]
  %v5258 = vld [vmem:[%s8 + $0xb0] sm:$0xff]
  %v5259 = vld [vmem:[%s8 + $0xb8] sm:$0xff]
  %v5260 = vld [vmem:[%s8 + $0xc0] sm:$0xff]
  %v5261 = vld [vmem:[%s8 + $0xc8] sm:$0xff]
  %v5262 = vld [vmem:[%s8 + $0xd0] sm:$0xff]
  %v5263 = vld [vmem:[%s8 + $0xd8] sm:$0xff]
  %v5264 = vld [vmem:[%s8 + $0xe0] sm:$0xff]
  %v5265 = vld [vmem:[%s8 + $0xe8] sm:$0xff]
  %v5266 = vld [vmem:[%s8 + $0xf0] sm:$0xff]
  %v5267 = vld [vmem:[%s8 + $0xf8] sm:$0xff]
  %v5268 = vld [vmem:[%s8 + $0x100] sm:$0xff]
  %v5269 = vld [vmem:[%s8 + $0x108] sm:$0xff]
  %v5270 = vld [vmem:[%s8 + $0x110] sm:$0xff]
  %v5271 = vld [vmem:[%s8 + $0x118] sm:$0xff]
  %v5272 = vld [vmem:[%s8 + $0x120] sm:$0xff]
  %v5273 = vld [vmem:[%s8 + $0x128] sm:$0xff]
  %v5274 = vld [vmem:[%s8 + $0x130] sm:$0xff]
  %v5275 = vld [vmem:[%s8 + $0x138] sm:$0xff]
  %v5276 = vld [vmem:[%s8 + $0x140] sm:$0xff]
  %v5277 = vld [vmem:[%s8 + $0x148] sm:$0xff]
  %v5278 = vld [vmem:[%s8 + $0x150] sm:$0xff]
  %v5279 = vld [vmem:[%s8 + $0x158] sm:$0xff]
  %v5280 = vld [vmem:[%s8 + $0x160] sm:$0xff]
  %v5281 = vld [vmem:[%s8 + $0x168] sm:$0xff]
  %v5282 = vld [vmem:[%s8 + $0x170] sm:$0xff]
  %v5283 = vld [vmem:[%s8 + $0x178] sm:$0xff]
  %v5284 = vld [vmem:[%s8 + $0x180] sm:$0xff]
  %v5285 = vld [vmem:[%s8 + $0x188] sm:$0xff]
  %v5286 = vld [vmem:[%s8 + $0x190] sm:$0xff]
  %v5287 = vld [vmem:[%s8 + $0x198] sm:$0xff]
  %v5288 = vld [vmem:[%s8 + $0x1a0] sm:$0xff]
  %v5289 = vld [vmem:[%s8 + $0x1a8] sm:$0xff]
  %v5290 = vld [vmem:[%s8 + $0x1b0] sm:$0xff]
  %v5291 = vld [vmem:[%s8 + $0x1b8] sm:$0xff]
  %v5292 = vld [vmem:[%s8 + $0x1c0] sm:$0xff]
  %v5293 = vld [vmem:[%s8 + $0x1c8] sm:$0xff]
  %v5294 = vld [vmem:[%s8 + $0x1d0] sm:$0xff]
  %v5295 = vld [vmem:[%s8 + $0x1d8] sm:$0xff]
  %v5296 = vld [vmem:[%s8 + $0x1e0] sm:$0xff]
  %v5297 = vld [vmem:[%s8 + $0x1e8] sm:$0xff]
  %v5298 = vld [vmem:[%s8 + $0x1f0] sm:$0xff]
  %v5299 = vld [vmem:[%s8 + $0x1f8] sm:$0xff]
  %v5300 = vld [vmem:[%s8 + $0x200] sm:$0xff]
  %v5301 = vld [vmem:[%s8 + $0x208] sm:$0xff]
  %v5302 = vld [vmem:[%s8 + $0x210] sm:$0xff]
  %v5303 = vld [vmem:[%s8 + $0x218] sm:$0xff]
  %v5304 = vld [vmem:[%s8 + $0x220] sm:$0xff]
  %v5305 = vld [vmem:[%s8 + $0x228] sm:$0xff]
  %v5306 = vld [vmem:[%s8 + $0x230] sm:$0xff]
  %v5307 = vld [vmem:[%s8 + $0x238] sm:$0xff]
  %v5308 = vld [vmem:[%s8 + $0x240] sm:$0xff]
  %v5309 = vld [vmem:[%s8 + $0x248] sm:$0xff]
  %v5310 = vld [vmem:[%s8 + $0x250] sm:$0xff]
  %v5311 = vld [vmem:[%s8 + $0x258] sm:$0xff]
  %v5312 = vld [vmem:[%s8 + $0x260] sm:$0xff]
  %v5313 = vld [vmem:[%s8 + $0x268] sm:$0xff]
  %v5314 = vld [vmem:[%s8 + $0x270] sm:$0xff]
  %v5315 = vld [vmem:[%s8 + $0x278] sm:$0xff]
  %v5316 = vld [vmem:[%s8 + $0x280] sm:$0xff]
  %v5317 = vld [vmem:[%s8 + $0x288] sm:$0xff]
  %v5318 = vld [vmem:[%s8 + $0x290] sm:$0xff]
  %v5319 = vld [vmem:[%s8 + $0x298] sm:$0xff]
  %v5320 = vld [vmem:[%s8 + $0x2a0] sm:$0xff]
  %v5321 = vld [vmem:[%s8 + $0x2a8] sm:$0xff]
  %v5322 = vld [vmem:[%s8 + $0x2b0] sm:$0xff]
  %v5323 = vld [vmem:[%s8 + $0x2b8] sm:$0xff]
  %v5324 = vld [vmem:[%s8 + $0x2c0] sm:$0xff]
  %v5325 = vld [vmem:[%s8 + $0x2c8] sm:$0xff]
  %v5326 = vld [vmem:[%s8 + $0x2d0] sm:$0xff]
  %v5327 = vld [vmem:[%s8 + $0x2d8] sm:$0xff]
  %v5328 = vld [vmem:[%s8 + $0x2e0] sm:$0xff]
  %v5329 = vld [vmem:[%s8 + $0x2e8] sm:$0xff]
  %v5330 = vld [vmem:[%s8 + $0x2f0] sm:$0xff]
  %v5331 = vld [vmem:[%s8 + $0x2f8] sm:$0xff]
  %v5332 = vld [vmem:[%s8 + $0x300] sm:$0xff]
  %v5333 = vld [vmem:[%s8 + $0x308] sm:$0xff]
  %v5334 = vld [vmem:[%s8 + $0x310] sm:$0xff]
  %v5335 = vld [vmem:[%s8 + $0x318] sm:$0xff]
  %v5336 = vld [vmem:[%s8 + $0x320] sm:$0xff]
  %v5337 = vld [vmem:[%s8 + $0x328] sm:$0xff]
  %v5338 = vld [vmem:[%s8 + $0x330] sm:$0xff]
  %v5339 = vld [vmem:[%s8 + $0x338] sm:$0xff]
  %v5340 = vld [vmem:[%s8 + $0x340] sm:$0xff]
  %v5341 = vld [vmem:[%s8 + $0x348] sm:$0xff]
  %v5342 = vld [vmem:[%s8 + $0x350] sm:$0xff]
  %v5343 = vld [vmem:[%s8 + $0x358] sm:$0xff]
  %v5344 = vld [vmem:[%s8 + $0x360] sm:$0xff]
  %v5345 = vld [vmem:[%s8 + $0x368] sm:$0xff]
  %v5346 = vld [vmem:[%s8 + $0x370] sm:$0xff]
  %v5347 = vld [vmem:[%s8 + $0x378] sm:$0xff]
  %v5348 = vld [vmem:[%s8 + $0x380] sm:$0xff]
  %v5349 = vld [vmem:[%s8 + $0x388] sm:$0xff]
  %v5350 = vld [vmem:[%s8 + $0x390] sm:$0xff]
  %v5351 = vld [vmem:[%s8 + $0x398] sm:$0xff]
  %v5352 = vld [vmem:[%s8 + $0x3a0] sm:$0xff]
  %v5353 = vld [vmem:[%s8 + $0x3a8] sm:$0xff]
  %v5354 = vld [vmem:[%s8 + $0x3b0] sm:$0xff]
  %v5355 = vld [vmem:[%s8 + $0x3b8] sm:$0xff]
  %v5356 = vld [vmem:[%s8 + $0x3c0] sm:$0xff]
  %v5357 = vld [vmem:[%s8 + $0x3c8] sm:$0xff]
  %v5358 = vld [vmem:[%s8 + $0x3d0] sm:$0xff]
  %v5359 = vld [vmem:[%s8 + $0x3d8] sm:$0xff]
  %v5360 = vld [vmem:[%s8 + $0x3e0] sm:$0xff]
  %v5361 = vld [vmem:[%s8 + $0x3e8] sm:$0xff]
  %v5362 = vld [vmem:[%s8 + $0x3f0] sm:$0xff]
  %v5363 = vld [vmem:[%s8 + $0x3f8] sm:$0xff]
  %v5492 = vunpack.c.l.b16 %v5236
  %v5493 = vunpack.c.h.b16 %v5236
  %v5494 = vunpack.c.l.b16 %v5237
  %v5495 = vunpack.c.h.b16 %v5237
  %v5496 = vunpack.c.l.b16 %v5238
  %v5497 = vunpack.c.h.b16 %v5238
  %v5498 = vunpack.c.l.b16 %v5239
  %v5499 = vunpack.c.h.b16 %v5239
  %v5500 = vunpack.c.l.b16 %v5240
  %v5501 = vunpack.c.h.b16 %v5240
  %v5502 = vunpack.c.l.b16 %v5241
  %v5503 = vunpack.c.h.b16 %v5241
  %v5504 = vunpack.c.l.b16 %v5242
  %v5505 = vunpack.c.h.b16 %v5242
  %v5506 = vunpack.c.l.b16 %v5243
  %v5507 = vunpack.c.h.b16 %v5243
  %v5508 = vunpack.c.l.b16 %v5244
  %v5509 = vunpack.c.h.b16 %v5244
  %v5510 = vunpack.c.l.b16 %v5245
  %v5511 = vunpack.c.h.b16 %v5245
  %v5512 = vunpack.c.l.b16 %v5246
  %v5513 = vunpack.c.h.b16 %v5246
  %v5514 = vunpack.c.l.b16 %v5247
  %v5515 = vunpack.c.h.b16 %v5247
  %v5516 = vunpack.c.l.b16 %v5248
  %v5517 = vunpack.c.h.b16 %v5248
  %v5518 = vunpack.c.l.b16 %v5249
  %v5519 = vunpack.c.h.b16 %v5249
  %v5520 = vunpack.c.l.b16 %v5250
  %v5521 = vunpack.c.h.b16 %v5250
  %v5522 = vunpack.c.l.b16 %v5251
  %v5523 = vunpack.c.h.b16 %v5251
  %v5524 = vunpack.c.l.b16 %v5252
  %v5525 = vunpack.c.h.b16 %v5252
  %v5526 = vunpack.c.l.b16 %v5253
  %v5527 = vunpack.c.h.b16 %v5253
  %v5528 = vunpack.c.l.b16 %v5254
  %v5529 = vunpack.c.h.b16 %v5254
  %v5530 = vunpack.c.l.b16 %v5255
  %v5531 = vunpack.c.h.b16 %v5255
  %v5532 = vunpack.c.l.b16 %v5256
  %v5533 = vunpack.c.h.b16 %v5256
  %v5534 = vunpack.c.l.b16 %v5257
  %v5535 = vunpack.c.h.b16 %v5257
  %v5536 = vunpack.c.l.b16 %v5258
  %v5537 = vunpack.c.h.b16 %v5258
  %v5538 = vunpack.c.l.b16 %v5259
  %v5539 = vunpack.c.h.b16 %v5259
  %v5540 = vunpack.c.l.b16 %v5260
  %v5541 = vunpack.c.h.b16 %v5260
  %v5542 = vunpack.c.l.b16 %v5261
  %v5543 = vunpack.c.h.b16 %v5261
  %v5544 = vunpack.c.l.b16 %v5262
  %v5545 = vunpack.c.h.b16 %v5262
  %v5546 = vunpack.c.l.b16 %v5263
  %v5547 = vunpack.c.h.b16 %v5263
  %v5548 = vunpack.c.l.b16 %v5264
  %v5549 = vunpack.c.h.b16 %v5264
  %v5550 = vunpack.c.l.b16 %v5265
  %v5551 = vunpack.c.h.b16 %v5265
  %v5552 = vunpack.c.l.b16 %v5266
  %v5553 = vunpack.c.h.b16 %v5266
  %v5554 = vunpack.c.l.b16 %v5267
  %v5555 = vunpack.c.h.b16 %v5267
  %v5556 = vunpack.c.l.b16 %v5268
  %v5557 = vunpack.c.h.b16 %v5268
  %v5558 = vunpack.c.l.b16 %v5269
  %v5559 = vunpack.c.h.b16 %v5269
  %v5560 = vunpack.c.l.b16 %v5270
  %v5561 = vunpack.c.h.b16 %v5270
  %v5562 = vunpack.c.l.b16 %v5271
  %v5563 = vunpack.c.h.b16 %v5271
  %v5564 = vunpack.c.l.b16 %v5272
  %v5565 = vunpack.c.h.b16 %v5272
  %v5566 = vunpack.c.l.b16 %v5273
  %v5567 = vunpack.c.h.b16 %v5273
  %v5568 = vunpack.c.l.b16 %v5274
  %v5569 = vunpack.c.h.b16 %v5274
  %v5570 = vunpack.c.l.b16 %v5275
  %v5571 = vunpack.c.h.b16 %v5275
  %v5572 = vunpack.c.l.b16 %v5276
  %v5573 = vunpack.c.h.b16 %v5276
  %v5574 = vunpack.c.l.b16 %v5277
  %v5575 = vunpack.c.h.b16 %v5277
  %v5576 = vunpack.c.l.b16 %v5278
  %v5577 = vunpack.c.h.b16 %v5278
  %v5578 = vunpack.c.l.b16 %v5279
  %v5579 = vunpack.c.h.b16 %v5279
  %v5580 = vunpack.c.l.b16 %v5280
  %v5581 = vunpack.c.h.b16 %v5280
  %v5582 = vunpack.c.l.b16 %v5281
  %v5583 = vunpack.c.h.b16 %v5281
  %v5584 = vunpack.c.l.b16 %v5282
  %v5585 = vunpack.c.h.b16 %v5282
  %v5586 = vunpack.c.l.b16 %v5283
  %v5587 = vunpack.c.h.b16 %v5283
  %v5588 = vunpack.c.l.b16 %v5284
  %v5589 = vunpack.c.h.b16 %v5284
  %v5590 = vunpack.c.l.b16 %v5285
  %v5591 = vunpack.c.h.b16 %v5285
  %v5592 = vunpack.c.l.b16 %v5286
  %v5593 = vunpack.c.h.b16 %v5286
  %v5594 = vunpack.c.l.b16 %v5287
  %v5595 = vunpack.c.h.b16 %v5287
  %v5596 = vunpack.c.l.b16 %v5288
  %v5597 = vunpack.c.h.b16 %v5288
  %v5598 = vunpack.c.l.b16 %v5289
  %v5599 = vunpack.c.h.b16 %v5289
  %v5600 = vunpack.c.l.b16 %v5290
  %v5601 = vunpack.c.h.b16 %v5290
  %v5602 = vunpack.c.l.b16 %v5291
  %v5603 = vunpack.c.h.b16 %v5291
  %v5604 = vunpack.c.l.b16 %v5292
  %v5605 = vunpack.c.h.b16 %v5292
  %v5606 = vunpack.c.l.b16 %v5293
  %v5607 = vunpack.c.h.b16 %v5293
  %v5608 = vunpack.c.l.b16 %v5294
  %v5609 = vunpack.c.h.b16 %v5294
  %v5610 = vunpack.c.l.b16 %v5295
  %v5611 = vunpack.c.h.b16 %v5295
  %v5612 = vunpack.c.l.b16 %v5296
  %v5613 = vunpack.c.h.b16 %v5296
  %v5614 = vunpack.c.l.b16 %v5297
  %v5615 = vunpack.c.h.b16 %v5297
  %v5616 = vunpack.c.l.b16 %v5298
  %v5617 = vunpack.c.h.b16 %v5298
  %v5618 = vunpack.c.l.b16 %v5299
  %v5619 = vunpack.c.h.b16 %v5299
  %v5620 = vunpack.c.l.b16 %v5300
  %v5621 = vunpack.c.h.b16 %v5300
  %v5622 = vunpack.c.l.b16 %v5301
  %v5623 = vunpack.c.h.b16 %v5301
  %v5624 = vunpack.c.l.b16 %v5302
  %v5625 = vunpack.c.h.b16 %v5302
  %v5626 = vunpack.c.l.b16 %v5303
  %v5627 = vunpack.c.h.b16 %v5303
  %v5628 = vunpack.c.l.b16 %v5304
  %v5629 = vunpack.c.h.b16 %v5304
  %v5630 = vunpack.c.l.b16 %v5305
  %v5631 = vunpack.c.h.b16 %v5305
  %v5632 = vunpack.c.l.b16 %v5306
  %v5633 = vunpack.c.h.b16 %v5306
  %v5634 = vunpack.c.l.b16 %v5307
  %v5635 = vunpack.c.h.b16 %v5307
  %v5636 = vunpack.c.l.b16 %v5308
  %v5637 = vunpack.c.h.b16 %v5308
  %v5638 = vunpack.c.l.b16 %v5309
  %v5639 = vunpack.c.h.b16 %v5309
  %v5640 = vunpack.c.l.b16 %v5310
  %v5641 = vunpack.c.h.b16 %v5310
  %v5642 = vunpack.c.l.b16 %v5311
  %v5643 = vunpack.c.h.b16 %v5311
  %v5644 = vunpack.c.l.b16 %v5312
  %v5645 = vunpack.c.h.b16 %v5312
  %v5646 = vunpack.c.l.b16 %v5313
  %v5647 = vunpack.c.h.b16 %v5313
  %v5648 = vunpack.c.l.b16 %v5314
  %v5649 = vunpack.c.h.b16 %v5314
  %v5650 = vunpack.c.l.b16 %v5315
  %v5651 = vunpack.c.h.b16 %v5315
  %v5652 = vunpack.c.l.b16 %v5316
  %v5653 = vunpack.c.h.b16 %v5316
  %v5654 = vunpack.c.l.b16 %v5317
  %v5655 = vunpack.c.h.b16 %v5317
  %v5656 = vunpack.c.l.b16 %v5318
  %v5657 = vunpack.c.h.b16 %v5318
  %v5658 = vunpack.c.l.b16 %v5319
  %v5659 = vunpack.c.h.b16 %v5319
  %v5660 = vunpack.c.l.b16 %v5320
  %v5661 = vunpack.c.h.b16 %v5320
  %v5662 = vunpack.c.l.b16 %v5321
  %v5663 = vunpack.c.h.b16 %v5321
  %v5664 = vunpack.c.l.b16 %v5322
  %v5665 = vunpack.c.h.b16 %v5322
  %v5666 = vunpack.c.l.b16 %v5323
  %v5667 = vunpack.c.h.b16 %v5323
  %v5668 = vunpack.c.l.b16 %v5324
  %v5669 = vunpack.c.h.b16 %v5324
  %v5670 = vunpack.c.l.b16 %v5325
  %v5671 = vunpack.c.h.b16 %v5325
  %v5672 = vunpack.c.l.b16 %v5326
  %v5673 = vunpack.c.h.b16 %v5326
  %v5674 = vunpack.c.l.b16 %v5327
  %v5675 = vunpack.c.h.b16 %v5327
  %v5676 = vunpack.c.l.b16 %v5328
  %v5677 = vunpack.c.h.b16 %v5328
  %v5678 = vunpack.c.l.b16 %v5329
  %v5679 = vunpack.c.h.b16 %v5329
  %v5680 = vunpack.c.l.b16 %v5330
  %v5681 = vunpack.c.h.b16 %v5330
  %v5682 = vunpack.c.l.b16 %v5331
  %v5683 = vunpack.c.h.b16 %v5331
  %v5684 = vunpack.c.l.b16 %v5332
  %v5685 = vunpack.c.h.b16 %v5332
  %v5686 = vunpack.c.l.b16 %v5333
  %v5687 = vunpack.c.h.b16 %v5333
  %v5688 = vunpack.c.l.b16 %v5334
  %v5689 = vunpack.c.h.b16 %v5334
  %v5690 = vunpack.c.l.b16 %v5335
  %v5691 = vunpack.c.h.b16 %v5335
  %v5692 = vunpack.c.l.b16 %v5336
  %v5693 = vunpack.c.h.b16 %v5336
  %v5694 = vunpack.c.l.b16 %v5337
  %v5695 = vunpack.c.h.b16 %v5337
  %v5696 = vunpack.c.l.b16 %v5338
  %v5697 = vunpack.c.h.b16 %v5338
  %v5698 = vunpack.c.l.b16 %v5339
  %v5699 = vunpack.c.h.b16 %v5339
  %v5700 = vunpack.c.l.b16 %v5340
  %v5701 = vunpack.c.h.b16 %v5340
  %v5702 = vunpack.c.l.b16 %v5341
  %v5703 = vunpack.c.h.b16 %v5341
  %v5704 = vunpack.c.l.b16 %v5342
  %v5705 = vunpack.c.h.b16 %v5342
  %v5706 = vunpack.c.l.b16 %v5343
  %v5707 = vunpack.c.h.b16 %v5343
  %v5708 = vunpack.c.l.b16 %v5344
  %v5709 = vunpack.c.h.b16 %v5344
  %v5710 = vunpack.c.l.b16 %v5345
  %v5711 = vunpack.c.h.b16 %v5345
  %v5712 = vunpack.c.l.b16 %v5346
  %v5713 = vunpack.c.h.b16 %v5346
  %v5714 = vunpack.c.l.b16 %v5347
  %v5715 = vunpack.c.h.b16 %v5347
  %v5716 = vunpack.c.l.b16 %v5348
  %v5717 = vunpack.c.h.b16 %v5348
  %v5718 = vunpack.c.l.b16 %v5349
  %v5719 = vunpack.c.h.b16 %v5349
  %v5720 = vunpack.c.l.b16 %v5350
  %v5721 = vunpack.c.h.b16 %v5350
  %v5722 = vunpack.c.l.b16 %v5351
  %v5723 = vunpack.c.h.b16 %v5351
  %v5724 = vunpack.c.l.b16 %v5352
  %v5725 = vunpack.c.h.b16 %v5352
  %v5726 = vunpack.c.l.b16 %v5353
  %v5727 = vunpack.c.h.b16 %v5353
  %v5728 = vunpack.c.l.b16 %v5354
  %v5729 = vunpack.c.h.b16 %v5354
  %v5730 = vunpack.c.l.b16 %v5355
  %v5731 = vunpack.c.h.b16 %v5355
  %v5732 = vunpack.c.l.b16 %v5356
  %v5733 = vunpack.c.h.b16 %v5356
  %v5734 = vunpack.c.l.b16 %v5357
  %v5735 = vunpack.c.h.b16 %v5357
  %v5736 = vunpack.c.l.b16 %v5358
  %v5737 = vunpack.c.h.b16 %v5358
  %v5738 = vunpack.c.l.b16 %v5359
  %v5739 = vunpack.c.h.b16 %v5359
  %v5740 = vunpack.c.l.b16 %v5360
  %v5741 = vunpack.c.h.b16 %v5360
  %v5742 = vunpack.c.l.b16 %v5361
  %v5743 = vunpack.c.h.b16 %v5361
  %v5744 = vunpack.c.l.b16 %v5362
  %v5745 = vunpack.c.h.b16 %v5362
  %v5746 = vunpack.c.l.b16 %v5363
  %v5747 = vunpack.c.h.b16 %v5363
  %v5748 = vpack.c.b16 %v5500, %v5492
  %v5749 = vpack.c.b16 %v5501, %v5493
  %v5750 = vpack.c.b16 %v5502, %v5494
  %v5751 = vpack.c.b16 %v5503, %v5495
  %v5752 = vpack.c.b16 %v5504, %v5496
  %v5753 = vpack.c.b16 %v5505, %v5497
  %v5754 = vpack.c.b16 %v5506, %v5498
  %v5755 = vpack.c.b16 %v5507, %v5499
  %v5756 = vpack.c.b16 %v5516, %v5508
  %v5757 = vpack.c.b16 %v5517, %v5509
  %v5758 = vpack.c.b16 %v5518, %v5510
  %v5759 = vpack.c.b16 %v5519, %v5511
  %v5760 = vpack.c.b16 %v5520, %v5512
  %v5761 = vpack.c.b16 %v5521, %v5513
  %v5762 = vpack.c.b16 %v5522, %v5514
  %v5763 = vpack.c.b16 %v5523, %v5515
  %v5764 = vpack.c.b16 %v5532, %v5524
  %v5765 = vpack.c.b16 %v5533, %v5525
  %v5766 = vpack.c.b16 %v5534, %v5526
  %v5767 = vpack.c.b16 %v5535, %v5527
  %v5768 = vpack.c.b16 %v5536, %v5528
  %v5769 = vpack.c.b16 %v5537, %v5529
  %v5770 = vpack.c.b16 %v5538, %v5530
  %v5771 = vpack.c.b16 %v5539, %v5531
  %v5772 = vpack.c.b16 %v5548, %v5540
  %v5773 = vpack.c.b16 %v5549, %v5541
  %v5774 = vpack.c.b16 %v5550, %v5542
  %v5775 = vpack.c.b16 %v5551, %v5543
  %v5776 = vpack.c.b16 %v5552, %v5544
  %v5777 = vpack.c.b16 %v5553, %v5545
  %v5778 = vpack.c.b16 %v5554, %v5546
  %v5779 = vpack.c.b16 %v5555, %v5547
  %v5780 = vpack.c.b16 %v5564, %v5556
  %v5781 = vpack.c.b16 %v5565, %v5557
  %v5782 = vpack.c.b16 %v5566, %v5558
  %v5783 = vpack.c.b16 %v5567, %v5559
  %v5784 = vpack.c.b16 %v5568, %v5560
  %v5785 = vpack.c.b16 %v5569, %v5561
  %v5786 = vpack.c.b16 %v5570, %v5562
  %v5787 = vpack.c.b16 %v5571, %v5563
  %v5788 = vpack.c.b16 %v5580, %v5572
  %v5789 = vpack.c.b16 %v5581, %v5573
  %v5790 = vpack.c.b16 %v5582, %v5574
  %v5791 = vpack.c.b16 %v5583, %v5575
  %v5792 = vpack.c.b16 %v5584, %v5576
  %v5793 = vpack.c.b16 %v5585, %v5577
  %v5794 = vpack.c.b16 %v5586, %v5578
  %v5795 = vpack.c.b16 %v5587, %v5579
  %v5796 = vpack.c.b16 %v5596, %v5588
  %v5797 = vpack.c.b16 %v5597, %v5589
  %v5798 = vpack.c.b16 %v5598, %v5590
  %v5799 = vpack.c.b16 %v5599, %v5591
  %v5800 = vpack.c.b16 %v5600, %v5592
  %v5801 = vpack.c.b16 %v5601, %v5593
  %v5802 = vpack.c.b16 %v5602, %v5594
  %v5803 = vpack.c.b16 %v5603, %v5595
  %v5804 = vpack.c.b16 %v5612, %v5604
  %v5805 = vpack.c.b16 %v5613, %v5605
  %v5806 = vpack.c.b16 %v5614, %v5606
  %v5807 = vpack.c.b16 %v5615, %v5607
  %v5808 = vpack.c.b16 %v5616, %v5608
  %v5809 = vpack.c.b16 %v5617, %v5609
  %v5810 = vpack.c.b16 %v5618, %v5610
  %v5811 = vpack.c.b16 %v5619, %v5611
  %v5812 = vpack.c.b16 %v5628, %v5620
  %v5813 = vpack.c.b16 %v5629, %v5621
  %v5814 = vpack.c.b16 %v5630, %v5622
  %v5815 = vpack.c.b16 %v5631, %v5623
  %v5816 = vpack.c.b16 %v5632, %v5624
  %v5817 = vpack.c.b16 %v5633, %v5625
  %v5818 = vpack.c.b16 %v5634, %v5626
  %v5819 = vpack.c.b16 %v5635, %v5627
  %v5820 = vpack.c.b16 %v5644, %v5636
  %v5821 = vpack.c.b16 %v5645, %v5637
  %v5822 = vpack.c.b16 %v5646, %v5638
  %v5823 = vpack.c.b16 %v5647, %v5639
  %v5824 = vpack.c.b16 %v5648, %v5640
  %v5825 = vpack.c.b16 %v5649, %v5641
  %v5826 = vpack.c.b16 %v5650, %v5642
  %v5827 = vpack.c.b16 %v5651, %v5643
  %v5828 = vpack.c.b16 %v5660, %v5652
  %v5829 = vpack.c.b16 %v5661, %v5653
  %v5830 = vpack.c.b16 %v5662, %v5654
  %v5831 = vpack.c.b16 %v5663, %v5655
  %v5832 = vpack.c.b16 %v5664, %v5656
  %v5833 = vpack.c.b16 %v5665, %v5657
  %v5834 = vpack.c.b16 %v5666, %v5658
  %v5835 = vpack.c.b16 %v5667, %v5659
  %v5836 = vpack.c.b16 %v5676, %v5668
  %v5837 = vpack.c.b16 %v5677, %v5669
  %v5838 = vpack.c.b16 %v5678, %v5670
  %v5839 = vpack.c.b16 %v5679, %v5671
  %v5840 = vpack.c.b16 %v5680, %v5672
  %v5841 = vpack.c.b16 %v5681, %v5673
  %v5842 = vpack.c.b16 %v5682, %v5674
  %v5843 = vpack.c.b16 %v5683, %v5675
  %v5844 = vpack.c.b16 %v5692, %v5684
  %v5845 = vpack.c.b16 %v5693, %v5685
  %v5846 = vpack.c.b16 %v5694, %v5686
  %v5847 = vpack.c.b16 %v5695, %v5687
  %v5848 = vpack.c.b16 %v5696, %v5688
  %v5849 = vpack.c.b16 %v5697, %v5689
  %v5850 = vpack.c.b16 %v5698, %v5690
  %v5851 = vpack.c.b16 %v5699, %v5691
  %v5852 = vpack.c.b16 %v5708, %v5700
  %v5853 = vpack.c.b16 %v5709, %v5701
  %v5854 = vpack.c.b16 %v5710, %v5702
  %v5855 = vpack.c.b16 %v5711, %v5703
  %v5856 = vpack.c.b16 %v5712, %v5704
  %v5857 = vpack.c.b16 %v5713, %v5705
  %v5858 = vpack.c.b16 %v5714, %v5706
  %v5859 = vpack.c.b16 %v5715, %v5707
  %v5860 = vpack.c.b16 %v5724, %v5716
  %v5861 = vpack.c.b16 %v5725, %v5717
  %v5862 = vpack.c.b16 %v5726, %v5718
  %v5863 = vpack.c.b16 %v5727, %v5719
  %v5864 = vpack.c.b16 %v5728, %v5720
  %v5865 = vpack.c.b16 %v5729, %v5721
  %v5866 = vpack.c.b16 %v5730, %v5722
  %v5867 = vpack.c.b16 %v5731, %v5723
  %v5868 = vpack.c.b16 %v5740, %v5732
  %v5869 = vpack.c.b16 %v5741, %v5733
  %v5870 = vpack.c.b16 %v5742, %v5734
  %v5871 = vpack.c.b16 %v5743, %v5735
  %v5872 = vpack.c.b16 %v5744, %v5736
  %v5873 = vpack.c.b16 %v5745, %v5737
  %v5874 = vpack.c.b16 %v5746, %v5738
  %v5875 = vpack.c.b16 %v5747, %v5739
  %6004 = vmatprep.subr.bf16.mxu0 %v5749
  %6005 = vmatpush1.bf16.msra.mxu0 %v5748
  %6006 = vmatprep.subr.bf16.mxu0 %v5757
  %6007 = vmatpush1.bf16.msra.mxu0 %v5756
  %6008 = vmatprep.subr.bf16.mxu0 %v5765
  %6009 = vmatpush1.bf16.msra.mxu0 %v5764
  %6010 = vmatprep.subr.bf16.mxu0 %v5773
  %6011 = vmatpush1.bf16.msra.mxu0 %v5772
  %6012 = vmatprep.subr.bf16.mxu0 %v5781
  %6013 = vmatpush1.bf16.msra.mxu0 %v5780
  %6014 = vmatprep.subr.bf16.mxu0 %v5789
  %6015 = vmatpush1.bf16.msra.mxu0 %v5788
  %6016 = vmatprep.subr.bf16.mxu0 %v5797
  %6017 = vmatpush1.bf16.msra.mxu0 %v5796
  %6018 = vmatprep.subr.bf16.mxu0 %v5805
  %6019 = vmatpush1.bf16.msra.mxu0 %v5804
  %6020 = vmatprep.subr.bf16.mxu0 %v5813
  %6021 = vmatpush1.bf16.msra.mxu0 %v5812
  %6022 = vmatprep.subr.bf16.mxu0 %v5821
  %6023 = vmatpush1.bf16.msra.mxu0 %v5820
  %6024 = vmatprep.subr.bf16.mxu0 %v5829
  %6025 = vmatpush1.bf16.msra.mxu0 %v5828
  %6026 = vmatprep.subr.bf16.mxu0 %v5837
  %6027 = vmatpush1.bf16.msra.mxu0 %v5836
  %6028 = vmatprep.subr.bf16.mxu0 %v5845
  %6029 = vmatpush1.bf16.msra.mxu0 %v5844
  %6030 = vmatprep.subr.bf16.mxu0 %v5853
  %6031 = vmatpush1.bf16.msra.mxu0 %v5852
  %6032 = vmatprep.subr.bf16.mxu0 %v5861
  %6033 = vmatpush1.bf16.msra.mxu0 %v5860
  %6034 = vmatprep.subr.bf16.mxu0 %v5869
  %6035 = vmatpush1.bf16.msra.mxu0 %v5868
  %6036 = vmatprep.mubr.bf16.mxu0 %v5235
  %6037 = vmatmul.mubr.bf16.gmra.mrb[0].mxu0 %v5234
  %v6038 = vpop.f32.mrb[0].mxu0
  %v6039 = vadd.f32 0.0, %v6038
  %v6040 = vpop.f32.mrb[0].mxu0
  %v6041 = vadd.f32 0.0, %v6040
  %v6042 = vpop.f32.mrb[0].mxu0
  %v6043 = vpop.f32.mrb[0].mxu0
  %6044 = vdwg.mxu0
  %6045 = vmatprep.subr.bf16.mxu0 %v5751
  %6046 = vmatpush1.bf16.msra.mxu0 %v5750
  %6047 = vmatprep.subr.bf16.mxu0 %v5759
  %6048 = vmatpush1.bf16.msra.mxu0 %v5758
  %6049 = vmatprep.subr.bf16.mxu0 %v5767
  %6050 = vmatpush1.bf16.msra.mxu0 %v5766
  %6051 = vmatprep.subr.bf16.mxu0 %v5775
  %6052 = vmatpush1.bf16.msra.mxu0 %v5774
  %6053 = vmatprep.subr.bf16.mxu0 %v5783
  %6054 = vmatpush1.bf16.msra.mxu0 %v5782
  %6055 = vmatprep.subr.bf16.mxu0 %v5791
  %6056 = vmatpush1.bf16.msra.mxu0 %v5790
  %6057 = vmatprep.subr.bf16.mxu0 %v5799
  %6058 = vmatpush1.bf16.msra.mxu0 %v5798
  %6059 = vmatprep.subr.bf16.mxu0 %v5807
  %6060 = vmatpush1.bf16.msra.mxu0 %v5806
  %6061 = vmatprep.subr.bf16.mxu0 %v5815
  %6062 = vmatpush1.bf16.msra.mxu0 %v5814
  %6063 = vmatprep.subr.bf16.mxu0 %v5823
  %6064 = vmatpush1.bf16.msra.mxu0 %v5822
  %6065 = vmatprep.subr.bf16.mxu0 %v5831
  %6066 = vmatpush1.bf16.msra.mxu0 %v5830
  %6067 = vmatprep.subr.bf16.mxu0 %v5839
  %6068 = vmatpush1.bf16.msra.mxu0 %v5838
  %6069 = vmatprep.subr.bf16.mxu0 %v5847
  %6070 = vmatpush1.bf16.msra.mxu0 %v5846
  %6071 = vmatprep.subr.bf16.mxu0 %v5855
  %6072 = vmatpush1.bf16.msra.mxu0 %v5854
  %6073 = vmatprep.subr.bf16.mxu0 %v5863
  %6074 = vmatpush1.bf16.msra.mxu0 %v5862
  %6075 = vmatprep.subr.bf16.mxu0 %v5871
  %6076 = vmatpush1.bf16.msra.mxu0 %v5870
  %6077 = vmatprep.mubr.bf16.mxu0 %v5235
  %6078 = vmatmul.mubr.bf16.gmra.mrb[0].mxu0 %v5234
  %v6079 = vpop.f32.mrb[0].mxu0
  %v6080 = vadd.f32 0.0, %v6079
  %v6081 = vpop.f32.mrb[0].mxu0
  %v6082 = vadd.f32 0.0, %v6081
  %v6083 = vpop.f32.mrb[0].mxu0
  %v6084 = vpop.f32.mrb[0].mxu0
  %6085 = vdwg.mxu0
  %6086 = vmatprep.subr.bf16.mxu0 %v5753
  %6087 = vmatpush1.bf16.msra.mxu0 %v5752
  %6088 = vmatprep.subr.bf16.mxu0 %v5761
  %6089 = vmatpush1.bf16.msra.mxu0 %v5760
  %6090 = vmatprep.subr.bf16.mxu0 %v5769
  %6091 = vmatpush1.bf16.msra.mxu0 %v5768
  %6092 = vmatprep.subr.bf16.mxu0 %v5777
  %6093 = vmatpush1.bf16.msra.mxu0 %v5776
  %6094 = vmatprep.subr.bf16.mxu0 %v5785
  %6095 = vmatpush1.bf16.msra.mxu0 %v5784
  %6096 = vmatprep.subr.bf16.mxu0 %v5793
  %6097 = vmatpush1.bf16.msra.mxu0 %v5792
  %6098 = vmatprep.subr.bf16.mxu0 %v5801
  %6099 = vmatpush1.bf16.msra.mxu0 %v5800
  %6100 = vmatprep.subr.bf16.mxu0 %v5809
  %6101 = vmatpush1.bf16.msra.mxu0 %v5808
  %6102 = vmatprep.subr.bf16.mxu0 %v5817
  %6103 = vmatpush1.bf16.msra.mxu0 %v5816
  %6104 = vmatprep.subr.bf16.mxu0 %v5825
  %6105 = vmatpush1.bf16.msra.mxu0 %v5824
  %6106 = vmatprep.subr.bf16.mxu0 %v5833
  %6107 = vmatpush1.bf16.msra.mxu0 %v5832
  %6108 = vmatprep.subr.bf16.mxu0 %v5841
  %6109 = vmatpush1.bf16.msra.mxu0 %v5840
  %6110 = vmatprep.subr.bf16.mxu0 %v5849
  %6111 = vmatpush1.bf16.msra.mxu0 %v5848
  %6112 = vmatprep.subr.bf16.mxu0 %v5857
  %6113 = vmatpush1.bf16.msra.mxu0 %v5856
  %6114 = vmatprep.subr.bf16.mxu0 %v5865
  %6115 = vmatpush1.bf16.msra.mxu0 %v5864
  %6116 = vmatprep.subr.bf16.mxu0 %v5873
  %6117 = vmatpush1.bf16.msra.mxu0 %v5872
  %6118 = vmatprep.mubr.bf16.mxu0 %v5235
  %6119 = vmatmul.mubr.bf16.gmra.mrb[0].mxu0 %v5234
  %v6120 = vpop.f32.mrb[0].mxu0
  %v6121 = vadd.f32 0.0, %v6120
  %v6122 = vpop.f32.mrb[0].mxu0
  %v6123 = vadd.f32 0.0, %v6122
  %v6124 = vpop.f32.mrb[0].mxu0
  %v6125 = vpop.f32.mrb[0].mxu0
  %6126 = vdwg.mxu0
  %6127 = vmatprep.subr.bf16.mxu0 %v5755
  %6128 = vmatpush1.bf16.msra.mxu0 %v5754
  %6129 = vmatprep.subr.bf16.mxu0 %v5763
  %6130 = vmatpush1.bf16.msra.mxu0 %v5762
  %6131 = vmatprep.subr.bf16.mxu0 %v5771
  %6132 = vmatpush1.bf16.msra.mxu0 %v5770
  %6133 = vmatprep.subr.bf16.mxu0 %v5779
  %6134 = vmatpush1.bf16.msra.mxu0 %v5778
  %6135 = vmatprep.subr.bf16.mxu0 %v5787
  %6136 = vmatpush1.bf16.msra.mxu0 %v5786
  %6137 = vmatprep.subr.bf16.mxu0 %v5795
  %6138 = vmatpush1.bf16.msra.mxu0 %v5794
  %6139 = vmatprep.subr.bf16.mxu0 %v5803
  %6140 = vmatpush1.bf16.msra.mxu0 %v5802
  %6141 = vmatprep.subr.bf16.mxu0 %v5811
  %6142 = vmatpush1.bf16.msra.mxu0 %v5810
  %6143 = vmatprep.subr.bf16.mxu0 %v5819
  %6144 = vmatpush1.bf16.msra.mxu0 %v5818
  %6145 = vmatprep.subr.bf16.mxu0 %v5827
  %6146 = vmatpush1.bf16.msra.mxu0 %v5826
  %6147 = vmatprep.subr.bf16.mxu0 %v5835
  %6148 = vmatpush1.bf16.msra.mxu0 %v5834
  %6149 = vmatprep.subr.bf16.mxu0 %v5843
  %6150 = vmatpush1.bf16.msra.mxu0 %v5842
  %6151 = vmatprep.subr.bf16.mxu0 %v5851
  %6152 = vmatpush1.bf16.msra.mxu0 %v5850
  %6153 = vmatprep.subr.bf16.mxu0 %v5859
  %6154 = vmatpush1.bf16.msra.mxu0 %v5858
  %6155 = vmatprep.subr.bf16.mxu0 %v5867
  %6156 = vmatpush1.bf16.msra.mxu0 %v5866
  %6157 = vmatprep.subr.bf16.mxu0 %v5875
  %6158 = vmatpush1.bf16.msra.mxu0 %v5874
  %6159 = vmatprep.mubr.bf16.mxu0 %v5235
  %6160 = vmatmul.mubr.bf16.gmra.mrb[0].mxu0 %v5234
  %v6161 = vpop.f32.mrb[0].mxu0
  %v6162 = vadd.f32 0.0, %v6161
  %v6163 = vpop.f32.mrb[0].mxu0
  %v6164 = vadd.f32 0.0, %v6163
  %v6165 = vpop.f32.mrb[0].mxu0
  %v6166 = vpop.f32.mrb[0].mxu0
  %6167 = vdwg.mxu0
  %v6168 = vadd.f32 %v3186, %v6039
  %v6169 = vadd.f32 %v3188, %v6041
  %v6170 = vadd.f32 %v3227, %v6080
  %v6171 = vadd.f32 %v3229, %v6082
  %v6172 = vmul.f32 %v6168, 0.5
  %v6173 = vtanh.pop %v6172
  %v6174 = vmul.f32 %v6173, 0.5
  %v6175 = vadd.f32 %v6174, 0.5
  %v6176 = vmul.f32 %v6169, 0.5
  %v6177 = vtanh.pop %v6176
  %v6178 = vmul.f32 %v6177, 0.5
  %v6179 = vadd.f32 %v6178, 0.5
  %v6180 = vtanh.pop %v6170
  %v6181 = vmul.f32 %v6171, 0.5
  %v6182 = vtanh.pop %v6181
  %v6183 = vmul.f32 %v6182, 0.5
  %v6184 = vadd.f32 %v6183, 0.5
  %v6185 = vmul.f32 %v6179, %v5208
  %v6186 = vmul.f32 %v6175, %v6180
  %v6187 = vadd.f32 %v6185, %v6186
  %v6188 = vtanh.pop %v6187
  %v6189 = vmul.f32 %v6184, %v6188
  %v6190 = vadd.f32 %v3238, %v6121
  %v6191 = vadd.f32 %v3242, %v6123
  %v6192 = vadd.f32 %v3246, %v6162
  %v6193 = vadd.f32 %v3250, %v6164
  %v6194 = vmul.f32 %v6190, 0.5
  %v6195 = vtanh.pop %v6194
  %v6196 = vmul.f32 %v6195, 0.5
  %v6197 = vadd.f32 %v6196, 0.5
  %v6198 = vmul.f32 %v6191, 0.5
  %v6199 = vtanh.pop %v6198
  %v6200 = vmul.f32 %v6199, 0.5
  %v6201 = vadd.f32 %v6200, 0.5
  %v6202 = vtanh.pop %v6192
  %v6203 = vmul.f32 %v6193, 0.5
  %v6204 = vtanh.pop %v6203
  %v6205 = vmul.f32 %v6204, 0.5
  %v6206 = vadd.f32 %v6205, 0.5
  %v6207 = vmul.f32 %v6201, %v5230
  %v6208 = vmul.f32 %v6197, %v6202
  %v6209 = vadd.f32 %v6207, %v6208
  %v6210 = vtanh.pop %v6209
  %v6211 = vmul.f32 %v6206, %v6210
  %6212 = vst [vmem:[#allocation3 + $0x10] sm:$0xff] %v6211
  %v6213 = vpack.c.bf16 %v6189, %v6189
  %v6214 = vpack.c.bf16 %v6211, %v6211
  %v6215 = vld [vmem:[%s8] sm:$0xff]
  %v6216 = vld [vmem:[%s8 + $0x8] sm:$0xff]
  %v6217 = vld [vmem:[%s8 + $0x10] sm:$0xff]
  %v6218 = vld [vmem:[%s8 + $0x18] sm:$0xff]
  %v6219 = vld [vmem:[%s8 + $0x20] sm:$0xff]
  %v6220 = vld [vmem:[%s8 + $0x28] sm:$0xff]
  %v6221 = vld [vmem:[%s8 + $0x30] sm:$0xff]
  %v6222 = vld [vmem:[%s8 + $0x38] sm:$0xff]
  %v6223 = vld [vmem:[%s8 + $0x40] sm:$0xff]
  %v6224 = vld [vmem:[%s8 + $0x48] sm:$0xff]
  %v6225 = vld [vmem:[%s8 + $0x50] sm:$0xff]
  %v6226 = vld [vmem:[%s8 + $0x58] sm:$0xff]
  %v6227 = vld [vmem:[%s8 + $0x60] sm:$0xff]
  %v6228 = vld [vmem:[%s8 + $0x68] sm:$0xff]
  %v6229 = vld [vmem:[%s8 + $0x70] sm:$0xff]
  %v6230 = vld [vmem:[%s8 + $0x78] sm:$0xff]
  %v6231 = vld [vmem:[%s8 + $0x80] sm:$0xff]
  %v6232 = vld [vmem:[%s8 + $0x88] sm:$0xff]
  %v6233 = vld [vmem:[%s8 + $0x90] sm:$0xff]
  %v6234 = vld [vmem:[%s8 + $0x98] sm:$0xff]
  %v6235 = vld [vmem:[%s8 + $0xa0] sm:$0xff]
  %v6236 = vld [vmem:[%s8 + $0xa8] sm:$0xff]
  %v6237 = vld [vmem:[%s8 + $0xb0] sm:$0xff]
  %v6238 = vld [vmem:[%s8 + $0xb8] sm:$0xff]
  %v6239 = vld [vmem:[%s8 + $0xc0] sm:$0xff]
  %v6240 = vld [vmem:[%s8 + $0xc8] sm:$0xff]
  %v6241 = vld [vmem:[%s8 + $0xd0] sm:$0xff]
  %v6242 = vld [vmem:[%s8 + $0xd8] sm:$0xff]
  %v6243 = vld [vmem:[%s8 + $0xe0] sm:$0xff]
  %v6244 = vld [vmem:[%s8 + $0xe8] sm:$0xff]
  %v6245 = vld [vmem:[%s8 + $0xf0] sm:$0xff]
  %v6246 = vld [vmem:[%s8 + $0xf8] sm:$0xff]
  %v6247 = vld [vmem:[%s8 + $0x100] sm:$0xff]
  %v6248 = vld [vmem:[%s8 + $0x108] sm:$0xff]
  %v6249 = vld [vmem:[%s8 + $0x110] sm:$0xff]
  %v6250 = vld [vmem:[%s8 + $0x118] sm:$0xff]
  %v6251 = vld [vmem:[%s8 + $0x120] sm:$0xff]
  %v6252 = vld [vmem:[%s8 + $0x128] sm:$0xff]
  %v6253 = vld [vmem:[%s8 + $0x130] sm:$0xff]
  %v6254 = vld [vmem:[%s8 + $0x138] sm:$0xff]
  %v6255 = vld [vmem:[%s8 + $0x140] sm:$0xff]
  %v6256 = vld [vmem:[%s8 + $0x148] sm:$0xff]
  %v6257 = vld [vmem:[%s8 + $0x150] sm:$0xff]
  %v6258 = vld [vmem:[%s8 + $0x158] sm:$0xff]
  %v6259 = vld [vmem:[%s8 + $0x160] sm:$0xff]
  %v6260 = vld [vmem:[%s8 + $0x168] sm:$0xff]
  %v6261 = vld [vmem:[%s8 + $0x170] sm:$0xff]
  %v6262 = vld [vmem:[%s8 + $0x178] sm:$0xff]
  %v6263 = vld [vmem:[%s8 + $0x180] sm:$0xff]
  %v6264 = vld [vmem:[%s8 + $0x188] sm:$0xff]
  %v6265 = vld [vmem:[%s8 + $0x190] sm:$0xff]
  %v6266 = vld [vmem:[%s8 + $0x198] sm:$0xff]
  %v6267 = vld [vmem:[%s8 + $0x1a0] sm:$0xff]
  %v6268 = vld [vmem:[%s8 + $0x1a8] sm:$0xff]
  %v6269 = vld [vmem:[%s8 + $0x1b0] sm:$0xff]
  %v6270 = vld [vmem:[%s8 + $0x1b8] sm:$0xff]
  %v6271 = vld [vmem:[%s8 + $0x1c0] sm:$0xff]
  %v6272 = vld [vmem:[%s8 + $0x1c8] sm:$0xff]
  %v6273 = vld [vmem:[%s8 + $0x1d0] sm:$0xff]
  %v6274 = vld [vmem:[%s8 + $0x1d8] sm:$0xff]
  %v6275 = vld [vmem:[%s8 + $0x1e0] sm:$0xff]
  %v6276 = vld [vmem:[%s8 + $0x1e8] sm:$0xff]
  %v6277 = vld [vmem:[%s8 + $0x1f0] sm:$0xff]
  %v6278 = vld [vmem:[%s8 + $0x1f8] sm:$0xff]
  %v6279 = vld [vmem:[%s8 + $0x200] sm:$0xff]
  %v6280 = vld [vmem:[%s8 + $0x208] sm:$0xff]
  %v6281 = vld [vmem:[%s8 + $0x210] sm:$0xff]
  %v6282 = vld [vmem:[%s8 + $0x218] sm:$0xff]
  %v6283 = vld [vmem:[%s8 + $0x220] sm:$0xff]
  %v6284 = vld [vmem:[%s8 + $0x228] sm:$0xff]
  %v6285 = vld [vmem:[%s8 + $0x230] sm:$0xff]
  %v6286 = vld [vmem:[%s8 + $0x238] sm:$0xff]
  %v6287 = vld [vmem:[%s8 + $0x240] sm:$0xff]
  %v6288 = vld [vmem:[%s8 + $0x248] sm:$0xff]
  %v6289 = vld [vmem:[%s8 + $0x250] sm:$0xff]
  %v6290 = vld [vmem:[%s8 + $0x258] sm:$0xff]
  %v6291 = vld [vmem:[%s8 + $0x260] sm:$0xff]
  %v6292 = vld [vmem:[%s8 + $0x268] sm:$0xff]
  %v6293 = vld [vmem:[%s8 + $0x270] sm:$0xff]
  %v6294 = vld [vmem:[%s8 + $0x278] sm:$0xff]
  %v6295 = vld [vmem:[%s8 + $0x280] sm:$0xff]
  %v6296 = vld [vmem:[%s8 + $0x288] sm:$0xff]
  %v6297 = vld [vmem:[%s8 + $0x290] sm:$0xff]
  %v6298 = vld [vmem:[%s8 + $0x298] sm:$0xff]
  %v6299 = vld [vmem:[%s8 + $0x2a0] sm:$0xff]
  %v6300 = vld [vmem:[%s8 + $0x2a8] sm:$0xff]
  %v6301 = vld [vmem:[%s8 + $0x2b0] sm:$0xff]
  %v6302 = vld [vmem:[%s8 + $0x2b8] sm:$0xff]
  %v6303 = vld [vmem:[%s8 + $0x2c0] sm:$0xff]
  %v6304 = vld [vmem:[%s8 + $0x2c8] sm:$0xff]
  %v6305 = vld [vmem:[%s8 + $0x2d0] sm:$0xff]
  %v6306 = vld [vmem:[%s8 + $0x2d8] sm:$0xff]
  %v6307 = vld [vmem:[%s8 + $0x2e0] sm:$0xff]
  %v6308 = vld [vmem:[%s8 + $0x2e8] sm:$0xff]
  %v6309 = vld [vmem:[%s8 + $0x2f0] sm:$0xff]
  %v6310 = vld [vmem:[%s8 + $0x2f8] sm:$0xff]
  %v6311 = vld [vmem:[%s8 + $0x300] sm:$0xff]
  %v6312 = vld [vmem:[%s8 + $0x308] sm:$0xff]
  %v6313 = vld [vmem:[%s8 + $0x310] sm:$0xff]
  %v6314 = vld [vmem:[%s8 + $0x318] sm:$0xff]
  %v6315 = vld [vmem:[%s8 + $0x320] sm:$0xff]
  %v6316 = vld [vmem:[%s8 + $0x328] sm:$0xff]
  %v6317 = vld [vmem:[%s8 + $0x330] sm:$0xff]
  %v6318 = vld [vmem:[%s8 + $0x338] sm:$0xff]
  %v6319 = vld [vmem:[%s8 + $0x340] sm:$0xff]
  %v6320 = vld [vmem:[%s8 + $0x348] sm:$0xff]
  %v6321 = vld [vmem:[%s8 + $0x350] sm:$0xff]
  %v6322 = vld [vmem:[%s8 + $0x358] sm:$0xff]
  %v6323 = vld [vmem:[%s8 + $0x360] sm:$0xff]
  %v6324 = vld [vmem:[%s8 + $0x368] sm:$0xff]
  %v6325 = vld [vmem:[%s8 + $0x370] sm:$0xff]
  %v6326 = vld [vmem:[%s8 + $0x378] sm:$0xff]
  %v6327 = vld [vmem:[%s8 + $0x380] sm:$0xff]
  %v6328 = vld [vmem:[%s8 + $0x388] sm:$0xff]
  %v6329 = vld [vmem:[%s8 + $0x390] sm:$0xff]
  %v6330 = vld [vmem:[%s8 + $0x398] sm:$0xff]
  %v6331 = vld [vmem:[%s8 + $0x3a0] sm:$0xff]
  %v6332 = vld [vmem:[%s8 + $0x3a8] sm:$0xff]
  %v6333 = vld [vmem:[%s8 + $0x3b0] sm:$0xff]
  %v6334 = vld [vmem:[%s8 + $0x3b8] sm:$0xff]
  %v6335 = vld [vmem:[%s8 + $0x3c0] sm:$0xff]
  %v6336 = vld [vmem:[%s8 + $0x3c8] sm:$0xff]
  %v6337 = vld [vmem:[%s8 + $0x3d0] sm:$0xff]
  %v6338 = vld [vmem:[%s8 + $0x3d8] sm:$0xff]
  %v6339 = vld [vmem:[%s8 + $0x3e0] sm:$0xff]
  %v6340 = vld [vmem:[%s8 + $0x3e8] sm:$0xff]
  %v6341 = vld [vmem:[%s8 + $0x3f0] sm:$0xff]
  %v6342 = vld [vmem:[%s8 + $0x3f8] sm:$0xff]
  %v6471 = vunpack.c.l.b16 %v6215
  %v6472 = vunpack.c.h.b16 %v6215
  %v6473 = vunpack.c.l.b16 %v6216
  %v6474 = vunpack.c.h.b16 %v6216
  %v6475 = vunpack.c.l.b16 %v6217
  %v6476 = vunpack.c.h.b16 %v6217
  %v6477 = vunpack.c.l.b16 %v6218
  %v6478 = vunpack.c.h.b16 %v6218
  %v6479 = vunpack.c.l.b16 %v6219
  %v6480 = vunpack.c.h.b16 %v6219
  %v6481 = vunpack.c.l.b16 %v6220
  %v6482 = vunpack.c.h.b16 %v6220
  %v6483 = vunpack.c.l.b16 %v6221
  %v6484 = vunpack.c.h.b16 %v6221
  %v6485 = vunpack.c.l.b16 %v6222
  %v6486 = vunpack.c.h.b16 %v6222
  %v6487 = vunpack.c.l.b16 %v6223
  %v6488 = vunpack.c.h.b16 %v6223
  %v6489 = vunpack.c.l.b16 %v6224
  %v6490 = vunpack.c.h.b16 %v6224
  %v6491 = vunpack.c.l.b16 %v6225
  %v6492 = vunpack.c.h.b16 %v6225
  %v6493 = vunpack.c.l.b16 %v6226
  %v6494 = vunpack.c.h.b16 %v6226
  %v6495 = vunpack.c.l.b16 %v6227
  %v6496 = vunpack.c.h.b16 %v6227
  %v6497 = vunpack.c.l.b16 %v6228
  %v6498 = vunpack.c.h.b16 %v6228
  %v6499 = vunpack.c.l.b16 %v6229
  %v6500 = vunpack.c.h.b16 %v6229
  %v6501 = vunpack.c.l.b16 %v6230
  %v6502 = vunpack.c.h.b16 %v6230
  %v6503 = vunpack.c.l.b16 %v6231
  %v6504 = vunpack.c.h.b16 %v6231
  %v6505 = vunpack.c.l.b16 %v6232
  %v6506 = vunpack.c.h.b16 %v6232
  %v6507 = vunpack.c.l.b16 %v6233
  %v6508 = vunpack.c.h.b16 %v6233
  %v6509 = vunpack.c.l.b16 %v6234
  %v6510 = vunpack.c.h.b16 %v6234
  %v6511 = vunpack.c.l.b16 %v6235
  %v6512 = vunpack.c.h.b16 %v6235
  %v6513 = vunpack.c.l.b16 %v6236
  %v6514 = vunpack.c.h.b16 %v6236
  %v6515 = vunpack.c.l.b16 %v6237
  %v6516 = vunpack.c.h.b16 %v6237
  %v6517 = vunpack.c.l.b16 %v6238
  %v6518 = vunpack.c.h.b16 %v6238
  %v6519 = vunpack.c.l.b16 %v6239
  %v6520 = vunpack.c.h.b16 %v6239
  %v6521 = vunpack.c.l.b16 %v6240
  %v6522 = vunpack.c.h.b16 %v6240
  %v6523 = vunpack.c.l.b16 %v6241
  %v6524 = vunpack.c.h.b16 %v6241
  %v6525 = vunpack.c.l.b16 %v6242
  %v6526 = vunpack.c.h.b16 %v6242
  %v6527 = vunpack.c.l.b16 %v6243
  %v6528 = vunpack.c.h.b16 %v6243
  %v6529 = vunpack.c.l.b16 %v6244
  %v6530 = vunpack.c.h.b16 %v6244
  %v6531 = vunpack.c.l.b16 %v6245
  %v6532 = vunpack.c.h.b16 %v6245
  %v6533 = vunpack.c.l.b16 %v6246
  %v6534 = vunpack.c.h.b16 %v6246
  %v6535 = vunpack.c.l.b16 %v6247
  %v6536 = vunpack.c.h.b16 %v6247
  %v6537 = vunpack.c.l.b16 %v6248
  %v6538 = vunpack.c.h.b16 %v6248
  %v6539 = vunpack.c.l.b16 %v6249
  %v6540 = vunpack.c.h.b16 %v6249
  %v6541 = vunpack.c.l.b16 %v6250
  %v6542 = vunpack.c.h.b16 %v6250
  %v6543 = vunpack.c.l.b16 %v6251
  %v6544 = vunpack.c.h.b16 %v6251
  %v6545 = vunpack.c.l.b16 %v6252
  %v6546 = vunpack.c.h.b16 %v6252
  %v6547 = vunpack.c.l.b16 %v6253
  %v6548 = vunpack.c.h.b16 %v6253
  %v6549 = vunpack.c.l.b16 %v6254
  %v6550 = vunpack.c.h.b16 %v6254
  %v6551 = vunpack.c.l.b16 %v6255
  %v6552 = vunpack.c.h.b16 %v6255
  %v6553 = vunpack.c.l.b16 %v6256
  %v6554 = vunpack.c.h.b16 %v6256
  %v6555 = vunpack.c.l.b16 %v6257
  %v6556 = vunpack.c.h.b16 %v6257
  %v6557 = vunpack.c.l.b16 %v6258
  %v6558 = vunpack.c.h.b16 %v6258
  %v6559 = vunpack.c.l.b16 %v6259
  %v6560 = vunpack.c.h.b16 %v6259
  %v6561 = vunpack.c.l.b16 %v6260
  %v6562 = vunpack.c.h.b16 %v6260
  %v6563 = vunpack.c.l.b16 %v6261
  %v6564 = vunpack.c.h.b16 %v6261
  %v6565 = vunpack.c.l.b16 %v6262
  %v6566 = vunpack.c.h.b16 %v6262
  %v6567 = vunpack.c.l.b16 %v6263
  %v6568 = vunpack.c.h.b16 %v6263
  %v6569 = vunpack.c.l.b16 %v6264
  %v6570 = vunpack.c.h.b16 %v6264
  %v6571 = vunpack.c.l.b16 %v6265
  %v6572 = vunpack.c.h.b16 %v6265
  %v6573 = vunpack.c.l.b16 %v6266
  %v6574 = vunpack.c.h.b16 %v6266
  %v6575 = vunpack.c.l.b16 %v6267
  %v6576 = vunpack.c.h.b16 %v6267
  %v6577 = vunpack.c.l.b16 %v6268
  %v6578 = vunpack.c.h.b16 %v6268
  %v6579 = vunpack.c.l.b16 %v6269
  %v6580 = vunpack.c.h.b16 %v6269
  %v6581 = vunpack.c.l.b16 %v6270
  %v6582 = vunpack.c.h.b16 %v6270
  %v6583 = vunpack.c.l.b16 %v6271
  %v6584 = vunpack.c.h.b16 %v6271
  %v6585 = vunpack.c.l.b16 %v6272
  %v6586 = vunpack.c.h.b16 %v6272
  %v6587 = vunpack.c.l.b16 %v6273
  %v6588 = vunpack.c.h.b16 %v6273
  %v6589 = vunpack.c.l.b16 %v6274
  %v6590 = vunpack.c.h.b16 %v6274
  %v6591 = vunpack.c.l.b16 %v6275
  %v6592 = vunpack.c.h.b16 %v6275
  %v6593 = vunpack.c.l.b16 %v6276
  %v6594 = vunpack.c.h.b16 %v6276
  %v6595 = vunpack.c.l.b16 %v6277
  %v6596 = vunpack.c.h.b16 %v6277
  %v6597 = vunpack.c.l.b16 %v6278
  %v6598 = vunpack.c.h.b16 %v6278
  %v6599 = vunpack.c.l.b16 %v6279
  %v6600 = vunpack.c.h.b16 %v6279
  %v6601 = vunpack.c.l.b16 %v6280
  %v6602 = vunpack.c.h.b16 %v6280
  %v6603 = vunpack.c.l.b16 %v6281
  %v6604 = vunpack.c.h.b16 %v6281
  %v6605 = vunpack.c.l.b16 %v6282
  %v6606 = vunpack.c.h.b16 %v6282
  %v6607 = vunpack.c.l.b16 %v6283
  %v6608 = vunpack.c.h.b16 %v6283
  %v6609 = vunpack.c.l.b16 %v6284
  %v6610 = vunpack.c.h.b16 %v6284
  %v6611 = vunpack.c.l.b16 %v6285
  %v6612 = vunpack.c.h.b16 %v6285
  %v6613 = vunpack.c.l.b16 %v6286
  %v6614 = vunpack.c.h.b16 %v6286
  %v6615 = vunpack.c.l.b16 %v6287
  %v6616 = vunpack.c.h.b16 %v6287
  %v6617 = vunpack.c.l.b16 %v6288
  %v6618 = vunpack.c.h.b16 %v6288
  %v6619 = vunpack.c.l.b16 %v6289
  %v6620 = vunpack.c.h.b16 %v6289
  %v6621 = vunpack.c.l.b16 %v6290
  %v6622 = vunpack.c.h.b16 %v6290
  %v6623 = vunpack.c.l.b16 %v6291
  %v6624 = vunpack.c.h.b16 %v6291
  %v6625 = vunpack.c.l.b16 %v6292
  %v6626 = vunpack.c.h.b16 %v6292
  %v6627 = vunpack.c.l.b16 %v6293
  %v6628 = vunpack.c.h.b16 %v6293
  %v6629 = vunpack.c.l.b16 %v6294
  %v6630 = vunpack.c.h.b16 %v6294
  %v6631 = vunpack.c.l.b16 %v6295
  %v6632 = vunpack.c.h.b16 %v6295
  %v6633 = vunpack.c.l.b16 %v6296
  %v6634 = vunpack.c.h.b16 %v6296
  %v6635 = vunpack.c.l.b16 %v6297
  %v6636 = vunpack.c.h.b16 %v6297
  %v6637 = vunpack.c.l.b16 %v6298
  %v6638 = vunpack.c.h.b16 %v6298
  %v6639 = vunpack.c.l.b16 %v6299
  %v6640 = vunpack.c.h.b16 %v6299
  %v6641 = vunpack.c.l.b16 %v6300
  %v6642 = vunpack.c.h.b16 %v6300
  %v6643 = vunpack.c.l.b16 %v6301
  %v6644 = vunpack.c.h.b16 %v6301
  %v6645 = vunpack.c.l.b16 %v6302
  %v6646 = vunpack.c.h.b16 %v6302
  %v6647 = vunpack.c.l.b16 %v6303
  %v6648 = vunpack.c.h.b16 %v6303
  %v6649 = vunpack.c.l.b16 %v6304
  %v6650 = vunpack.c.h.b16 %v6304
  %v6651 = vunpack.c.l.b16 %v6305
  %v6652 = vunpack.c.h.b16 %v6305
  %v6653 = vunpack.c.l.b16 %v6306
  %v6654 = vunpack.c.h.b16 %v6306
  %v6655 = vunpack.c.l.b16 %v6307
  %v6656 = vunpack.c.h.b16 %v6307
  %v6657 = vunpack.c.l.b16 %v6308
  %v6658 = vunpack.c.h.b16 %v6308
  %v6659 = vunpack.c.l.b16 %v6309
  %v6660 = vunpack.c.h.b16 %v6309
  %v6661 = vunpack.c.l.b16 %v6310
  %v6662 = vunpack.c.h.b16 %v6310
  %v6663 = vunpack.c.l.b16 %v6311
  %v6664 = vunpack.c.h.b16 %v6311
  %v6665 = vunpack.c.l.b16 %v6312
  %v6666 = vunpack.c.h.b16 %v6312
  %v6667 = vunpack.c.l.b16 %v6313
  %v6668 = vunpack.c.h.b16 %v6313
  %v6669 = vunpack.c.l.b16 %v6314
  %v6670 = vunpack.c.h.b16 %v6314
  %v6671 = vunpack.c.l.b16 %v6315
  %v6672 = vunpack.c.h.b16 %v6315
  %v6673 = vunpack.c.l.b16 %v6316
  %v6674 = vunpack.c.h.b16 %v6316
  %v6675 = vunpack.c.l.b16 %v6317
  %v6676 = vunpack.c.h.b16 %v6317
  %v6677 = vunpack.c.l.b16 %v6318
  %v6678 = vunpack.c.h.b16 %v6318
  %v6679 = vunpack.c.l.b16 %v6319
  %v6680 = vunpack.c.h.b16 %v6319
  %v6681 = vunpack.c.l.b16 %v6320
  %v6682 = vunpack.c.h.b16 %v6320
  %v6683 = vunpack.c.l.b16 %v6321
  %v6684 = vunpack.c.h.b16 %v6321
  %v6685 = vunpack.c.l.b16 %v6322
  %v6686 = vunpack.c.h.b16 %v6322
  %v6687 = vunpack.c.l.b16 %v6323
  %v6688 = vunpack.c.h.b16 %v6323
  %v6689 = vunpack.c.l.b16 %v6324
  %v6690 = vunpack.c.h.b16 %v6324
  %v6691 = vunpack.c.l.b16 %v6325
  %v6692 = vunpack.c.h.b16 %v6325
  %v6693 = vunpack.c.l.b16 %v6326
  %v6694 = vunpack.c.h.b16 %v6326
  %v6695 = vunpack.c.l.b16 %v6327
  %v6696 = vunpack.c.h.b16 %v6327
  %v6697 = vunpack.c.l.b16 %v6328
  %v6698 = vunpack.c.h.b16 %v6328
  %v6699 = vunpack.c.l.b16 %v6329
  %v6700 = vunpack.c.h.b16 %v6329
  %v6701 = vunpack.c.l.b16 %v6330
  %v6702 = vunpack.c.h.b16 %v6330
  %v6703 = vunpack.c.l.b16 %v6331
  %v6704 = vunpack.c.h.b16 %v6331
  %v6705 = vunpack.c.l.b16 %v6332
  %v6706 = vunpack.c.h.b16 %v6332
  %v6707 = vunpack.c.l.b16 %v6333
  %v6708 = vunpack.c.h.b16 %v6333
  %v6709 = vunpack.c.l.b16 %v6334
  %v6710 = vunpack.c.h.b16 %v6334
  %v6711 = vunpack.c.l.b16 %v6335
  %v6712 = vunpack.c.h.b16 %v6335
  %v6713 = vunpack.c.l.b16 %v6336
  %v6714 = vunpack.c.h.b16 %v6336
  %v6715 = vunpack.c.l.b16 %v6337
  %v6716 = vunpack.c.h.b16 %v6337
  %v6717 = vunpack.c.l.b16 %v6338
  %v6718 = vunpack.c.h.b16 %v6338
  %v6719 = vunpack.c.l.b16 %v6339
  %v6720 = vunpack.c.h.b16 %v6339
  %v6721 = vunpack.c.l.b16 %v6340
  %v6722 = vunpack.c.h.b16 %v6340
  %v6723 = vunpack.c.l.b16 %v6341
  %v6724 = vunpack.c.h.b16 %v6341
  %v6725 = vunpack.c.l.b16 %v6342
  %v6726 = vunpack.c.h.b16 %v6342
  %v6727 = vpack.c.b16 %v6479, %v6471
  %v6728 = vpack.c.b16 %v6480, %v6472
  %v6729 = vpack.c.b16 %v6481, %v6473
  %v6730 = vpack.c.b16 %v6482, %v6474
  %v6731 = vpack.c.b16 %v6483, %v6475
  %v6732 = vpack.c.b16 %v6484, %v6476
  %v6733 = vpack.c.b16 %v6485, %v6477
  %v6734 = vpack.c.b16 %v6486, %v6478
  %v6735 = vpack.c.b16 %v6495, %v6487
  %v6736 = vpack.c.b16 %v6496, %v6488
  %v6737 = vpack.c.b16 %v6497, %v6489
  %v6738 = vpack.c.b16 %v6498, %v6490
  %v6739 = vpack.c.b16 %v6499, %v6491
  %v6740 = vpack.c.b16 %v6500, %v6492
  %v6741 = vpack.c.b16 %v6501, %v6493
  %v6742 = vpack.c.b16 %v6502, %v6494
  %v6743 = vpack.c.b16 %v6511, %v6503
  %v6744 = vpack.c.b16 %v6512, %v6504
  %v6745 = vpack.c.b16 %v6513, %v6505
  %v6746 = vpack.c.b16 %v6514, %v6506
  %v6747 = vpack.c.b16 %v6515, %v6507
  %v6748 = vpack.c.b16 %v6516, %v6508
  %v6749 = vpack.c.b16 %v6517, %v6509
  %v6750 = vpack.c.b16 %v6518, %v6510
  %v6751 = vpack.c.b16 %v6527, %v6519
  %v6752 = vpack.c.b16 %v6528, %v6520
  %v6753 = vpack.c.b16 %v6529, %v6521
  %v6754 = vpack.c.b16 %v6530, %v6522
  %v6755 = vpack.c.b16 %v6531, %v6523
  %v6756 = vpack.c.b16 %v6532, %v6524
  %v6757 = vpack.c.b16 %v6533, %v6525
  %v6758 = vpack.c.b16 %v6534, %v6526
  %v6759 = vpack.c.b16 %v6543, %v6535
  %v6760 = vpack.c.b16 %v6544, %v6536
  %v6761 = vpack.c.b16 %v6545, %v6537
  %v6762 = vpack.c.b16 %v6546, %v6538
  %v6763 = vpack.c.b16 %v6547, %v6539
  %v6764 = vpack.c.b16 %v6548, %v6540
  %v6765 = vpack.c.b16 %v6549, %v6541
  %v6766 = vpack.c.b16 %v6550, %v6542
  %v6767 = vpack.c.b16 %v6559, %v6551
  %v6768 = vpack.c.b16 %v6560, %v6552
  %v6769 = vpack.c.b16 %v6561, %v6553
  %v6770 = vpack.c.b16 %v6562, %v6554
  %v6771 = vpack.c.b16 %v6563, %v6555
  %v6772 = vpack.c.b16 %v6564, %v6556
  %v6773 = vpack.c.b16 %v6565, %v6557
  %v6774 = vpack.c.b16 %v6566, %v6558
  %v6775 = vpack.c.b16 %v6575, %v6567
  %v6776 = vpack.c.b16 %v6576, %v6568
  %v6777 = vpack.c.b16 %v6577, %v6569
  %v6778 = vpack.c.b16 %v6578, %v6570
  %v6779 = vpack.c.b16 %v6579, %v6571
  %v6780 = vpack.c.b16 %v6580, %v6572
  %v6781 = vpack.c.b16 %v6581, %v6573
  %v6782 = vpack.c.b16 %v6582, %v6574
  %v6783 = vpack.c.b16 %v6591, %v6583
  %v6784 = vpack.c.b16 %v6592, %v6584
  %v6785 = vpack.c.b16 %v6593, %v6585
  %v6786 = vpack.c.b16 %v6594, %v6586
  %v6787 = vpack.c.b16 %v6595, %v6587
  %v6788 = vpack.c.b16 %v6596, %v6588
  %v6789 = vpack.c.b16 %v6597, %v6589
  %v6790 = vpack.c.b16 %v6598, %v6590
  %v6791 = vpack.c.b16 %v6607, %v6599
  %v6792 = vpack.c.b16 %v6608, %v6600
  %v6793 = vpack.c.b16 %v6609, %v6601
  %v6794 = vpack.c.b16 %v6610, %v6602
  %v6795 = vpack.c.b16 %v6611, %v6603
  %v6796 = vpack.c.b16 %v6612, %v6604
  %v6797 = vpack.c.b16 %v6613, %v6605
  %v6798 = vpack.c.b16 %v6614, %v6606
  %v6799 = vpack.c.b16 %v6623, %v6615
  %v6800 = vpack.c.b16 %v6624, %v6616
  %v6801 = vpack.c.b16 %v6625, %v6617
  %v6802 = vpack.c.b16 %v6626, %v6618
  %v6803 = vpack.c.b16 %v6627, %v6619
  %v6804 = vpack.c.b16 %v6628, %v6620
  %v6805 = vpack.c.b16 %v6629, %v6621
  %v6806 = vpack.c.b16 %v6630, %v6622
  %v6807 = vpack.c.b16 %v6639, %v6631
  %v6808 = vpack.c.b16 %v6640, %v6632
  %v6809 = vpack.c.b16 %v6641, %v6633
  %v6810 = vpack.c.b16 %v6642, %v6634
  %v6811 = vpack.c.b16 %v6643, %v6635
  %v6812 = vpack.c.b16 %v6644, %v6636
  %v6813 = vpack.c.b16 %v6645, %v6637
  %v6814 = vpack.c.b16 %v6646, %v6638
  %v6815 = vpack.c.b16 %v6655, %v6647
  %v6816 = vpack.c.b16 %v6656, %v6648
  %v6817 = vpack.c.b16 %v6657, %v6649
  %v6818 = vpack.c.b16 %v6658, %v6650
  %v6819 = vpack.c.b16 %v6659, %v6651
  %v6820 = vpack.c.b16 %v6660, %v6652
  %v6821 = vpack.c.b16 %v6661, %v6653
  %v6822 = vpack.c.b16 %v6662, %v6654
  %v6823 = vpack.c.b16 %v6671, %v6663
  %v6824 = vpack.c.b16 %v6672, %v6664
  %v6825 = vpack.c.b16 %v6673, %v6665
  %v6826 = vpack.c.b16 %v6674, %v6666
  %v6827 = vpack.c.b16 %v6675, %v6667
  %v6828 = vpack.c.b16 %v6676, %v6668
  %v6829 = vpack.c.b16 %v6677, %v6669
  %v6830 = vpack.c.b16 %v6678, %v6670
  %v6831 = vpack.c.b16 %v6687, %v6679
  %v6832 = vpack.c.b16 %v6688, %v6680
  %v6833 = vpack.c.b16 %v6689, %v6681
  %v6834 = vpack.c.b16 %v6690, %v6682
  %v6835 = vpack.c.b16 %v6691, %v6683
  %v6836 = vpack.c.b16 %v6692, %v6684
  %v6837 = vpack.c.b16 %v6693, %v6685
  %v6838 = vpack.c.b16 %v6694, %v6686
  %v6839 = vpack.c.b16 %v6703, %v6695
  %v6840 = vpack.c.b16 %v6704, %v6696
  %v6841 = vpack.c.b16 %v6705, %v6697
  %v6842 = vpack.c.b16 %v6706, %v6698
  %v6843 = vpack.c.b16 %v6707, %v6699
  %v6844 = vpack.c.b16 %v6708, %v6700
  %v6845 = vpack.c.b16 %v6709, %v6701
  %v6846 = vpack.c.b16 %v6710, %v6702
  %v6847 = vpack.c.b16 %v6719, %v6711
  %v6848 = vpack.c.b16 %v6720, %v6712
  %v6849 = vpack.c.b16 %v6721, %v6713
  %v6850 = vpack.c.b16 %v6722, %v6714
  %v6851 = vpack.c.b16 %v6723, %v6715
  %v6852 = vpack.c.b16 %v6724, %v6716
  %v6853 = vpack.c.b16 %v6725, %v6717
  %v6854 = vpack.c.b16 %v6726, %v6718
  %6983 = vmatprep.subr.bf16.mxu0 %v6728
  %6984 = vmatpush1.bf16.msra.mxu0 %v6727
  %6985 = vmatprep.subr.bf16.mxu0 %v6736
  %6986 = vmatpush1.bf16.msra.mxu0 %v6735
  %6987 = vmatprep.subr.bf16.mxu0 %v6744
  %6988 = vmatpush1.bf16.msra.mxu0 %v6743
  %6989 = vmatprep.subr.bf16.mxu0 %v6752
  %6990 = vmatpush1.bf16.msra.mxu0 %v6751
  %6991 = vmatprep.subr.bf16.mxu0 %v6760
  %6992 = vmatpush1.bf16.msra.mxu0 %v6759
  %6993 = vmatprep.subr.bf16.mxu0 %v6768
  %6994 = vmatpush1.bf16.msra.mxu0 %v6767
  %6995 = vmatprep.subr.bf16.mxu0 %v6776
  %6996 = vmatpush1.bf16.msra.mxu0 %v6775
  %6997 = vmatprep.subr.bf16.mxu0 %v6784
  %6998 = vmatpush1.bf16.msra.mxu0 %v6783
  %6999 = vmatprep.subr.bf16.mxu0 %v6792
  %7000 = vmatpush1.bf16.msra.mxu0 %v6791
  %7001 = vmatprep.subr.bf16.mxu0 %v6800
  %7002 = vmatpush1.bf16.msra.mxu0 %v6799
  %7003 = vmatprep.subr.bf16.mxu0 %v6808
  %7004 = vmatpush1.bf16.msra.mxu0 %v6807
  %7005 = vmatprep.subr.bf16.mxu0 %v6816
  %7006 = vmatpush1.bf16.msra.mxu0 %v6815
  %7007 = vmatprep.subr.bf16.mxu0 %v6824
  %7008 = vmatpush1.bf16.msra.mxu0 %v6823
  %7009 = vmatprep.subr.bf16.mxu0 %v6832
  %7010 = vmatpush1.bf16.msra.mxu0 %v6831
  %7011 = vmatprep.subr.bf16.mxu0 %v6840
  %7012 = vmatpush1.bf16.msra.mxu0 %v6839
  %7013 = vmatprep.subr.bf16.mxu0 %v6848
  %7014 = vmatpush1.bf16.msra.mxu0 %v6847
  %7015 = vmatprep.mubr.bf16.mxu0 %v6214
  %7016 = vmatmul.mubr.bf16.gmra.mrb[0].mxu0 %v6213
  %v7017 = vpop.f32.mrb[0].mxu0
  %v7018 = vadd.f32 0.0, %v7017
  %v7019 = vpop.f32.mrb[0].mxu0
  %v7020 = vadd.f32 0.0, %v7019
  %v7021 = vpop.f32.mrb[0].mxu0
  %v7022 = vpop.f32.mrb[0].mxu0
  %7023 = vdwg.mxu0
  %7024 = vmatprep.subr.bf16.mxu0 %v6730
  %7025 = vmatpush1.bf16.msra.mxu0 %v6729
  %7026 = vmatprep.subr.bf16.mxu0 %v6738
  %7027 = vmatpush1.bf16.msra.mxu0 %v6737
  %7028 = vmatprep.subr.bf16.mxu0 %v6746
  %7029 = vmatpush1.bf16.msra.mxu0 %v6745
  %7030 = vmatprep.subr.bf16.mxu0 %v6754
  %7031 = vmatpush1.bf16.msra.mxu0 %v6753
  %7032 = vmatprep.subr.bf16.mxu0 %v6762
  %7033 = vmatpush1.bf16.msra.mxu0 %v6761
  %7034 = vmatprep.subr.bf16.mxu0 %v6770
  %7035 = vmatpush1.bf16.msra.mxu0 %v6769
  %7036 = vmatprep.subr.bf16.mxu0 %v6778
  %7037 = vmatpush1.bf16.msra.mxu0 %v6777
  %7038 = vmatprep.subr.bf16.mxu0 %v6786
  %7039 = vmatpush1.bf16.msra.mxu0 %v6785
  %7040 = vmatprep.subr.bf16.mxu0 %v6794
  %7041 = vmatpush1.bf16.msra.mxu0 %v6793
  %7042 = vmatprep.subr.bf16.mxu0 %v6802
  %7043 = vmatpush1.bf16.msra.mxu0 %v6801
  %7044 = vmatprep.subr.bf16.mxu0 %v6810
  %7045 = vmatpush1.bf16.msra.mxu0 %v6809
  %7046 = vmatprep.subr.bf16.mxu0 %v6818
  %7047 = vmatpush1.bf16.msra.mxu0 %v6817
  %7048 = vmatprep.subr.bf16.mxu0 %v6826
  %7049 = vmatpush1.bf16.msra.mxu0 %v6825
  %7050 = vmatprep.subr.bf16.mxu0 %v6834
  %7051 = vmatpush1.bf16.msra.mxu0 %v6833
  %7052 = vmatprep.subr.bf16.mxu0 %v6842
  %7053 = vmatpush1.bf16.msra.mxu0 %v6841
  %7054 = vmatprep.subr.bf16.mxu0 %v6850
  %7055 = vmatpush1.bf16.msra.mxu0 %v6849
  %7056 = vmatprep.mubr.bf16.mxu0 %v6214
  %7057 = vmatmul.mubr.bf16.gmra.mrb[0].mxu0 %v6213
  %v7058 = vpop.f32.mrb[0].mxu0
  %v7059 = vadd.f32 0.0, %v7058
  %v7060 = vpop.f32.mrb[0].mxu0
  %v7061 = vadd.f32 0.0, %v7060
  %v7062 = vpop.f32.mrb[0].mxu0
  %v7063 = vpop.f32.mrb[0].mxu0
  %7064 = vdwg.mxu0
  %7065 = vmatprep.subr.bf16.mxu0 %v6732
  %7066 = vmatpush1.bf16.msra.mxu0 %v6731
  %7067 = vmatprep.subr.bf16.mxu0 %v6740
  %7068 = vmatpush1.bf16.msra.mxu0 %v6739
  %7069 = vmatprep.subr.bf16.mxu0 %v6748
  %7070 = vmatpush1.bf16.msra.mxu0 %v6747
  %7071 = vmatprep.subr.bf16.mxu0 %v6756
  %7072 = vmatpush1.bf16.msra.mxu0 %v6755
  %7073 = vmatprep.subr.bf16.mxu0 %v6764
  %7074 = vmatpush1.bf16.msra.mxu0 %v6763
  %7075 = vmatprep.subr.bf16.mxu0 %v6772
  %7076 = vmatpush1.bf16.msra.mxu0 %v6771
  %7077 = vmatprep.subr.bf16.mxu0 %v6780
  %7078 = vmatpush1.bf16.msra.mxu0 %v6779
  %7079 = vmatprep.subr.bf16.mxu0 %v6788
  %7080 = vmatpush1.bf16.msra.mxu0 %v6787
  %7081 = vmatprep.subr.bf16.mxu0 %v6796
  %7082 = vmatpush1.bf16.msra.mxu0 %v6795
  %7083 = vmatprep.subr.bf16.mxu0 %v6804
  %7084 = vmatpush1.bf16.msra.mxu0 %v6803
  %7085 = vmatprep.subr.bf16.mxu0 %v6812
  %7086 = vmatpush1.bf16.msra.mxu0 %v6811
  %7087 = vmatprep.subr.bf16.mxu0 %v6820
  %7088 = vmatpush1.bf16.msra.mxu0 %v6819
  %7089 = vmatprep.subr.bf16.mxu0 %v6828
  %7090 = vmatpush1.bf16.msra.mxu0 %v6827
  %7091 = vmatprep.subr.bf16.mxu0 %v6836
  %7092 = vmatpush1.bf16.msra.mxu0 %v6835
  %7093 = vmatprep.subr.bf16.mxu0 %v6844
  %7094 = vmatpush1.bf16.msra.mxu0 %v6843
  %7095 = vmatprep.subr.bf16.mxu0 %v6852
  %7096 = vmatpush1.bf16.msra.mxu0 %v6851
  %7097 = vmatprep.mubr.bf16.mxu0 %v6214
  %7098 = vmatmul.mubr.bf16.gmra.mrb[0].mxu0 %v6213
  %v7099 = vpop.f32.mrb[0].mxu0
  %v7100 = vadd.f32 0.0, %v7099
  %v7101 = vpop.f32.mrb[0].mxu0
  %v7102 = vadd.f32 0.0, %v7101
  %v7103 = vpop.f32.mrb[0].mxu0
  %v7104 = vpop.f32.mrb[0].mxu0
  %7105 = vdwg.mxu0
  %7106 = vmatprep.subr.bf16.mxu0 %v6734
  %7107 = vmatpush1.bf16.msra.mxu0 %v6733
  %7108 = vmatprep.subr.bf16.mxu0 %v6742
  %7109 = vmatpush1.bf16.msra.mxu0 %v6741
  %7110 = vmatprep.subr.bf16.mxu0 %v6750
  %7111 = vmatpush1.bf16.msra.mxu0 %v6749
  %7112 = vmatprep.subr.bf16.mxu0 %v6758
  %7113 = vmatpush1.bf16.msra.mxu0 %v6757
  %7114 = vmatprep.subr.bf16.mxu0 %v6766
  %7115 = vmatpush1.bf16.msra.mxu0 %v6765
  %7116 = vmatprep.subr.bf16.mxu0 %v6774
  %7117 = vmatpush1.bf16.msra.mxu0 %v6773
  %7118 = vmatprep.subr.bf16.mxu0 %v6782
  %7119 = vmatpush1.bf16.msra.mxu0 %v6781
  %7120 = vmatprep.subr.bf16.mxu0 %v6790
  %7121 = vmatpush1.bf16.msra.mxu0 %v6789
  %7122 = vmatprep.subr.bf16.mxu0 %v6798
  %7123 = vmatpush1.bf16.msra.mxu0 %v6797
  %7124 = vmatprep.subr.bf16.mxu0 %v6806
  %7125 = vmatpush1.bf16.msra.mxu0 %v6805
  %7126 = vmatprep.subr.bf16.mxu0 %v6814
  %7127 = vmatpush1.bf16.msra.mxu0 %v6813
  %7128 = vmatprep.subr.bf16.mxu0 %v6822
  %7129 = vmatpush1.bf16.msra.mxu0 %v6821
  %7130 = vmatprep.subr.bf16.mxu0 %v6830
  %7131 = vmatpush1.bf16.msra.mxu0 %v6829
  %7132 = vmatprep.subr.bf16.mxu0 %v6838
  %7133 = vmatpush1.bf16.msra.mxu0 %v6837
  %7134 = vmatprep.subr.bf16.mxu0 %v6846
  %7135 = vmatpush1.bf16.msra.mxu0 %v6845
  %7136 = vmatprep.subr.bf16.mxu0 %v6854
  %7137 = vmatpush1.bf16.msra.mxu0 %v6853
  %7138 = vmatprep.mubr.bf16.mxu0 %v6214
  %7139 = vmatmul.mubr.bf16.gmra.mrb[0].mxu0 %v6213
  %v7140 = vpop.f32.mrb[0].mxu0
  %v7141 = vadd.f32 0.0, %v7140
  %v7142 = vpop.f32.mrb[0].mxu0
  %v7143 = vadd.f32 0.0, %v7142
  %v7144 = vpop.f32.mrb[0].mxu0
  %v7145 = vpop.f32.mrb[0].mxu0
  %7146 = vdwg.mxu0
  %v7147 = vadd.f32 %v3186, %v7018
  %v7148 = vadd.f32 %v3188, %v7020
  %v7149 = vadd.f32 %v3227, %v7059
  %v7150 = vadd.f32 %v3229, %v7061
  %v7151 = vmul.f32 %v7147, 0.5
  %v7152 = vtanh.pop %v7151
  %v7153 = vmul.f32 %v7152, 0.5
  %v7154 = vadd.f32 %v7153, 0.5
  %v7155 = vmul.f32 %v7148, 0.5
  %v7156 = vtanh.pop %v7155
  %v7157 = vmul.f32 %v7156, 0.5
  %v7158 = vadd.f32 %v7157, 0.5
  %v7159 = vtanh.pop %v7149
  %v7160 = vmul.f32 %v7150, 0.5
  %v7161 = vtanh.pop %v7160
  %v7162 = vmul.f32 %v7161, 0.5
  %v7163 = vadd.f32 %v7162, 0.5
  %v7164 = vmul.f32 %v7158, %v6187
  %v7165 = vmul.f32 %v7154, %v7159
  %v7166 = vadd.f32 %v7164, %v7165
  %v7167 = vtanh.pop %v7166
  %v7168 = vmul.f32 %v7163, %v7167
  %v7169 = vadd.f32 %v3238, %v7100
  %v7170 = vadd.f32 %v3242, %v7102
  %v7171 = vadd.f32 %v3246, %v7141
  %v7172 = vadd.f32 %v3250, %v7143
  %v7173 = vmul.f32 %v7169, 0.5
  %v7174 = vtanh.pop %v7173
  %v7175 = vmul.f32 %v7174, 0.5
  %v7176 = vadd.f32 %v7175, 0.5
  %v7177 = vmul.f32 %v7170, 0.5
  %v7178 = vtanh.pop %v7177
  %v7179 = vmul.f32 %v7178, 0.5
  %v7180 = vadd.f32 %v7179, 0.5
  %v7181 = vtanh.pop %v7171
  %v7182 = vmul.f32 %v7172, 0.5
  %v7183 = vtanh.pop %v7182
  %v7184 = vmul.f32 %v7183, 0.5
  %v7185 = vadd.f32 %v7184, 0.5
  %v7186 = vmul.f32 %v7180, %v6209
  %v7187 = vmul.f32 %v7176, %v7181
  %v7188 = vadd.f32 %v7186, %v7187
  %v7189 = vtanh.pop %v7188
  %v7190 = vmul.f32 %v7185, %v7189
  %7191 = vst [vmem:[#allocation3 + $0x18] sm:$0xff] %v7190
  %v7192 = vpack.c.bf16 %v7168, %v7168
  %v7193 = vpack.c.bf16 %v7190, %v7190
  %v7194 = vld [vmem:[%s8] sm:$0xff]
  %v7195 = vld [vmem:[%s8 + $0x8] sm:$0xff]
  %v7196 = vld [vmem:[%s8 + $0x10] sm:$0xff]
  %v7197 = vld [vmem:[%s8 + $0x18] sm:$0xff]
  %v7198 = vld [vmem:[%s8 + $0x20] sm:$0xff]
  %v7199 = vld [vmem:[%s8 + $0x28] sm:$0xff]
  %v7200 = vld [vmem:[%s8 + $0x30] sm:$0xff]
  %v7201 = vld [vmem:[%s8 + $0x38] sm:$0xff]
  %v7202 = vld [vmem:[%s8 + $0x40] sm:$0xff]
  %v7203 = vld [vmem:[%s8 + $0x48] sm:$0xff]
  %v7204 = vld [vmem:[%s8 + $0x50] sm:$0xff]
  %v7205 = vld [vmem:[%s8 + $0x58] sm:$0xff]
  %v7206 = vld [vmem:[%s8 + $0x60] sm:$0xff]
  %v7207 = vld [vmem:[%s8 + $0x68] sm:$0xff]
  %v7208 = vld [vmem:[%s8 + $0x70] sm:$0xff]
  %v7209 = vld [vmem:[%s8 + $0x78] sm:$0xff]
  %v7210 = vld [vmem:[%s8 + $0x80] sm:$0xff]
  %v7211 = vld [vmem:[%s8 + $0x88] sm:$0xff]
  %v7212 = vld [vmem:[%s8 + $0x90] sm:$0xff]
  %v7213 = vld [vmem:[%s8 + $0x98] sm:$0xff]
  %v7214 = vld [vmem:[%s8 + $0xa0] sm:$0xff]
  %v7215 = vld [vmem:[%s8 + $0xa8] sm:$0xff]
  %v7216 = vld [vmem:[%s8 + $0xb0] sm:$0xff]
  %v7217 = vld [vmem:[%s8 + $0xb8] sm:$0xff]
  %v7218 = vld [vmem:[%s8 + $0xc0] sm:$0xff]
  %v7219 = vld [vmem:[%s8 + $0xc8] sm:$0xff]
  %v7220 = vld [vmem:[%s8 + $0xd0] sm:$0xff]
  %v7221 = vld [vmem:[%s8 + $0xd8] sm:$0xff]
  %v7222 = vld [vmem:[%s8 + $0xe0] sm:$0xff]
  %v7223 = vld [vmem:[%s8 + $0xe8] sm:$0xff]
  %v7224 = vld [vmem:[%s8 + $0xf0] sm:$0xff]
  %v7225 = vld [vmem:[%s8 + $0xf8] sm:$0xff]
  %v7226 = vld [vmem:[%s8 + $0x100] sm:$0xff]
  %v7227 = vld [vmem:[%s8 + $0x108] sm:$0xff]
  %v7228 = vld [vmem:[%s8 + $0x110] sm:$0xff]
  %v7229 = vld [vmem:[%s8 + $0x118] sm:$0xff]
  %v7230 = vld [vmem:[%s8 + $0x120] sm:$0xff]
  %v7231 = vld [vmem:[%s8 + $0x128] sm:$0xff]
  %v7232 = vld [vmem:[%s8 + $0x130] sm:$0xff]
  %v7233 = vld [vmem:[%s8 + $0x138] sm:$0xff]
  %v7234 = vld [vmem:[%s8 + $0x140] sm:$0xff]
  %v7235 = vld [vmem:[%s8 + $0x148] sm:$0xff]
  %v7236 = vld [vmem:[%s8 + $0x150] sm:$0xff]
  %v7237 = vld [vmem:[%s8 + $0x158] sm:$0xff]
  %v7238 = vld [vmem:[%s8 + $0x160] sm:$0xff]
  %v7239 = vld [vmem:[%s8 + $0x168] sm:$0xff]
  %v7240 = vld [vmem:[%s8 + $0x170] sm:$0xff]
  %v7241 = vld [vmem:[%s8 + $0x178] sm:$0xff]
  %v7242 = vld [vmem:[%s8 + $0x180] sm:$0xff]
  %v7243 = vld [vmem:[%s8 + $0x188] sm:$0xff]
  %v7244 = vld [vmem:[%s8 + $0x190] sm:$0xff]
  %v7245 = vld [vmem:[%s8 + $0x198] sm:$0xff]
  %v7246 = vld [vmem:[%s8 + $0x1a0] sm:$0xff]
  %v7247 = vld [vmem:[%s8 + $0x1a8] sm:$0xff]
  %v7248 = vld [vmem:[%s8 + $0x1b0] sm:$0xff]
  %v7249 = vld [vmem:[%s8 + $0x1b8] sm:$0xff]
  %v7250 = vld [vmem:[%s8 + $0x1c0] sm:$0xff]
  %v7251 = vld [vmem:[%s8 + $0x1c8] sm:$0xff]
  %v7252 = vld [vmem:[%s8 + $0x1d0] sm:$0xff]
  %v7253 = vld [vmem:[%s8 + $0x1d8] sm:$0xff]
  %v7254 = vld [vmem:[%s8 + $0x1e0] sm:$0xff]
  %v7255 = vld [vmem:[%s8 + $0x1e8] sm:$0xff]
  %v7256 = vld [vmem:[%s8 + $0x1f0] sm:$0xff]
  %v7257 = vld [vmem:[%s8 + $0x1f8] sm:$0xff]
  %v7258 = vld [vmem:[%s8 + $0x200] sm:$0xff]
  %v7259 = vld [vmem:[%s8 + $0x208] sm:$0xff]
  %v7260 = vld [vmem:[%s8 + $0x210] sm:$0xff]
  %v7261 = vld [vmem:[%s8 + $0x218] sm:$0xff]
  %v7262 = vld [vmem:[%s8 + $0x220] sm:$0xff]
  %v7263 = vld [vmem:[%s8 + $0x228] sm:$0xff]
  %v7264 = vld [vmem:[%s8 + $0x230] sm:$0xff]
  %v7265 = vld [vmem:[%s8 + $0x238] sm:$0xff]
  %v7266 = vld [vmem:[%s8 + $0x240] sm:$0xff]
  %v7267 = vld [vmem:[%s8 + $0x248] sm:$0xff]
  %v7268 = vld [vmem:[%s8 + $0x250] sm:$0xff]
  %v7269 = vld [vmem:[%s8 + $0x258] sm:$0xff]
  %v7270 = vld [vmem:[%s8 + $0x260] sm:$0xff]
  %v7271 = vld [vmem:[%s8 + $0x268] sm:$0xff]
  %v7272 = vld [vmem:[%s8 + $0x270] sm:$0xff]
  %v7273 = vld [vmem:[%s8 + $0x278] sm:$0xff]
  %v7274 = vld [vmem:[%s8 + $0x280] sm:$0xff]
  %v7275 = vld [vmem:[%s8 + $0x288] sm:$0xff]
  %v7276 = vld [vmem:[%s8 + $0x290] sm:$0xff]
  %v7277 = vld [vmem:[%s8 + $0x298] sm:$0xff]
  %v7278 = vld [vmem:[%s8 + $0x2a0] sm:$0xff]
  %v7279 = vld [vmem:[%s8 + $0x2a8] sm:$0xff]
  %v7280 = vld [vmem:[%s8 + $0x2b0] sm:$0xff]
  %v7281 = vld [vmem:[%s8 + $0x2b8] sm:$0xff]
  %v7282 = vld [vmem:[%s8 + $0x2c0] sm:$0xff]
  %v7283 = vld [vmem:[%s8 + $0x2c8] sm:$0xff]
  %v7284 = vld [vmem:[%s8 + $0x2d0] sm:$0xff]
  %v7285 = vld [vmem:[%s8 + $0x2d8] sm:$0xff]
  %v7286 = vld [vmem:[%s8 + $0x2e0] sm:$0xff]
  %v7287 = vld [vmem:[%s8 + $0x2e8] sm:$0xff]
  %v7288 = vld [vmem:[%s8 + $0x2f0] sm:$0xff]
  %v7289 = vld [vmem:[%s8 + $0x2f8] sm:$0xff]
  %v7290 = vld [vmem:[%s8 + $0x300] sm:$0xff]
  %v7291 = vld [vmem:[%s8 + $0x308] sm:$0xff]
  %v7292 = vld [vmem:[%s8 + $0x310] sm:$0xff]
  %v7293 = vld [vmem:[%s8 + $0x318] sm:$0xff]
  %v7294 = vld [vmem:[%s8 + $0x320] sm:$0xff]
  %v7295 = vld [vmem:[%s8 + $0x328] sm:$0xff]
  %v7296 = vld [vmem:[%s8 + $0x330] sm:$0xff]
  %v7297 = vld [vmem:[%s8 + $0x338] sm:$0xff]
  %v7298 = vld [vmem:[%s8 + $0x340] sm:$0xff]
  %v7299 = vld [vmem:[%s8 + $0x348] sm:$0xff]
  %v7300 = vld [vmem:[%s8 + $0x350] sm:$0xff]
  %v7301 = vld [vmem:[%s8 + $0x358] sm:$0xff]
  %v7302 = vld [vmem:[%s8 + $0x360] sm:$0xff]
  %v7303 = vld [vmem:[%s8 + $0x368] sm:$0xff]
  %v7304 = vld [vmem:[%s8 + $0x370] sm:$0xff]
  %v7305 = vld [vmem:[%s8 + $0x378] sm:$0xff]
  %v7306 = vld [vmem:[%s8 + $0x380] sm:$0xff]
  %v7307 = vld [vmem:[%s8 + $0x388] sm:$0xff]
  %v7308 = vld [vmem:[%s8 + $0x390] sm:$0xff]
  %v7309 = vld [vmem:[%s8 + $0x398] sm:$0xff]
  %v7310 = vld [vmem:[%s8 + $0x3a0] sm:$0xff]
  %v7311 = vld [vmem:[%s8 + $0x3a8] sm:$0xff]
  %v7312 = vld [vmem:[%s8 + $0x3b0] sm:$0xff]
  %v7313 = vld [vmem:[%s8 + $0x3b8] sm:$0xff]
  %v7314 = vld [vmem:[%s8 + $0x3c0] sm:$0xff]
  %v7315 = vld [vmem:[%s8 + $0x3c8] sm:$0xff]
  %v7316 = vld [vmem:[%s8 + $0x3d0] sm:$0xff]
  %v7317 = vld [vmem:[%s8 + $0x3d8] sm:$0xff]
  %v7318 = vld [vmem:[%s8 + $0x3e0] sm:$0xff]
  %v7319 = vld [vmem:[%s8 + $0x3e8] sm:$0xff]
  %v7320 = vld [vmem:[%s8 + $0x3f0] sm:$0xff]
  %v7321 = vld [vmem:[%s8 + $0x3f8] sm:$0xff]
  %v7450 = vunpack.c.l.b16 %v7194
  %v7451 = vunpack.c.h.b16 %v7194
  %v7452 = vunpack.c.l.b16 %v7195
  %v7453 = vunpack.c.h.b16 %v7195
  %v7454 = vunpack.c.l.b16 %v7196
  %v7455 = vunpack.c.h.b16 %v7196
  %v7456 = vunpack.c.l.b16 %v7197
  %v7457 = vunpack.c.h.b16 %v7197
  %v7458 = vunpack.c.l.b16 %v7198
  %v7459 = vunpack.c.h.b16 %v7198
  %v7460 = vunpack.c.l.b16 %v7199
  %v7461 = vunpack.c.h.b16 %v7199
  %v7462 = vunpack.c.l.b16 %v7200
  %v7463 = vunpack.c.h.b16 %v7200
  %v7464 = vunpack.c.l.b16 %v7201
  %v7465 = vunpack.c.h.b16 %v7201
  %v7466 = vunpack.c.l.b16 %v7202
  %v7467 = vunpack.c.h.b16 %v7202
  %v7468 = vunpack.c.l.b16 %v7203
  %v7469 = vunpack.c.h.b16 %v7203
  %v7470 = vunpack.c.l.b16 %v7204
  %v7471 = vunpack.c.h.b16 %v7204
  %v7472 = vunpack.c.l.b16 %v7205
  %v7473 = vunpack.c.h.b16 %v7205
  %v7474 = vunpack.c.l.b16 %v7206
  %v7475 = vunpack.c.h.b16 %v7206
  %v7476 = vunpack.c.l.b16 %v7207
  %v7477 = vunpack.c.h.b16 %v7207
  %v7478 = vunpack.c.l.b16 %v7208
  %v7479 = vunpack.c.h.b16 %v7208
  %v7480 = vunpack.c.l.b16 %v7209
  %v7481 = vunpack.c.h.b16 %v7209
  %v7482 = vunpack.c.l.b16 %v7210
  %v7483 = vunpack.c.h.b16 %v7210
  %v7484 = vunpack.c.l.b16 %v7211
  %v7485 = vunpack.c.h.b16 %v7211
  %v7486 = vunpack.c.l.b16 %v7212
  %v7487 = vunpack.c.h.b16 %v7212
  %v7488 = vunpack.c.l.b16 %v7213
  %v7489 = vunpack.c.h.b16 %v7213
  %v7490 = vunpack.c.l.b16 %v7214
  %v7491 = vunpack.c.h.b16 %v7214
  %v7492 = vunpack.c.l.b16 %v7215
  %v7493 = vunpack.c.h.b16 %v7215
  %v7494 = vunpack.c.l.b16 %v7216
  %v7495 = vunpack.c.h.b16 %v7216
  %v7496 = vunpack.c.l.b16 %v7217
  %v7497 = vunpack.c.h.b16 %v7217
  %v7498 = vunpack.c.l.b16 %v7218
  %v7499 = vunpack.c.h.b16 %v7218
  %v7500 = vunpack.c.l.b16 %v7219
  %v7501 = vunpack.c.h.b16 %v7219
  %v7502 = vunpack.c.l.b16 %v7220
  %v7503 = vunpack.c.h.b16 %v7220
  %v7504 = vunpack.c.l.b16 %v7221
  %v7505 = vunpack.c.h.b16 %v7221
  %v7506 = vunpack.c.l.b16 %v7222
  %v7507 = vunpack.c.h.b16 %v7222
  %v7508 = vunpack.c.l.b16 %v7223
  %v7509 = vunpack.c.h.b16 %v7223
  %v7510 = vunpack.c.l.b16 %v7224
  %v7511 = vunpack.c.h.b16 %v7224
  %v7512 = vunpack.c.l.b16 %v7225
  %v7513 = vunpack.c.h.b16 %v7225
  %v7514 = vunpack.c.l.b16 %v7226
  %v7515 = vunpack.c.h.b16 %v7226
  %v7516 = vunpack.c.l.b16 %v7227
  %v7517 = vunpack.c.h.b16 %v7227
  %v7518 = vunpack.c.l.b16 %v7228
  %v7519 = vunpack.c.h.b16 %v7228
  %v7520 = vunpack.c.l.b16 %v7229
  %v7521 = vunpack.c.h.b16 %v7229
  %v7522 = vunpack.c.l.b16 %v7230
  %v7523 = vunpack.c.h.b16 %v7230
  %v7524 = vunpack.c.l.b16 %v7231
  %v7525 = vunpack.c.h.b16 %v7231
  %v7526 = vunpack.c.l.b16 %v7232
  %v7527 = vunpack.c.h.b16 %v7232
  %v7528 = vunpack.c.l.b16 %v7233
  %v7529 = vunpack.c.h.b16 %v7233
  %v7530 = vunpack.c.l.b16 %v7234
  %v7531 = vunpack.c.h.b16 %v7234
  %v7532 = vunpack.c.l.b16 %v7235
  %v7533 = vunpack.c.h.b16 %v7235
  %v7534 = vunpack.c.l.b16 %v7236
  %v7535 = vunpack.c.h.b16 %v7236
  %v7536 = vunpack.c.l.b16 %v7237
  %v7537 = vunpack.c.h.b16 %v7237
  %v7538 = vunpack.c.l.b16 %v7238
  %v7539 = vunpack.c.h.b16 %v7238
  %v7540 = vunpack.c.l.b16 %v7239
  %v7541 = vunpack.c.h.b16 %v7239
  %v7542 = vunpack.c.l.b16 %v7240
  %v7543 = vunpack.c.h.b16 %v7240
  %v7544 = vunpack.c.l.b16 %v7241
  %v7545 = vunpack.c.h.b16 %v7241
  %v7546 = vunpack.c.l.b16 %v7242
  %v7547 = vunpack.c.h.b16 %v7242
  %v7548 = vunpack.c.l.b16 %v7243
  %v7549 = vunpack.c.h.b16 %v7243
  %v7550 = vunpack.c.l.b16 %v7244
  %v7551 = vunpack.c.h.b16 %v7244
  %v7552 = vunpack.c.l.b16 %v7245
  %v7553 = vunpack.c.h.b16 %v7245
  %v7554 = vunpack.c.l.b16 %v7246
  %v7555 = vunpack.c.h.b16 %v7246
  %v7556 = vunpack.c.l.b16 %v7247
  %v7557 = vunpack.c.h.b16 %v7247
  %v7558 = vunpack.c.l.b16 %v7248
  %v7559 = vunpack.c.h.b16 %v7248
  %v7560 = vunpack.c.l.b16 %v7249
  %v7561 = vunpack.c.h.b16 %v7249
  %v7562 = vunpack.c.l.b16 %v7250
  %v7563 = vunpack.c.h.b16 %v7250
  %v7564 = vunpack.c.l.b16 %v7251
  %v7565 = vunpack.c.h.b16 %v7251
  %v7566 = vunpack.c.l.b16 %v7252
  %v7567 = vunpack.c.h.b16 %v7252
  %v7568 = vunpack.c.l.b16 %v7253
  %v7569 = vunpack.c.h.b16 %v7253
  %v7570 = vunpack.c.l.b16 %v7254
  %v7571 = vunpack.c.h.b16 %v7254
  %v7572 = vunpack.c.l.b16 %v7255
  %v7573 = vunpack.c.h.b16 %v7255
  %v7574 = vunpack.c.l.b16 %v7256
  %v7575 = vunpack.c.h.b16 %v7256
  %v7576 = vunpack.c.l.b16 %v7257
  %v7577 = vunpack.c.h.b16 %v7257
  %v7578 = vunpack.c.l.b16 %v7258
  %v7579 = vunpack.c.h.b16 %v7258
  %v7580 = vunpack.c.l.b16 %v7259
  %v7581 = vunpack.c.h.b16 %v7259
  %v7582 = vunpack.c.l.b16 %v7260
  %v7583 = vunpack.c.h.b16 %v7260
  %v7584 = vunpack.c.l.b16 %v7261
  %v7585 = vunpack.c.h.b16 %v7261
  %v7586 = vunpack.c.l.b16 %v7262
  %v7587 = vunpack.c.h.b16 %v7262
  %v7588 = vunpack.c.l.b16 %v7263
  %v7589 = vunpack.c.h.b16 %v7263
  %v7590 = vunpack.c.l.b16 %v7264
  %v7591 = vunpack.c.h.b16 %v7264
  %v7592 = vunpack.c.l.b16 %v7265
  %v7593 = vunpack.c.h.b16 %v7265
  %v7594 = vunpack.c.l.b16 %v7266
  %v7595 = vunpack.c.h.b16 %v7266
  %v7596 = vunpack.c.l.b16 %v7267
  %v7597 = vunpack.c.h.b16 %v7267
  %v7598 = vunpack.c.l.b16 %v7268
  %v7599 = vunpack.c.h.b16 %v7268
  %v7600 = vunpack.c.l.b16 %v7269
  %v7601 = vunpack.c.h.b16 %v7269
  %v7602 = vunpack.c.l.b16 %v7270
  %v7603 = vunpack.c.h.b16 %v7270
  %v7604 = vunpack.c.l.b16 %v7271
  %v7605 = vunpack.c.h.b16 %v7271
  %v7606 = vunpack.c.l.b16 %v7272
  %v7607 = vunpack.c.h.b16 %v7272
  %v7608 = vunpack.c.l.b16 %v7273
  %v7609 = vunpack.c.h.b16 %v7273
  %v7610 = vunpack.c.l.b16 %v7274
  %v7611 = vunpack.c.h.b16 %v7274
  %v7612 = vunpack.c.l.b16 %v7275
  %v7613 = vunpack.c.h.b16 %v7275
  %v7614 = vunpack.c.l.b16 %v7276
  %v7615 = vunpack.c.h.b16 %v7276
  %v7616 = vunpack.c.l.b16 %v7277
  %v7617 = vunpack.c.h.b16 %v7277
  %v7618 = vunpack.c.l.b16 %v7278
  %v7619 = vunpack.c.h.b16 %v7278
  %v7620 = vunpack.c.l.b16 %v7279
  %v7621 = vunpack.c.h.b16 %v7279
  %v7622 = vunpack.c.l.b16 %v7280
  %v7623 = vunpack.c.h.b16 %v7280
  %v7624 = vunpack.c.l.b16 %v7281
  %v7625 = vunpack.c.h.b16 %v7281
  %v7626 = vunpack.c.l.b16 %v7282
  %v7627 = vunpack.c.h.b16 %v7282
  %v7628 = vunpack.c.l.b16 %v7283
  %v7629 = vunpack.c.h.b16 %v7283
  %v7630 = vunpack.c.l.b16 %v7284
  %v7631 = vunpack.c.h.b16 %v7284
  %v7632 = vunpack.c.l.b16 %v7285
  %v7633 = vunpack.c.h.b16 %v7285
  %v7634 = vunpack.c.l.b16 %v7286
  %v7635 = vunpack.c.h.b16 %v7286
  %v7636 = vunpack.c.l.b16 %v7287
  %v7637 = vunpack.c.h.b16 %v7287
  %v7638 = vunpack.c.l.b16 %v7288
  %v7639 = vunpack.c.h.b16 %v7288
  %v7640 = vunpack.c.l.b16 %v7289
  %v7641 = vunpack.c.h.b16 %v7289
  %v7642 = vunpack.c.l.b16 %v7290
  %v7643 = vunpack.c.h.b16 %v7290
  %v7644 = vunpack.c.l.b16 %v7291
  %v7645 = vunpack.c.h.b16 %v7291
  %v7646 = vunpack.c.l.b16 %v7292
  %v7647 = vunpack.c.h.b16 %v7292
  %v7648 = vunpack.c.l.b16 %v7293
  %v7649 = vunpack.c.h.b16 %v7293
  %v7650 = vunpack.c.l.b16 %v7294
  %v7651 = vunpack.c.h.b16 %v7294
  %v7652 = vunpack.c.l.b16 %v7295
  %v7653 = vunpack.c.h.b16 %v7295
  %v7654 = vunpack.c.l.b16 %v7296
  %v7655 = vunpack.c.h.b16 %v7296
  %v7656 = vunpack.c.l.b16 %v7297
  %v7657 = vunpack.c.h.b16 %v7297
  %v7658 = vunpack.c.l.b16 %v7298
  %v7659 = vunpack.c.h.b16 %v7298
  %v7660 = vunpack.c.l.b16 %v7299
  %v7661 = vunpack.c.h.b16 %v7299
  %v7662 = vunpack.c.l.b16 %v7300
  %v7663 = vunpack.c.h.b16 %v7300
  %v7664 = vunpack.c.l.b16 %v7301
  %v7665 = vunpack.c.h.b16 %v7301
  %v7666 = vunpack.c.l.b16 %v7302
  %v7667 = vunpack.c.h.b16 %v7302
  %v7668 = vunpack.c.l.b16 %v7303
  %v7669 = vunpack.c.h.b16 %v7303
  %v7670 = vunpack.c.l.b16 %v7304
  %v7671 = vunpack.c.h.b16 %v7304
  %v7672 = vunpack.c.l.b16 %v7305
  %v7673 = vunpack.c.h.b16 %v7305
  %v7674 = vunpack.c.l.b16 %v7306
  %v7675 = vunpack.c.h.b16 %v7306
  %v7676 = vunpack.c.l.b16 %v7307
  %v7677 = vunpack.c.h.b16 %v7307
  %v7678 = vunpack.c.l.b16 %v7308
  %v7679 = vunpack.c.h.b16 %v7308
  %v7680 = vunpack.c.l.b16 %v7309
  %v7681 = vunpack.c.h.b16 %v7309
  %v7682 = vunpack.c.l.b16 %v7310
  %v7683 = vunpack.c.h.b16 %v7310
  %v7684 = vunpack.c.l.b16 %v7311
  %v7685 = vunpack.c.h.b16 %v7311
  %v7686 = vunpack.c.l.b16 %v7312
  %v7687 = vunpack.c.h.b16 %v7312
  %v7688 = vunpack.c.l.b16 %v7313
  %v7689 = vunpack.c.h.b16 %v7313
  %v7690 = vunpack.c.l.b16 %v7314
  %v7691 = vunpack.c.h.b16 %v7314
  %v7692 = vunpack.c.l.b16 %v7315
  %v7693 = vunpack.c.h.b16 %v7315
  %v7694 = vunpack.c.l.b16 %v7316
  %v7695 = vunpack.c.h.b16 %v7316
  %v7696 = vunpack.c.l.b16 %v7317
  %v7697 = vunpack.c.h.b16 %v7317
  %v7698 = vunpack.c.l.b16 %v7318
  %v7699 = vunpack.c.h.b16 %v7318
  %v7700 = vunpack.c.l.b16 %v7319
  %v7701 = vunpack.c.h.b16 %v7319
  %v7702 = vunpack.c.l.b16 %v7320
  %v7703 = vunpack.c.h.b16 %v7320
  %v7704 = vunpack.c.l.b16 %v7321
  %v7705 = vunpack.c.h.b16 %v7321
  %v7706 = vpack.c.b16 %v7458, %v7450
  %v7707 = vpack.c.b16 %v7459, %v7451
  %v7708 = vpack.c.b16 %v7460, %v7452
  %v7709 = vpack.c.b16 %v7461, %v7453
  %v7710 = vpack.c.b16 %v7462, %v7454
  %v7711 = vpack.c.b16 %v7463, %v7455
  %v7712 = vpack.c.b16 %v7464, %v7456
  %v7713 = vpack.c.b16 %v7465, %v7457
  %v7714 = vpack.c.b16 %v7474, %v7466
  %v7715 = vpack.c.b16 %v7475, %v7467
  %v7716 = vpack.c.b16 %v7476, %v7468
  %v7717 = vpack.c.b16 %v7477, %v7469
  %v7718 = vpack.c.b16 %v7478, %v7470
  %v7719 = vpack.c.b16 %v7479, %v7471
  %v7720 = vpack.c.b16 %v7480, %v7472
  %v7721 = vpack.c.b16 %v7481, %v7473
  %v7722 = vpack.c.b16 %v7490, %v7482
  %v7723 = vpack.c.b16 %v7491, %v7483
  %v7724 = vpack.c.b16 %v7492, %v7484
  %v7725 = vpack.c.b16 %v7493, %v7485
  %v7726 = vpack.c.b16 %v7494, %v7486
  %v7727 = vpack.c.b16 %v7495, %v7487
  %v7728 = vpack.c.b16 %v7496, %v7488
  %v7729 = vpack.c.b16 %v7497, %v7489
  %v7730 = vpack.c.b16 %v7506, %v7498
  %v7731 = vpack.c.b16 %v7507, %v7499
  %v7732 = vpack.c.b16 %v7508, %v7500
  %v7733 = vpack.c.b16 %v7509, %v7501
  %v7734 = vpack.c.b16 %v7510, %v7502
  %v7735 = vpack.c.b16 %v7511, %v7503
  %v7736 = vpack.c.b16 %v7512, %v7504
  %v7737 = vpack.c.b16 %v7513, %v7505
  %v7738 = vpack.c.b16 %v7522, %v7514
  %v7739 = vpack.c.b16 %v7523, %v7515
  %v7740 = vpack.c.b16 %v7524, %v7516
  %v7741 = vpack.c.b16 %v7525, %v7517
  %v7742 = vpack.c.b16 %v7526, %v7518
  %v7743 = vpack.c.b16 %v7527, %v7519
  %v7744 = vpack.c.b16 %v7528, %v7520
  %v7745 = vpack.c.b16 %v7529, %v7521
  %v7746 = vpack.c.b16 %v7538, %v7530
  %v7747 = vpack.c.b16 %v7539, %v7531
  %v7748 = vpack.c.b16 %v7540, %v7532
  %v7749 = vpack.c.b16 %v7541, %v7533
  %v7750 = vpack.c.b16 %v7542, %v7534
  %v7751 = vpack.c.b16 %v7543, %v7535
  %v7752 = vpack.c.b16 %v7544, %v7536
  %v7753 = vpack.c.b16 %v7545, %v7537
  %v7754 = vpack.c.b16 %v7554, %v7546
  %v7755 = vpack.c.b16 %v7555, %v7547
  %v7756 = vpack.c.b16 %v7556, %v7548
  %v7757 = vpack.c.b16 %v7557, %v7549
  %v7758 = vpack.c.b16 %v7558, %v7550
  %v7759 = vpack.c.b16 %v7559, %v7551
  %v7760 = vpack.c.b16 %v7560, %v7552
  %v7761 = vpack.c.b16 %v7561, %v7553
  %v7762 = vpack.c.b16 %v7570, %v7562
  %v7763 = vpack.c.b16 %v7571, %v7563
  %v7764 = vpack.c.b16 %v7572, %v7564
  %v7765 = vpack.c.b16 %v7573, %v7565
  %v7766 = vpack.c.b16 %v7574, %v7566
  %v7767 = vpack.c.b16 %v7575, %v7567
  %v7768 = vpack.c.b16 %v7576, %v7568
  %v7769 = vpack.c.b16 %v7577, %v7569
  %v7770 = vpack.c.b16 %v7586, %v7578
  %v7771 = vpack.c.b16 %v7587, %v7579
  %v7772 = vpack.c.b16 %v7588, %v7580
  %v7773 = vpack.c.b16 %v7589, %v7581
  %v7774 = vpack.c.b16 %v7590, %v7582
  %v7775 = vpack.c.b16 %v7591, %v7583
  %v7776 = vpack.c.b16 %v7592, %v7584
  %v7777 = vpack.c.b16 %v7593, %v7585
  %v7778 = vpack.c.b16 %v7602, %v7594
  %v7779 = vpack.c.b16 %v7603, %v7595
  %v7780 = vpack.c.b16 %v7604, %v7596
  %v7781 = vpack.c.b16 %v7605, %v7597
  %v7782 = vpack.c.b16 %v7606, %v7598
  %v7783 = vpack.c.b16 %v7607, %v7599
  %v7784 = vpack.c.b16 %v7608, %v7600
  %v7785 = vpack.c.b16 %v7609, %v7601
  %v7786 = vpack.c.b16 %v7618, %v7610
  %v7787 = vpack.c.b16 %v7619, %v7611
  %v7788 = vpack.c.b16 %v7620, %v7612
  %v7789 = vpack.c.b16 %v7621, %v7613
  %v7790 = vpack.c.b16 %v7622, %v7614
  %v7791 = vpack.c.b16 %v7623, %v7615
  %v7792 = vpack.c.b16 %v7624, %v7616
  %v7793 = vpack.c.b16 %v7625, %v7617
  %v7794 = vpack.c.b16 %v7634, %v7626
  %v7795 = vpack.c.b16 %v7635, %v7627
  %v7796 = vpack.c.b16 %v7636, %v7628
  %v7797 = vpack.c.b16 %v7637, %v7629
  %v7798 = vpack.c.b16 %v7638, %v7630
  %v7799 = vpack.c.b16 %v7639, %v7631
  %v7800 = vpack.c.b16 %v7640, %v7632
  %v7801 = vpack.c.b16 %v7641, %v7633
  %v7802 = vpack.c.b16 %v7650, %v7642
  %v7803 = vpack.c.b16 %v7651, %v7643
  %v7804 = vpack.c.b16 %v7652, %v7644
  %v7805 = vpack.c.b16 %v7653, %v7645
  %v7806 = vpack.c.b16 %v7654, %v7646
  %v7807 = vpack.c.b16 %v7655, %v7647
  %v7808 = vpack.c.b16 %v7656, %v7648
  %v7809 = vpack.c.b16 %v7657, %v7649
  %v7810 = vpack.c.b16 %v7666, %v7658
  %v7811 = vpack.c.b16 %v7667, %v7659
  %v7812 = vpack.c.b16 %v7668, %v7660
  %v7813 = vpack.c.b16 %v7669, %v7661
  %v7814 = vpack.c.b16 %v7670, %v7662
  %v7815 = vpack.c.b16 %v7671, %v7663
  %v7816 = vpack.c.b16 %v7672, %v7664
  %v7817 = vpack.c.b16 %v7673, %v7665
  %v7818 = vpack.c.b16 %v7682, %v7674
  %v7819 = vpack.c.b16 %v7683, %v7675
  %v7820 = vpack.c.b16 %v7684, %v7676
  %v7821 = vpack.c.b16 %v7685, %v7677
  %v7822 = vpack.c.b16 %v7686, %v7678
  %v7823 = vpack.c.b16 %v7687, %v7679
  %v7824 = vpack.c.b16 %v7688, %v7680
  %v7825 = vpack.c.b16 %v7689, %v7681
  %v7826 = vpack.c.b16 %v7698, %v7690
  %v7827 = vpack.c.b16 %v7699, %v7691
  %v7828 = vpack.c.b16 %v7700, %v7692
  %v7829 = vpack.c.b16 %v7701, %v7693
  %v7830 = vpack.c.b16 %v7702, %v7694
  %v7831 = vpack.c.b16 %v7703, %v7695
  %v7832 = vpack.c.b16 %v7704, %v7696
  %v7833 = vpack.c.b16 %v7705, %v7697
  %7962 = vmatprep.subr.bf16.mxu0 %v7707
  %7963 = vmatpush1.bf16.msra.mxu0 %v7706
  %7964 = vmatprep.subr.bf16.mxu0 %v7715
  %7965 = vmatpush1.bf16.msra.mxu0 %v7714
  %7966 = vmatprep.subr.bf16.mxu0 %v7723
  %7967 = vmatpush1.bf16.msra.mxu0 %v7722
  %7968 = vmatprep.subr.bf16.mxu0 %v7731
  %7969 = vmatpush1.bf16.msra.mxu0 %v7730
  %7970 = vmatprep.subr.bf16.mxu0 %v7739
  %7971 = vmatpush1.bf16.msra.mxu0 %v7738
  %7972 = vmatprep.subr.bf16.mxu0 %v7747
  %7973 = vmatpush1.bf16.msra.mxu0 %v7746
  %7974 = vmatprep.subr.bf16.mxu0 %v7755
  %7975 = vmatpush1.bf16.msra.mxu0 %v7754
  %7976 = vmatprep.subr.bf16.mxu0 %v7763
  %7977 = vmatpush1.bf16.msra.mxu0 %v7762
  %7978 = vmatprep.subr.bf16.mxu0 %v7771
  %7979 = vmatpush1.bf16.msra.mxu0 %v7770
  %7980 = vmatprep.subr.bf16.mxu0 %v7779
  %7981 = vmatpush1.bf16.msra.mxu0 %v7778
  %7982 = vmatprep.subr.bf16.mxu0 %v7787
  %7983 = vmatpush1.bf16.msra.mxu0 %v7786
  %7984 = vmatprep.subr.bf16.mxu0 %v7795
  %7985 = vmatpush1.bf16.msra.mxu0 %v7794
  %7986 = vmatprep.subr.bf16.mxu0 %v7803
  %7987 = vmatpush1.bf16.msra.mxu0 %v7802
  %7988 = vmatprep.subr.bf16.mxu0 %v7811
  %7989 = vmatpush1.bf16.msra.mxu0 %v7810
  %7990 = vmatprep.subr.bf16.mxu0 %v7819
  %7991 = vmatpush1.bf16.msra.mxu0 %v7818
  %7992 = vmatprep.subr.bf16.mxu0 %v7827
  %7993 = vmatpush1.bf16.msra.mxu0 %v7826
  %7994 = vmatprep.mubr.bf16.mxu0 %v7193
  %7995 = vmatmul.mubr.bf16.gmra.mrb[0].mxu0 %v7192
  %v7996 = vpop.f32.mrb[0].mxu0
  %v7997 = vadd.f32 0.0, %v7996
  %v7998 = vpop.f32.mrb[0].mxu0
  %v7999 = vadd.f32 0.0, %v7998
  %v8000 = vpop.f32.mrb[0].mxu0
  %v8001 = vpop.f32.mrb[0].mxu0
  %8002 = vdwg.mxu0
  %8003 = vmatprep.subr.bf16.mxu0 %v7709
  %8004 = vmatpush1.bf16.msra.mxu0 %v7708
  %8005 = vmatprep.subr.bf16.mxu0 %v7717
  %8006 = vmatpush1.bf16.msra.mxu0 %v7716
  %8007 = vmatprep.subr.bf16.mxu0 %v7725
  %8008 = vmatpush1.bf16.msra.mxu0 %v7724
  %8009 = vmatprep.subr.bf16.mxu0 %v7733
  %8010 = vmatpush1.bf16.msra.mxu0 %v7732
  %8011 = vmatprep.subr.bf16.mxu0 %v7741
  %8012 = vmatpush1.bf16.msra.mxu0 %v7740
  %8013 = vmatprep.subr.bf16.mxu0 %v7749
  %8014 = vmatpush1.bf16.msra.mxu0 %v7748
  %8015 = vmatprep.subr.bf16.mxu0 %v7757
  %8016 = vmatpush1.bf16.msra.mxu0 %v7756
  %8017 = vmatprep.subr.bf16.mxu0 %v7765
  %8018 = vmatpush1.bf16.msra.mxu0 %v7764
  %8019 = vmatprep.subr.bf16.mxu0 %v7773
  %8020 = vmatpush1.bf16.msra.mxu0 %v7772
  %8021 = vmatprep.subr.bf16.mxu0 %v7781
  %8022 = vmatpush1.bf16.msra.mxu0 %v7780
  %8023 = vmatprep.subr.bf16.mxu0 %v7789
  %8024 = vmatpush1.bf16.msra.mxu0 %v7788
  %8025 = vmatprep.subr.bf16.mxu0 %v7797
  %8026 = vmatpush1.bf16.msra.mxu0 %v7796
  %8027 = vmatprep.subr.bf16.mxu0 %v7805
  %8028 = vmatpush1.bf16.msra.mxu0 %v7804
  %8029 = vmatprep.subr.bf16.mxu0 %v7813
  %8030 = vmatpush1.bf16.msra.mxu0 %v7812
  %8031 = vmatprep.subr.bf16.mxu0 %v7821
  %8032 = vmatpush1.bf16.msra.mxu0 %v7820
  %8033 = vmatprep.subr.bf16.mxu0 %v7829
  %8034 = vmatpush1.bf16.msra.mxu0 %v7828
  %8035 = vmatprep.mubr.bf16.mxu0 %v7193
  %8036 = vmatmul.mubr.bf16.gmra.mrb[0].mxu0 %v7192
  %v8037 = vpop.f32.mrb[0].mxu0
  %v8038 = vadd.f32 0.0, %v8037
  %v8039 = vpop.f32.mrb[0].mxu0
  %v8040 = vadd.f32 0.0, %v8039
  %v8041 = vpop.f32.mrb[0].mxu0
  %v8042 = vpop.f32.mrb[0].mxu0
  %8043 = vdwg.mxu0
  %8044 = vmatprep.subr.bf16.mxu0 %v7711
  %8045 = vmatpush1.bf16.msra.mxu0 %v7710
  %8046 = vmatprep.subr.bf16.mxu0 %v7719
  %8047 = vmatpush1.bf16.msra.mxu0 %v7718
  %8048 = vmatprep.subr.bf16.mxu0 %v7727
  %8049 = vmatpush1.bf16.msra.mxu0 %v7726
  %8050 = vmatprep.subr.bf16.mxu0 %v7735
  %8051 = vmatpush1.bf16.msra.mxu0 %v7734
  %8052 = vmatprep.subr.bf16.mxu0 %v7743
  %8053 = vmatpush1.bf16.msra.mxu0 %v7742
  %8054 = vmatprep.subr.bf16.mxu0 %v7751
  %8055 = vmatpush1.bf16.msra.mxu0 %v7750
  %8056 = vmatprep.subr.bf16.mxu0 %v7759
  %8057 = vmatpush1.bf16.msra.mxu0 %v7758
  %8058 = vmatprep.subr.bf16.mxu0 %v7767
  %8059 = vmatpush1.bf16.msra.mxu0 %v7766
  %8060 = vmatprep.subr.bf16.mxu0 %v7775
  %8061 = vmatpush1.bf16.msra.mxu0 %v7774
  %8062 = vmatprep.subr.bf16.mxu0 %v7783
  %8063 = vmatpush1.bf16.msra.mxu0 %v7782
  %8064 = vmatprep.subr.bf16.mxu0 %v7791
  %8065 = vmatpush1.bf16.msra.mxu0 %v7790
  %8066 = vmatprep.subr.bf16.mxu0 %v7799
  %8067 = vmatpush1.bf16.msra.mxu0 %v7798
  %8068 = vmatprep.subr.bf16.mxu0 %v7807
  %8069 = vmatpush1.bf16.msra.mxu0 %v7806
  %8070 = vmatprep.subr.bf16.mxu0 %v7815
  %8071 = vmatpush1.bf16.msra.mxu0 %v7814
  %8072 = vmatprep.subr.bf16.mxu0 %v7823
  %8073 = vmatpush1.bf16.msra.mxu0 %v7822
  %8074 = vmatprep.subr.bf16.mxu0 %v7831
  %8075 = vmatpush1.bf16.msra.mxu0 %v7830
  %8076 = vmatprep.mubr.bf16.mxu0 %v7193
  %8077 = vmatmul.mubr.bf16.gmra.mrb[0].mxu0 %v7192
  %v8078 = vpop.f32.mrb[0].mxu0
  %v8079 = vadd.f32 0.0, %v8078
  %v8080 = vpop.f32.mrb[0].mxu0
  %v8081 = vadd.f32 0.0, %v8080
  %v8082 = vpop.f32.mrb[0].mxu0
  %v8083 = vpop.f32.mrb[0].mxu0
  %8084 = vdwg.mxu0
  %8085 = vmatprep.subr.bf16.mxu0 %v7713
  %8086 = vmatpush1.bf16.msra.mxu0 %v7712
  %8087 = vmatprep.subr.bf16.mxu0 %v7721
  %8088 = vmatpush1.bf16.msra.mxu0 %v7720
  %8089 = vmatprep.subr.bf16.mxu0 %v7729
  %8090 = vmatpush1.bf16.msra.mxu0 %v7728
  %8091 = vmatprep.subr.bf16.mxu0 %v7737
  %8092 = vmatpush1.bf16.msra.mxu0 %v7736
  %8093 = vmatprep.subr.bf16.mxu0 %v7745
  %8094 = vmatpush1.bf16.msra.mxu0 %v7744
  %8095 = vmatprep.subr.bf16.mxu0 %v7753
  %8096 = vmatpush1.bf16.msra.mxu0 %v7752
  %8097 = vmatprep.subr.bf16.mxu0 %v7761
  %8098 = vmatpush1.bf16.msra.mxu0 %v7760
  %8099 = vmatprep.subr.bf16.mxu0 %v7769
  %8100 = vmatpush1.bf16.msra.mxu0 %v7768
  %8101 = vmatprep.subr.bf16.mxu0 %v7777
  %8102 = vmatpush1.bf16.msra.mxu0 %v7776
  %8103 = vmatprep.subr.bf16.mxu0 %v7785
  %8104 = vmatpush1.bf16.msra.mxu0 %v7784
  %8105 = vmatprep.subr.bf16.mxu0 %v7793
  %8106 = vmatpush1.bf16.msra.mxu0 %v7792
  %8107 = vmatprep.subr.bf16.mxu0 %v7801
  %8108 = vmatpush1.bf16.msra.mxu0 %v7800
  %8109 = vmatprep.subr.bf16.mxu0 %v7809
  %8110 = vmatpush1.bf16.msra.mxu0 %v7808
  %8111 = vmatprep.subr.bf16.mxu0 %v7817
  %8112 = vmatpush1.bf16.msra.mxu0 %v7816
  %8113 = vmatprep.subr.bf16.mxu0 %v7825
  %8114 = vmatpush1.bf16.msra.mxu0 %v7824
  %8115 = vmatprep.subr.bf16.mxu0 %v7833
  %8116 = vmatpush1.bf16.msra.mxu0 %v7832
  %8117 = vmatprep.mubr.bf16.mxu0 %v7193
  %8118 = vmatmul.mubr.bf16.gmra.mrb[0].mxu0 %v7192
  %v8119 = vpop.f32.mrb[0].mxu0
  %v8120 = vadd.f32 0.0, %v8119
  %v8121 = vpop.f32.mrb[0].mxu0
  %v8122 = vadd.f32 0.0, %v8121
  %v8123 = vpop.f32.mrb[0].mxu0
  %v8124 = vpop.f32.mrb[0].mxu0
  %8125 = vdwg.mxu0
  %v8126 = vadd.f32 %v3186, %v7997
  %v8127 = vadd.f32 %v3188, %v7999
  %v8128 = vadd.f32 %v3227, %v8038
  %v8129 = vadd.f32 %v3229, %v8040
  %v8130 = vmul.f32 %v8126, 0.5
  %v8131 = vtanh.pop %v8130
  %v8132 = vmul.f32 %v8131, 0.5
  %v8133 = vadd.f32 %v8132, 0.5
  %v8134 = vmul.f32 %v8127, 0.5
  %v8135 = vtanh.pop %v8134
  %v8136 = vmul.f32 %v8135, 0.5
  %v8137 = vadd.f32 %v8136, 0.5
  %v8138 = vtanh.pop %v8128
  %v8139 = vmul.f32 %v8129, 0.5
  %v8140 = vtanh.pop %v8139
  %v8141 = vmul.f32 %v8140, 0.5
  %v8142 = vadd.f32 %v8141, 0.5
  %v8143 = vmul.f32 %v8137, %v7166
  %v8144 = vmul.f32 %v8133, %v8138
  %v8145 = vadd.f32 %v8143, %v8144
  %v8146 = vtanh.pop %v8145
  %v8147 = vmul.f32 %v8142, %v8146
  %v8148 = vadd.f32 %v3238, %v8079
  %v8149 = vadd.f32 %v3242, %v8081
  %v8150 = vadd.f32 %v3246, %v8120
  %v8151 = vadd.f32 %v3250, %v8122
  %v8152 = vmul.f32 %v8148, 0.5
  %v8153 = vtanh.pop %v8152
  %v8154 = vmul.f32 %v8153, 0.5
  %v8155 = vadd.f32 %v8154, 0.5
  %v8156 = vmul.f32 %v8149, 0.5
  %v8157 = vtanh.pop %v8156
  %v8158 = vmul.f32 %v8157, 0.5
  %v8159 = vadd.f32 %v8158, 0.5
  %v8160 = vtanh.pop %v8150
  %v8161 = vmul.f32 %v8151, 0.5
  %v8162 = vtanh.pop %v8161
  %v8163 = vmul.f32 %v8162, 0.5
  %v8164 = vadd.f32 %v8163, 0.5
  %v8165 = vmul.f32 %v8159, %v7188
  %v8166 = vmul.f32 %v8155, %v8160
  %v8167 = vadd.f32 %v8165, %v8166
  %v8168 = vtanh.pop %v8167
  %v8169 = vmul.f32 %v8164, %v8168
  %8170 = vst [vmem:[#allocation3 + $0x20] sm:$0xff] %v8169
  %v8171 = vpack.c.bf16 %v8147, %v8147
  %v8172 = vpack.c.bf16 %v8169, %v8169
  %v8173 = vld [vmem:[%s8] sm:$0xff]
  %v8174 = vld [vmem:[%s8 + $0x8] sm:$0xff]
  %v8175 = vld [vmem:[%s8 + $0x10] sm:$0xff]
  %v8176 = vld [vmem:[%s8 + $0x18] sm:$0xff]
  %v8177 = vld [vmem:[%s8 + $0x20] sm:$0xff]
  %v8178 = vld [vmem:[%s8 + $0x28] sm:$0xff]
  %v8179 = vld [vmem:[%s8 + $0x30] sm:$0xff]
  %v8180 = vld [vmem:[%s8 + $0x38] sm:$0xff]
  %v8181 = vld [vmem:[%s8 + $0x40] sm:$0xff]
  %v8182 = vld [vmem:[%s8 + $0x48] sm:$0xff]
  %v8183 = vld [vmem:[%s8 + $0x50] sm:$0xff]
  %v8184 = vld [vmem:[%s8 + $0x58] sm:$0xff]
  %v8185 = vld [vmem:[%s8 + $0x60] sm:$0xff]
  %v8186 = vld [vmem:[%s8 + $0x68] sm:$0xff]
  %v8187 = vld [vmem:[%s8 + $0x70] sm:$0xff]
  %v8188 = vld [vmem:[%s8 + $0x78] sm:$0xff]
  %v8189 = vld [vmem:[%s8 + $0x80] sm:$0xff]
  %v8190 = vld [vmem:[%s8 + $0x88] sm:$0xff]
  %v8191 = vld [vmem:[%s8 + $0x90] sm:$0xff]
  %v8192 = vld [vmem:[%s8 + $0x98] sm:$0xff]
  %v8193 = vld [vmem:[%s8 + $0xa0] sm:$0xff]
  %v8194 = vld [vmem:[%s8 + $0xa8] sm:$0xff]
  %v8195 = vld [vmem:[%s8 + $0xb0] sm:$0xff]
  %v8196 = vld [vmem:[%s8 + $0xb8] sm:$0xff]
  %v8197 = vld [vmem:[%s8 + $0xc0] sm:$0xff]
  %v8198 = vld [vmem:[%s8 + $0xc8] sm:$0xff]
  %v8199 = vld [vmem:[%s8 + $0xd0] sm:$0xff]
  %v8200 = vld [vmem:[%s8 + $0xd8] sm:$0xff]
  %v8201 = vld [vmem:[%s8 + $0xe0] sm:$0xff]
  %v8202 = vld [vmem:[%s8 + $0xe8] sm:$0xff]
  %v8203 = vld [vmem:[%s8 + $0xf0] sm:$0xff]
  %v8204 = vld [vmem:[%s8 + $0xf8] sm:$0xff]
  %v8205 = vld [vmem:[%s8 + $0x100] sm:$0xff]
  %v8206 = vld [vmem:[%s8 + $0x108] sm:$0xff]
  %v8207 = vld [vmem:[%s8 + $0x110] sm:$0xff]
  %v8208 = vld [vmem:[%s8 + $0x118] sm:$0xff]
  %v8209 = vld [vmem:[%s8 + $0x120] sm:$0xff]
  %v8210 = vld [vmem:[%s8 + $0x128] sm:$0xff]
  %v8211 = vld [vmem:[%s8 + $0x130] sm:$0xff]
  %v8212 = vld [vmem:[%s8 + $0x138] sm:$0xff]
  %v8213 = vld [vmem:[%s8 + $0x140] sm:$0xff]
  %v8214 = vld [vmem:[%s8 + $0x148] sm:$0xff]
  %v8215 = vld [vmem:[%s8 + $0x150] sm:$0xff]
  %v8216 = vld [vmem:[%s8 + $0x158] sm:$0xff]
  %v8217 = vld [vmem:[%s8 + $0x160] sm:$0xff]
  %v8218 = vld [vmem:[%s8 + $0x168] sm:$0xff]
  %v8219 = vld [vmem:[%s8 + $0x170] sm:$0xff]
  %v8220 = vld [vmem:[%s8 + $0x178] sm:$0xff]
  %v8221 = vld [vmem:[%s8 + $0x180] sm:$0xff]
  %v8222 = vld [vmem:[%s8 + $0x188] sm:$0xff]
  %v8223 = vld [vmem:[%s8 + $0x190] sm:$0xff]
  %v8224 = vld [vmem:[%s8 + $0x198] sm:$0xff]
  %v8225 = vld [vmem:[%s8 + $0x1a0] sm:$0xff]
  %v8226 = vld [vmem:[%s8 + $0x1a8] sm:$0xff]
  %v8227 = vld [vmem:[%s8 + $0x1b0] sm:$0xff]
  %v8228 = vld [vmem:[%s8 + $0x1b8] sm:$0xff]
  %v8229 = vld [vmem:[%s8 + $0x1c0] sm:$0xff]
  %v8230 = vld [vmem:[%s8 + $0x1c8] sm:$0xff]
  %v8231 = vld [vmem:[%s8 + $0x1d0] sm:$0xff]
  %v8232 = vld [vmem:[%s8 + $0x1d8] sm:$0xff]
  %v8233 = vld [vmem:[%s8 + $0x1e0] sm:$0xff]
  %v8234 = vld [vmem:[%s8 + $0x1e8] sm:$0xff]
  %v8235 = vld [vmem:[%s8 + $0x1f0] sm:$0xff]
  %v8236 = vld [vmem:[%s8 + $0x1f8] sm:$0xff]
  %v8237 = vld [vmem:[%s8 + $0x200] sm:$0xff]
  %v8238 = vld [vmem:[%s8 + $0x208] sm:$0xff]
  %v8239 = vld [vmem:[%s8 + $0x210] sm:$0xff]
  %v8240 = vld [vmem:[%s8 + $0x218] sm:$0xff]
  %v8241 = vld [vmem:[%s8 + $0x220] sm:$0xff]
  %v8242 = vld [vmem:[%s8 + $0x228] sm:$0xff]
  %v8243 = vld [vmem:[%s8 + $0x230] sm:$0xff]
  %v8244 = vld [vmem:[%s8 + $0x238] sm:$0xff]
  %v8245 = vld [vmem:[%s8 + $0x240] sm:$0xff]
  %v8246 = vld [vmem:[%s8 + $0x248] sm:$0xff]
  %v8247 = vld [vmem:[%s8 + $0x250] sm:$0xff]
  %v8248 = vld [vmem:[%s8 + $0x258] sm:$0xff]
  %v8249 = vld [vmem:[%s8 + $0x260] sm:$0xff]
  %v8250 = vld [vmem:[%s8 + $0x268] sm:$0xff]
  %v8251 = vld [vmem:[%s8 + $0x270] sm:$0xff]
  %v8252 = vld [vmem:[%s8 + $0x278] sm:$0xff]
  %v8253 = vld [vmem:[%s8 + $0x280] sm:$0xff]
  %v8254 = vld [vmem:[%s8 + $0x288] sm:$0xff]
  %v8255 = vld [vmem:[%s8 + $0x290] sm:$0xff]
  %v8256 = vld [vmem:[%s8 + $0x298] sm:$0xff]
  %v8257 = vld [vmem:[%s8 + $0x2a0] sm:$0xff]
  %v8258 = vld [vmem:[%s8 + $0x2a8] sm:$0xff]
  %v8259 = vld [vmem:[%s8 + $0x2b0] sm:$0xff]
  %v8260 = vld [vmem:[%s8 + $0x2b8] sm:$0xff]
  %v8261 = vld [vmem:[%s8 + $0x2c0] sm:$0xff]
  %v8262 = vld [vmem:[%s8 + $0x2c8] sm:$0xff]
  %v8263 = vld [vmem:[%s8 + $0x2d0] sm:$0xff]
  %v8264 = vld [vmem:[%s8 + $0x2d8] sm:$0xff]
  %v8265 = vld [vmem:[%s8 + $0x2e0] sm:$0xff]
  %v8266 = vld [vmem:[%s8 + $0x2e8] sm:$0xff]
  %v8267 = vld [vmem:[%s8 + $0x2f0] sm:$0xff]
  %v8268 = vld [vmem:[%s8 + $0x2f8] sm:$0xff]
  %v8269 = vld [vmem:[%s8 + $0x300] sm:$0xff]
  %v8270 = vld [vmem:[%s8 + $0x308] sm:$0xff]
  %v8271 = vld [vmem:[%s8 + $0x310] sm:$0xff]
  %v8272 = vld [vmem:[%s8 + $0x318] sm:$0xff]
  %v8273 = vld [vmem:[%s8 + $0x320] sm:$0xff]
  %v8274 = vld [vmem:[%s8 + $0x328] sm:$0xff]
  %v8275 = vld [vmem:[%s8 + $0x330] sm:$0xff]
  %v8276 = vld [vmem:[%s8 + $0x338] sm:$0xff]
  %v8277 = vld [vmem:[%s8 + $0x340] sm:$0xff]
  %v8278 = vld [vmem:[%s8 + $0x348] sm:$0xff]
  %v8279 = vld [vmem:[%s8 + $0x350] sm:$0xff]
  %v8280 = vld [vmem:[%s8 + $0x358] sm:$0xff]
  %v8281 = vld [vmem:[%s8 + $0x360] sm:$0xff]
  %v8282 = vld [vmem:[%s8 + $0x368] sm:$0xff]
  %v8283 = vld [vmem:[%s8 + $0x370] sm:$0xff]
  %v8284 = vld [vmem:[%s8 + $0x378] sm:$0xff]
  %v8285 = vld [vmem:[%s8 + $0x380] sm:$0xff]
  %v8286 = vld [vmem:[%s8 + $0x388] sm:$0xff]
  %v8287 = vld [vmem:[%s8 + $0x390] sm:$0xff]
  %v8288 = vld [vmem:[%s8 + $0x398] sm:$0xff]
  %v8289 = vld [vmem:[%s8 + $0x3a0] sm:$0xff]
  %v8290 = vld [vmem:[%s8 + $0x3a8] sm:$0xff]
  %v8291 = vld [vmem:[%s8 + $0x3b0] sm:$0xff]
  %v8292 = vld [vmem:[%s8 + $0x3b8] sm:$0xff]
  %v8293 = vld [vmem:[%s8 + $0x3c0] sm:$0xff]
  %v8294 = vld [vmem:[%s8 + $0x3c8] sm:$0xff]
  %v8295 = vld [vmem:[%s8 + $0x3d0] sm:$0xff]
  %v8296 = vld [vmem:[%s8 + $0x3d8] sm:$0xff]
  %v8297 = vld [vmem:[%s8 + $0x3e0] sm:$0xff]
  %v8298 = vld [vmem:[%s8 + $0x3e8] sm:$0xff]
  %v8299 = vld [vmem:[%s8 + $0x3f0] sm:$0xff]
  %v8300 = vld [vmem:[%s8 + $0x3f8] sm:$0xff]
  %v8429 = vunpack.c.l.b16 %v8173
  %v8430 = vunpack.c.h.b16 %v8173
  %v8431 = vunpack.c.l.b16 %v8174
  %v8432 = vunpack.c.h.b16 %v8174
  %v8433 = vunpack.c.l.b16 %v8175
  %v8434 = vunpack.c.h.b16 %v8175
  %v8435 = vunpack.c.l.b16 %v8176
  %v8436 = vunpack.c.h.b16 %v8176
  %v8437 = vunpack.c.l.b16 %v8177
  %v8438 = vunpack.c.h.b16 %v8177
  %v8439 = vunpack.c.l.b16 %v8178
  %v8440 = vunpack.c.h.b16 %v8178
  %v8441 = vunpack.c.l.b16 %v8179
  %v8442 = vunpack.c.h.b16 %v8179
  %v8443 = vunpack.c.l.b16 %v8180
  %v8444 = vunpack.c.h.b16 %v8180
  %v8445 = vunpack.c.l.b16 %v8181
  %v8446 = vunpack.c.h.b16 %v8181
  %v8447 = vunpack.c.l.b16 %v8182
  %v8448 = vunpack.c.h.b16 %v8182
  %v8449 = vunpack.c.l.b16 %v8183
  %v8450 = vunpack.c.h.b16 %v8183
  %v8451 = vunpack.c.l.b16 %v8184
  %v8452 = vunpack.c.h.b16 %v8184
  %v8453 = vunpack.c.l.b16 %v8185
  %v8454 = vunpack.c.h.b16 %v8185
  %v8455 = vunpack.c.l.b16 %v8186
  %v8456 = vunpack.c.h.b16 %v8186
  %v8457 = vunpack.c.l.b16 %v8187
  %v8458 = vunpack.c.h.b16 %v8187
  %v8459 = vunpack.c.l.b16 %v8188
  %v8460 = vunpack.c.h.b16 %v8188
  %v8461 = vunpack.c.l.b16 %v8189
  %v8462 = vunpack.c.h.b16 %v8189
  %v8463 = vunpack.c.l.b16 %v8190
  %v8464 = vunpack.c.h.b16 %v8190
  %v8465 = vunpack.c.l.b16 %v8191
  %v8466 = vunpack.c.h.b16 %v8191
  %v8467 = vunpack.c.l.b16 %v8192
  %v8468 = vunpack.c.h.b16 %v8192
  %v8469 = vunpack.c.l.b16 %v8193
  %v8470 = vunpack.c.h.b16 %v8193
  %v8471 = vunpack.c.l.b16 %v8194
  %v8472 = vunpack.c.h.b16 %v8194
  %v8473 = vunpack.c.l.b16 %v8195
  %v8474 = vunpack.c.h.b16 %v8195
  %v8475 = vunpack.c.l.b16 %v8196
  %v8476 = vunpack.c.h.b16 %v8196
  %v8477 = vunpack.c.l.b16 %v8197
  %v8478 = vunpack.c.h.b16 %v8197
  %v8479 = vunpack.c.l.b16 %v8198
  %v8480 = vunpack.c.h.b16 %v8198
  %v8481 = vunpack.c.l.b16 %v8199
  %v8482 = vunpack.c.h.b16 %v8199
  %v8483 = vunpack.c.l.b16 %v8200
  %v8484 = vunpack.c.h.b16 %v8200
  %v8485 = vunpack.c.l.b16 %v8201
  %v8486 = vunpack.c.h.b16 %v8201
  %v8487 = vunpack.c.l.b16 %v8202
  %v8488 = vunpack.c.h.b16 %v8202
  %v8489 = vunpack.c.l.b16 %v8203
  %v8490 = vunpack.c.h.b16 %v8203
  %v8491 = vunpack.c.l.b16 %v8204
  %v8492 = vunpack.c.h.b16 %v8204
  %v8493 = vunpack.c.l.b16 %v8205
  %v8494 = vunpack.c.h.b16 %v8205
  %v8495 = vunpack.c.l.b16 %v8206
  %v8496 = vunpack.c.h.b16 %v8206
  %v8497 = vunpack.c.l.b16 %v8207
  %v8498 = vunpack.c.h.b16 %v8207
  %v8499 = vunpack.c.l.b16 %v8208
  %v8500 = vunpack.c.h.b16 %v8208
  %v8501 = vunpack.c.l.b16 %v8209
  %v8502 = vunpack.c.h.b16 %v8209
  %v8503 = vunpack.c.l.b16 %v8210
  %v8504 = vunpack.c.h.b16 %v8210
  %v8505 = vunpack.c.l.b16 %v8211
  %v8506 = vunpack.c.h.b16 %v8211
  %v8507 = vunpack.c.l.b16 %v8212
  %v8508 = vunpack.c.h.b16 %v8212
  %v8509 = vunpack.c.l.b16 %v8213
  %v8510 = vunpack.c.h.b16 %v8213
  %v8511 = vunpack.c.l.b16 %v8214
  %v8512 = vunpack.c.h.b16 %v8214
  %v8513 = vunpack.c.l.b16 %v8215
  %v8514 = vunpack.c.h.b16 %v8215
  %v8515 = vunpack.c.l.b16 %v8216
  %v8516 = vunpack.c.h.b16 %v8216
  %v8517 = vunpack.c.l.b16 %v8217
  %v8518 = vunpack.c.h.b16 %v8217
  %v8519 = vunpack.c.l.b16 %v8218
  %v8520 = vunpack.c.h.b16 %v8218
  %v8521 = vunpack.c.l.b16 %v8219
  %v8522 = vunpack.c.h.b16 %v8219
  %v8523 = vunpack.c.l.b16 %v8220
  %v8524 = vunpack.c.h.b16 %v8220
  %v8525 = vunpack.c.l.b16 %v8221
  %v8526 = vunpack.c.h.b16 %v8221
  %v8527 = vunpack.c.l.b16 %v8222
  %v8528 = vunpack.c.h.b16 %v8222
  %v8529 = vunpack.c.l.b16 %v8223
  %v8530 = vunpack.c.h.b16 %v8223
  %v8531 = vunpack.c.l.b16 %v8224
  %v8532 = vunpack.c.h.b16 %v8224
  %v8533 = vunpack.c.l.b16 %v8225
  %v8534 = vunpack.c.h.b16 %v8225
  %v8535 = vunpack.c.l.b16 %v8226
  %v8536 = vunpack.c.h.b16 %v8226
  %v8537 = vunpack.c.l.b16 %v8227
  %v8538 = vunpack.c.h.b16 %v8227
  %v8539 = vunpack.c.l.b16 %v8228
  %v8540 = vunpack.c.h.b16 %v8228
  %v8541 = vunpack.c.l.b16 %v8229
  %v8542 = vunpack.c.h.b16 %v8229
  %v8543 = vunpack.c.l.b16 %v8230
  %v8544 = vunpack.c.h.b16 %v8230
  %v8545 = vunpack.c.l.b16 %v8231
  %v8546 = vunpack.c.h.b16 %v8231
  %v8547 = vunpack.c.l.b16 %v8232
  %v8548 = vunpack.c.h.b16 %v8232
  %v8549 = vunpack.c.l.b16 %v8233
  %v8550 = vunpack.c.h.b16 %v8233
  %v8551 = vunpack.c.l.b16 %v8234
  %v8552 = vunpack.c.h.b16 %v8234
  %v8553 = vunpack.c.l.b16 %v8235
  %v8554 = vunpack.c.h.b16 %v8235
  %v8555 = vunpack.c.l.b16 %v8236
  %v8556 = vunpack.c.h.b16 %v8236
  %v8557 = vunpack.c.l.b16 %v8237
  %v8558 = vunpack.c.h.b16 %v8237
  %v8559 = vunpack.c.l.b16 %v8238
  %v8560 = vunpack.c.h.b16 %v8238
  %v8561 = vunpack.c.l.b16 %v8239
  %v8562 = vunpack.c.h.b16 %v8239
  %v8563 = vunpack.c.l.b16 %v8240
  %v8564 = vunpack.c.h.b16 %v8240
  %v8565 = vunpack.c.l.b16 %v8241
  %v8566 = vunpack.c.h.b16 %v8241
  %v8567 = vunpack.c.l.b16 %v8242
  %v8568 = vunpack.c.h.b16 %v8242
  %v8569 = vunpack.c.l.b16 %v8243
  %v8570 = vunpack.c.h.b16 %v8243
  %v8571 = vunpack.c.l.b16 %v8244
  %v8572 = vunpack.c.h.b16 %v8244
  %v8573 = vunpack.c.l.b16 %v8245
  %v8574 = vunpack.c.h.b16 %v8245
  %v8575 = vunpack.c.l.b16 %v8246
  %v8576 = vunpack.c.h.b16 %v8246
  %v8577 = vunpack.c.l.b16 %v8247
  %v8578 = vunpack.c.h.b16 %v8247
  %v8579 = vunpack.c.l.b16 %v8248
  %v8580 = vunpack.c.h.b16 %v8248
  %v8581 = vunpack.c.l.b16 %v8249
  %v8582 = vunpack.c.h.b16 %v8249
  %v8583 = vunpack.c.l.b16 %v8250
  %v8584 = vunpack.c.h.b16 %v8250
  %v8585 = vunpack.c.l.b16 %v8251
  %v8586 = vunpack.c.h.b16 %v8251
  %v8587 = vunpack.c.l.b16 %v8252
  %v8588 = vunpack.c.h.b16 %v8252
  %v8589 = vunpack.c.l.b16 %v8253
  %v8590 = vunpack.c.h.b16 %v8253
  %v8591 = vunpack.c.l.b16 %v8254
  %v8592 = vunpack.c.h.b16 %v8254
  %v8593 = vunpack.c.l.b16 %v8255
  %v8594 = vunpack.c.h.b16 %v8255
  %v8595 = vunpack.c.l.b16 %v8256
  %v8596 = vunpack.c.h.b16 %v8256
  %v8597 = vunpack.c.l.b16 %v8257
  %v8598 = vunpack.c.h.b16 %v8257
  %v8599 = vunpack.c.l.b16 %v8258
  %v8600 = vunpack.c.h.b16 %v8258
  %v8601 = vunpack.c.l.b16 %v8259
  %v8602 = vunpack.c.h.b16 %v8259
  %v8603 = vunpack.c.l.b16 %v8260
  %v8604 = vunpack.c.h.b16 %v8260
  %v8605 = vunpack.c.l.b16 %v8261
  %v8606 = vunpack.c.h.b16 %v8261
  %v8607 = vunpack.c.l.b16 %v8262
  %v8608 = vunpack.c.h.b16 %v8262
  %v8609 = vunpack.c.l.b16 %v8263
  %v8610 = vunpack.c.h.b16 %v8263
  %v8611 = vunpack.c.l.b16 %v8264
  %v8612 = vunpack.c.h.b16 %v8264
  %v8613 = vunpack.c.l.b16 %v8265
  %v8614 = vunpack.c.h.b16 %v8265
  %v8615 = vunpack.c.l.b16 %v8266
  %v8616 = vunpack.c.h.b16 %v8266
  %v8617 = vunpack.c.l.b16 %v8267
  %v8618 = vunpack.c.h.b16 %v8267
  %v8619 = vunpack.c.l.b16 %v8268
  %v8620 = vunpack.c.h.b16 %v8268
  %v8621 = vunpack.c.l.b16 %v8269
  %v8622 = vunpack.c.h.b16 %v8269
  %v8623 = vunpack.c.l.b16 %v8270
  %v8624 = vunpack.c.h.b16 %v8270
  %v8625 = vunpack.c.l.b16 %v8271
  %v8626 = vunpack.c.h.b16 %v8271
  %v8627 = vunpack.c.l.b16 %v8272
  %v8628 = vunpack.c.h.b16 %v8272
  %v8629 = vunpack.c.l.b16 %v8273
  %v8630 = vunpack.c.h.b16 %v8273
  %v8631 = vunpack.c.l.b16 %v8274
  %v8632 = vunpack.c.h.b16 %v8274
  %v8633 = vunpack.c.l.b16 %v8275
  %v8634 = vunpack.c.h.b16 %v8275
  %v8635 = vunpack.c.l.b16 %v8276
  %v8636 = vunpack.c.h.b16 %v8276
  %v8637 = vunpack.c.l.b16 %v8277
  %v8638 = vunpack.c.h.b16 %v8277
  %v8639 = vunpack.c.l.b16 %v8278
  %v8640 = vunpack.c.h.b16 %v8278
  %v8641 = vunpack.c.l.b16 %v8279
  %v8642 = vunpack.c.h.b16 %v8279
  %v8643 = vunpack.c.l.b16 %v8280
  %v8644 = vunpack.c.h.b16 %v8280
  %v8645 = vunpack.c.l.b16 %v8281
  %v8646 = vunpack.c.h.b16 %v8281
  %v8647 = vunpack.c.l.b16 %v8282
  %v8648 = vunpack.c.h.b16 %v8282
  %v8649 = vunpack.c.l.b16 %v8283
  %v8650 = vunpack.c.h.b16 %v8283
  %v8651 = vunpack.c.l.b16 %v8284
  %v8652 = vunpack.c.h.b16 %v8284
  %v8653 = vunpack.c.l.b16 %v8285
  %v8654 = vunpack.c.h.b16 %v8285
  %v8655 = vunpack.c.l.b16 %v8286
  %v8656 = vunpack.c.h.b16 %v8286
  %v8657 = vunpack.c.l.b16 %v8287
  %v8658 = vunpack.c.h.b16 %v8287
  %v8659 = vunpack.c.l.b16 %v8288
  %v8660 = vunpack.c.h.b16 %v8288
  %v8661 = vunpack.c.l.b16 %v8289
  %v8662 = vunpack.c.h.b16 %v8289
  %v8663 = vunpack.c.l.b16 %v8290
  %v8664 = vunpack.c.h.b16 %v8290
  %v8665 = vunpack.c.l.b16 %v8291
  %v8666 = vunpack.c.h.b16 %v8291
  %v8667 = vunpack.c.l.b16 %v8292
  %v8668 = vunpack.c.h.b16 %v8292
  %v8669 = vunpack.c.l.b16 %v8293
  %v8670 = vunpack.c.h.b16 %v8293
  %v8671 = vunpack.c.l.b16 %v8294
  %v8672 = vunpack.c.h.b16 %v8294
  %v8673 = vunpack.c.l.b16 %v8295
  %v8674 = vunpack.c.h.b16 %v8295
  %v8675 = vunpack.c.l.b16 %v8296
  %v8676 = vunpack.c.h.b16 %v8296
  %v8677 = vunpack.c.l.b16 %v8297
  %v8678 = vunpack.c.h.b16 %v8297
  %v8679 = vunpack.c.l.b16 %v8298
  %v8680 = vunpack.c.h.b16 %v8298
  %v8681 = vunpack.c.l.b16 %v8299
  %v8682 = vunpack.c.h.b16 %v8299
  %v8683 = vunpack.c.l.b16 %v8300
  %v8684 = vunpack.c.h.b16 %v8300
  %v8685 = vpack.c.b16 %v8437, %v8429
  %v8686 = vpack.c.b16 %v8438, %v8430
  %v8687 = vpack.c.b16 %v8439, %v8431
  %v8688 = vpack.c.b16 %v8440, %v8432
  %v8689 = vpack.c.b16 %v8441, %v8433
  %v8690 = vpack.c.b16 %v8442, %v8434
  %v8691 = vpack.c.b16 %v8443, %v8435
  %v8692 = vpack.c.b16 %v8444, %v8436
  %v8693 = vpack.c.b16 %v8453, %v8445
  %v8694 = vpack.c.b16 %v8454, %v8446
  %v8695 = vpack.c.b16 %v8455, %v8447
  %v8696 = vpack.c.b16 %v8456, %v8448
  %v8697 = vpack.c.b16 %v8457, %v8449
  %v8698 = vpack.c.b16 %v8458, %v8450
  %v8699 = vpack.c.b16 %v8459, %v8451
  %v8700 = vpack.c.b16 %v8460, %v8452
  %v8701 = vpack.c.b16 %v8469, %v8461
  %v8702 = vpack.c.b16 %v8470, %v8462
  %v8703 = vpack.c.b16 %v8471, %v8463
  %v8704 = vpack.c.b16 %v8472, %v8464
  %v8705 = vpack.c.b16 %v8473, %v8465
  %v8706 = vpack.c.b16 %v8474, %v8466
  %v8707 = vpack.c.b16 %v8475, %v8467
  %v8708 = vpack.c.b16 %v8476, %v8468
  %v8709 = vpack.c.b16 %v8485, %v8477
  %v8710 = vpack.c.b16 %v8486, %v8478
  %v8711 = vpack.c.b16 %v8487, %v8479
  %v8712 = vpack.c.b16 %v8488, %v8480
  %v8713 = vpack.c.b16 %v8489, %v8481
  %v8714 = vpack.c.b16 %v8490, %v8482
  %v8715 = vpack.c.b16 %v8491, %v8483
  %v8716 = vpack.c.b16 %v8492, %v8484
  %v8717 = vpack.c.b16 %v8501, %v8493
  %v8718 = vpack.c.b16 %v8502, %v8494
  %v8719 = vpack.c.b16 %v8503, %v8495
  %v8720 = vpack.c.b16 %v8504, %v8496
  %v8721 = vpack.c.b16 %v8505, %v8497
  %v8722 = vpack.c.b16 %v8506, %v8498
  %v8723 = vpack.c.b16 %v8507, %v8499
  %v8724 = vpack.c.b16 %v8508, %v8500
  %v8725 = vpack.c.b16 %v8517, %v8509
  %v8726 = vpack.c.b16 %v8518, %v8510
  %v8727 = vpack.c.b16 %v8519, %v8511
  %v8728 = vpack.c.b16 %v8520, %v8512
  %v8729 = vpack.c.b16 %v8521, %v8513
  %v8730 = vpack.c.b16 %v8522, %v8514
  %v8731 = vpack.c.b16 %v8523, %v8515
  %v8732 = vpack.c.b16 %v8524, %v8516
  %v8733 = vpack.c.b16 %v8533, %v8525
  %v8734 = vpack.c.b16 %v8534, %v8526
  %v8735 = vpack.c.b16 %v8535, %v8527
  %v8736 = vpack.c.b16 %v8536, %v8528
  %v8737 = vpack.c.b16 %v8537, %v8529
  %v8738 = vpack.c.b16 %v8538, %v8530
  %v8739 = vpack.c.b16 %v8539, %v8531
  %v8740 = vpack.c.b16 %v8540, %v8532
  %v8741 = vpack.c.b16 %v8549, %v8541
  %v8742 = vpack.c.b16 %v8550, %v8542
  %v8743 = vpack.c.b16 %v8551, %v8543
  %v8744 = vpack.c.b16 %v8552, %v8544
  %v8745 = vpack.c.b16 %v8553, %v8545
  %v8746 = vpack.c.b16 %v8554, %v8546
  %v8747 = vpack.c.b16 %v8555, %v8547
  %v8748 = vpack.c.b16 %v8556, %v8548
  %v8749 = vpack.c.b16 %v8565, %v8557
  %v8750 = vpack.c.b16 %v8566, %v8558
  %v8751 = vpack.c.b16 %v8567, %v8559
  %v8752 = vpack.c.b16 %v8568, %v8560
  %v8753 = vpack.c.b16 %v8569, %v8561
  %v8754 = vpack.c.b16 %v8570, %v8562
  %v8755 = vpack.c.b16 %v8571, %v8563
  %v8756 = vpack.c.b16 %v8572, %v8564
  %v8757 = vpack.c.b16 %v8581, %v8573
  %v8758 = vpack.c.b16 %v8582, %v8574
  %v8759 = vpack.c.b16 %v8583, %v8575
  %v8760 = vpack.c.b16 %v8584, %v8576
  %v8761 = vpack.c.b16 %v8585, %v8577
  %v8762 = vpack.c.b16 %v8586, %v8578
  %v8763 = vpack.c.b16 %v8587, %v8579
  %v8764 = vpack.c.b16 %v8588, %v8580
  %v8765 = vpack.c.b16 %v8597, %v8589
  %v8766 = vpack.c.b16 %v8598, %v8590
  %v8767 = vpack.c.b16 %v8599, %v8591
  %v8768 = vpack.c.b16 %v8600, %v8592
  %v8769 = vpack.c.b16 %v8601, %v8593
  %v8770 = vpack.c.b16 %v8602, %v8594
  %v8771 = vpack.c.b16 %v8603, %v8595
  %v8772 = vpack.c.b16 %v8604, %v8596
  %v8773 = vpack.c.b16 %v8613, %v8605
  %v8774 = vpack.c.b16 %v8614, %v8606
  %v8775 = vpack.c.b16 %v8615, %v8607
  %v8776 = vpack.c.b16 %v8616, %v8608
  %v8777 = vpack.c.b16 %v8617, %v8609
  %v8778 = vpack.c.b16 %v8618, %v8610
  %v8779 = vpack.c.b16 %v8619, %v8611
  %v8780 = vpack.c.b16 %v8620, %v8612
  %v8781 = vpack.c.b16 %v8629, %v8621
  %v8782 = vpack.c.b16 %v8630, %v8622
  %v8783 = vpack.c.b16 %v8631, %v8623
  %v8784 = vpack.c.b16 %v8632, %v8624
  %v8785 = vpack.c.b16 %v8633, %v8625
  %v8786 = vpack.c.b16 %v8634, %v8626
  %v8787 = vpack.c.b16 %v8635, %v8627
  %v8788 = vpack.c.b16 %v8636, %v8628
  %v8789 = vpack.c.b16 %v8645, %v8637
  %v8790 = vpack.c.b16 %v8646, %v8638
  %v8791 = vpack.c.b16 %v8647, %v8639
  %v8792 = vpack.c.b16 %v8648, %v8640
  %v8793 = vpack.c.b16 %v8649, %v8641
  %v8794 = vpack.c.b16 %v8650, %v8642
  %v8795 = vpack.c.b16 %v8651, %v8643
  %v8796 = vpack.c.b16 %v8652, %v8644
  %v8797 = vpack.c.b16 %v8661, %v8653
  %v8798 = vpack.c.b16 %v8662, %v8654
  %v8799 = vpack.c.b16 %v8663, %v8655
  %v8800 = vpack.c.b16 %v8664, %v8656
  %v8801 = vpack.c.b16 %v8665, %v8657
  %v8802 = vpack.c.b16 %v8666, %v8658
  %v8803 = vpack.c.b16 %v8667, %v8659
  %v8804 = vpack.c.b16 %v8668, %v8660
  %v8805 = vpack.c.b16 %v8677, %v8669
  %v8806 = vpack.c.b16 %v8678, %v8670
  %v8807 = vpack.c.b16 %v8679, %v8671
  %v8808 = vpack.c.b16 %v8680, %v8672
  %v8809 = vpack.c.b16 %v8681, %v8673
  %v8810 = vpack.c.b16 %v8682, %v8674
  %v8811 = vpack.c.b16 %v8683, %v8675
  %v8812 = vpack.c.b16 %v8684, %v8676
  %8941 = vmatprep.subr.bf16.mxu0 %v8686
  %8942 = vmatpush1.bf16.msra.mxu0 %v8685
  %8943 = vmatprep.subr.bf16.mxu0 %v8694
  %8944 = vmatpush1.bf16.msra.mxu0 %v8693
  %8945 = vmatprep.subr.bf16.mxu0 %v8702
  %8946 = vmatpush1.bf16.msra.mxu0 %v8701
  %8947 = vmatprep.subr.bf16.mxu0 %v8710
  %8948 = vmatpush1.bf16.msra.mxu0 %v8709
  %8949 = vmatprep.subr.bf16.mxu0 %v8718
  %8950 = vmatpush1.bf16.msra.mxu0 %v8717
  %8951 = vmatprep.subr.bf16.mxu0 %v8726
  %8952 = vmatpush1.bf16.msra.mxu0 %v8725
  %8953 = vmatprep.subr.bf16.mxu0 %v8734
  %8954 = vmatpush1.bf16.msra.mxu0 %v8733
  %8955 = vmatprep.subr.bf16.mxu0 %v8742
  %8956 = vmatpush1.bf16.msra.mxu0 %v8741
  %8957 = vmatprep.subr.bf16.mxu0 %v8750
  %8958 = vmatpush1.bf16.msra.mxu0 %v8749
  %8959 = vmatprep.subr.bf16.mxu0 %v8758
  %8960 = vmatpush1.bf16.msra.mxu0 %v8757
  %8961 = vmatprep.subr.bf16.mxu0 %v8766
  %8962 = vmatpush1.bf16.msra.mxu0 %v8765
  %8963 = vmatprep.subr.bf16.mxu0 %v8774
  %8964 = vmatpush1.bf16.msra.mxu0 %v8773
  %8965 = vmatprep.subr.bf16.mxu0 %v8782
  %8966 = vmatpush1.bf16.msra.mxu0 %v8781
  %8967 = vmatprep.subr.bf16.mxu0 %v8790
  %8968 = vmatpush1.bf16.msra.mxu0 %v8789
  %8969 = vmatprep.subr.bf16.mxu0 %v8798
  %8970 = vmatpush1.bf16.msra.mxu0 %v8797
  %8971 = vmatprep.subr.bf16.mxu0 %v8806
  %8972 = vmatpush1.bf16.msra.mxu0 %v8805
  %8973 = vmatprep.mubr.bf16.mxu0 %v8172
  %8974 = vmatmul.mubr.bf16.gmra.mrb[0].mxu0 %v8171
  %v8975 = vpop.f32.mrb[0].mxu0
  %v8976 = vadd.f32 0.0, %v8975
  %v8977 = vpop.f32.mrb[0].mxu0
  %v8978 = vadd.f32 0.0, %v8977
  %v8979 = vpop.f32.mrb[0].mxu0
  %v8980 = vpop.f32.mrb[0].mxu0
  %8981 = vdwg.mxu0
  %8982 = vmatprep.subr.bf16.mxu0 %v8688
  %8983 = vmatpush1.bf16.msra.mxu0 %v8687
  %8984 = vmatprep.subr.bf16.mxu0 %v8696
  %8985 = vmatpush1.bf16.msra.mxu0 %v8695
  %8986 = vmatprep.subr.bf16.mxu0 %v8704
  %8987 = vmatpush1.bf16.msra.mxu0 %v8703
  %8988 = vmatprep.subr.bf16.mxu0 %v8712
  %8989 = vmatpush1.bf16.msra.mxu0 %v8711
  %8990 = vmatprep.subr.bf16.mxu0 %v8720
  %8991 = vmatpush1.bf16.msra.mxu0 %v8719
  %8992 = vmatprep.subr.bf16.mxu0 %v8728
  %8993 = vmatpush1.bf16.msra.mxu0 %v8727
  %8994 = vmatprep.subr.bf16.mxu0 %v8736
  %8995 = vmatpush1.bf16.msra.mxu0 %v8735
  %8996 = vmatprep.subr.bf16.mxu0 %v8744
  %8997 = vmatpush1.bf16.msra.mxu0 %v8743
  %8998 = vmatprep.subr.bf16.mxu0 %v8752
  %8999 = vmatpush1.bf16.msra.mxu0 %v8751
  %9000 = vmatprep.subr.bf16.mxu0 %v8760
  %9001 = vmatpush1.bf16.msra.mxu0 %v8759
  %9002 = vmatprep.subr.bf16.mxu0 %v8768
  %9003 = vmatpush1.bf16.msra.mxu0 %v8767
  %9004 = vmatprep.subr.bf16.mxu0 %v8776
  %9005 = vmatpush1.bf16.msra.mxu0 %v8775
  %9006 = vmatprep.subr.bf16.mxu0 %v8784
  %9007 = vmatpush1.bf16.msra.mxu0 %v8783
  %9008 = vmatprep.subr.bf16.mxu0 %v8792
  %9009 = vmatpush1.bf16.msra.mxu0 %v8791
  %9010 = vmatprep.subr.bf16.mxu0 %v8800
  %9011 = vmatpush1.bf16.msra.mxu0 %v8799
  %9012 = vmatprep.subr.bf16.mxu0 %v8808
  %9013 = vmatpush1.bf16.msra.mxu0 %v8807
  %9014 = vmatprep.mubr.bf16.mxu0 %v8172
  %9015 = vmatmul.mubr.bf16.gmra.mrb[0].mxu0 %v8171
  %v9016 = vpop.f32.mrb[0].mxu0
  %v9017 = vadd.f32 0.0, %v9016
  %v9018 = vpop.f32.mrb[0].mxu0
  %v9019 = vadd.f32 0.0, %v9018
  %v9020 = vpop.f32.mrb[0].mxu0
  %v9021 = vpop.f32.mrb[0].mxu0
  %9022 = vdwg.mxu0
  %9023 = vmatprep.subr.bf16.mxu0 %v8690
  %9024 = vmatpush1.bf16.msra.mxu0 %v8689
  %9025 = vmatprep.subr.bf16.mxu0 %v8698
  %9026 = vmatpush1.bf16.msra.mxu0 %v8697
  %9027 = vmatprep.subr.bf16.mxu0 %v8706
  %9028 = vmatpush1.bf16.msra.mxu0 %v8705
  %9029 = vmatprep.subr.bf16.mxu0 %v8714
  %9030 = vmatpush1.bf16.msra.mxu0 %v8713
  %9031 = vmatprep.subr.bf16.mxu0 %v8722
  %9032 = vmatpush1.bf16.msra.mxu0 %v8721
  %9033 = vmatprep.subr.bf16.mxu0 %v8730
  %9034 = vmatpush1.bf16.msra.mxu0 %v8729
  %9035 = vmatprep.subr.bf16.mxu0 %v8738
  %9036 = vmatpush1.bf16.msra.mxu0 %v8737
  %9037 = vmatprep.subr.bf16.mxu0 %v8746
  %9038 = vmatpush1.bf16.msra.mxu0 %v8745
  %9039 = vmatprep.subr.bf16.mxu0 %v8754
  %9040 = vmatpush1.bf16.msra.mxu0 %v8753
  %9041 = vmatprep.subr.bf16.mxu0 %v8762
  %9042 = vmatpush1.bf16.msra.mxu0 %v8761
  %9043 = vmatprep.subr.bf16.mxu0 %v8770
  %9044 = vmatpush1.bf16.msra.mxu0 %v8769
  %9045 = vmatprep.subr.bf16.mxu0 %v8778
  %9046 = vmatpush1.bf16.msra.mxu0 %v8777
  %9047 = vmatprep.subr.bf16.mxu0 %v8786
  %9048 = vmatpush1.bf16.msra.mxu0 %v8785
  %9049 = vmatprep.subr.bf16.mxu0 %v8794
  %9050 = vmatpush1.bf16.msra.mxu0 %v8793
  %9051 = vmatprep.subr.bf16.mxu0 %v8802
  %9052 = vmatpush1.bf16.msra.mxu0 %v8801
  %9053 = vmatprep.subr.bf16.mxu0 %v8810
  %9054 = vmatpush1.bf16.msra.mxu0 %v8809
  %9055 = vmatprep.mubr.bf16.mxu0 %v8172
  %9056 = vmatmul.mubr.bf16.gmra.mrb[0].mxu0 %v8171
  %v9057 = vpop.f32.mrb[0].mxu0
  %v9058 = vadd.f32 0.0, %v9057
  %v9059 = vpop.f32.mrb[0].mxu0
  %v9060 = vadd.f32 0.0, %v9059
  %v9061 = vpop.f32.mrb[0].mxu0
  %v9062 = vpop.f32.mrb[0].mxu0
  %9063 = vdwg.mxu0
  %9064 = vmatprep.subr.bf16.mxu0 %v8692
  %9065 = vmatpush1.bf16.msra.mxu0 %v8691
  %9066 = vmatprep.subr.bf16.mxu0 %v8700
  %9067 = vmatpush1.bf16.msra.mxu0 %v8699
  %9068 = vmatprep.subr.bf16.mxu0 %v8708
  %9069 = vmatpush1.bf16.msra.mxu0 %v8707
  %9070 = vmatprep.subr.bf16.mxu0 %v8716
  %9071 = vmatpush1.bf16.msra.mxu0 %v8715
  %9072 = vmatprep.subr.bf16.mxu0 %v8724
  %9073 = vmatpush1.bf16.msra.mxu0 %v8723
  %9074 = vmatprep.subr.bf16.mxu0 %v8732
  %9075 = vmatpush1.bf16.msra.mxu0 %v8731
  %9076 = vmatprep.subr.bf16.mxu0 %v8740
  %9077 = vmatpush1.bf16.msra.mxu0 %v8739
  %9078 = vmatprep.subr.bf16.mxu0 %v8748
  %9079 = vmatpush1.bf16.msra.mxu0 %v8747
  %9080 = vmatprep.subr.bf16.mxu0 %v8756
  %9081 = vmatpush1.bf16.msra.mxu0 %v8755
  %9082 = vmatprep.subr.bf16.mxu0 %v8764
  %9083 = vmatpush1.bf16.msra.mxu0 %v8763
  %9084 = vmatprep.subr.bf16.mxu0 %v8772
  %9085 = vmatpush1.bf16.msra.mxu0 %v8771
  %9086 = vmatprep.subr.bf16.mxu0 %v8780
  %9087 = vmatpush1.bf16.msra.mxu0 %v8779
  %9088 = vmatprep.subr.bf16.mxu0 %v8788
  %9089 = vmatpush1.bf16.msra.mxu0 %v8787
  %9090 = vmatprep.subr.bf16.mxu0 %v8796
  %9091 = vmatpush1.bf16.msra.mxu0 %v8795
  %9092 = vmatprep.subr.bf16.mxu0 %v8804
  %9093 = vmatpush1.bf16.msra.mxu0 %v8803
  %9094 = vmatprep.subr.bf16.mxu0 %v8812
  %9095 = vmatpush1.bf16.msra.mxu0 %v8811
  %9096 = vmatprep.mubr.bf16.mxu0 %v8172
  %9097 = vmatmul.mubr.bf16.gmra.mrb[0].mxu0 %v8171
  %v9098 = vpop.f32.mrb[0].mxu0
  %v9099 = vadd.f32 0.0, %v9098
  %v9100 = vpop.f32.mrb[0].mxu0
  %v9101 = vadd.f32 0.0, %v9100
  %v9102 = vpop.f32.mrb[0].mxu0
  %v9103 = vpop.f32.mrb[0].mxu0
  %9104 = vdwg.mxu0
  %v9105 = vadd.f32 %v3186, %v8976
  %v9106 = vadd.f32 %v3188, %v8978
  %v9107 = vadd.f32 %v3227, %v9017
  %v9108 = vadd.f32 %v3229, %v9019
  %v9109 = vmul.f32 %v9105, 0.5
  %v9110 = vtanh.pop %v9109
  %v9111 = vmul.f32 %v9110, 0.5
  %v9112 = vadd.f32 %v9111, 0.5
  %v9113 = vmul.f32 %v9106, 0.5
  %v9114 = vtanh.pop %v9113
  %v9115 = vmul.f32 %v9114, 0.5
  %v9116 = vadd.f32 %v9115, 0.5
  %v9117 = vtanh.pop %v9107
  %v9118 = vmul.f32 %v9108, 0.5
  %v9119 = vtanh.pop %v9118
  %v9120 = vmul.f32 %v9119, 0.5
  %v9121 = vadd.f32 %v9120, 0.5
  %v9122 = vmul.f32 %v9116, %v8145
  %v9123 = vmul.f32 %v9112, %v9117
  %v9124 = vadd.f32 %v9122, %v9123
  %v9125 = vtanh.pop %v9124
  %v9126 = vmul.f32 %v9121, %v9125
  %v9127 = vadd.f32 %v3238, %v9058
  %v9128 = vadd.f32 %v3242, %v9060
  %v9129 = vadd.f32 %v3246, %v9099
  %v9130 = vadd.f32 %v3250, %v9101
  %v9131 = vmul.f32 %v9127, 0.5
  %v9132 = vtanh.pop %v9131
  %v9133 = vmul.f32 %v9132, 0.5
  %v9134 = vadd.f32 %v9133, 0.5
  %v9135 = vmul.f32 %v9128, 0.5
  %v9136 = vtanh.pop %v9135
  %v9137 = vmul.f32 %v9136, 0.5
  %v9138 = vadd.f32 %v9137, 0.5
  %v9139 = vtanh.pop %v9129
  %v9140 = vmul.f32 %v9130, 0.5
  %v9141 = vtanh.pop %v9140
  %v9142 = vmul.f32 %v9141, 0.5
  %v9143 = vadd.f32 %v9142, 0.5
  %v9144 = vmul.f32 %v9138, %v8167
  %v9145 = vmul.f32 %v9134, %v9139
  %v9146 = vadd.f32 %v9144, %v9145
  %v9147 = vtanh.pop %v9146
  %v9148 = vmul.f32 %v9143, %v9147
  %9149 = vst [vmem:[#allocation3 + $0x28] sm:$0xff] %v9148
  %v9150 = vpack.c.bf16 %v9126, %v9126
  %v9151 = vpack.c.bf16 %v9148, %v9148
  %v9152 = vld [vmem:[%s8] sm:$0xff]
  %v9153 = vld [vmem:[%s8 + $0x8] sm:$0xff]
  %v9154 = vld [vmem:[%s8 + $0x10] sm:$0xff]
  %v9155 = vld [vmem:[%s8 + $0x18] sm:$0xff]
  %v9156 = vld [vmem:[%s8 + $0x20] sm:$0xff]
  %v9157 = vld [vmem:[%s8 + $0x28] sm:$0xff]
  %v9158 = vld [vmem:[%s8 + $0x30] sm:$0xff]
  %v9159 = vld [vmem:[%s8 + $0x38] sm:$0xff]
  %v9160 = vld [vmem:[%s8 + $0x40] sm:$0xff]
  %v9161 = vld [vmem:[%s8 + $0x48] sm:$0xff]
  %v9162 = vld [vmem:[%s8 + $0x50] sm:$0xff]
  %v9163 = vld [vmem:[%s8 + $0x58] sm:$0xff]
  %v9164 = vld [vmem:[%s8 + $0x60] sm:$0xff]
  %v9165 = vld [vmem:[%s8 + $0x68] sm:$0xff]
  %v9166 = vld [vmem:[%s8 + $0x70] sm:$0xff]
  %v9167 = vld [vmem:[%s8 + $0x78] sm:$0xff]
  %v9168 = vld [vmem:[%s8 + $0x80] sm:$0xff]
  %v9169 = vld [vmem:[%s8 + $0x88] sm:$0xff]
  %v9170 = vld [vmem:[%s8 + $0x90] sm:$0xff]
  %v9171 = vld [vmem:[%s8 + $0x98] sm:$0xff]
  %v9172 = vld [vmem:[%s8 + $0xa0] sm:$0xff]
  %v9173 = vld [vmem:[%s8 + $0xa8] sm:$0xff]
  %v9174 = vld [vmem:[%s8 + $0xb0] sm:$0xff]
  %v9175 = vld [vmem:[%s8 + $0xb8] sm:$0xff]
  %v9176 = vld [vmem:[%s8 + $0xc0] sm:$0xff]
  %v9177 = vld [vmem:[%s8 + $0xc8] sm:$0xff]
  %v9178 = vld [vmem:[%s8 + $0xd0] sm:$0xff]
  %v9179 = vld [vmem:[%s8 + $0xd8] sm:$0xff]
  %v9180 = vld [vmem:[%s8 + $0xe0] sm:$0xff]
  %v9181 = vld [vmem:[%s8 + $0xe8] sm:$0xff]
  %v9182 = vld [vmem:[%s8 + $0xf0] sm:$0xff]
  %v9183 = vld [vmem:[%s8 + $0xf8] sm:$0xff]
  %v9184 = vld [vmem:[%s8 + $0x100] sm:$0xff]
  %v9185 = vld [vmem:[%s8 + $0x108] sm:$0xff]
  %v9186 = vld [vmem:[%s8 + $0x110] sm:$0xff]
  %v9187 = vld [vmem:[%s8 + $0x118] sm:$0xff]
  %v9188 = vld [vmem:[%s8 + $0x120] sm:$0xff]
  %v9189 = vld [vmem:[%s8 + $0x128] sm:$0xff]
  %v9190 = vld [vmem:[%s8 + $0x130] sm:$0xff]
  %v9191 = vld [vmem:[%s8 + $0x138] sm:$0xff]
  %v9192 = vld [vmem:[%s8 + $0x140] sm:$0xff]
  %v9193 = vld [vmem:[%s8 + $0x148] sm:$0xff]
  %v9194 = vld [vmem:[%s8 + $0x150] sm:$0xff]
  %v9195 = vld [vmem:[%s8 + $0x158] sm:$0xff]
  %v9196 = vld [vmem:[%s8 + $0x160] sm:$0xff]
  %v9197 = vld [vmem:[%s8 + $0x168] sm:$0xff]
  %v9198 = vld [vmem:[%s8 + $0x170] sm:$0xff]
  %v9199 = vld [vmem:[%s8 + $0x178] sm:$0xff]
  %v9200 = vld [vmem:[%s8 + $0x180] sm:$0xff]
  %v9201 = vld [vmem:[%s8 + $0x188] sm:$0xff]
  %v9202 = vld [vmem:[%s8 + $0x190] sm:$0xff]
  %v9203 = vld [vmem:[%s8 + $0x198] sm:$0xff]
  %v9204 = vld [vmem:[%s8 + $0x1a0] sm:$0xff]
  %v9205 = vld [vmem:[%s8 + $0x1a8] sm:$0xff]
  %v9206 = vld [vmem:[%s8 + $0x1b0] sm:$0xff]
  %v9207 = vld [vmem:[%s8 + $0x1b8] sm:$0xff]
  %v9208 = vld [vmem:[%s8 + $0x1c0] sm:$0xff]
  %v9209 = vld [vmem:[%s8 + $0x1c8] sm:$0xff]
  %v9210 = vld [vmem:[%s8 + $0x1d0] sm:$0xff]
  %v9211 = vld [vmem:[%s8 + $0x1d8] sm:$0xff]
  %v9212 = vld [vmem:[%s8 + $0x1e0] sm:$0xff]
  %v9213 = vld [vmem:[%s8 + $0x1e8] sm:$0xff]
  %v9214 = vld [vmem:[%s8 + $0x1f0] sm:$0xff]
  %v9215 = vld [vmem:[%s8 + $0x1f8] sm:$0xff]
  %v9216 = vld [vmem:[%s8 + $0x200] sm:$0xff]
  %v9217 = vld [vmem:[%s8 + $0x208] sm:$0xff]
  %v9218 = vld [vmem:[%s8 + $0x210] sm:$0xff]
  %v9219 = vld [vmem:[%s8 + $0x218] sm:$0xff]
  %v9220 = vld [vmem:[%s8 + $0x220] sm:$0xff]
  %v9221 = vld [vmem:[%s8 + $0x228] sm:$0xff]
  %v9222 = vld [vmem:[%s8 + $0x230] sm:$0xff]
  %v9223 = vld [vmem:[%s8 + $0x238] sm:$0xff]
  %v9224 = vld [vmem:[%s8 + $0x240] sm:$0xff]
  %v9225 = vld [vmem:[%s8 + $0x248] sm:$0xff]
  %v9226 = vld [vmem:[%s8 + $0x250] sm:$0xff]
  %v9227 = vld [vmem:[%s8 + $0x258] sm:$0xff]
  %v9228 = vld [vmem:[%s8 + $0x260] sm:$0xff]
  %v9229 = vld [vmem:[%s8 + $0x268] sm:$0xff]
  %v9230 = vld [vmem:[%s8 + $0x270] sm:$0xff]
  %v9231 = vld [vmem:[%s8 + $0x278] sm:$0xff]
  %v9232 = vld [vmem:[%s8 + $0x280] sm:$0xff]
  %v9233 = vld [vmem:[%s8 + $0x288] sm:$0xff]
  %v9234 = vld [vmem:[%s8 + $0x290] sm:$0xff]
  %v9235 = vld [vmem:[%s8 + $0x298] sm:$0xff]
  %v9236 = vld [vmem:[%s8 + $0x2a0] sm:$0xff]
  %v9237 = vld [vmem:[%s8 + $0x2a8] sm:$0xff]
  %v9238 = vld [vmem:[%s8 + $0x2b0] sm:$0xff]
  %v9239 = vld [vmem:[%s8 + $0x2b8] sm:$0xff]
  %v9240 = vld [vmem:[%s8 + $0x2c0] sm:$0xff]
  %v9241 = vld [vmem:[%s8 + $0x2c8] sm:$0xff]
  %v9242 = vld [vmem:[%s8 + $0x2d0] sm:$0xff]
  %v9243 = vld [vmem:[%s8 + $0x2d8] sm:$0xff]
  %v9244 = vld [vmem:[%s8 + $0x2e0] sm:$0xff]
  %v9245 = vld [vmem:[%s8 + $0x2e8] sm:$0xff]
  %v9246 = vld [vmem:[%s8 + $0x2f0] sm:$0xff]
  %v9247 = vld [vmem:[%s8 + $0x2f8] sm:$0xff]
  %v9248 = vld [vmem:[%s8 + $0x300] sm:$0xff]
  %v9249 = vld [vmem:[%s8 + $0x308] sm:$0xff]
  %v9250 = vld [vmem:[%s8 + $0x310] sm:$0xff]
  %v9251 = vld [vmem:[%s8 + $0x318] sm:$0xff]
  %v9252 = vld [vmem:[%s8 + $0x320] sm:$0xff]
  %v9253 = vld [vmem:[%s8 + $0x328] sm:$0xff]
  %v9254 = vld [vmem:[%s8 + $0x330] sm:$0xff]
  %v9255 = vld [vmem:[%s8 + $0x338] sm:$0xff]
  %v9256 = vld [vmem:[%s8 + $0x340] sm:$0xff]
  %v9257 = vld [vmem:[%s8 + $0x348] sm:$0xff]
  %v9258 = vld [vmem:[%s8 + $0x350] sm:$0xff]
  %v9259 = vld [vmem:[%s8 + $0x358] sm:$0xff]
  %v9260 = vld [vmem:[%s8 + $0x360] sm:$0xff]
  %v9261 = vld [vmem:[%s8 + $0x368] sm:$0xff]
  %v9262 = vld [vmem:[%s8 + $0x370] sm:$0xff]
  %v9263 = vld [vmem:[%s8 + $0x378] sm:$0xff]
  %v9264 = vld [vmem:[%s8 + $0x380] sm:$0xff]
  %v9265 = vld [vmem:[%s8 + $0x388] sm:$0xff]
  %v9266 = vld [vmem:[%s8 + $0x390] sm:$0xff]
  %v9267 = vld [vmem:[%s8 + $0x398] sm:$0xff]
  %v9268 = vld [vmem:[%s8 + $0x3a0] sm:$0xff]
  %v9269 = vld [vmem:[%s8 + $0x3a8] sm:$0xff]
  %v9270 = vld [vmem:[%s8 + $0x3b0] sm:$0xff]
  %v9271 = vld [vmem:[%s8 + $0x3b8] sm:$0xff]
  %v9272 = vld [vmem:[%s8 + $0x3c0] sm:$0xff]
  %v9273 = vld [vmem:[%s8 + $0x3c8] sm:$0xff]
  %v9274 = vld [vmem:[%s8 + $0x3d0] sm:$0xff]
  %v9275 = vld [vmem:[%s8 + $0x3d8] sm:$0xff]
  %v9276 = vld [vmem:[%s8 + $0x3e0] sm:$0xff]
  %v9277 = vld [vmem:[%s8 + $0x3e8] sm:$0xff]
  %v9278 = vld [vmem:[%s8 + $0x3f0] sm:$0xff]
  %v9279 = vld [vmem:[%s8 + $0x3f8] sm:$0xff]
  %v9408 = vunpack.c.l.b16 %v9152
  %v9409 = vunpack.c.h.b16 %v9152
  %v9410 = vunpack.c.l.b16 %v9153
  %v9411 = vunpack.c.h.b16 %v9153
  %v9412 = vunpack.c.l.b16 %v9154
  %v9413 = vunpack.c.h.b16 %v9154
  %v9414 = vunpack.c.l.b16 %v9155
  %v9415 = vunpack.c.h.b16 %v9155
  %v9416 = vunpack.c.l.b16 %v9156
  %v9417 = vunpack.c.h.b16 %v9156
  %v9418 = vunpack.c.l.b16 %v9157
  %v9419 = vunpack.c.h.b16 %v9157
  %v9420 = vunpack.c.l.b16 %v9158
  %v9421 = vunpack.c.h.b16 %v9158
  %v9422 = vunpack.c.l.b16 %v9159
  %v9423 = vunpack.c.h.b16 %v9159
  %v9424 = vunpack.c.l.b16 %v9160
  %v9425 = vunpack.c.h.b16 %v9160
  %v9426 = vunpack.c.l.b16 %v9161
  %v9427 = vunpack.c.h.b16 %v9161
  %v9428 = vunpack.c.l.b16 %v9162
  %v9429 = vunpack.c.h.b16 %v9162
  %v9430 = vunpack.c.l.b16 %v9163
  %v9431 = vunpack.c.h.b16 %v9163
  %v9432 = vunpack.c.l.b16 %v9164
  %v9433 = vunpack.c.h.b16 %v9164
  %v9434 = vunpack.c.l.b16 %v9165
  %v9435 = vunpack.c.h.b16 %v9165
  %v9436 = vunpack.c.l.b16 %v9166
  %v9437 = vunpack.c.h.b16 %v9166
  %v9438 = vunpack.c.l.b16 %v9167
  %v9439 = vunpack.c.h.b16 %v9167
  %v9440 = vunpack.c.l.b16 %v9168
  %v9441 = vunpack.c.h.b16 %v9168
  %v9442 = vunpack.c.l.b16 %v9169
  %v9443 = vunpack.c.h.b16 %v9169
  %v9444 = vunpack.c.l.b16 %v9170
  %v9445 = vunpack.c.h.b16 %v9170
  %v9446 = vunpack.c.l.b16 %v9171
  %v9447 = vunpack.c.h.b16 %v9171
  %v9448 = vunpack.c.l.b16 %v9172
  %v9449 = vunpack.c.h.b16 %v9172
  %v9450 = vunpack.c.l.b16 %v9173
  %v9451 = vunpack.c.h.b16 %v9173
  %v9452 = vunpack.c.l.b16 %v9174
  %v9453 = vunpack.c.h.b16 %v9174
  %v9454 = vunpack.c.l.b16 %v9175
  %v9455 = vunpack.c.h.b16 %v9175
  %v9456 = vunpack.c.l.b16 %v9176
  %v9457 = vunpack.c.h.b16 %v9176
  %v9458 = vunpack.c.l.b16 %v9177
  %v9459 = vunpack.c.h.b16 %v9177
  %v9460 = vunpack.c.l.b16 %v9178
  %v9461 = vunpack.c.h.b16 %v9178
  %v9462 = vunpack.c.l.b16 %v9179
  %v9463 = vunpack.c.h.b16 %v9179
  %v9464 = vunpack.c.l.b16 %v9180
  %v9465 = vunpack.c.h.b16 %v9180
  %v9466 = vunpack.c.l.b16 %v9181
  %v9467 = vunpack.c.h.b16 %v9181
  %v9468 = vunpack.c.l.b16 %v9182
  %v9469 = vunpack.c.h.b16 %v9182
  %v9470 = vunpack.c.l.b16 %v9183
  %v9471 = vunpack.c.h.b16 %v9183
  %v9472 = vunpack.c.l.b16 %v9184
  %v9473 = vunpack.c.h.b16 %v9184
  %v9474 = vunpack.c.l.b16 %v9185
  %v9475 = vunpack.c.h.b16 %v9185
  %v9476 = vunpack.c.l.b16 %v9186
  %v9477 = vunpack.c.h.b16 %v9186
  %v9478 = vunpack.c.l.b16 %v9187
  %v9479 = vunpack.c.h.b16 %v9187
  %v9480 = vunpack.c.l.b16 %v9188
  %v9481 = vunpack.c.h.b16 %v9188
  %v9482 = vunpack.c.l.b16 %v9189
  %v9483 = vunpack.c.h.b16 %v9189
  %v9484 = vunpack.c.l.b16 %v9190
  %v9485 = vunpack.c.h.b16 %v9190
  %v9486 = vunpack.c.l.b16 %v9191
  %v9487 = vunpack.c.h.b16 %v9191
  %v9488 = vunpack.c.l.b16 %v9192
  %v9489 = vunpack.c.h.b16 %v9192
  %v9490 = vunpack.c.l.b16 %v9193
  %v9491 = vunpack.c.h.b16 %v9193
  %v9492 = vunpack.c.l.b16 %v9194
  %v9493 = vunpack.c.h.b16 %v9194
  %v9494 = vunpack.c.l.b16 %v9195
  %v9495 = vunpack.c.h.b16 %v9195
  %v9496 = vunpack.c.l.b16 %v9196
  %v9497 = vunpack.c.h.b16 %v9196
  %v9498 = vunpack.c.l.b16 %v9197
  %v9499 = vunpack.c.h.b16 %v9197
  %v9500 = vunpack.c.l.b16 %v9198
  %v9501 = vunpack.c.h.b16 %v9198
  %v9502 = vunpack.c.l.b16 %v9199
  %v9503 = vunpack.c.h.b16 %v9199
  %v9504 = vunpack.c.l.b16 %v9200
  %v9505 = vunpack.c.h.b16 %v9200
  %v9506 = vunpack.c.l.b16 %v9201
  %v9507 = vunpack.c.h.b16 %v9201
  %v9508 = vunpack.c.l.b16 %v9202
  %v9509 = vunpack.c.h.b16 %v9202
  %v9510 = vunpack.c.l.b16 %v9203
  %v9511 = vunpack.c.h.b16 %v9203
  %v9512 = vunpack.c.l.b16 %v9204
  %v9513 = vunpack.c.h.b16 %v9204
  %v9514 = vunpack.c.l.b16 %v9205
  %v9515 = vunpack.c.h.b16 %v9205
  %v9516 = vunpack.c.l.b16 %v9206
  %v9517 = vunpack.c.h.b16 %v9206
  %v9518 = vunpack.c.l.b16 %v9207
  %v9519 = vunpack.c.h.b16 %v9207
  %v9520 = vunpack.c.l.b16 %v9208
  %v9521 = vunpack.c.h.b16 %v9208
  %v9522 = vunpack.c.l.b16 %v9209
  %v9523 = vunpack.c.h.b16 %v9209
  %v9524 = vunpack.c.l.b16 %v9210
  %v9525 = vunpack.c.h.b16 %v9210
  %v9526 = vunpack.c.l.b16 %v9211
  %v9527 = vunpack.c.h.b16 %v9211
  %v9528 = vunpack.c.l.b16 %v9212
  %v9529 = vunpack.c.h.b16 %v9212
  %v9530 = vunpack.c.l.b16 %v9213
  %v9531 = vunpack.c.h.b16 %v9213
  %v9532 = vunpack.c.l.b16 %v9214
  %v9533 = vunpack.c.h.b16 %v9214
  %v9534 = vunpack.c.l.b16 %v9215
  %v9535 = vunpack.c.h.b16 %v9215
  %v9536 = vunpack.c.l.b16 %v9216
  %v9537 = vunpack.c.h.b16 %v9216
  %v9538 = vunpack.c.l.b16 %v9217
  %v9539 = vunpack.c.h.b16 %v9217
  %v9540 = vunpack.c.l.b16 %v9218
  %v9541 = vunpack.c.h.b16 %v9218
  %v9542 = vunpack.c.l.b16 %v9219
  %v9543 = vunpack.c.h.b16 %v9219
  %v9544 = vunpack.c.l.b16 %v9220
  %v9545 = vunpack.c.h.b16 %v9220
  %v9546 = vunpack.c.l.b16 %v9221
  %v9547 = vunpack.c.h.b16 %v9221
  %v9548 = vunpack.c.l.b16 %v9222
  %v9549 = vunpack.c.h.b16 %v9222
  %v9550 = vunpack.c.l.b16 %v9223
  %v9551 = vunpack.c.h.b16 %v9223
  %v9552 = vunpack.c.l.b16 %v9224
  %v9553 = vunpack.c.h.b16 %v9224
  %v9554 = vunpack.c.l.b16 %v9225
  %v9555 = vunpack.c.h.b16 %v9225
  %v9556 = vunpack.c.l.b16 %v9226
  %v9557 = vunpack.c.h.b16 %v9226
  %v9558 = vunpack.c.l.b16 %v9227
  %v9559 = vunpack.c.h.b16 %v9227
  %v9560 = vunpack.c.l.b16 %v9228
  %v9561 = vunpack.c.h.b16 %v9228
  %v9562 = vunpack.c.l.b16 %v9229
  %v9563 = vunpack.c.h.b16 %v9229
  %v9564 = vunpack.c.l.b16 %v9230
  %v9565 = vunpack.c.h.b16 %v9230
  %v9566 = vunpack.c.l.b16 %v9231
  %v9567 = vunpack.c.h.b16 %v9231
  %v9568 = vunpack.c.l.b16 %v9232
  %v9569 = vunpack.c.h.b16 %v9232
  %v9570 = vunpack.c.l.b16 %v9233
  %v9571 = vunpack.c.h.b16 %v9233
  %v9572 = vunpack.c.l.b16 %v9234
  %v9573 = vunpack.c.h.b16 %v9234
  %v9574 = vunpack.c.l.b16 %v9235
  %v9575 = vunpack.c.h.b16 %v9235
  %v9576 = vunpack.c.l.b16 %v9236
  %v9577 = vunpack.c.h.b16 %v9236
  %v9578 = vunpack.c.l.b16 %v9237
  %v9579 = vunpack.c.h.b16 %v9237
  %v9580 = vunpack.c.l.b16 %v9238
  %v9581 = vunpack.c.h.b16 %v9238
  %v9582 = vunpack.c.l.b16 %v9239
  %v9583 = vunpack.c.h.b16 %v9239
  %v9584 = vunpack.c.l.b16 %v9240
  %v9585 = vunpack.c.h.b16 %v9240
  %v9586 = vunpack.c.l.b16 %v9241
  %v9587 = vunpack.c.h.b16 %v9241
  %v9588 = vunpack.c.l.b16 %v9242
  %v9589 = vunpack.c.h.b16 %v9242
  %v9590 = vunpack.c.l.b16 %v9243
  %v9591 = vunpack.c.h.b16 %v9243
  %v9592 = vunpack.c.l.b16 %v9244
  %v9593 = vunpack.c.h.b16 %v9244
  %v9594 = vunpack.c.l.b16 %v9245
  %v9595 = vunpack.c.h.b16 %v9245
  %v9596 = vunpack.c.l.b16 %v9246
  %v9597 = vunpack.c.h.b16 %v9246
  %v9598 = vunpack.c.l.b16 %v9247
  %v9599 = vunpack.c.h.b16 %v9247
  %v9600 = vunpack.c.l.b16 %v9248
  %v9601 = vunpack.c.h.b16 %v9248
  %v9602 = vunpack.c.l.b16 %v9249
  %v9603 = vunpack.c.h.b16 %v9249
  %v9604 = vunpack.c.l.b16 %v9250
  %v9605 = vunpack.c.h.b16 %v9250
  %v9606 = vunpack.c.l.b16 %v9251
  %v9607 = vunpack.c.h.b16 %v9251
  %v9608 = vunpack.c.l.b16 %v9252
  %v9609 = vunpack.c.h.b16 %v9252
  %v9610 = vunpack.c.l.b16 %v9253
  %v9611 = vunpack.c.h.b16 %v9253
  %v9612 = vunpack.c.l.b16 %v9254
  %v9613 = vunpack.c.h.b16 %v9254
  %v9614 = vunpack.c.l.b16 %v9255
  %v9615 = vunpack.c.h.b16 %v9255
  %v9616 = vunpack.c.l.b16 %v9256
  %v9617 = vunpack.c.h.b16 %v9256
  %v9618 = vunpack.c.l.b16 %v9257
  %v9619 = vunpack.c.h.b16 %v9257
  %v9620 = vunpack.c.l.b16 %v9258
  %v9621 = vunpack.c.h.b16 %v9258
  %v9622 = vunpack.c.l.b16 %v9259
  %v9623 = vunpack.c.h.b16 %v9259
  %v9624 = vunpack.c.l.b16 %v9260
  %v9625 = vunpack.c.h.b16 %v9260
  %v9626 = vunpack.c.l.b16 %v9261
  %v9627 = vunpack.c.h.b16 %v9261
  %v9628 = vunpack.c.l.b16 %v9262
  %v9629 = vunpack.c.h.b16 %v9262
  %v9630 = vunpack.c.l.b16 %v9263
  %v9631 = vunpack.c.h.b16 %v9263
  %v9632 = vunpack.c.l.b16 %v9264
  %v9633 = vunpack.c.h.b16 %v9264
  %v9634 = vunpack.c.l.b16 %v9265
  %v9635 = vunpack.c.h.b16 %v9265
  %v9636 = vunpack.c.l.b16 %v9266
  %v9637 = vunpack.c.h.b16 %v9266
  %v9638 = vunpack.c.l.b16 %v9267
  %v9639 = vunpack.c.h.b16 %v9267
  %v9640 = vunpack.c.l.b16 %v9268
  %v9641 = vunpack.c.h.b16 %v9268
  %v9642 = vunpack.c.l.b16 %v9269
  %v9643 = vunpack.c.h.b16 %v9269
  %v9644 = vunpack.c.l.b16 %v9270
  %v9645 = vunpack.c.h.b16 %v9270
  %v9646 = vunpack.c.l.b16 %v9271
  %v9647 = vunpack.c.h.b16 %v9271
  %v9648 = vunpack.c.l.b16 %v9272
  %v9649 = vunpack.c.h.b16 %v9272
  %v9650 = vunpack.c.l.b16 %v9273
  %v9651 = vunpack.c.h.b16 %v9273
  %v9652 = vunpack.c.l.b16 %v9274
  %v9653 = vunpack.c.h.b16 %v9274
  %v9654 = vunpack.c.l.b16 %v9275
  %v9655 = vunpack.c.h.b16 %v9275
  %v9656 = vunpack.c.l.b16 %v9276
  %v9657 = vunpack.c.h.b16 %v9276
  %v9658 = vunpack.c.l.b16 %v9277
  %v9659 = vunpack.c.h.b16 %v9277
  %v9660 = vunpack.c.l.b16 %v9278
  %v9661 = vunpack.c.h.b16 %v9278
  %v9662 = vunpack.c.l.b16 %v9279
  %v9663 = vunpack.c.h.b16 %v9279
  %v9664 = vpack.c.b16 %v9416, %v9408
  %v9665 = vpack.c.b16 %v9417, %v9409
  %v9666 = vpack.c.b16 %v9418, %v9410
  %v9667 = vpack.c.b16 %v9419, %v9411
  %v9668 = vpack.c.b16 %v9420, %v9412
  %v9669 = vpack.c.b16 %v9421, %v9413
  %v9670 = vpack.c.b16 %v9422, %v9414
  %v9671 = vpack.c.b16 %v9423, %v9415
  %v9672 = vpack.c.b16 %v9432, %v9424
  %v9673 = vpack.c.b16 %v9433, %v9425
  %v9674 = vpack.c.b16 %v9434, %v9426
  %v9675 = vpack.c.b16 %v9435, %v9427
  %v9676 = vpack.c.b16 %v9436, %v9428
  %v9677 = vpack.c.b16 %v9437, %v9429
  %v9678 = vpack.c.b16 %v9438, %v9430
  %v9679 = vpack.c.b16 %v9439, %v9431
  %v9680 = vpack.c.b16 %v9448, %v9440
  %v9681 = vpack.c.b16 %v9449, %v9441
  %v9682 = vpack.c.b16 %v9450, %v9442
  %v9683 = vpack.c.b16 %v9451, %v9443
  %v9684 = vpack.c.b16 %v9452, %v9444
  %v9685 = vpack.c.b16 %v9453, %v9445
  %v9686 = vpack.c.b16 %v9454, %v9446
  %v9687 = vpack.c.b16 %v9455, %v9447
  %v9688 = vpack.c.b16 %v9464, %v9456
  %v9689 = vpack.c.b16 %v9465, %v9457
  %v9690 = vpack.c.b16 %v9466, %v9458
  %v9691 = vpack.c.b16 %v9467, %v9459
  %v9692 = vpack.c.b16 %v9468, %v9460
  %v9693 = vpack.c.b16 %v9469, %v9461
  %v9694 = vpack.c.b16 %v9470, %v9462
  %v9695 = vpack.c.b16 %v9471, %v9463
  %v9696 = vpack.c.b16 %v9480, %v9472
  %v9697 = vpack.c.b16 %v9481, %v9473
  %v9698 = vpack.c.b16 %v9482, %v9474
  %v9699 = vpack.c.b16 %v9483, %v9475
  %v9700 = vpack.c.b16 %v9484, %v9476
  %v9701 = vpack.c.b16 %v9485, %v9477
  %v9702 = vpack.c.b16 %v9486, %v9478
  %v9703 = vpack.c.b16 %v9487, %v9479
  %v9704 = vpack.c.b16 %v9496, %v9488
  %v9705 = vpack.c.b16 %v9497, %v9489
  %v9706 = vpack.c.b16 %v9498, %v9490
  %v9707 = vpack.c.b16 %v9499, %v9491
  %v9708 = vpack.c.b16 %v9500, %v9492
  %v9709 = vpack.c.b16 %v9501, %v9493
  %v9710 = vpack.c.b16 %v9502, %v9494
  %v9711 = vpack.c.b16 %v9503, %v9495
  %v9712 = vpack.c.b16 %v9512, %v9504
  %v9713 = vpack.c.b16 %v9513, %v9505
  %v9714 = vpack.c.b16 %v9514, %v9506
  %v9715 = vpack.c.b16 %v9515, %v9507
  %v9716 = vpack.c.b16 %v9516, %v9508
  %v9717 = vpack.c.b16 %v9517, %v9509
  %v9718 = vpack.c.b16 %v9518, %v9510
  %v9719 = vpack.c.b16 %v9519, %v9511
  %v9720 = vpack.c.b16 %v9528, %v9520
  %v9721 = vpack.c.b16 %v9529, %v9521
  %v9722 = vpack.c.b16 %v9530, %v9522
  %v9723 = vpack.c.b16 %v9531, %v9523
  %v9724 = vpack.c.b16 %v9532, %v9524
  %v9725 = vpack.c.b16 %v9533, %v9525
  %v9726 = vpack.c.b16 %v9534, %v9526
  %v9727 = vpack.c.b16 %v9535, %v9527
  %v9728 = vpack.c.b16 %v9544, %v9536
  %v9729 = vpack.c.b16 %v9545, %v9537
  %v9730 = vpack.c.b16 %v9546, %v9538
  %v9731 = vpack.c.b16 %v9547, %v9539
  %v9732 = vpack.c.b16 %v9548, %v9540
  %v9733 = vpack.c.b16 %v9549, %v9541
  %v9734 = vpack.c.b16 %v9550, %v9542
  %v9735 = vpack.c.b16 %v9551, %v9543
  %v9736 = vpack.c.b16 %v9560, %v9552
  %v9737 = vpack.c.b16 %v9561, %v9553
  %v9738 = vpack.c.b16 %v9562, %v9554
  %v9739 = vpack.c.b16 %v9563, %v9555
  %v9740 = vpack.c.b16 %v9564, %v9556
  %v9741 = vpack.c.b16 %v9565, %v9557
  %v9742 = vpack.c.b16 %v9566, %v9558
  %v9743 = vpack.c.b16 %v9567, %v9559
  %v9744 = vpack.c.b16 %v9576, %v9568
  %v9745 = vpack.c.b16 %v9577, %v9569
  %v9746 = vpack.c.b16 %v9578, %v9570
  %v9747 = vpack.c.b16 %v9579, %v9571
  %v9748 = vpack.c.b16 %v9580, %v9572
  %v9749 = vpack.c.b16 %v9581, %v9573
  %v9750 = vpack.c.b16 %v9582, %v9574
  %v9751 = vpack.c.b16 %v9583, %v9575
  %v9752 = vpack.c.b16 %v9592, %v9584
  %v9753 = vpack.c.b16 %v9593, %v9585
  %v9754 = vpack.c.b16 %v9594, %v9586
  %v9755 = vpack.c.b16 %v9595, %v9587
  %v9756 = vpack.c.b16 %v9596, %v9588
  %v9757 = vpack.c.b16 %v9597, %v9589
  %v9758 = vpack.c.b16 %v9598, %v9590
  %v9759 = vpack.c.b16 %v9599, %v9591
  %v9760 = vpack.c.b16 %v9608, %v9600
  %v9761 = vpack.c.b16 %v9609, %v9601
  %v9762 = vpack.c.b16 %v9610, %v9602
  %v9763 = vpack.c.b16 %v9611, %v9603
  %v9764 = vpack.c.b16 %v9612, %v9604
  %v9765 = vpack.c.b16 %v9613, %v9605
  %v9766 = vpack.c.b16 %v9614, %v9606
  %v9767 = vpack.c.b16 %v9615, %v9607
  %v9768 = vpack.c.b16 %v9624, %v9616
  %v9769 = vpack.c.b16 %v9625, %v9617
  %v9770 = vpack.c.b16 %v9626, %v9618
  %v9771 = vpack.c.b16 %v9627, %v9619
  %v9772 = vpack.c.b16 %v9628, %v9620
  %v9773 = vpack.c.b16 %v9629, %v9621
  %v9774 = vpack.c.b16 %v9630, %v9622
  %v9775 = vpack.c.b16 %v9631, %v9623
  %v9776 = vpack.c.b16 %v9640, %v9632
  %v9777 = vpack.c.b16 %v9641, %v9633
  %v9778 = vpack.c.b16 %v9642, %v9634
  %v9779 = vpack.c.b16 %v9643, %v9635
  %v9780 = vpack.c.b16 %v9644, %v9636
  %v9781 = vpack.c.b16 %v9645, %v9637
  %v9782 = vpack.c.b16 %v9646, %v9638
  %v9783 = vpack.c.b16 %v9647, %v9639
  %v9784 = vpack.c.b16 %v9656, %v9648
  %v9785 = vpack.c.b16 %v9657, %v9649
  %v9786 = vpack.c.b16 %v9658, %v9650
  %v9787 = vpack.c.b16 %v9659, %v9651
  %v9788 = vpack.c.b16 %v9660, %v9652
  %v9789 = vpack.c.b16 %v9661, %v9653
  %v9790 = vpack.c.b16 %v9662, %v9654
  %v9791 = vpack.c.b16 %v9663, %v9655
  %9920 = vmatprep.subr.bf16.mxu0 %v9665
  %9921 = vmatpush1.bf16.msra.mxu0 %v9664
  %9922 = vmatprep.subr.bf16.mxu0 %v9673
  %9923 = vmatpush1.bf16.msra.mxu0 %v9672
  %9924 = vmatprep.subr.bf16.mxu0 %v9681
  %9925 = vmatpush1.bf16.msra.mxu0 %v9680
  %9926 = vmatprep.subr.bf16.mxu0 %v9689
  %9927 = vmatpush1.bf16.msra.mxu0 %v9688
  %9928 = vmatprep.subr.bf16.mxu0 %v9697
  %9929 = vmatpush1.bf16.msra.mxu0 %v9696
  %9930 = vmatprep.subr.bf16.mxu0 %v9705
  %9931 = vmatpush1.bf16.msra.mxu0 %v9704
  %9932 = vmatprep.subr.bf16.mxu0 %v9713
  %9933 = vmatpush1.bf16.msra.mxu0 %v9712
  %9934 = vmatprep.subr.bf16.mxu0 %v9721
  %9935 = vmatpush1.bf16.msra.mxu0 %v9720
  %9936 = vmatprep.subr.bf16.mxu0 %v9729
  %9937 = vmatpush1.bf16.msra.mxu0 %v9728
  %9938 = vmatprep.subr.bf16.mxu0 %v9737
  %9939 = vmatpush1.bf16.msra.mxu0 %v9736
  %9940 = vmatprep.subr.bf16.mxu0 %v9745
  %9941 = vmatpush1.bf16.msra.mxu0 %v9744
  %9942 = vmatprep.subr.bf16.mxu0 %v9753
  %9943 = vmatpush1.bf16.msra.mxu0 %v9752
  %9944 = vmatprep.subr.bf16.mxu0 %v9761
  %9945 = vmatpush1.bf16.msra.mxu0 %v9760
  %9946 = vmatprep.subr.bf16.mxu0 %v9769
  %9947 = vmatpush1.bf16.msra.mxu0 %v9768
  %9948 = vmatprep.subr.bf16.mxu0 %v9777
  %9949 = vmatpush1.bf16.msra.mxu0 %v9776
  %9950 = vmatprep.subr.bf16.mxu0 %v9785
  %9951 = vmatpush1.bf16.msra.mxu0 %v9784
  %9952 = vmatprep.mubr.bf16.mxu0 %v9151
  %9953 = vmatmul.mubr.bf16.gmra.mrb[0].mxu0 %v9150
  %v9954 = vpop.f32.mrb[0].mxu0
  %v9955 = vadd.f32 0.0, %v9954
  %v9956 = vpop.f32.mrb[0].mxu0
  %v9957 = vadd.f32 0.0, %v9956
  %v9958 = vpop.f32.mrb[0].mxu0
  %v9959 = vpop.f32.mrb[0].mxu0
  %9960 = vdwg.mxu0
  %9961 = vmatprep.subr.bf16.mxu0 %v9667
  %9962 = vmatpush1.bf16.msra.mxu0 %v9666
  %9963 = vmatprep.subr.bf16.mxu0 %v9675
  %9964 = vmatpush1.bf16.msra.mxu0 %v9674
  %9965 = vmatprep.subr.bf16.mxu0 %v9683
  %9966 = vmatpush1.bf16.msra.mxu0 %v9682
  %9967 = vmatprep.subr.bf16.mxu0 %v9691
  %9968 = vmatpush1.bf16.msra.mxu0 %v9690
  %9969 = vmatprep.subr.bf16.mxu0 %v9699
  %9970 = vmatpush1.bf16.msra.mxu0 %v9698
  %9971 = vmatprep.subr.bf16.mxu0 %v9707
  %9972 = vmatpush1.bf16.msra.mxu0 %v9706
  %9973 = vmatprep.subr.bf16.mxu0 %v9715
  %9974 = vmatpush1.bf16.msra.mxu0 %v9714
  %9975 = vmatprep.subr.bf16.mxu0 %v9723
  %9976 = vmatpush1.bf16.msra.mxu0 %v9722
  %9977 = vmatprep.subr.bf16.mxu0 %v9731
  %9978 = vmatpush1.bf16.msra.mxu0 %v9730
  %9979 = vmatprep.subr.bf16.mxu0 %v9739
  %9980 = vmatpush1.bf16.msra.mxu0 %v9738
  %9981 = vmatprep.subr.bf16.mxu0 %v9747
  %9982 = vmatpush1.bf16.msra.mxu0 %v9746
  %9983 = vmatprep.subr.bf16.mxu0 %v9755
  %9984 = vmatpush1.bf16.msra.mxu0 %v9754
  %9985 = vmatprep.subr.bf16.mxu0 %v9763
  %9986 = vmatpush1.bf16.msra.mxu0 %v9762
  %9987 = vmatprep.subr.bf16.mxu0 %v9771
  %9988 = vmatpush1.bf16.msra.mxu0 %v9770
  %9989 = vmatprep.subr.bf16.mxu0 %v9779
  %9990 = vmatpush1.bf16.msra.mxu0 %v9778
  %9991 = vmatprep.subr.bf16.mxu0 %v9787
  %9992 = vmatpush1.bf16.msra.mxu0 %v9786
  %9993 = vmatprep.mubr.bf16.mxu0 %v9151
  %9994 = vmatmul.mubr.bf16.gmra.mrb[0].mxu0 %v9150
  %v9995 = vpop.f32.mrb[0].mxu0
  %v9996 = vadd.f32 0.0, %v9995
  %v9997 = vpop.f32.mrb[0].mxu0
  %v9998 = vadd.f32 0.0, %v9997
  %v9999 = vpop.f32.mrb[0].mxu0
  %v10000 = vpop.f32.mrb[0].mxu0
  %10001 = vdwg.mxu0
  %10002 = vmatprep.subr.bf16.mxu0 %v9669
  %10003 = vmatpush1.bf16.msra.mxu0 %v9668
  %10004 = vmatprep.subr.bf16.mxu0 %v9677
  %10005 = vmatpush1.bf16.msra.mxu0 %v9676
  %10006 = vmatprep.subr.bf16.mxu0 %v9685
  %10007 = vmatpush1.bf16.msra.mxu0 %v9684
  %10008 = vmatprep.subr.bf16.mxu0 %v9693
  %10009 = vmatpush1.bf16.msra.mxu0 %v9692
  %10010 = vmatprep.subr.bf16.mxu0 %v9701
  %10011 = vmatpush1.bf16.msra.mxu0 %v9700
  %10012 = vmatprep.subr.bf16.mxu0 %v9709
  %10013 = vmatpush1.bf16.msra.mxu0 %v9708
  %10014 = vmatprep.subr.bf16.mxu0 %v9717
  %10015 = vmatpush1.bf16.msra.mxu0 %v9716
  %10016 = vmatprep.subr.bf16.mxu0 %v9725
  %10017 = vmatpush1.bf16.msra.mxu0 %v9724
  %10018 = vmatprep.subr.bf16.mxu0 %v9733
  %10019 = vmatpush1.bf16.msra.mxu0 %v9732
  %10020 = vmatprep.subr.bf16.mxu0 %v9741
  %10021 = vmatpush1.bf16.msra.mxu0 %v9740
  %10022 = vmatprep.subr.bf16.mxu0 %v9749
  %10023 = vmatpush1.bf16.msra.mxu0 %v9748
  %10024 = vmatprep.subr.bf16.mxu0 %v9757
  %10025 = vmatpush1.bf16.msra.mxu0 %v9756
  %10026 = vmatprep.subr.bf16.mxu0 %v9765
  %10027 = vmatpush1.bf16.msra.mxu0 %v9764
  %10028 = vmatprep.subr.bf16.mxu0 %v9773
  %10029 = vmatpush1.bf16.msra.mxu0 %v9772
  %10030 = vmatprep.subr.bf16.mxu0 %v9781
  %10031 = vmatpush1.bf16.msra.mxu0 %v9780
  %10032 = vmatprep.subr.bf16.mxu0 %v9789
  %10033 = vmatpush1.bf16.msra.mxu0 %v9788
  %10034 = vmatprep.mubr.bf16.mxu0 %v9151
  %10035 = vmatmul.mubr.bf16.gmra.mrb[0].mxu0 %v9150
  %v10036 = vpop.f32.mrb[0].mxu0
  %v10037 = vadd.f32 0.0, %v10036
  %v10038 = vpop.f32.mrb[0].mxu0
  %v10039 = vadd.f32 0.0, %v10038
  %v10040 = vpop.f32.mrb[0].mxu0
  %v10041 = vpop.f32.mrb[0].mxu0
  %10042 = vdwg.mxu0
  %10043 = vmatprep.subr.bf16.mxu0 %v9671
  %10044 = vmatpush1.bf16.msra.mxu0 %v9670
  %10045 = vmatprep.subr.bf16.mxu0 %v9679
  %10046 = vmatpush1.bf16.msra.mxu0 %v9678
  %10047 = vmatprep.subr.bf16.mxu0 %v9687
  %10048 = vmatpush1.bf16.msra.mxu0 %v9686
  %10049 = vmatprep.subr.bf16.mxu0 %v9695
  %10050 = vmatpush1.bf16.msra.mxu0 %v9694
  %10051 = vmatprep.subr.bf16.mxu0 %v9703
  %10052 = vmatpush1.bf16.msra.mxu0 %v9702
  %10053 = vmatprep.subr.bf16.mxu0 %v9711
  %10054 = vmatpush1.bf16.msra.mxu0 %v9710
  %10055 = vmatprep.subr.bf16.mxu0 %v9719
  %10056 = vmatpush1.bf16.msra.mxu0 %v9718
  %10057 = vmatprep.subr.bf16.mxu0 %v9727
  %10058 = vmatpush1.bf16.msra.mxu0 %v9726
  %10059 = vmatprep.subr.bf16.mxu0 %v9735
  %10060 = vmatpush1.bf16.msra.mxu0 %v9734
  %10061 = vmatprep.subr.bf16.mxu0 %v9743
  %10062 = vmatpush1.bf16.msra.mxu0 %v9742
  %10063 = vmatprep.subr.bf16.mxu0 %v9751
  %10064 = vmatpush1.bf16.msra.mxu0 %v9750
  %10065 = vmatprep.subr.bf16.mxu0 %v9759
  %10066 = vmatpush1.bf16.msra.mxu0 %v9758
  %10067 = vmatprep.subr.bf16.mxu0 %v9767
  %10068 = vmatpush1.bf16.msra.mxu0 %v9766
  %10069 = vmatprep.subr.bf16.mxu0 %v9775
  %10070 = vmatpush1.bf16.msra.mxu0 %v9774
  %10071 = vmatprep.subr.bf16.mxu0 %v9783
  %10072 = vmatpush1.bf16.msra.mxu0 %v9782
  %10073 = vmatprep.subr.bf16.mxu0 %v9791
  %10074 = vmatpush1.bf16.msra.mxu0 %v9790
  %10075 = vmatprep.mubr.bf16.mxu0 %v9151
  %10076 = vmatmul.mubr.bf16.gmra.mrb[0].mxu0 %v9150
  %v10077 = vpop.f32.mrb[0].mxu0
  %v10078 = vadd.f32 0.0, %v10077
  %v10079 = vpop.f32.mrb[0].mxu0
  %v10080 = vadd.f32 0.0, %v10079
  %v10081 = vpop.f32.mrb[0].mxu0
  %v10082 = vpop.f32.mrb[0].mxu0
  %10083 = vdwg.mxu0
  %v10084 = vadd.f32 %v3186, %v9955
  %v10085 = vadd.f32 %v3188, %v9957
  %v10086 = vadd.f32 %v3227, %v9996
  %v10087 = vadd.f32 %v3229, %v9998
  %v10088 = vmul.f32 %v10084, 0.5
  %v10089 = vtanh.pop %v10088
  %v10090 = vmul.f32 %v10089, 0.5
  %v10091 = vadd.f32 %v10090, 0.5
  %v10092 = vmul.f32 %v10085, 0.5
  %v10093 = vtanh.pop %v10092
  %v10094 = vmul.f32 %v10093, 0.5
  %v10095 = vadd.f32 %v10094, 0.5
  %v10096 = vtanh.pop %v10086
  %v10097 = vmul.f32 %v10087, 0.5
  %v10098 = vtanh.pop %v10097
  %v10099 = vmul.f32 %v10098, 0.5
  %v10100 = vadd.f32 %v10099, 0.5
  %v10101 = vmul.f32 %v10095, %v9124
  %v10102 = vmul.f32 %v10091, %v10096
  %v10103 = vadd.f32 %v10101, %v10102
  %v10104 = vtanh.pop %v10103
  %v10105 = vmul.f32 %v10100, %v10104
  %v10106 = vadd.f32 %v3238, %v10037
  %v10107 = vadd.f32 %v3242, %v10039
  %v10108 = vadd.f32 %v3246, %v10078
  %v10109 = vadd.f32 %v3250, %v10080
  %v10110 = vmul.f32 %v10106, 0.5
  %v10111 = vtanh.pop %v10110
  %v10112 = vmul.f32 %v10111, 0.5
  %v10113 = vadd.f32 %v10112, 0.5
  %v10114 = vmul.f32 %v10107, 0.5
  %v10115 = vtanh.pop %v10114
  %v10116 = vmul.f32 %v10115, 0.5
  %v10117 = vadd.f32 %v10116, 0.5
  %v10118 = vtanh.pop %v10108
  %v10119 = vmul.f32 %v10109, 0.5
  %v10120 = vtanh.pop %v10119
  %v10121 = vmul.f32 %v10120, 0.5
  %v10122 = vadd.f32 %v10121, 0.5
  %v10123 = vmul.f32 %v10117, %v9146
  %v10124 = vmul.f32 %v10113, %v10118
  %v10125 = vadd.f32 %v10123, %v10124
  %v10126 = vtanh.pop %v10125
  %v10127 = vmul.f32 %v10122, %v10126
  %10128 = vst [vmem:[#allocation3 + $0x30] sm:$0xff] %v10127
  %v10129 = vpack.c.bf16 %v10105, %v10105
  %v10130 = vpack.c.bf16 %v10127, %v10127
  %v10131 = vld [vmem:[%s8 + $0x10] sm:$0xff]
  %v10132 = vld [vmem:[%s8 + $0x18] sm:$0xff]
  %v10133 = vld [vmem:[%s8 + $0x30] sm:$0xff]
  %v10134 = vld [vmem:[%s8 + $0x38] sm:$0xff]
  %v10135 = vld [vmem:[%s8 + $0x50] sm:$0xff]
  %v10136 = vld [vmem:[%s8 + $0x58] sm:$0xff]
  %v10137 = vld [vmem:[%s8 + $0x70] sm:$0xff]
  %v10138 = vld [vmem:[%s8 + $0x78] sm:$0xff]
  %v10139 = vld [vmem:[%s8 + $0x90] sm:$0xff]
  %v10140 = vld [vmem:[%s8 + $0x98] sm:$0xff]
  %v10141 = vld [vmem:[%s8 + $0xb0] sm:$0xff]
  %v10142 = vld [vmem:[%s8 + $0xb8] sm:$0xff]
  %v10143 = vld [vmem:[%s8 + $0xd0] sm:$0xff]
  %v10144 = vld [vmem:[%s8 + $0xd8] sm:$0xff]
  %v10145 = vld [vmem:[%s8 + $0xf0] sm:$0xff]
  %v10146 = vld [vmem:[%s8 + $0xf8] sm:$0xff]
  %v10147 = vld [vmem:[%s8 + $0x110] sm:$0xff]
  %v10148 = vld [vmem:[%s8 + $0x118] sm:$0xff]
  %v10149 = vld [vmem:[%s8 + $0x130] sm:$0xff]
  %v10150 = vld [vmem:[%s8 + $0x138] sm:$0xff]
  %v10151 = vld [vmem:[%s8 + $0x150] sm:$0xff]
  %v10152 = vld [vmem:[%s8 + $0x158] sm:$0xff]
  %v10153 = vld [vmem:[%s8 + $0x170] sm:$0xff]
  %v10154 = vld [vmem:[%s8 + $0x178] sm:$0xff]
  %v10155 = vld [vmem:[%s8 + $0x190] sm:$0xff]
  %v10156 = vld [vmem:[%s8 + $0x198] sm:$0xff]
  %v10157 = vld [vmem:[%s8 + $0x1b0] sm:$0xff]
  %v10158 = vld [vmem:[%s8 + $0x1b8] sm:$0xff]
  %v10159 = vld [vmem:[%s8 + $0x1d0] sm:$0xff]
  %v10160 = vld [vmem:[%s8 + $0x1d8] sm:$0xff]
  %v10161 = vld [vmem:[%s8 + $0x1f0] sm:$0xff]
  %v10162 = vld [vmem:[%s8 + $0x1f8] sm:$0xff]
  %v10163 = vld [vmem:[%s8 + $0x210] sm:$0xff]
  %v10164 = vld [vmem:[%s8 + $0x218] sm:$0xff]
  %v10165 = vld [vmem:[%s8 + $0x230] sm:$0xff]
  %v10166 = vld [vmem:[%s8 + $0x238] sm:$0xff]
  %v10167 = vld [vmem:[%s8 + $0x250] sm:$0xff]
  %v10168 = vld [vmem:[%s8 + $0x258] sm:$0xff]
  %v10169 = vld [vmem:[%s8 + $0x270] sm:$0xff]
  %v10170 = vld [vmem:[%s8 + $0x278] sm:$0xff]
  %v10171 = vld [vmem:[%s8 + $0x290] sm:$0xff]
  %v10172 = vld [vmem:[%s8 + $0x298] sm:$0xff]
  %v10173 = vld [vmem:[%s8 + $0x2b0] sm:$0xff]
  %v10174 = vld [vmem:[%s8 + $0x2b8] sm:$0xff]
  %v10175 = vld [vmem:[%s8 + $0x2d0] sm:$0xff]
  %v10176 = vld [vmem:[%s8 + $0x2d8] sm:$0xff]
  %v10177 = vld [vmem:[%s8 + $0x2f0] sm:$0xff]
  %v10178 = vld [vmem:[%s8 + $0x2f8] sm:$0xff]
  %v10179 = vld [vmem:[%s8 + $0x310] sm:$0xff]
  %v10180 = vld [vmem:[%s8 + $0x318] sm:$0xff]
  %v10181 = vld [vmem:[%s8 + $0x330] sm:$0xff]
  %v10182 = vld [vmem:[%s8 + $0x338] sm:$0xff]
  %v10183 = vld [vmem:[%s8 + $0x350] sm:$0xff]
  %v10184 = vld [vmem:[%s8 + $0x358] sm:$0xff]
  %v10185 = vld [vmem:[%s8 + $0x370] sm:$0xff]
  %v10186 = vld [vmem:[%s8 + $0x378] sm:$0xff]
  %v10187 = vld [vmem:[%s8 + $0x390] sm:$0xff]
  %v10188 = vld [vmem:[%s8 + $0x398] sm:$0xff]
  %v10189 = vld [vmem:[%s8 + $0x3b0] sm:$0xff]
  %v10190 = vld [vmem:[%s8 + $0x3b8] sm:$0xff]
  %v10191 = vld [vmem:[%s8 + $0x3d0] sm:$0xff]
  %v10192 = vld [vmem:[%s8 + $0x3d8] sm:$0xff]
  %v10193 = vld [vmem:[%s8 + $0x3f0] sm:$0xff]
  %v10194 = vld [vmem:[%s8 + $0x3f8] sm:$0xff]
  %v10259 = vunpack.c.l.b16 %v10131
  %v10260 = vunpack.c.h.b16 %v10131
  %v10261 = vunpack.c.l.b16 %v10132
  %v10262 = vunpack.c.h.b16 %v10132
  %v10263 = vunpack.c.l.b16 %v10133
  %v10264 = vunpack.c.h.b16 %v10133
  %v10265 = vunpack.c.l.b16 %v10134
  %v10266 = vunpack.c.h.b16 %v10134
  %v10267 = vunpack.c.l.b16 %v10135
  %v10268 = vunpack.c.h.b16 %v10135
  %v10269 = vunpack.c.l.b16 %v10136
  %v10270 = vunpack.c.h.b16 %v10136
  %v10271 = vunpack.c.l.b16 %v10137
  %v10272 = vunpack.c.h.b16 %v10137
  %v10273 = vunpack.c.l.b16 %v10138
  %v10274 = vunpack.c.h.b16 %v10138
  %v10275 = vunpack.c.l.b16 %v10139
  %v10276 = vunpack.c.h.b16 %v10139
  %v10277 = vunpack.c.l.b16 %v10140
  %v10278 = vunpack.c.h.b16 %v10140
  %v10279 = vunpack.c.l.b16 %v10141
  %v10280 = vunpack.c.h.b16 %v10141
  %v10281 = vunpack.c.l.b16 %v10142
  %v10282 = vunpack.c.h.b16 %v10142
  %v10283 = vunpack.c.l.b16 %v10143
  %v10284 = vunpack.c.h.b16 %v10143
  %v10285 = vunpack.c.l.b16 %v10144
  %v10286 = vunpack.c.h.b16 %v10144
  %v10287 = vunpack.c.l.b16 %v10145
  %v10288 = vunpack.c.h.b16 %v10145
  %v10289 = vunpack.c.l.b16 %v10146
  %v10290 = vunpack.c.h.b16 %v10146
  %v10291 = vunpack.c.l.b16 %v10147
  %v10292 = vunpack.c.h.b16 %v10147
  %v10293 = vunpack.c.l.b16 %v10148
  %v10294 = vunpack.c.h.b16 %v10148
  %v10295 = vunpack.c.l.b16 %v10149
  %v10296 = vunpack.c.h.b16 %v10149
  %v10297 = vunpack.c.l.b16 %v10150
  %v10298 = vunpack.c.h.b16 %v10150
  %v10299 = vunpack.c.l.b16 %v10151
  %v10300 = vunpack.c.h.b16 %v10151
  %v10301 = vunpack.c.l.b16 %v10152
  %v10302 = vunpack.c.h.b16 %v10152
  %v10303 = vunpack.c.l.b16 %v10153
  %v10304 = vunpack.c.h.b16 %v10153
  %v10305 = vunpack.c.l.b16 %v10154
  %v10306 = vunpack.c.h.b16 %v10154
  %v10307 = vunpack.c.l.b16 %v10155
  %v10308 = vunpack.c.h.b16 %v10155
  %v10309 = vunpack.c.l.b16 %v10156
  %v10310 = vunpack.c.h.b16 %v10156
  %v10311 = vunpack.c.l.b16 %v10157
  %v10312 = vunpack.c.h.b16 %v10157
  %v10313 = vunpack.c.l.b16 %v10158
  %v10314 = vunpack.c.h.b16 %v10158
  %v10315 = vunpack.c.l.b16 %v10159
  %v10316 = vunpack.c.h.b16 %v10159
  %v10317 = vunpack.c.l.b16 %v10160
  %v10318 = vunpack.c.h.b16 %v10160
  %v10319 = vunpack.c.l.b16 %v10161
  %v10320 = vunpack.c.h.b16 %v10161
  %v10321 = vunpack.c.l.b16 %v10162
  %v10322 = vunpack.c.h.b16 %v10162
  %v10323 = vunpack.c.l.b16 %v10163
  %v10324 = vunpack.c.h.b16 %v10163
  %v10325 = vunpack.c.l.b16 %v10164
  %v10326 = vunpack.c.h.b16 %v10164
  %v10327 = vunpack.c.l.b16 %v10165
  %v10328 = vunpack.c.h.b16 %v10165
  %v10329 = vunpack.c.l.b16 %v10166
  %v10330 = vunpack.c.h.b16 %v10166
  %v10331 = vunpack.c.l.b16 %v10167
  %v10332 = vunpack.c.h.b16 %v10167
  %v10333 = vunpack.c.l.b16 %v10168
  %v10334 = vunpack.c.h.b16 %v10168
  %v10335 = vunpack.c.l.b16 %v10169
  %v10336 = vunpack.c.h.b16 %v10169
  %v10337 = vunpack.c.l.b16 %v10170
  %v10338 = vunpack.c.h.b16 %v10170
  %v10339 = vunpack.c.l.b16 %v10171
  %v10340 = vunpack.c.h.b16 %v10171
  %v10341 = vunpack.c.l.b16 %v10172
  %v10342 = vunpack.c.h.b16 %v10172
  %v10343 = vunpack.c.l.b16 %v10173
  %v10344 = vunpack.c.h.b16 %v10173
  %v10345 = vunpack.c.l.b16 %v10174
  %v10346 = vunpack.c.h.b16 %v10174
  %v10347 = vunpack.c.l.b16 %v10175
  %v10348 = vunpack.c.h.b16 %v10175
  %v10349 = vunpack.c.l.b16 %v10176
  %v10350 = vunpack.c.h.b16 %v10176
  %v10351 = vunpack.c.l.b16 %v10177
  %v10352 = vunpack.c.h.b16 %v10177
  %v10353 = vunpack.c.l.b16 %v10178
  %v10354 = vunpack.c.h.b16 %v10178
  %v10355 = vunpack.c.l.b16 %v10179
  %v10356 = vunpack.c.h.b16 %v10179
  %v10357 = vunpack.c.l.b16 %v10180
  %v10358 = vunpack.c.h.b16 %v10180
  %v10359 = vunpack.c.l.b16 %v10181
  %v10360 = vunpack.c.h.b16 %v10181
  %v10361 = vunpack.c.l.b16 %v10182
  %v10362 = vunpack.c.h.b16 %v10182
  %v10363 = vunpack.c.l.b16 %v10183
  %v10364 = vunpack.c.h.b16 %v10183
  %v10365 = vunpack.c.l.b16 %v10184
  %v10366 = vunpack.c.h.b16 %v10184
  %v10367 = vunpack.c.l.b16 %v10185
  %v10368 = vunpack.c.h.b16 %v10185
  %v10369 = vunpack.c.l.b16 %v10186
  %v10370 = vunpack.c.h.b16 %v10186
  %v10371 = vunpack.c.l.b16 %v10187
  %v10372 = vunpack.c.h.b16 %v10187
  %v10373 = vunpack.c.l.b16 %v10188
  %v10374 = vunpack.c.h.b16 %v10188
  %v10375 = vunpack.c.l.b16 %v10189
  %v10376 = vunpack.c.h.b16 %v10189
  %v10377 = vunpack.c.l.b16 %v10190
  %v10378 = vunpack.c.h.b16 %v10190
  %v10379 = vunpack.c.l.b16 %v10191
  %v10380 = vunpack.c.h.b16 %v10191
  %v10381 = vunpack.c.l.b16 %v10192
  %v10382 = vunpack.c.h.b16 %v10192
  %v10383 = vunpack.c.l.b16 %v10193
  %v10384 = vunpack.c.h.b16 %v10193
  %v10385 = vunpack.c.l.b16 %v10194
  %v10386 = vunpack.c.h.b16 %v10194
  %v10387 = vpack.c.b16 %v10263, %v10259
  %v10388 = vpack.c.b16 %v10264, %v10260
  %v10389 = vpack.c.b16 %v10265, %v10261
  %v10390 = vpack.c.b16 %v10266, %v10262
  %v10391 = vpack.c.b16 %v10271, %v10267
  %v10392 = vpack.c.b16 %v10272, %v10268
  %v10393 = vpack.c.b16 %v10273, %v10269
  %v10394 = vpack.c.b16 %v10274, %v10270
  %v10395 = vpack.c.b16 %v10279, %v10275
  %v10396 = vpack.c.b16 %v10280, %v10276
  %v10397 = vpack.c.b16 %v10281, %v10277
  %v10398 = vpack.c.b16 %v10282, %v10278
  %v10399 = vpack.c.b16 %v10287, %v10283
  %v10400 = vpack.c.b16 %v10288, %v10284
  %v10401 = vpack.c.b16 %v10289, %v10285
  %v10402 = vpack.c.b16 %v10290, %v10286
  %v10403 = vpack.c.b16 %v10295, %v10291
  %v10404 = vpack.c.b16 %v10296, %v10292
  %v10405 = vpack.c.b16 %v10297, %v10293
  %v10406 = vpack.c.b16 %v10298, %v10294
  %v10407 = vpack.c.b16 %v10303, %v10299
  %v10408 = vpack.c.b16 %v10304, %v10300
  %v10409 = vpack.c.b16 %v10305, %v10301
  %v10410 = vpack.c.b16 %v10306, %v10302
  %v10411 = vpack.c.b16 %v10311, %v10307
  %v10412 = vpack.c.b16 %v10312, %v10308
  %v10413 = vpack.c.b16 %v10313, %v10309
  %v10414 = vpack.c.b16 %v10314, %v10310
  %v10415 = vpack.c.b16 %v10319, %v10315
  %v10416 = vpack.c.b16 %v10320, %v10316
  %v10417 = vpack.c.b16 %v10321, %v10317
  %v10418 = vpack.c.b16 %v10322, %v10318
  %v10419 = vpack.c.b16 %v10327, %v10323
  %v10420 = vpack.c.b16 %v10328, %v10324
  %v10421 = vpack.c.b16 %v10329, %v10325
  %v10422 = vpack.c.b16 %v10330, %v10326
  %v10423 = vpack.c.b16 %v10335, %v10331
  %v10424 = vpack.c.b16 %v10336, %v10332
  %v10425 = vpack.c.b16 %v10337, %v10333
  %v10426 = vpack.c.b16 %v10338, %v10334
  %v10427 = vpack.c.b16 %v10343, %v10339
  %v10428 = vpack.c.b16 %v10344, %v10340
  %v10429 = vpack.c.b16 %v10345, %v10341
  %v10430 = vpack.c.b16 %v10346, %v10342
  %v10431 = vpack.c.b16 %v10351, %v10347
  %v10432 = vpack.c.b16 %v10352, %v10348
  %v10433 = vpack.c.b16 %v10353, %v10349
  %v10434 = vpack.c.b16 %v10354, %v10350
  %v10435 = vpack.c.b16 %v10359, %v10355
  %v10436 = vpack.c.b16 %v10360, %v10356
  %v10437 = vpack.c.b16 %v10361, %v10357
  %v10438 = vpack.c.b16 %v10362, %v10358
  %v10439 = vpack.c.b16 %v10367, %v10363
  %v10440 = vpack.c.b16 %v10368, %v10364
  %v10441 = vpack.c.b16 %v10369, %v10365
  %v10442 = vpack.c.b16 %v10370, %v10366
  %v10443 = vpack.c.b16 %v10375, %v10371
  %v10444 = vpack.c.b16 %v10376, %v10372
  %v10445 = vpack.c.b16 %v10377, %v10373
  %v10446 = vpack.c.b16 %v10378, %v10374
  %v10447 = vpack.c.b16 %v10383, %v10379
  %v10448 = vpack.c.b16 %v10384, %v10380
  %v10449 = vpack.c.b16 %v10385, %v10381
  %v10450 = vpack.c.b16 %v10386, %v10382
  %10515 = vmatprep.subr.bf16.mxu0 %v10388
  %10516 = vmatpush1.bf16.msra.mxu0 %v10387
  %10517 = vmatprep.subr.bf16.mxu0 %v10392
  %10518 = vmatpush1.bf16.msra.mxu0 %v10391
  %10519 = vmatprep.subr.bf16.mxu0 %v10396
  %10520 = vmatpush1.bf16.msra.mxu0 %v10395
  %10521 = vmatprep.subr.bf16.mxu0 %v10400
  %10522 = vmatpush1.bf16.msra.mxu0 %v10399
  %10523 = vmatprep.subr.bf16.mxu0 %v10404
  %10524 = vmatpush1.bf16.msra.mxu0 %v10403
  %10525 = vmatprep.subr.bf16.mxu0 %v10408
  %10526 = vmatpush1.bf16.msra.mxu0 %v10407
  %10527 = vmatprep.subr.bf16.mxu0 %v10412
  %10528 = vmatpush1.bf16.msra.mxu0 %v10411
  %10529 = vmatprep.subr.bf16.mxu0 %v10416
  %10530 = vmatpush1.bf16.msra.mxu0 %v10415
  %10531 = vmatprep.subr.bf16.mxu0 %v10420
  %10532 = vmatpush1.bf16.msra.mxu0 %v10419
  %10533 = vmatprep.subr.bf16.mxu0 %v10424
  %10534 = vmatpush1.bf16.msra.mxu0 %v10423
  %10535 = vmatprep.subr.bf16.mxu0 %v10428
  %10536 = vmatpush1.bf16.msra.mxu0 %v10427
  %10537 = vmatprep.subr.bf16.mxu0 %v10432
  %10538 = vmatpush1.bf16.msra.mxu0 %v10431
  %10539 = vmatprep.subr.bf16.mxu0 %v10436
  %10540 = vmatpush1.bf16.msra.mxu0 %v10435
  %10541 = vmatprep.subr.bf16.mxu0 %v10440
  %10542 = vmatpush1.bf16.msra.mxu0 %v10439
  %10543 = vmatprep.subr.bf16.mxu0 %v10444
  %10544 = vmatpush1.bf16.msra.mxu0 %v10443
  %10545 = vmatprep.subr.bf16.mxu0 %v10448
  %10546 = vmatpush1.bf16.msra.mxu0 %v10447
  %10547 = vmatprep.mubr.bf16.mxu0 %v10130
  %10548 = vmatmul.mubr.bf16.gmra.mrb[0].mxu0 %v10129
  %v10549 = vpop.f32.mrb[0].mxu0
  %v10550 = vadd.f32 0.0, %v10549
  %v10551 = vpop.f32.mrb[0].mxu0
  %v10552 = vadd.f32 0.0, %v10551
  %v10553 = vpop.f32.mrb[0].mxu0
  %v10554 = vpop.f32.mrb[0].mxu0
  %10555 = vdwg.mxu0
  %10556 = vmatprep.subr.bf16.mxu0 %v10390
  %10557 = vmatpush1.bf16.msra.mxu0 %v10389
  %10558 = vmatprep.subr.bf16.mxu0 %v10394
  %10559 = vmatpush1.bf16.msra.mxu0 %v10393
  %10560 = vmatprep.subr.bf16.mxu0 %v10398
  %10561 = vmatpush1.bf16.msra.mxu0 %v10397
  %10562 = vmatprep.subr.bf16.mxu0 %v10402
  %10563 = vmatpush1.bf16.msra.mxu0 %v10401
  %10564 = vmatprep.subr.bf16.mxu0 %v10406
  %10565 = vmatpush1.bf16.msra.mxu0 %v10405
  %10566 = vmatprep.subr.bf16.mxu0 %v10410
  %10567 = vmatpush1.bf16.msra.mxu0 %v10409
  %10568 = vmatprep.subr.bf16.mxu0 %v10414
  %10569 = vmatpush1.bf16.msra.mxu0 %v10413
  %10570 = vmatprep.subr.bf16.mxu0 %v10418
  %10571 = vmatpush1.bf16.msra.mxu0 %v10417
  %10572 = vmatprep.subr.bf16.mxu0 %v10422
  %10573 = vmatpush1.bf16.msra.mxu0 %v10421
  %10574 = vmatprep.subr.bf16.mxu0 %v10426
  %10575 = vmatpush1.bf16.msra.mxu0 %v10425
  %10576 = vmatprep.subr.bf16.mxu0 %v10430
  %10577 = vmatpush1.bf16.msra.mxu0 %v10429
  %10578 = vmatprep.subr.bf16.mxu0 %v10434
  %10579 = vmatpush1.bf16.msra.mxu0 %v10433
  %10580 = vmatprep.subr.bf16.mxu0 %v10438
  %10581 = vmatpush1.bf16.msra.mxu0 %v10437
  %10582 = vmatprep.subr.bf16.mxu0 %v10442
  %10583 = vmatpush1.bf16.msra.mxu0 %v10441
  %10584 = vmatprep.subr.bf16.mxu0 %v10446
  %10585 = vmatpush1.bf16.msra.mxu0 %v10445
  %10586 = vmatprep.subr.bf16.mxu0 %v10450
  %10587 = vmatpush1.bf16.msra.mxu0 %v10449
  %10588 = vmatprep.mubr.bf16.mxu0 %v10130
  %10589 = vmatmul.mubr.bf16.gmra.mrb[0].mxu0 %v10129
  %v10590 = vpop.f32.mrb[0].mxu0
  %v10591 = vadd.f32 0.0, %v10590
  %v10592 = vpop.f32.mrb[0].mxu0
  %v10593 = vadd.f32 0.0, %v10592
  %v10594 = vpop.f32.mrb[0].mxu0
  %v10595 = vpop.f32.mrb[0].mxu0
  %10596 = vdwg.mxu0
  %v10597 = vadd.f32 %v3238, %v10550
  %v10598 = vadd.f32 %v3242, %v10552
  %v10599 = vadd.f32 %v3246, %v10591
  %v10600 = vadd.f32 %v3250, %v10593
  %v10601 = vmul.f32 %v10597, 0.5
  %v10602 = vtanh.pop %v10601
  %v10603 = vmul.f32 %v10602, 0.5
  %v10604 = vadd.f32 %v10603, 0.5
  %v10605 = vmul.f32 %v10598, 0.5
  %v10606 = vtanh.pop %v10605
  %v10607 = vmul.f32 %v10606, 0.5
  %v10608 = vadd.f32 %v10607, 0.5
  %v10609 = vtanh.pop %v10599
  %v10610 = vmul.f32 %v10600, 0.5
  %v10611 = vtanh.pop %v10610
  %v10612 = vmul.f32 %v10611, 0.5
  %v10613 = vadd.f32 %v10612, 0.5
  %v10614 = vmul.f32 %v10608, %v10125
  %v10615 = vmul.f32 %v10604, %v10609
  %v10616 = vadd.f32 %v10614, %v10615
  %v10617 = vtanh.pop %v10616
  %v10618 = vmul.f32 %v10613, %v10617
  %10619 = vst [vmem:[#allocation3 + $0x38] sm:$0xff] %v10618
  %v10620 = vld [vmem:[#allocation3] sm:$0xff]
  %v10621 = vld [vmem:[#allocation3 + $0x8] sm:$0xff]
  %v10622 = vld [vmem:[#allocation3 + $0x10] sm:$0xff]
  %v10623 = vld [vmem:[#allocation3 + $0x18] sm:$0xff]
  %v10624 = vld [vmem:[#allocation3 + $0x20] sm:$0xff]
  %v10625 = vld [vmem:[#allocation3 + $0x28] sm:$0xff]
  %v10626 = vld [vmem:[#allocation3 + $0x30] sm:$0xff]
  %v10627 = vld [vmem:[#allocation3 + $0x38] sm:$0xff]
  %v10628 = vpack.c.bf16 %v10621, %v10620
  %v10629 = vpack.c.bf16 %v10623, %v10622
  %v10630 = vpack.c.bf16 %v10625, %v10624
  %v10631 = vpack.c.bf16 %v10627, %v10626
  %v10632 = vld [vmem:[%s10] sm:$0xf]
  %v10633 = vld [vmem:[%s10 + $0x4] sm:$0xf]
  %v10634 = vld [vmem:[%s10 + $0x8] sm:$0xf]
  %v10635 = vld [vmem:[%s10 + $0xc] sm:$0xf]
  %v10636 = vld [vmem:[%s10 + $0x10] sm:$0xf]
  %v10637 = vld [vmem:[%s10 + $0x14] sm:$0xf]
  %v10638 = vld [vmem:[%s10 + $0x18] sm:$0xf]
  %v10639 = vld [vmem:[%s10 + $0x1c] sm:$0xf]
  %v10640 = vld [vmem:[%s10 + $0x20] sm:$0xf]
  %v10641 = vld [vmem:[%s10 + $0x24] sm:$0xf]
  %v10642 = vld [vmem:[%s10 + $0x28] sm:$0xf]
  %v10643 = vld [vmem:[%s10 + $0x2c] sm:$0xf]
  %v10644 = vld [vmem:[%s10 + $0x30] sm:$0xf]
  %v10645 = vld [vmem:[%s10 + $0x34] sm:$0xf]
  %v10646 = vld [vmem:[%s10 + $0x38] sm:$0xf]
  %v10647 = vld [vmem:[%s10 + $0x3c] sm:$0xf]
  %v10648 = vld [vmem:[%s11] sm:$0x1]
  %v10650 = vlaneseq
  %v10651 = vshrl.u32 %v10650, 7
  %v10652 = vsub.s32 0, %v10651
  %v10653 = vrot.slane %v10648, %v10652
  %v10671 = vunpack.c.l.b16 %v10632
  %v10672 = vunpack.c.l.b16 %v10633
  %v10673 = vunpack.c.l.b16 %v10634
  %v10674 = vunpack.c.l.b16 %v10635
  %v10675 = vunpack.c.l.b16 %v10636
  %v10676 = vunpack.c.l.b16 %v10637
  %v10677 = vunpack.c.l.b16 %v10638
  %v10678 = vunpack.c.l.b16 %v10639
  %v10679 = vunpack.c.l.b16 %v10640
  %v10680 = vunpack.c.l.b16 %v10641
  %v10681 = vunpack.c.l.b16 %v10642
  %v10682 = vunpack.c.l.b16 %v10643
  %v10683 = vunpack.c.l.b16 %v10644
  %v10684 = vunpack.c.l.b16 %v10645
  %v10685 = vunpack.c.l.b16 %v10646
  %v10686 = vunpack.c.l.b16 %v10647
  %v10687 = vpack.c.b16 %v10672, %v10671
  %v10688 = vpack.c.b16 %v10674, %v10673
  %v10689 = vpack.c.b16 %v10676, %v10675
  %v10690 = vpack.c.b16 %v10678, %v10677
  %v10691 = vpack.c.b16 %v10680, %v10679
  %v10692 = vpack.c.b16 %v10682, %v10681
  %v10693 = vpack.c.b16 %v10684, %v10683
  %v10694 = vpack.c.b16 %v10686, %v10685
  %10703 = vmatprep.subr.bf16.mxu0 0
  %10704 = vmatpush1.bf16.msra.mxu0 %v10687
  %10705 = vmatprep.subr.bf16.mxu0 0
  %10706 = vmatpush1.bf16.msra.mxu0 %v10688
  %10707 = vmatprep.subr.bf16.mxu0 0
  %10708 = vmatpush1.bf16.msra.mxu0 %v10689
  %10709 = vmatprep.subr.bf16.mxu0 0
  %10710 = vmatpush1.bf16.msra.mxu0 %v10690
  %10711 = vmatprep.subr.bf16.mxu0 0
  %10712 = vmatpush1.bf16.msra.mxu0 %v10691
  %10713 = vmatprep.subr.bf16.mxu0 0
  %10714 = vmatpush1.bf16.msra.mxu0 %v10692
  %10715 = vmatprep.subr.bf16.mxu0 0
  %10716 = vmatpush1.bf16.msra.mxu0 %v10693
  %10717 = vmatprep.subr.bf16.mxu0 0
  %10718 = vmatpush1.bf16.msra.mxu0 %v10694
  %10719 = vmatprep.subr.bf16.mxu0 0
  %10720 = vmatpush1.bf16.msra.mxu0 0
  %10721 = vmatprep.subr.bf16.mxu0 0
  %10722 = vmatpush1.bf16.msra.mxu0 0
  %10723 = vmatprep.subr.bf16.mxu0 0
  %10724 = vmatpush1.bf16.msra.mxu0 0
  %10725 = vmatprep.subr.bf16.mxu0 0
  %10726 = vmatpush1.bf16.msra.mxu0 0
  %10727 = vmatprep.subr.bf16.mxu0 0
  %10728 = vmatpush1.bf16.msra.mxu0 0
  %10729 = vmatprep.subr.bf16.mxu0 0
  %10730 = vmatpush1.bf16.msra.mxu0 0
  %10731 = vmatprep.subr.bf16.mxu0 0
  %10732 = vmatpush1.bf16.msra.mxu0 0
  %10733 = vmatprep.subr.bf16.mxu0 0
  %10734 = vmatpush1.bf16.msra.mxu0 0
  %10735 = vmatprep.mubr.bf16.mxu0 0
  %10736 = vmatmul.mubr.bf16.gmra.mrb[0].mxu0 %v10628
  %v10737 = vpop.f32.mrb[0].mxu0
  %v10738 = vadd.f32 %v10653, %v10737
  %v10739 = vpop.f32.mrb[0].mxu0
  %v10740 = vpop.f32.mrb[0].mxu0
  %v10741 = vadd.f32 %v10653, %v10740
  %v10742 = vpop.f32.mrb[0].mxu0
  %10743 = vmatprep.mubr.bf16.mxu0 0
  %10744 = vmatmul.mubr.bf16.gmra.mrb[0].mxu0 %v10629
  %v10745 = vpop.f32.mrb[0].mxu0
  %v10746 = vadd.f32 %v10653, %v10745
  %v10747 = vpop.f32.mrb[0].mxu0
  %v10748 = vpop.f32.mrb[0].mxu0
  %v10749 = vadd.f32 %v10653, %v10748
  %v10750 = vpop.f32.mrb[0].mxu0
  %10751 = vmatprep.mubr.bf16.mxu0 0
  %10752 = vmatmul.mubr.bf16.gmra.mrb[0].mxu0 %v10630
  %v10753 = vpop.f32.mrb[0].mxu0
  %v10754 = vadd.f32 %v10653, %v10753
  %v10755 = vpop.f32.mrb[0].mxu0
  %v10756 = vpop.f32.mrb[0].mxu0
  %v10757 = vadd.f32 %v10653, %v10756
  %v10758 = vpop.f32.mrb[0].mxu0
  %10759 = vmatprep.mubr.bf16.mxu0 0
  %10760 = vmatmul.mubr.bf16.gmra.mrb[0].mxu0 %v10631
  %v10761 = vpop.f32.mrb[0].mxu0
  %v10762 = vadd.f32 %v10653, %v10761
  %v10763 = vpop.f32.mrb[0].mxu0
  %v10764 = vpop.f32.mrb[0].mxu0
  %v10765 = vadd.f32 %v10653, %v10764
  %v10766 = vpop.f32.mrb[0].mxu0
  %10767 = vdwg.mxu0
  %10768 = vst [vmem:[%s12] sm:$0xff] %v10738
  %10769 = vst [vmem:[%s12 + $0x8] sm:$0xff] %v10741
  %10770 = vst [vmem:[%s12 + $0x10] sm:$0xff] %v10746
  %10771 = vst [vmem:[%s12 + $0x18] sm:$0xff] %v10749
  %10772 = vst [vmem:[%s12 + $0x20] sm:$0xff] %v10754
  %10773 = vst [vmem:[%s12 + $0x28] sm:$0xff] %v10757
  %10774 = vst [vmem:[%s12 + $0x30] sm:$0xff] %v10762
  %10775 = vst [vmem:[%s12 + $0x38] sm:$0xff] %v10765
  // Predicated region
  $region50: #{recurrent_autoencoder_forward.1} parent=0 // pred_check
    _
  $region51: #{recurrent_autoencoder_forward.1} parent=0 // pred_check_branch
    %10777 = sbr.rel (0) target = $region53
  $region52: #{recurrent_autoencoder_forward.1} parent=0 // pred_region
    _
  $region53: #{recurrent_autoencoder_forward.1} parent=0 // pred_fallthru
    _
  // Predicated region
  $region54: #{recurrent_autoencoder_forward.1} parent=0 // pred_check
    _
  $region55: #{recurrent_autoencoder_forward.1} parent=0 // pred_check_branch
    %10779 = sbr.rel (0) target = $region57
  $region56: #{recurrent_autoencoder_forward.1} parent=0 // pred_region
    _
  $region57: #{recurrent_autoencoder_forward.1} parent=0 // pred_fallthru
    _

</llo_original>
